<compile_context>
chip_gen: v5e
topology: v5e:2x2
jax: 0.10.0
libtpu: 0.0.40
codegen_flags: <defaults>
</compile_context>

<pallas_src>
import jax
import jax.numpy as jnp
from jax import lax
from jax.experimental import pallas as pl
from jax.experimental.pallas import tpu as pltpu


KSIZE = 5
PAD = 2
STRIDE = 2
NEG_SLOPE = 0.2


def _layer_geometry(h, w):
    hp, wp = h + 2 * PAD, w + 2 * PAD
    ho = (hp - KSIZE) // STRIDE + 1
    wo = (wp - KSIZE) // STRIDE + 1
    return hp, wp, ho, wo


def _build_row_operator(w_hwio, wp, wo):
    """Fold kw taps + stride-2 decimation into 5 dense (Wp*Cin, Wo*Cout) mats.

    M[kh][wp*Cin + c, j*Cout + d] = w[kh, wp - 2j, c, d]  (0 elsewhere), so that
    out_row_i = sum_kh  padded_row_{2i+kh} @ M[kh].
    """
    k, _, cin, cout = w_hwio.shape
    wp_idx = jnp.arange(wp)[:, None]                      # (Wp, 1)
    j_idx = jnp.arange(wo)[None, :]                       # (1, Wo)
    kw = wp_idx - STRIDE * j_idx                          # (Wp, Wo)
    valid = (kw >= 0) & (kw < k)
    g = w_hwio[:, jnp.clip(kw, 0, k - 1), :, :]           # (k, Wp, Wo, Cin, Cout)
    g = jnp.where(valid[None, :, :, None, None], g, 0.0)
    g = jnp.transpose(g, (0, 1, 3, 2, 4))                 # (k, Wp, Cin, Wo, Cout)
    return g.reshape(k, wp * cin, wo * cout)


def init_params(key, input_dim, cnum):
    # Conv weights kept in HWIO; note: real PyTorch OIHW weights would need a
    # transpose to (kH, kW, Cin, Cout) before use.
    dims = [(input_dim, cnum), (cnum, cnum * 2), (cnum * 2, cnum * 4),
            (cnum * 4, cnum * 8), (cnum * 8, cnum * 8)]
    params = {}
    keys = jax.random.split(key, 2 * len(dims) + 2)
    for i, (cin, cout) in enumerate(dims):
        params[f"w{i+1}"] = 0.05 * jax.random.normal(
            keys[2 * i], (KSIZE, KSIZE, cin, cout), dtype=jnp.float32)
        params[f"b{i+1}"] = 0.01 * jax.random.normal(
            keys[2 * i + 1], (cout,), dtype=jnp.float32)
    params["w_fc"] = 0.05 * jax.random.normal(
        keys[-2], (cnum * 8, 1), dtype=jnp.float32)
    params["b_fc"] = 0.01 * jax.random.normal(keys[-1], (1, 1), dtype=jnp.float32)
    return params


def inpainting_discriminator(params, x_nchw):
    n, cin0, h0, w0 = x_nchw.shape

    # ---- static layer geometry ------------------------------------------------
    metas = []
    h, w = h0, w0
    for i in range(5):
        wgt = params[f"w{i+1}"]
        hp, wp, ho, wo = _layer_geometry(h, w)
        metas.append(dict(cin=wgt.shape[2], cout=wgt.shape[3],
                          hp=hp, wp=wp, ho=ho, wo=wo))
        h, w = ho, wo

    # ---- wrapper-side prep (cheap XLA glue; no im2col blowup) ------------------
    x = jnp.transpose(x_nchw, (0, 2, 3, 1))                       # NCHW -> NHWC
    x = jnp.pad(x, ((0, 0), (PAD, PAD), (PAD, PAD), (0, 0)))
    x = x.reshape(n, metas[0]["hp"], metas[0]["wp"] * metas[0]["cin"]
                  ).astype(jnp.float32)

    row_ops, biases = [], []
    for i, meta in enumerate(metas):
        rop = _build_row_operator(params[f"w{i+1}"], meta["wp"], meta["wo"])
        row_ops.append(rop.astype(jnp.bfloat16))                  # bf16 MXU feed
        biases.append(jnp.tile(params[f"b{i+1}"], meta["wo"])
                      .reshape(1, meta["wo"] * meta["cout"]).astype(jnp.float32))

    w_fc = params["w_fc"].reshape(1, -1).astype(jnp.float32)      # (1, cnum*8)
    b_fc = params["b_fc"].reshape(1, 1).astype(jnp.float32)

    # padded activation scratch for layers 2..5 (f32, row-flattened (H, W*C))
    scratch = [pltpu.VMEM((1, metas[i]["hp"], metas[i]["wp"] * metas[i]["cin"]),
                          jnp.float32) for i in range(1, 5)]

    # ---- the fused kernel ------------------------------------------------------
    def kernel(x_ref, m1, m2, m3, m4, m5, b1, b2, b3, b4, b5, wfc, bfc,
               o_ref, a2, a3, a4, a5):
        srcs = [x_ref, a2, a3, a4, a5]
        dsts = [a2, a3, a4, a5, None]
        mrefs = [m1, m2, m3, m4, m5]
        brefs = [b1, b2, b3, b4, b5]

        # zero the padded scratch: conv zero-padding lives in the borders
        for s in (a2, a3, a4, a5):
            s[...] = jnp.zeros(s.shape, s.dtype)

        pooled = None
        for l, meta in enumerate(metas):
            ho, wo, cout = meta["ho"], meta["wo"], meta["cout"]
            src, dst = srcs[l], dsts[l]
            bias = brefs[l][...]                                  # (1, Wo*Cout) f32
            if l == 4:
                pooled = jnp.zeros((1, cout), jnp.float32)
            for i in range(ho):
                acc = bias
                for kh in range(KSIZE):
                    row = src[:, STRIDE * i + kh, :].astype(jnp.bfloat16)
                    acc = acc + jnp.dot(row, mrefs[l][kh],
                                        preferred_element_type=jnp.float32)
                act = jnp.where(acc >= 0.0, acc, NEG_SLOPE * acc)  # LeakyReLU(0.2)
                if l < 4:
                    # write into the interior of the next layer's padded slab
                    dst[:, i + PAD, PAD * cout:(PAD + wo) * cout] = act
                else:
                    for j in range(wo):                            # avg-pool accum
                        pooled = pooled + act[:, j * cout:(j + 1) * cout]

        pooled = pooled * (1.0 / float(metas[4]["ho"] * metas[4]["wo"]))
        # Linear(cnum*8, 1) as VPU multiply + lane reduction (no 1-wide matmul)
        logit = jnp.sum(pooled * wfc[...], axis=-1, keepdims=True) + bfc[...]
        o_ref[0] = logit.astype(o_ref.dtype)

    # ---- pallas_call -----------------------------------------------------------
    x_spec = pl.BlockSpec((1,) + x.shape[1:], lambda b: (b, 0, 0))
    m_specs = [pl.BlockSpec(r.shape, lambda b: (0, 0, 0)) for r in row_ops]
    b_specs = [pl.BlockSpec(bb.shape, lambda b: (0, 0)) for bb in biases]
    wfc_spec = pl.BlockSpec(w_fc.shape, lambda b: (0, 0))
    bfc_spec = pl.BlockSpec(b_fc.shape, lambda b: (0, 0))
    out_spec = pl.BlockSpec((1, 1, 1), lambda b: (b, 0, 0))

    flops = 2 * n * sum(m["ho"] * KSIZE * (m["wp"] * m["cin"]) * (m["wo"] * m["cout"])
                        for m in metas)
    bytes_accessed = (x.size * 4 + sum(r.size * 2 for r in row_ops)
                      + sum(bb.size * 4 for bb in biases)
                      + w_fc.size * 4 + b_fc.size * 4 + n * 4)

    out = pl.pallas_call(
        kernel,
        out_shape=jax.ShapeDtypeStruct((n, 1, 1), jnp.float32),
        grid=(n,),
        in_specs=[x_spec] + m_specs + b_specs + [wfc_spec, bfc_spec],
        out_specs=out_spec,
        scratch_shapes=scratch,
        compiler_params=pltpu.CompilerParams(
            dimension_semantics=("parallel",),          # v7x: 2 TCs split batch
            vmem_limit_bytes=32 * 1024 * 1024),
        cost_estimate=pl.CostEstimate(flops=flops, transcendentals=0,
                                      bytes_accessed=bytes_accessed),
    )(x, *row_ops, *biases, w_fc, b_fc)

    return out.reshape(n, 1)


# ---- pure-JAX reference (for correctness check only) ---------------------------
def reference_forward(params, x_nchw):
    x = jnp.transpose(x_nchw, (0, 2, 3, 1))
    for i in range(1, 6):
        x = lax.conv_general_dilated(
            x, params[f"w{i}"], window_strides=(STRIDE, STRIDE),
            padding=[(PAD, PAD), (PAD, PAD)],
            dimension_numbers=("NHWC", "HWIO", "NHWC"))
        x = x + params[f"b{i}"]
        x = jnp.where(x >= 0.0, x, NEG_SLOPE * x)
    pooled = jnp.mean(x, axis=(1, 2))                    # AdaptiveAvgPool2d((1,1))
    return pooled @ params["w_fc"] + params["b_fc"]      # (N, 1)


if __name__ == "__main__":
    key = jax.random.PRNGKey(0)
    k_params, k_x = jax.random.split(key)

    batch, input_dim, img_size, cnum = 2, 4, 16, 8
    params = init_params(k_params, input_dim, cnum)
    x = jax.random.normal(k_x, (batch, input_dim, img_size, img_size),
                          dtype=jnp.float32)

    out = jax.jit(inpainting_discriminator)(params, x)
    jax.block_until_ready(out)
    assert out.shape == (batch, 1), out.shape

    ref = reference_forward(params, x)
    assert jnp.allclose(out, ref, rtol=5e-2, atol=2e-2), (out, ref)

    print("KERNEL_OK")
</pallas_src>

<mosaic_0001>
module attributes {stable_mosaic.version = 11 : i64} {
  func.func @kernel(%arg0: i32, %arg1: memref<1x20x80xf32, #tpu.memory_space<vmem>>, %arg2: memref<5x80x64xbf16, #tpu.memory_space<vmem>>, %arg3: memref<5x96x64xbf16, #tpu.memory_space<vmem>>, %arg4: memref<5x128x64xbf16, #tpu.memory_space<vmem>>, %arg5: memref<5x192x64xbf16, #tpu.memory_space<vmem>>, %arg6: memref<5x320x64xbf16, #tpu.memory_space<vmem>>, %arg7: memref<1x64xf32, #tpu.memory_space<vmem>>, %arg8: memref<1x64xf32, #tpu.memory_space<vmem>>, %arg9: memref<1x64xf32, #tpu.memory_space<vmem>>, %arg10: memref<1x64xf32, #tpu.memory_space<vmem>>, %arg11: memref<1x64xf32, #tpu.memory_space<vmem>>, %arg12: memref<1x64xf32, #tpu.memory_space<vmem>>, %arg13: memref<1x1xf32, #tpu.memory_space<vmem>>, %arg14: memref<1x1x1xf32, #tpu.memory_space<vmem>>, %arg15: memref<1x12x96xf32, #tpu.memory_space<vmem>>, %arg16: memref<1x8x128xf32, #tpu.memory_space<vmem>>, %arg17: memref<1x6x192xf32, #tpu.memory_space<vmem>>, %arg18: memref<1x5x320xf32, #tpu.memory_space<vmem>>) attributes {dimension_semantics = [#tpu.dimension_semantics<parallel>], iteration_bounds = array<i64: 2>, scalar_prefetch = 0 : i64, scratch_operands = 4 : i64, tpu.core_type = #tpu.core_type<tc>, window_params = [{transform_indices = @transform_0, window_bounds = array<i64: 1, 20, 80>}, {pipeline_mode = #tpu.pipeline_mode<synchronous>, transform_indices = @transform_1, window_bounds = array<i64: 5, 80, 64>}, {pipeline_mode = #tpu.pipeline_mode<synchronous>, transform_indices = @transform_2, window_bounds = array<i64: 5, 96, 64>}, {pipeline_mode = #tpu.pipeline_mode<synchronous>, transform_indices = @transform_3, window_bounds = array<i64: 5, 128, 64>}, {pipeline_mode = #tpu.pipeline_mode<synchronous>, transform_indices = @transform_4, window_bounds = array<i64: 5, 192, 64>}, {pipeline_mode = #tpu.pipeline_mode<synchronous>, transform_indices = @transform_5, window_bounds = array<i64: 5, 320, 64>}, {pipeline_mode = #tpu.pipeline_mode<synchronous>, transform_indices = @transform_6, window_bounds = array<i64: 1, 64>}, {pipeline_mode = #tpu.pipeline_mode<synchronous>, transform_indices = @transform_7, window_bounds = array<i64: 1, 64>}, {pipeline_mode = #tpu.pipeline_mode<synchronous>, transform_indices = @transform_8, window_bounds = array<i64: 1, 64>}, {pipeline_mode = #tpu.pipeline_mode<synchronous>, transform_indices = @transform_9, window_bounds = array<i64: 1, 64>}, {pipeline_mode = #tpu.pipeline_mode<synchronous>, transform_indices = @transform_10, window_bounds = array<i64: 1, 64>}, {pipeline_mode = #tpu.pipeline_mode<synchronous>, transform_indices = @transform_11, window_bounds = array<i64: 1, 64>}, {pipeline_mode = #tpu.pipeline_mode<synchronous>, transform_indices = @transform_12, window_bounds = array<i64: 1, 1>}, {transform_indices = @transform_13, window_bounds = array<i64: 1, 1, 1>}]} {
    %cst = arith.constant 0.000000e+00 : f32
    %0 = vector.broadcast %cst : f32 to vector<1x12x96xf32>
    %c0 = arith.constant 0 : index
    %c0_0 = arith.constant 0 : index
    %c0_1 = arith.constant 0 : index
    %1 = vector.load %arg15[%c0, %c0_0, %c0_1] : memref<1x12x96xf32, #tpu.memory_space<vmem>>, vector<1x12x96xf32>
    tpu.vector_store %arg15[%c0, %c0_0, %c0_1], %0 {strides = array<i32>} : memref<1x12x96xf32, #tpu.memory_space<vmem>>, vector<1x12x96xf32>,
    %cst_2 = arith.constant 0.000000e+00 : f32
    %2 = vector.broadcast %cst_2 : f32 to vector<1x8x128xf32>
    %c0_3 = arith.constant 0 : index
    %c0_4 = arith.constant 0 : index
    %c0_5 = arith.constant 0 : index
    %3 = vector.load %arg16[%c0_3, %c0_4, %c0_5] : memref<1x8x128xf32, #tpu.memory_space<vmem>>, vector<1x8x128xf32>
    tpu.vector_store %arg16[%c0_3, %c0_4, %c0_5], %2 {strides = array<i32>} : memref<1x8x128xf32, #tpu.memory_space<vmem>>, vector<1x8x128xf32>,
    %cst_6 = arith.constant 0.000000e+00 : f32
    %4 = vector.broadcast %cst_6 : f32 to vector<1x6x192xf32>
    %c0_7 = arith.constant 0 : index
    %c0_8 = arith.constant 0 : index
    %c0_9 = arith.constant 0 : index
    %5 = vector.load %arg17[%c0_7, %c0_8, %c0_9] : memref<1x6x192xf32, #tpu.memory_space<vmem>>, vector<1x6x192xf32>
    tpu.vector_store %arg17[%c0_7, %c0_8, %c0_9], %4 {strides = array<i32>} : memref<1x6x192xf32, #tpu.memory_space<vmem>>, vector<1x6x192xf32>,
    %cst_10 = arith.constant 0.000000e+00 : f32
    %6 = vector.broadcast %cst_10 : f32 to vector<1x5x320xf32>
    %c0_11 = arith.constant 0 : index
    %c0_12 = arith.constant 0 : index
    %c0_13 = arith.constant 0 : index
    %7 = vector.load %arg18[%c0_11, %c0_12, %c0_13] : memref<1x5x320xf32, #tpu.memory_space<vmem>>, vector<1x5x320xf32>
    tpu.vector_store %arg18[%c0_11, %c0_12, %c0_13], %6 {strides = array<i32>} : memref<1x5x320xf32, #tpu.memory_space<vmem>>, vector<1x5x320xf32>,
    %c0_14 = arith.constant 0 : index
    %c0_15 = arith.constant 0 : index
    %8 = vector.load %arg7[%c0_14, %c0_15] : memref<1x64xf32, #tpu.memory_space<vmem>>, vector<1x64xf32>
    %c0_16 = arith.constant 0 : index
    %c0_17 = arith.constant 0 : index
    %c0_18 = arith.constant 0 : index
    %9 = vector.load %arg1[%c0_16, %c0_17, %c0_18] : memref<1x20x80xf32, #tpu.memory_space<vmem>>, vector<1x1x80xf32>
    %10 = vector.shape_cast %9 : vector<1x1x80xf32> to vector<1x80xf32>
    %11 = arith.truncf %10 : vector<1x80xf32> to vector<1x80xbf16>
    %c0_19 = arith.constant 0 : index
    %c0_20 = arith.constant 0 : index
    %c0_21 = arith.constant 0 : index
    %12 = vector.load %arg2[%c0_19, %c0_20, %c0_21] : memref<5x80x64xbf16, #tpu.memory_space<vmem>>, vector<1x80x64xbf16>
    %13 = vector.shape_cast %12 : vector<1x80x64xbf16> to vector<80x64xbf16>
    %cst_22 = arith.constant dense<0.000000e+00> : vector<1x64xf32>
    %14 = tpu.matmul %11, %13, %cst_22 {dimension_numbers = #tpu.dot_dimension_numbers<[1], [0], [0], [1], [0, 0, 1, 1], [], []>} : vector<1x80xbf16>, vector<80x64xbf16>, vector<1x64xf32> -> vector<1x64xf32>
    %15 = arith.addf %8, %14 : vector<1x64xf32>
    %c0_23 = arith.constant 0 : index
    %c1 = arith.constant 1 : index
    %c0_24 = arith.constant 0 : index
    %16 = vector.load %arg1[%c0_23, %c1, %c0_24] : memref<1x20x80xf32, #tpu.memory_space<vmem>>, vector<1x1x80xf32>
    %17 = vector.shape_cast %16 : vector<1x1x80xf32> to vector<1x80xf32>
    %18 = arith.truncf %17 : vector<1x80xf32> to vector<1x80xbf16>
    %c1_25 = arith.constant 1 : index
    %c0_26 = arith.constant 0 : index
    %c0_27 = arith.constant 0 : index
    %19 = vector.load %arg2[%c1_25, %c0_26, %c0_27] : memref<5x80x64xbf16, #tpu.memory_space<vmem>>, vector<1x80x64xbf16>
    %20 = vector.shape_cast %19 : vector<1x80x64xbf16> to vector<80x64xbf16>
    %cst_28 = arith.constant dense<0.000000e+00> : vector<1x64xf32>
    %21 = tpu.matmul %18, %20, %cst_28 {dimension_numbers = #tpu.dot_dimension_numbers<[1], [0], [0], [1], [0, 0, 1, 1], [], []>} : vector<1x80xbf16>, vector<80x64xbf16>, vector<1x64xf32> -> vector<1x64xf32>
    %22 = arith.addf %15, %21 : vector<1x64xf32>
    %c0_29 = arith.constant 0 : index
    %c2 = arith.constant 2 : index
    %c0_30 = arith.constant 0 : index
    %23 = vector.load %arg1[%c0_29, %c2, %c0_30] : memref<1x20x80xf32, #tpu.memory_space<vmem>>, vector<1x1x80xf32>
    %24 = vector.shape_cast %23 : vector<1x1x80xf32> to vector<1x80xf32>
    %25 = arith.truncf %24 : vector<1x80xf32> to vector<1x80xbf16>
    %c2_31 = arith.constant 2 : index
    %c0_32 = arith.constant 0 : index
    %c0_33 = arith.constant 0 : index
    %26 = vector.load %arg2[%c2_31, %c0_32, %c0_33] : memref<5x80x64xbf16, #tpu.memory_space<vmem>>, vector<1x80x64xbf16>
    %27 = vector.shape_cast %26 : vector<1x80x64xbf16> to vector<80x64xbf16>
    %cst_34 = arith.constant dense<0.000000e+00> : vector<1x64xf32>
    %28 = tpu.matmul %25, %27, %cst_34 {dimension_numbers = #tpu.dot_dimension_numbers<[1], [0], [0], [1], [0, 0, 1, 1], [], []>} : vector<1x80xbf16>, vector<80x64xbf16>, vector<1x64xf32> -> vector<1x64xf32>
    %29 = arith.addf %22, %28 : vector<1x64xf32>
    %c0_35 = arith.constant 0 : index
    %c3 = arith.constant 3 : index
    %c0_36 = arith.constant 0 : index
    %30 = vector.load %arg1[%c0_35, %c3, %c0_36] : memref<1x20x80xf32, #tpu.memory_space<vmem>>, vector<1x1x80xf32>
    %31 = vector.shape_cast %30 : vector<1x1x80xf32> to vector<1x80xf32>
    %32 = arith.truncf %31 : vector<1x80xf32> to vector<1x80xbf16>
    %c3_37 = arith.constant 3 : index
    %c0_38 = arith.constant 0 : index
    %c0_39 = arith.constant 0 : index
    %33 = vector.load %arg2[%c3_37, %c0_38, %c0_39] : memref<5x80x64xbf16, #tpu.memory_space<vmem>>, vector<1x80x64xbf16>
    %34 = vector.shape_cast %33 : vector<1x80x64xbf16> to vector<80x64xbf16>
    %cst_40 = arith.constant dense<0.000000e+00> : vector<1x64xf32>
    %35 = tpu.matmul %32, %34, %cst_40 {dimension_numbers = #tpu.dot_dimension_numbers<[1], [0], [0], [1], [0, 0, 1, 1], [], []>} : vector<1x80xbf16>, vector<80x64xbf16>, vector<1x64xf32> -> vector<1x64xf32>
    %36 = arith.addf %29, %35 : vector<1x64xf32>
    %c0_41 = arith.constant 0 : index
    %c4 = arith.constant 4 : index
    %c0_42 = arith.constant 0 : index
    %37 = vector.load %arg1[%c0_41, %c4, %c0_42] : memref<1x20x80xf32, #tpu.memory_space<vmem>>, vector<1x1x80xf32>
    %38 = vector.shape_cast %37 : vector<1x1x80xf32> to vector<1x80xf32>
    %39 = arith.truncf %38 : vector<1x80xf32> to vector<1x80xbf16>
    %c4_43 = arith.constant 4 : index
    %c0_44 = arith.constant 0 : index
    %c0_45 = arith.constant 0 : index
    %40 = vector.load %arg2[%c4_43, %c0_44, %c0_45] : memref<5x80x64xbf16, #tpu.memory_space<vmem>>, vector<1x80x64xbf16>
    %41 = vector.shape_cast %40 : vector<1x80x64xbf16> to vector<80x64xbf16>
    %cst_46 = arith.constant dense<0.000000e+00> : vector<1x64xf32>
    %42 = tpu.matmul %39, %41, %cst_46 {dimension_numbers = #tpu.dot_dimension_numbers<[1], [0], [0], [1], [0, 0, 1, 1], [], []>} : vector<1x80xbf16>, vector<80x64xbf16>, vector<1x64xf32> -> vector<1x64xf32>
    %43 = arith.addf %36, %42 : vector<1x64xf32>
    %cst_47 = arith.constant 0.000000e+00 : f32
    %44 = vector.broadcast %cst_47 : f32 to vector<1x64xf32>
    %45 = arith.cmpf oge, %43, %44 : vector<1x64xf32>
    %cst_48 = arith.constant 2.000000e-01 : f32
    %46 = vector.broadcast %cst_48 : f32 to vector<1x64xf32>
    %47 = arith.mulf %46, %43 : vector<1x64xf32>
    %48 = arith.select %45, %43, %47 : vector<1x64xi1>, vector<1x64xf32>
    %c0_49 = arith.constant 0 : index
    %c2_50 = arith.constant 2 : index
    %c16 = arith.constant 16 : index
    %49 = vector.load %arg15[%c0_49, %c2_50, %c16] : memref<1x12x96xf32, #tpu.memory_space<vmem>>, vector<1x1x64xf32>
    %50 = vector.shape_cast %49 : vector<1x1x64xf32> to vector<1x64xf32>
    %51 = vector.shape_cast %48 : vector<1x64xf32> to vector<1x1x64xf32>
    tpu.vector_store %arg15[%c0_49, %c2_50, %c16], %51 {strides = array<i32>} : memref<1x12x96xf32, #tpu.memory_space<vmem>>, vector<1x1x64xf32>,
    %c0_51 = arith.constant 0 : index
    %c2_52 = arith.constant 2 : index
    %c0_53 = arith.constant 0 : index
    %52 = vector.load %arg1[%c0_51, %c2_52, %c0_53] : memref<1x20x80xf32, #tpu.memory_space<vmem>>, vector<1x1x80xf32>
    %53 = vector.shape_cast %52 : vector<1x1x80xf32> to vector<1x80xf32>
    %54 = arith.truncf %53 : vector<1x80xf32> to vector<1x80xbf16>
    %c0_54 = arith.constant 0 : index
    %c0_55 = arith.constant 0 : index
    %c0_56 = arith.constant 0 : index
    %55 = vector.load %arg2[%c0_54, %c0_55, %c0_56] : memref<5x80x64xbf16, #tpu.memory_space<vmem>>, vector<1x80x64xbf16>
    %56 = vector.shape_cast %55 : vector<1x80x64xbf16> to vector<80x64xbf16>
    %cst_57 = arith.constant dense<0.000000e+00> : vector<1x64xf32>
    %57 = tpu.matmul %54, %56, %cst_57 {dimension_numbers = #tpu.dot_dimension_numbers<[1], [0], [0], [1], [0, 0, 1, 1], [], []>} : vector<1x80xbf16>, vector<80x64xbf16>, vector<1x64xf32> -> vector<1x64xf32>
    %58 = arith.addf %8, %57 : vector<1x64xf32>
    %c0_58 = arith.constant 0 : index
    %c3_59 = arith.constant 3 : index
    %c0_60 = arith.constant 0 : index
    %59 = vector.load %arg1[%c0_58, %c3_59, %c0_60] : memref<1x20x80xf32, #tpu.memory_space<vmem>>, vector<1x1x80xf32>
    %60 = vector.shape_cast %59 : vector<1x1x80xf32> to vector<1x80xf32>
    %61 = arith.truncf %60 : vector<1x80xf32> to vector<1x80xbf16>
    %c1_61 = arith.constant 1 : index
    %c0_62 = arith.constant 0 : index
    %c0_63 = arith.constant 0 : index
    %62 = vector.load %arg2[%c1_61, %c0_62, %c0_63] : memref<5x80x64xbf16, #tpu.memory_space<vmem>>, vector<1x80x64xbf16>
    %63 = vector.shape_cast %62 : vector<1x80x64xbf16> to vector<80x64xbf16>
    %cst_64 = arith.constant dense<0.000000e+00> : vector<1x64xf32>
    %64 = tpu.matmul %61, %63, %cst_64 {dimension_numbers = #tpu.dot_dimension_numbers<[1], [0], [0], [1], [0, 0, 1, 1], [], []>} : vector<1x80xbf16>, vector<80x64xbf16>, vector<1x64xf32> -> vector<1x64xf32>
    %65 = arith.addf %58, %64 : vector<1x64xf32>
    %c0_65 = arith.constant 0 : index
    %c4_66 = arith.constant 4 : index
    %c0_67 = arith.constant 0 : index
    %66 = vector.load %arg1[%c0_65, %c4_66, %c0_67] : memref<1x20x80xf32, #tpu.memory_space<vmem>>, vector<1x1x80xf32>
    %67 = vector.shape_cast %66 : vector<1x1x80xf32> to vector<1x80xf32>
    %68 = arith.truncf %67 : vector<1x80xf32> to vector<1x80xbf16>
    %c2_68 = arith.constant 2 : index
    %c0_69 = arith.constant 0 : index
    %c0_70 = arith.constant 0 : index
    %69 = vector.load %arg2[%c2_68, %c0_69, %c0_70] : memref<5x80x64xbf16, #tpu.memory_space<vmem>>, vector<1x80x64xbf16>
    %70 = vector.shape_cast %69 : vector<1x80x64xbf16> to vector<80x64xbf16>
    %cst_71 = arith.constant dense<0.000000e+00> : vector<1x64xf32>
    %71 = tpu.matmul %68, %70, %cst_71 {dimension_numbers = #tpu.dot_dimension_numbers<[1], [0], [0], [1], [0, 0, 1, 1], [], []>} : vector<1x80xbf16>, vector<80x64xbf16>, vector<1x64xf32> -> vector<1x64xf32>
    %72 = arith.addf %65, %71 : vector<1x64xf32>
    %c0_72 = arith.constant 0 : index
    %c5 = arith.constant 5 : index
    %c0_73 = arith.constant 0 : index
    %73 = vector.load %arg1[%c0_72, %c5, %c0_73] : memref<1x20x80xf32, #tpu.memory_space<vmem>>, vector<1x1x80xf32>
    %74 = vector.shape_cast %73 : vector<1x1x80xf32> to vector<1x80xf32>
    %75 = arith.truncf %74 : vector<1x80xf32> to vector<1x80xbf16>
    %c3_74 = arith.constant 3 : index
    %c0_75 = arith.constant 0 : index
    %c0_76 = arith.constant 0 : index
    %76 = vector.load %arg2[%c3_74, %c0_75, %c0_76] : memref<5x80x64xbf16, #tpu.memory_space<vmem>>, vector<1x80x64xbf16>
    %77 = vector.shape_cast %76 : vector<1x80x64xbf16> to vector<80x64xbf16>
    %cst_77 = arith.constant dense<0.000000e+00> : vector<1x64xf32>
    %78 = tpu.matmul %75, %77, %cst_77 {dimension_numbers = #tpu.dot_dimension_numbers<[1], [0], [0], [1], [0, 0, 1, 1], [], []>} : vector<1x80xbf16>, vector<80x64xbf16>, vector<1x64xf32> -> vector<1x64xf32>
    %79 = arith.addf %72, %78 : vector<1x64xf32>
    %c0_78 = arith.constant 0 : index
    %c6 = arith.constant 6 : index
    %c0_79 = arith.constant 0 : index
    %80 = vector.load %arg1[%c0_78, %c6, %c0_79] : memref<1x20x80xf32, #tpu.memory_space<vmem>>, vector<1x1x80xf32>
    %81 = vector.shape_cast %80 : vector<1x1x80xf32> to vector<1x80xf32>
    %82 = arith.truncf %81 : vector<1x80xf32> to vector<1x80xbf16>
    %c4_80 = arith.constant 4 : index
    %c0_81 = arith.constant 0 : index
    %c0_82 = arith.constant 0 : index
    %83 = vector.load %arg2[%c4_80, %c0_81, %c0_82] : memref<5x80x64xbf16, #tpu.memory_space<vmem>>, vector<1x80x64xbf16>
    %84 = vector.shape_cast %83 : vector<1x80x64xbf16> to vector<80x64xbf16>
    %cst_83 = arith.constant dense<0.000000e+00> : vector<1x64xf32>
    %85 = tpu.matmul %82, %84, %cst_83 {dimension_numbers = #tpu.dot_dimension_numbers<[1], [0], [0], [1], [0, 0, 1, 1], [], []>} : vector<1x80xbf16>, vector<80x64xbf16>, vector<1x64xf32> -> vector<1x64xf32>
    %86 = arith.addf %79, %85 : vector<1x64xf32>
    %cst_84 = arith.constant 0.000000e+00 : f32
    %87 = vector.broadcast %cst_84 : f32 to vector<1x64xf32>
    %88 = arith.cmpf oge, %86, %87 : vector<1x64xf32>
    %cst_85 = arith.constant 2.000000e-01 : f32
    %89 = vector.broadcast %cst_85 : f32 to vector<1x64xf32>
    %90 = arith.mulf %89, %86 : vector<1x64xf32>
    %91 = arith.select %88, %86, %90 : vector<1x64xi1>, vector<1x64xf32>
    %c0_86 = arith.constant 0 : index
    %c3_87 = arith.constant 3 : index
    %c16_88 = arith.constant 16 : index
    %92 = vector.load %arg15[%c0_86, %c3_87, %c16_88] : memref<1x12x96xf32, #tpu.memory_space<vmem>>, vector<1x1x64xf32>
    %93 = vector.shape_cast %92 : vector<1x1x64xf32> to vector<1x64xf32>
    %94 = vector.shape_cast %91 : vector<1x64xf32> to vector<1x1x64xf32>
    tpu.vector_store %arg15[%c0_86, %c3_87, %c16_88], %94 {strides = array<i32>} : memref<1x12x96xf32, #tpu.memory_space<vmem>>, vector<1x1x64xf32>,
    %c0_89 = arith.constant 0 : index
    %c4_90 = arith.constant 4 : index
    %c0_91 = arith.constant 0 : index
    %95 = vector.load %arg1[%c0_89, %c4_90, %c0_91] : memref<1x20x80xf32, #tpu.memory_space<vmem>>, vector<1x1x80xf32>
    %96 = vector.shape_cast %95 : vector<1x1x80xf32> to vector<1x80xf32>
    %97 = arith.truncf %96 : vector<1x80xf32> to vector<1x80xbf16>
    %c0_92 = arith.constant 0 : index
    %c0_93 = arith.constant 0 : index
    %c0_94 = arith.constant 0 : index
    %98 = vector.load %arg2[%c0_92, %c0_93, %c0_94] : memref<5x80x64xbf16, #tpu.memory_space<vmem>>, vector<1x80x64xbf16>
    %99 = vector.shape_cast %98 : vector<1x80x64xbf16> to vector<80x64xbf16>
    %cst_95 = arith.constant dense<0.000000e+00> : vector<1x64xf32>
    %100 = tpu.matmul %97, %99, %cst_95 {dimension_numbers = #tpu.dot_dimension_numbers<[1], [0], [0], [1], [0, 0, 1, 1], [], []>} : vector<1x80xbf16>, vector<80x64xbf16>, vector<1x64xf32> -> vector<1x64xf32>
    %101 = arith.addf %8, %100 : vector<1x64xf32>
    %c0_96 = arith.constant 0 : index
    %c5_97 = arith.constant 5 : index
    %c0_98 = arith.constant 0 : index
    %102 = vector.load %arg1[%c0_96, %c5_97, %c0_98] : memref<1x20x80xf32, #tpu.memory_space<vmem>>, vector<1x1x80xf32>
    %103 = vector.shape_cast %102 : vector<1x1x80xf32> to vector<1x80xf32>
    %104 = arith.truncf %103 : vector<1x80xf32> to vector<1x80xbf16>
    %c1_99 = arith.constant 1 : index
    %c0_100 = arith.constant 0 : index
    %c0_101 = arith.constant 0 : index
    %105 = vector.load %arg2[%c1_99, %c0_100, %c0_101] : memref<5x80x64xbf16, #tpu.memory_space<vmem>>, vector<1x80x64xbf16>
    %106 = vector.shape_cast %105 : vector<1x80x64xbf16> to vector<80x64xbf16>
    %cst_102 = arith.constant dense<0.000000e+00> : vector<1x64xf32>
    %107 = tpu.matmul %104, %106, %cst_102 {dimension_numbers = #tpu.dot_dimension_numbers<[1], [0], [0], [1], [0, 0, 1, 1], [], []>} : vector<1x80xbf16>, vector<80x64xbf16>, vector<1x64xf32> -> vector<1x64xf32>
    %108 = arith.addf %101, %107 : vector<1x64xf32>
    %c0_103 = arith.constant 0 : index
    %c6_104 = arith.constant 6 : index
    %c0_105 = arith.constant 0 : index
    %109 = vector.load %arg1[%c0_103, %c6_104, %c0_105] : memref<1x20x80xf32, #tpu.memory_space<vmem>>, vector<1x1x80xf32>
    %110 = vector.shape_cast %109 : vector<1x1x80xf32> to vector<1x80xf32>
    %111 = arith.truncf %110 : vector<1x80xf32> to vector<1x80xbf16>
    %c2_106 = arith.constant 2 : index
    %c0_107 = arith.constant 0 : index
    %c0_108 = arith.constant 0 : index
    %112 = vector.load %arg2[%c2_106, %c0_107, %c0_108] : memref<5x80x64xbf16, #tpu.memory_space<vmem>>, vector<1x80x64xbf16>
    %113 = vector.shape_cast %112 : vector<1x80x64xbf16> to vector<80x64xbf16>
    %cst_109 = arith.constant dense<0.000000e+00> : vector<1x64xf32>
    %114 = tpu.matmul %111, %113, %cst_109 {dimension_numbers = #tpu.dot_dimension_numbers<[1], [0], [0], [1], [0, 0, 1, 1], [], []>} : vector<1x80xbf16>, vector<80x64xbf16>, vector<1x64xf32> -> vector<1x64xf32>
    %115 = arith.addf %108, %114 : vector<1x64xf32>
    %c0_110 = arith.constant 0 : index
    %c7 = arith.constant 7 : index
    %c0_111 = arith.constant 0 : index
    %116 = vector.load %arg1[%c0_110, %c7, %c0_111] : memref<1x20x80xf32, #tpu.memory_space<vmem>>, vector<1x1x80xf32>
    %117 = vector.shape_cast %116 : vector<1x1x80xf32> to vector<1x80xf32>
    %118 = arith.truncf %117 : vector<1x80xf32> to vector<1x80xbf16>
    %c3_112 = arith.constant 3 : index
    %c0_113 = arith.constant 0 : index
    %c0_114 = arith.constant 0 : index
    %119 = vector.load %arg2[%c3_112, %c0_113, %c0_114] : memref<5x80x64xbf16, #tpu.memory_space<vmem>>, vector<1x80x64xbf16>
    %120 = vector.shape_cast %119 : vector<1x80x64xbf16> to vector<80x64xbf16>
    %cst_115 = arith.constant dense<0.000000e+00> : vector<1x64xf32>
    %121 = tpu.matmul %118, %120, %cst_115 {dimension_numbers = #tpu.dot_dimension_numbers<[1], [0], [0], [1], [0, 0, 1, 1], [], []>} : vector<1x80xbf16>, vector<80x64xbf16>, vector<1x64xf32> -> vector<1x64xf32>
    %122 = arith.addf %115, %121 : vector<1x64xf32>
    %c0_116 = arith.constant 0 : index
    %c8 = arith.constant 8 : index
    %c0_117 = arith.constant 0 : index
    %123 = vector.load %arg1[%c0_116, %c8, %c0_117] : memref<1x20x80xf32, #tpu.memory_space<vmem>>, vector<1x1x80xf32>
    %124 = vector.shape_cast %123 : vector<1x1x80xf32> to vector<1x80xf32>
    %125 = arith.truncf %124 : vector<1x80xf32> to vector<1x80xbf16>
    %c4_118 = arith.constant 4 : index
    %c0_119 = arith.constant 0 : index
    %c0_120 = arith.constant 0 : index
    %126 = vector.load %arg2[%c4_118, %c0_119, %c0_120] : memref<5x80x64xbf16, #tpu.memory_space<vmem>>, vector<1x80x64xbf16>
    %127 = vector.shape_cast %126 : vector<1x80x64xbf16> to vector<80x64xbf16>
    %cst_121 = arith.constant dense<0.000000e+00> : vector<1x64xf32>
    %128 = tpu.matmul %125, %127, %cst_121 {dimension_numbers = #tpu.dot_dimension_numbers<[1], [0], [0], [1], [0, 0, 1, 1], [], []>} : vector<1x80xbf16>, vector<80x64xbf16>, vector<1x64xf32> -> vector<1x64xf32>
    %129 = arith.addf %122, %128 : vector<1x64xf32>
    %cst_122 = arith.constant 0.000000e+00 : f32
    %130 = vector.broadcast %cst_122 : f32 to vector<1x64xf32>
    %131 = arith.cmpf oge, %129, %130 : vector<1x64xf32>
    %cst_123 = arith.constant 2.000000e-01 : f32
    %132 = vector.broadcast %cst_123 : f32 to vector<1x64xf32>
    %133 = arith.mulf %132, %129 : vector<1x64xf32>
    %134 = arith.select %131, %129, %133 : vector<1x64xi1>, vector<1x64xf32>
    %c0_124 = arith.constant 0 : index
    %c4_125 = arith.constant 4 : index
    %c16_126 = arith.constant 16 : index
    %135 = vector.load %arg15[%c0_124, %c4_125, %c16_126] : memref<1x12x96xf32, #tpu.memory_space<vmem>>, vector<1x1x64xf32>
    %136 = vector.shape_cast %135 : vector<1x1x64xf32> to vector<1x64xf32>
    %137 = vector.shape_cast %134 : vector<1x64xf32> to vector<1x1x64xf32>
    tpu.vector_store %arg15[%c0_124, %c4_125, %c16_126], %137 {strides = array<i32>} : memref<1x12x96xf32, #tpu.memory_space<vmem>>, vector<1x1x64xf32>,
    %c0_127 = arith.constant 0 : index
    %c6_128 = arith.constant 6 : index
    %c0_129 = arith.constant 0 : index
    %138 = vector.load %arg1[%c0_127, %c6_128, %c0_129] : memref<1x20x80xf32, #tpu.memory_space<vmem>>, vector<1x1x80xf32>
    %139 = vector.shape_cast %138 : vector<1x1x80xf32> to vector<1x80xf32>
    %140 = arith.truncf %139 : vector<1x80xf32> to vector<1x80xbf16>
    %c0_130 = arith.constant 0 : index
    %c0_131 = arith.constant 0 : index
    %c0_132 = arith.constant 0 : index
    %141 = vector.load %arg2[%c0_130, %c0_131, %c0_132] : memref<5x80x64xbf16, #tpu.memory_space<vmem>>, vector<1x80x64xbf16>
    %142 = vector.shape_cast %141 : vector<1x80x64xbf16> to vector<80x64xbf16>
    %cst_133 = arith.constant dense<0.000000e+00> : vector<1x64xf32>
    %143 = tpu.matmul %140, %142, %cst_133 {dimension_numbers = #tpu.dot_dimension_numbers<[1], [0], [0], [1], [0, 0, 1, 1], [], []>} : vector<1x80xbf16>, vector<80x64xbf16>, vector<1x64xf32> -> vector<1x64xf32>
    %144 = arith.addf %8, %143 : vector<1x64xf32>
    %c0_134 = arith.constant 0 : index
    %c7_135 = arith.constant 7 : index
    %c0_136 = arith.constant 0 : index
    %145 = vector.load %arg1[%c0_134, %c7_135, %c0_136] : memref<1x20x80xf32, #tpu.memory_space<vmem>>, vector<1x1x80xf32>
    %146 = vector.shape_cast %145 : vector<1x1x80xf32> to vector<1x80xf32>
    %147 = arith.truncf %146 : vector<1x80xf32> to vector<1x80xbf16>
    %c1_137 = arith.constant 1 : index
    %c0_138 = arith.constant 0 : index
    %c0_139 = arith.constant 0 : index
    %148 = vector.load %arg2[%c1_137, %c0_138, %c0_139] : memref<5x80x64xbf16, #tpu.memory_space<vmem>>, vector<1x80x64xbf16>
    %149 = vector.shape_cast %148 : vector<1x80x64xbf16> to vector<80x64xbf16>
    %cst_140 = arith.constant dense<0.000000e+00> : vector<1x64xf32>
    %150 = tpu.matmul %147, %149, %cst_140 {dimension_numbers = #tpu.dot_dimension_numbers<[1], [0], [0], [1], [0, 0, 1, 1], [], []>} : vector<1x80xbf16>, vector<80x64xbf16>, vector<1x64xf32> -> vector<1x64xf32>
    %151 = arith.addf %144, %150 : vector<1x64xf32>
    %c0_141 = arith.constant 0 : index
    %c8_142 = arith.constant 8 : index
    %c0_143 = arith.constant 0 : index
    %152 = vector.load %arg1[%c0_141, %c8_142, %c0_143] : memref<1x20x80xf32, #tpu.memory_space<vmem>>, vector<1x1x80xf32>
    %153 = vector.shape_cast %152 : vector<1x1x80xf32> to vector<1x80xf32>
    %154 = arith.truncf %153 : vector<1x80xf32> to vector<1x80xbf16>
    %c2_144 = arith.constant 2 : index
    %c0_145 = arith.constant 0 : index
    %c0_146 = arith.constant 0 : index
    %155 = vector.load %arg2[%c2_144, %c0_145, %c0_146] : memref<5x80x64xbf16, #tpu.memory_space<vmem>>, vector<1x80x64xbf16>
    %156 = vector.shape_cast %155 : vector<1x80x64xbf16> to vector<80x64xbf16>
    %cst_147 = arith.constant dense<0.000000e+00> : vector<1x64xf32>
    %157 = tpu.matmul %154, %156, %cst_147 {dimension_numbers = #tpu.dot_dimension_numbers<[1], [0], [0], [1], [0, 0, 1, 1], [], []>} : vector<1x80xbf16>, vector<80x64xbf16>, vector<1x64xf32> -> vector<1x64xf32>
    %158 = arith.addf %151, %157 : vector<1x64xf32>
    %c0_148 = arith.constant 0 : index
    %c9 = arith.constant 9 : index
    %c0_149 = arith.constant 0 : index
    %159 = vector.load %arg1[%c0_148, %c9, %c0_149] : memref<1x20x80xf32, #tpu.memory_space<vmem>>, vector<1x1x80xf32>
    %160 = vector.shape_cast %159 : vector<1x1x80xf32> to vector<1x80xf32>
    %161 = arith.truncf %160 : vector<1x80xf32> to vector<1x80xbf16>
    %c3_150 = arith.constant 3 : index
    %c0_151 = arith.constant 0 : index
    %c0_152 = arith.constant 0 : index
    %162 = vector.load %arg2[%c3_150, %c0_151, %c0_152] : memref<5x80x64xbf16, #tpu.memory_space<vmem>>, vector<1x80x64xbf16>
    %163 = vector.shape_cast %162 : vector<1x80x64xbf16> to vector<80x64xbf16>
    %cst_153 = arith.constant dense<0.000000e+00> : vector<1x64xf32>
    %164 = tpu.matmul %161, %163, %cst_153 {dimension_numbers = #tpu.dot_dimension_numbers<[1], [0], [0], [1], [0, 0, 1, 1], [], []>} : vector<1x80xbf16>, vector<80x64xbf16>, vector<1x64xf32> -> vector<1x64xf32>
    %165 = arith.addf %158, %164 : vector<1x64xf32>
    %c0_154 = arith.constant 0 : index
    %c10 = arith.constant 10 : index
    %c0_155 = arith.constant 0 : index
    %166 = vector.load %arg1[%c0_154, %c10, %c0_155] : memref<1x20x80xf32, #tpu.memory_space<vmem>>, vector<1x1x80xf32>
    %167 = vector.shape_cast %166 : vector<1x1x80xf32> to vector<1x80xf32>
    %168 = arith.truncf %167 : vector<1x80xf32> to vector<1x80xbf16>
    %c4_156 = arith.constant 4 : index
    %c0_157 = arith.constant 0 : index
    %c0_158 = arith.constant 0 : index
    %169 = vector.load %arg2[%c4_156, %c0_157, %c0_158] : memref<5x80x64xbf16, #tpu.memory_space<vmem>>, vector<1x80x64xbf16>
    %170 = vector.shape_cast %169 : vector<1x80x64xbf16> to vector<80x64xbf16>
    %cst_159 = arith.constant dense<0.000000e+00> : vector<1x64xf32>
    %171 = tpu.matmul %168, %170, %cst_159 {dimension_numbers = #tpu.dot_dimension_numbers<[1], [0], [0], [1], [0, 0, 1, 1], [], []>} : vector<1x80xbf16>, vector<80x64xbf16>, vector<1x64xf32> -> vector<1x64xf32>
    %172 = arith.addf %165, %171 : vector<1x64xf32>
    %cst_160 = arith.constant 0.000000e+00 : f32
    %173 = vector.broadcast %cst_160 : f32 to vector<1x64xf32>
    %174 = arith.cmpf oge, %172, %173 : vector<1x64xf32>
    %cst_161 = arith.constant 2.000000e-01 : f32
    %175 = vector.broadcast %cst_161 : f32 to vector<1x64xf32>
    %176 = arith.mulf %175, %172 : vector<1x64xf32>
    %177 = arith.select %174, %172, %176 : vector<1x64xi1>, vector<1x64xf32>
    %c0_162 = arith.constant 0 : index
    %c5_163 = arith.constant 5 : index
    %c16_164 = arith.constant 16 : index
    %178 = vector.load %arg15[%c0_162, %c5_163, %c16_164] : memref<1x12x96xf32, #tpu.memory_space<vmem>>, vector<1x1x64xf32>
    %179 = vector.shape_cast %178 : vector<1x1x64xf32> to vector<1x64xf32>
    %180 = vector.shape_cast %177 : vector<1x64xf32> to vector<1x1x64xf32>
    tpu.vector_store %arg15[%c0_162, %c5_163, %c16_164], %180 {strides = array<i32>} : memref<1x12x96xf32, #tpu.memory_space<vmem>>, vector<1x1x64xf32>,
    %c0_165 = arith.constant 0 : index
    %c8_166 = arith.constant 8 : index
    %c0_167 = arith.constant 0 : index
    %181 = vector.load %arg1[%c0_165, %c8_166, %c0_167] : memref<1x20x80xf32, #tpu.memory_space<vmem>>, vector<1x1x80xf32>
    %182 = vector.shape_cast %181 : vector<1x1x80xf32> to vector<1x80xf32>
    %183 = arith.truncf %182 : vector<1x80xf32> to vector<1x80xbf16>
    %c0_168 = arith.constant 0 : index
    %c0_169 = arith.constant 0 : index
    %c0_170 = arith.constant 0 : index
    %184 = vector.load %arg2[%c0_168, %c0_169, %c0_170] : memref<5x80x64xbf16, #tpu.memory_space<vmem>>, vector<1x80x64xbf16>
    %185 = vector.shape_cast %184 : vector<1x80x64xbf16> to vector<80x64xbf16>
    %cst_171 = arith.constant dense<0.000000e+00> : vector<1x64xf32>
    %186 = tpu.matmul %183, %185, %cst_171 {dimension_numbers = #tpu.dot_dimension_numbers<[1], [0], [0], [1], [0, 0, 1, 1], [], []>} : vector<1x80xbf16>, vector<80x64xbf16>, vector<1x64xf32> -> vector<1x64xf32>
    %187 = arith.addf %8, %186 : vector<1x64xf32>
    %c0_172 = arith.constant 0 : index
    %c9_173 = arith.constant 9 : index
    %c0_174 = arith.constant 0 : index
    %188 = vector.load %arg1[%c0_172, %c9_173, %c0_174] : memref<1x20x80xf32, #tpu.memory_space<vmem>>, vector<1x1x80xf32>
    %189 = vector.shape_cast %188 : vector<1x1x80xf32> to vector<1x80xf32>
    %190 = arith.truncf %189 : vector<1x80xf32> to vector<1x80xbf16>
    %c1_175 = arith.constant 1 : index
    %c0_176 = arith.constant 0 : index
    %c0_177 = arith.constant 0 : index
    %191 = vector.load %arg2[%c1_175, %c0_176, %c0_177] : memref<5x80x64xbf16, #tpu.memory_space<vmem>>, vector<1x80x64xbf16>
    %192 = vector.shape_cast %191 : vector<1x80x64xbf16> to vector<80x64xbf16>
    %cst_178 = arith.constant dense<0.000000e+00> : vector<1x64xf32>
    %193 = tpu.matmul %190, %192, %cst_178 {dimension_numbers = #tpu.dot_dimension_numbers<[1], [0], [0], [1], [0, 0, 1, 1], [], []>} : vector<1x80xbf16>, vector<80x64xbf16>, vector<1x64xf32> -> vector<1x64xf32>
    %194 = arith.addf %187, %193 : vector<1x64xf32>
    %c0_179 = arith.constant 0 : index
    %c10_180 = arith.constant 10 : index
    %c0_181 = arith.constant 0 : index
    %195 = vector.load %arg1[%c0_179, %c10_180, %c0_181] : memref<1x20x80xf32, #tpu.memory_space<vmem>>, vector<1x1x80xf32>
    %196 = vector.shape_cast %195 : vector<1x1x80xf32> to vector<1x80xf32>
    %197 = arith.truncf %196 : vector<1x80xf32> to vector<1x80xbf16>
    %c2_182 = arith.constant 2 : index
    %c0_183 = arith.constant 0 : index
    %c0_184 = arith.constant 0 : index
    %198 = vector.load %arg2[%c2_182, %c0_183, %c0_184] : memref<5x80x64xbf16, #tpu.memory_space<vmem>>, vector<1x80x64xbf16>
    %199 = vector.shape_cast %198 : vector<1x80x64xbf16> to vector<80x64xbf16>
    %cst_185 = arith.constant dense<0.000000e+00> : vector<1x64xf32>
    %200 = tpu.matmul %197, %199, %cst_185 {dimension_numbers = #tpu.dot_dimension_numbers<[1], [0], [0], [1], [0, 0, 1, 1], [], []>} : vector<1x80xbf16>, vector<80x64xbf16>, vector<1x64xf32> -> vector<1x64xf32>
    %201 = arith.addf %194, %200 : vector<1x64xf32>
    %c0_186 = arith.constant 0 : index
    %c11 = arith.constant 11 : index
    %c0_187 = arith.constant 0 : index
    %202 = vector.load %arg1[%c0_186, %c11, %c0_187] : memref<1x20x80xf32, #tpu.memory_space<vmem>>, vector<1x1x80xf32>
    %203 = vector.shape_cast %202 : vector<1x1x80xf32> to vector<1x80xf32>
    %204 = arith.truncf %203 : vector<1x80xf32> to vector<1x80xbf16>
    %c3_188 = arith.constant 3 : index
    %c0_189 = arith.constant 0 : index
    %c0_190 = arith.constant 0 : index
    %205 = vector.load %arg2[%c3_188, %c0_189, %c0_190] : memref<5x80x64xbf16, #tpu.memory_space<vmem>>, vector<1x80x64xbf16>
    %206 = vector.shape_cast %205 : vector<1x80x64xbf16> to vector<80x64xbf16>
    %cst_191 = arith.constant dense<0.000000e+00> : vector<1x64xf32>
    %207 = tpu.matmul %204, %206, %cst_191 {dimension_numbers = #tpu.dot_dimension_numbers<[1], [0], [0], [1], [0, 0, 1, 1], [], []>} : vector<1x80xbf16>, vector<80x64xbf16>, vector<1x64xf32> -> vector<1x64xf32>
    %208 = arith.addf %201, %207 : vector<1x64xf32>
    %c0_192 = arith.constant 0 : index
    %c12 = arith.constant 12 : index
    %c0_193 = arith.constant 0 : index
    %209 = vector.load %arg1[%c0_192, %c12, %c0_193] : memref<1x20x80xf32, #tpu.memory_space<vmem>>, vector<1x1x80xf32>
    %210 = vector.shape_cast %209 : vector<1x1x80xf32> to vector<1x80xf32>
    %211 = arith.truncf %210 : vector<1x80xf32> to vector<1x80xbf16>
    %c4_194 = arith.constant 4 : index
    %c0_195 = arith.constant 0 : index
    %c0_196 = arith.constant 0 : index
    %212 = vector.load %arg2[%c4_194, %c0_195, %c0_196] : memref<5x80x64xbf16, #tpu.memory_space<vmem>>, vector<1x80x64xbf16>
    %213 = vector.shape_cast %212 : vector<1x80x64xbf16> to vector<80x64xbf16>
    %cst_197 = arith.constant dense<0.000000e+00> : vector<1x64xf32>
    %214 = tpu.matmul %211, %213, %cst_197 {dimension_numbers = #tpu.dot_dimension_numbers<[1], [0], [0], [1], [0, 0, 1, 1], [], []>} : vector<1x80xbf16>, vector<80x64xbf16>, vector<1x64xf32> -> vector<1x64xf32>
    %215 = arith.addf %208, %214 : vector<1x64xf32>
    %cst_198 = arith.constant 0.000000e+00 : f32
    %216 = vector.broadcast %cst_198 : f32 to vector<1x64xf32>
    %217 = arith.cmpf oge, %215, %216 : vector<1x64xf32>
    %cst_199 = arith.constant 2.000000e-01 : f32
    %218 = vector.broadcast %cst_199 : f32 to vector<1x64xf32>
    %219 = arith.mulf %218, %215 : vector<1x64xf32>
    %220 = arith.select %217, %215, %219 : vector<1x64xi1>, vector<1x64xf32>
    %c0_200 = arith.constant 0 : index
    %c6_201 = arith.constant 6 : index
    %c16_202 = arith.constant 16 : index
    %221 = vector.load %arg15[%c0_200, %c6_201, %c16_202] : memref<1x12x96xf32, #tpu.memory_space<vmem>>, vector<1x1x64xf32>
    %222 = vector.shape_cast %221 : vector<1x1x64xf32> to vector<1x64xf32>
    %223 = vector.shape_cast %220 : vector<1x64xf32> to vector<1x1x64xf32>
    tpu.vector_store %arg15[%c0_200, %c6_201, %c16_202], %223 {strides = array<i32>} : memref<1x12x96xf32, #tpu.memory_space<vmem>>, vector<1x1x64xf32>,
    %c0_203 = arith.constant 0 : index
    %c10_204 = arith.constant 10 : index
    %c0_205 = arith.constant 0 : index
    %224 = vector.load %arg1[%c0_203, %c10_204, %c0_205] : memref<1x20x80xf32, #tpu.memory_space<vmem>>, vector<1x1x80xf32>
    %225 = vector.shape_cast %224 : vector<1x1x80xf32> to vector<1x80xf32>
    %226 = arith.truncf %225 : vector<1x80xf32> to vector<1x80xbf16>
    %c0_206 = arith.constant 0 : index
    %c0_207 = arith.constant 0 : index
    %c0_208 = arith.constant 0 : index
    %227 = vector.load %arg2[%c0_206, %c0_207, %c0_208] : memref<5x80x64xbf16, #tpu.memory_space<vmem>>, vector<1x80x64xbf16>
    %228 = vector.shape_cast %227 : vector<1x80x64xbf16> to vector<80x64xbf16>
    %cst_209 = arith.constant dense<0.000000e+00> : vector<1x64xf32>
    %229 = tpu.matmul %226, %228, %cst_209 {dimension_numbers = #tpu.dot_dimension_numbers<[1], [0], [0], [1], [0, 0, 1, 1], [], []>} : vector<1x80xbf16>, vector<80x64xbf16>, vector<1x64xf32> -> vector<1x64xf32>
    %230 = arith.addf %8, %229 : vector<1x64xf32>
    %c0_210 = arith.constant 0 : index
    %c11_211 = arith.constant 11 : index
    %c0_212 = arith.constant 0 : index
    %231 = vector.load %arg1[%c0_210, %c11_211, %c0_212] : memref<1x20x80xf32, #tpu.memory_space<vmem>>, vector<1x1x80xf32>
    %232 = vector.shape_cast %231 : vector<1x1x80xf32> to vector<1x80xf32>
    %233 = arith.truncf %232 : vector<1x80xf32> to vector<1x80xbf16>
    %c1_213 = arith.constant 1 : index
    %c0_214 = arith.constant 0 : index
    %c0_215 = arith.constant 0 : index
    %234 = vector.load %arg2[%c1_213, %c0_214, %c0_215] : memref<5x80x64xbf16, #tpu.memory_space<vmem>>, vector<1x80x64xbf16>
    %235 = vector.shape_cast %234 : vector<1x80x64xbf16> to vector<80x64xbf16>
    %cst_216 = arith.constant dense<0.000000e+00> : vector<1x64xf32>
    %236 = tpu.matmul %233, %235, %cst_216 {dimension_numbers = #tpu.dot_dimension_numbers<[1], [0], [0], [1], [0, 0, 1, 1], [], []>} : vector<1x80xbf16>, vector<80x64xbf16>, vector<1x64xf32> -> vector<1x64xf32>
    %237 = arith.addf %230, %236 : vector<1x64xf32>
    %c0_217 = arith.constant 0 : index
    %c12_218 = arith.constant 12 : index
    %c0_219 = arith.constant 0 : index
    %238 = vector.load %arg1[%c0_217, %c12_218, %c0_219] : memref<1x20x80xf32, #tpu.memory_space<vmem>>, vector<1x1x80xf32>
    %239 = vector.shape_cast %238 : vector<1x1x80xf32> to vector<1x80xf32>
    %240 = arith.truncf %239 : vector<1x80xf32> to vector<1x80xbf16>
    %c2_220 = arith.constant 2 : index
    %c0_221 = arith.constant 0 : index
    %c0_222 = arith.constant 0 : index
    %241 = vector.load %arg2[%c2_220, %c0_221, %c0_222] : memref<5x80x64xbf16, #tpu.memory_space<vmem>>, vector<1x80x64xbf16>
    %242 = vector.shape_cast %241 : vector<1x80x64xbf16> to vector<80x64xbf16>
    %cst_223 = arith.constant dense<0.000000e+00> : vector<1x64xf32>
    %243 = tpu.matmul %240, %242, %cst_223 {dimension_numbers = #tpu.dot_dimension_numbers<[1], [0], [0], [1], [0, 0, 1, 1], [], []>} : vector<1x80xbf16>, vector<80x64xbf16>, vector<1x64xf32> -> vector<1x64xf32>
    %244 = arith.addf %237, %243 : vector<1x64xf32>
    %c0_224 = arith.constant 0 : index
    %c13 = arith.constant 13 : index
    %c0_225 = arith.constant 0 : index
    %245 = vector.load %arg1[%c0_224, %c13, %c0_225] : memref<1x20x80xf32, #tpu.memory_space<vmem>>, vector<1x1x80xf32>
    %246 = vector.shape_cast %245 : vector<1x1x80xf32> to vector<1x80xf32>
    %247 = arith.truncf %246 : vector<1x80xf32> to vector<1x80xbf16>
    %c3_226 = arith.constant 3 : index
    %c0_227 = arith.constant 0 : index
    %c0_228 = arith.constant 0 : index
    %248 = vector.load %arg2[%c3_226, %c0_227, %c0_228] : memref<5x80x64xbf16, #tpu.memory_space<vmem>>, vector<1x80x64xbf16>
    %249 = vector.shape_cast %248 : vector<1x80x64xbf16> to vector<80x64xbf16>
    %cst_229 = arith.constant dense<0.000000e+00> : vector<1x64xf32>
    %250 = tpu.matmul %247, %249, %cst_229 {dimension_numbers = #tpu.dot_dimension_numbers<[1], [0], [0], [1], [0, 0, 1, 1], [], []>} : vector<1x80xbf16>, vector<80x64xbf16>, vector<1x64xf32> -> vector<1x64xf32>
    %251 = arith.addf %244, %250 : vector<1x64xf32>
    %c0_230 = arith.constant 0 : index
    %c14 = arith.constant 14 : index
    %c0_231 = arith.constant 0 : index
    %252 = vector.load %arg1[%c0_230, %c14, %c0_231] : memref<1x20x80xf32, #tpu.memory_space<vmem>>, vector<1x1x80xf32>
    %253 = vector.shape_cast %252 : vector<1x1x80xf32> to vector<1x80xf32>
    %254 = arith.truncf %253 : vector<1x80xf32> to vector<1x80xbf16>
    %c4_232 = arith.constant 4 : index
    %c0_233 = arith.constant 0 : index
    %c0_234 = arith.constant 0 : index
    %255 = vector.load %arg2[%c4_232, %c0_233, %c0_234] : memref<5x80x64xbf16, #tpu.memory_space<vmem>>, vector<1x80x64xbf16>
    %256 = vector.shape_cast %255 : vector<1x80x64xbf16> to vector<80x64xbf16>
    %cst_235 = arith.constant dense<0.000000e+00> : vector<1x64xf32>
    %257 = tpu.matmul %254, %256, %cst_235 {dimension_numbers = #tpu.dot_dimension_numbers<[1], [0], [0], [1], [0, 0, 1, 1], [], []>} : vector<1x80xbf16>, vector<80x64xbf16>, vector<1x64xf32> -> vector<1x64xf32>
    %258 = arith.addf %251, %257 : vector<1x64xf32>
    %cst_236 = arith.constant 0.000000e+00 : f32
    %259 = vector.broadcast %cst_236 : f32 to vector<1x64xf32>
    %260 = arith.cmpf oge, %258, %259 : vector<1x64xf32>
    %cst_237 = arith.constant 2.000000e-01 : f32
    %261 = vector.broadcast %cst_237 : f32 to vector<1x64xf32>
    %262 = arith.mulf %261, %258 : vector<1x64xf32>
    %263 = arith.select %260, %258, %262 : vector<1x64xi1>, vector<1x64xf32>
    %c0_238 = arith.constant 0 : index
    %c7_239 = arith.constant 7 : index
    %c16_240 = arith.constant 16 : index
    %264 = vector.load %arg15[%c0_238, %c7_239, %c16_240] : memref<1x12x96xf32, #tpu.memory_space<vmem>>, vector<1x1x64xf32>
    %265 = vector.shape_cast %264 : vector<1x1x64xf32> to vector<1x64xf32>
    %266 = vector.shape_cast %263 : vector<1x64xf32> to vector<1x1x64xf32>
    tpu.vector_store %arg15[%c0_238, %c7_239, %c16_240], %266 {strides = array<i32>} : memref<1x12x96xf32, #tpu.memory_space<vmem>>, vector<1x1x64xf32>,
    %c0_241 = arith.constant 0 : index
    %c12_242 = arith.constant 12 : index
    %c0_243 = arith.constant 0 : index
    %267 = vector.load %arg1[%c0_241, %c12_242, %c0_243] : memref<1x20x80xf32, #tpu.memory_space<vmem>>, vector<1x1x80xf32>
    %268 = vector.shape_cast %267 : vector<1x1x80xf32> to vector<1x80xf32>
    %269 = arith.truncf %268 : vector<1x80xf32> to vector<1x80xbf16>
    %c0_244 = arith.constant 0 : index
    %c0_245 = arith.constant 0 : index
    %c0_246 = arith.constant 0 : index
    %270 = vector.load %arg2[%c0_244, %c0_245, %c0_246] : memref<5x80x64xbf16, #tpu.memory_space<vmem>>, vector<1x80x64xbf16>
    %271 = vector.shape_cast %270 : vector<1x80x64xbf16> to vector<80x64xbf16>
    %cst_247 = arith.constant dense<0.000000e+00> : vector<1x64xf32>
    %272 = tpu.matmul %269, %271, %cst_247 {dimension_numbers = #tpu.dot_dimension_numbers<[1], [0], [0], [1], [0, 0, 1, 1], [], []>} : vector<1x80xbf16>, vector<80x64xbf16>, vector<1x64xf32> -> vector<1x64xf32>
    %273 = arith.addf %8, %272 : vector<1x64xf32>
    %c0_248 = arith.constant 0 : index
    %c13_249 = arith.constant 13 : index
    %c0_250 = arith.constant 0 : index
    %274 = vector.load %arg1[%c0_248, %c13_249, %c0_250] : memref<1x20x80xf32, #tpu.memory_space<vmem>>, vector<1x1x80xf32>
    %275 = vector.shape_cast %274 : vector<1x1x80xf32> to vector<1x80xf32>
    %276 = arith.truncf %275 : vector<1x80xf32> to vector<1x80xbf16>
    %c1_251 = arith.constant 1 : index
    %c0_252 = arith.constant 0 : index
    %c0_253 = arith.constant 0 : index
    %277 = vector.load %arg2[%c1_251, %c0_252, %c0_253] : memref<5x80x64xbf16, #tpu.memory_space<vmem>>, vector<1x80x64xbf16>
    %278 = vector.shape_cast %277 : vector<1x80x64xbf16> to vector<80x64xbf16>
    %cst_254 = arith.constant dense<0.000000e+00> : vector<1x64xf32>
    %279 = tpu.matmul %276, %278, %cst_254 {dimension_numbers = #tpu.dot_dimension_numbers<[1], [0], [0], [1], [0, 0, 1, 1], [], []>} : vector<1x80xbf16>, vector<80x64xbf16>, vector<1x64xf32> -> vector<1x64xf32>
    %280 = arith.addf %273, %279 : vector<1x64xf32>
    %c0_255 = arith.constant 0 : index
    %c14_256 = arith.constant 14 : index
    %c0_257 = arith.constant 0 : index
    %281 = vector.load %arg1[%c0_255, %c14_256, %c0_257] : memref<1x20x80xf32, #tpu.memory_space<vmem>>, vector<1x1x80xf32>
    %282 = vector.shape_cast %281 : vector<1x1x80xf32> to vector<1x80xf32>
    %283 = arith.truncf %282 : vector<1x80xf32> to vector<1x80xbf16>
    %c2_258 = arith.constant 2 : index
    %c0_259 = arith.constant 0 : index
    %c0_260 = arith.constant 0 : index
    %284 = vector.load %arg2[%c2_258, %c0_259, %c0_260] : memref<5x80x64xbf16, #tpu.memory_space<vmem>>, vector<1x80x64xbf16>
    %285 = vector.shape_cast %284 : vector<1x80x64xbf16> to vector<80x64xbf16>
    %cst_261 = arith.constant dense<0.000000e+00> : vector<1x64xf32>
    %286 = tpu.matmul %283, %285, %cst_261 {dimension_numbers = #tpu.dot_dimension_numbers<[1], [0], [0], [1], [0, 0, 1, 1], [], []>} : vector<1x80xbf16>, vector<80x64xbf16>, vector<1x64xf32> -> vector<1x64xf32>
    %287 = arith.addf %280, %286 : vector<1x64xf32>
    %c0_262 = arith.constant 0 : index
    %c15 = arith.constant 15 : index
    %c0_263 = arith.constant 0 : index
    %288 = vector.load %arg1[%c0_262, %c15, %c0_263] : memref<1x20x80xf32, #tpu.memory_space<vmem>>, vector<1x1x80xf32>
    %289 = vector.shape_cast %288 : vector<1x1x80xf32> to vector<1x80xf32>
    %290 = arith.truncf %289 : vector<1x80xf32> to vector<1x80xbf16>
    %c3_264 = arith.constant 3 : index
    %c0_265 = arith.constant 0 : index
    %c0_266 = arith.constant 0 : index
    %291 = vector.load %arg2[%c3_264, %c0_265, %c0_266] : memref<5x80x64xbf16, #tpu.memory_space<vmem>>, vector<1x80x64xbf16>
    %292 = vector.shape_cast %291 : vector<1x80x64xbf16> to vector<80x64xbf16>
    %cst_267 = arith.constant dense<0.000000e+00> : vector<1x64xf32>
    %293 = tpu.matmul %290, %292, %cst_267 {dimension_numbers = #tpu.dot_dimension_numbers<[1], [0], [0], [1], [0, 0, 1, 1], [], []>} : vector<1x80xbf16>, vector<80x64xbf16>, vector<1x64xf32> -> vector<1x64xf32>
    %294 = arith.addf %287, %293 : vector<1x64xf32>
    %c0_268 = arith.constant 0 : index
    %c16_269 = arith.constant 16 : index
    %c0_270 = arith.constant 0 : index
    %295 = vector.load %arg1[%c0_268, %c16_269, %c0_270] : memref<1x20x80xf32, #tpu.memory_space<vmem>>, vector<1x1x80xf32>
    %296 = vector.shape_cast %295 : vector<1x1x80xf32> to vector<1x80xf32>
    %297 = arith.truncf %296 : vector<1x80xf32> to vector<1x80xbf16>
    %c4_271 = arith.constant 4 : index
    %c0_272 = arith.constant 0 : index
    %c0_273 = arith.constant 0 : index
    %298 = vector.load %arg2[%c4_271, %c0_272, %c0_273] : memref<5x80x64xbf16, #tpu.memory_space<vmem>>, vector<1x80x64xbf16>
    %299 = vector.shape_cast %298 : vector<1x80x64xbf16> to vector<80x64xbf16>
    %cst_274 = arith.constant dense<0.000000e+00> : vector<1x64xf32>
    %300 = tpu.matmul %297, %299, %cst_274 {dimension_numbers = #tpu.dot_dimension_numbers<[1], [0], [0], [1], [0, 0, 1, 1], [], []>} : vector<1x80xbf16>, vector<80x64xbf16>, vector<1x64xf32> -> vector<1x64xf32>
    %301 = arith.addf %294, %300 : vector<1x64xf32>
    %cst_275 = arith.constant 0.000000e+00 : f32
    %302 = vector.broadcast %cst_275 : f32 to vector<1x64xf32>
    %303 = arith.cmpf oge, %301, %302 : vector<1x64xf32>
    %cst_276 = arith.constant 2.000000e-01 : f32
    %304 = vector.broadcast %cst_276 : f32 to vector<1x64xf32>
    %305 = arith.mulf %304, %301 : vector<1x64xf32>
    %306 = arith.select %303, %301, %305 : vector<1x64xi1>, vector<1x64xf32>
    %c0_277 = arith.constant 0 : index
    %c8_278 = arith.constant 8 : index
    %c16_279 = arith.constant 16 : index
    %307 = vector.load %arg15[%c0_277, %c8_278, %c16_279] : memref<1x12x96xf32, #tpu.memory_space<vmem>>, vector<1x1x64xf32>
    %308 = vector.shape_cast %307 : vector<1x1x64xf32> to vector<1x64xf32>
    %309 = vector.shape_cast %306 : vector<1x64xf32> to vector<1x1x64xf32>
    tpu.vector_store %arg15[%c0_277, %c8_278, %c16_279], %309 {strides = array<i32>} : memref<1x12x96xf32, #tpu.memory_space<vmem>>, vector<1x1x64xf32>,
    %c0_280 = arith.constant 0 : index
    %c14_281 = arith.constant 14 : index
    %c0_282 = arith.constant 0 : index
    %310 = vector.load %arg1[%c0_280, %c14_281, %c0_282] : memref<1x20x80xf32, #tpu.memory_space<vmem>>, vector<1x1x80xf32>
    %311 = vector.shape_cast %310 : vector<1x1x80xf32> to vector<1x80xf32>
    %312 = arith.truncf %311 : vector<1x80xf32> to vector<1x80xbf16>
    %c0_283 = arith.constant 0 : index
    %c0_284 = arith.constant 0 : index
    %c0_285 = arith.constant 0 : index
    %313 = vector.load %arg2[%c0_283, %c0_284, %c0_285] : memref<5x80x64xbf16, #tpu.memory_space<vmem>>, vector<1x80x64xbf16>
    %314 = vector.shape_cast %313 : vector<1x80x64xbf16> to vector<80x64xbf16>
    %cst_286 = arith.constant dense<0.000000e+00> : vector<1x64xf32>
    %315 = tpu.matmul %312, %314, %cst_286 {dimension_numbers = #tpu.dot_dimension_numbers<[1], [0], [0], [1], [0, 0, 1, 1], [], []>} : vector<1x80xbf16>, vector<80x64xbf16>, vector<1x64xf32> -> vector<1x64xf32>
    %316 = arith.addf %8, %315 : vector<1x64xf32>
    %c0_287 = arith.constant 0 : index
    %c15_288 = arith.constant 15 : index
    %c0_289 = arith.constant 0 : index
    %317 = vector.load %arg1[%c0_287, %c15_288, %c0_289] : memref<1x20x80xf32, #tpu.memory_space<vmem>>, vector<1x1x80xf32>
    %318 = vector.shape_cast %317 : vector<1x1x80xf32> to vector<1x80xf32>
    %319 = arith.truncf %318 : vector<1x80xf32> to vector<1x80xbf16>
    %c1_290 = arith.constant 1 : index
    %c0_291 = arith.constant 0 : index
    %c0_292 = arith.constant 0 : index
    %320 = vector.load %arg2[%c1_290, %c0_291, %c0_292] : memref<5x80x64xbf16, #tpu.memory_space<vmem>>, vector<1x80x64xbf16>
    %321 = vector.shape_cast %320 : vector<1x80x64xbf16> to vector<80x64xbf16>
    %cst_293 = arith.constant dense<0.000000e+00> : vector<1x64xf32>
    %322 = tpu.matmul %319, %321, %cst_293 {dimension_numbers = #tpu.dot_dimension_numbers<[1], [0], [0], [1], [0, 0, 1, 1], [], []>} : vector<1x80xbf16>, vector<80x64xbf16>, vector<1x64xf32> -> vector<1x64xf32>
    %323 = arith.addf %316, %322 : vector<1x64xf32>
    %c0_294 = arith.constant 0 : index
    %c16_295 = arith.constant 16 : index
    %c0_296 = arith.constant 0 : index
    %324 = vector.load %arg1[%c0_294, %c16_295, %c0_296] : memref<1x20x80xf32, #tpu.memory_space<vmem>>, vector<1x1x80xf32>
    %325 = vector.shape_cast %324 : vector<1x1x80xf32> to vector<1x80xf32>
    %326 = arith.truncf %325 : vector<1x80xf32> to vector<1x80xbf16>
    %c2_297 = arith.constant 2 : index
    %c0_298 = arith.constant 0 : index
    %c0_299 = arith.constant 0 : index
    %327 = vector.load %arg2[%c2_297, %c0_298, %c0_299] : memref<5x80x64xbf16, #tpu.memory_space<vmem>>, vector<1x80x64xbf16>
    %328 = vector.shape_cast %327 : vector<1x80x64xbf16> to vector<80x64xbf16>
    %cst_300 = arith.constant dense<0.000000e+00> : vector<1x64xf32>
    %329 = tpu.matmul %326, %328, %cst_300 {dimension_numbers = #tpu.dot_dimension_numbers<[1], [0], [0], [1], [0, 0, 1, 1], [], []>} : vector<1x80xbf16>, vector<80x64xbf16>, vector<1x64xf32> -> vector<1x64xf32>
    %330 = arith.addf %323, %329 : vector<1x64xf32>
    %c0_301 = arith.constant 0 : index
    %c17 = arith.constant 17 : index
    %c0_302 = arith.constant 0 : index
    %331 = vector.load %arg1[%c0_301, %c17, %c0_302] : memref<1x20x80xf32, #tpu.memory_space<vmem>>, vector<1x1x80xf32>
    %332 = vector.shape_cast %331 : vector<1x1x80xf32> to vector<1x80xf32>
    %333 = arith.truncf %332 : vector<1x80xf32> to vector<1x80xbf16>
    %c3_303 = arith.constant 3 : index
    %c0_304 = arith.constant 0 : index
    %c0_305 = arith.constant 0 : index
    %334 = vector.load %arg2[%c3_303, %c0_304, %c0_305] : memref<5x80x64xbf16, #tpu.memory_space<vmem>>, vector<1x80x64xbf16>
    %335 = vector.shape_cast %334 : vector<1x80x64xbf16> to vector<80x64xbf16>
    %cst_306 = arith.constant dense<0.000000e+00> : vector<1x64xf32>
    %336 = tpu.matmul %333, %335, %cst_306 {dimension_numbers = #tpu.dot_dimension_numbers<[1], [0], [0], [1], [0, 0, 1, 1], [], []>} : vector<1x80xbf16>, vector<80x64xbf16>, vector<1x64xf32> -> vector<1x64xf32>
    %337 = arith.addf %330, %336 : vector<1x64xf32>
    %c0_307 = arith.constant 0 : index
    %c18 = arith.constant 18 : index
    %c0_308 = arith.constant 0 : index
    %338 = vector.load %arg1[%c0_307, %c18, %c0_308] : memref<1x20x80xf32, #tpu.memory_space<vmem>>, vector<1x1x80xf32>
    %339 = vector.shape_cast %338 : vector<1x1x80xf32> to vector<1x80xf32>
    %340 = arith.truncf %339 : vector<1x80xf32> to vector<1x80xbf16>
    %c4_309 = arith.constant 4 : index
    %c0_310 = arith.constant 0 : index
    %c0_311 = arith.constant 0 : index
    %341 = vector.load %arg2[%c4_309, %c0_310, %c0_311] : memref<5x80x64xbf16, #tpu.memory_space<vmem>>, vector<1x80x64xbf16>
    %342 = vector.shape_cast %341 : vector<1x80x64xbf16> to vector<80x64xbf16>
    %cst_312 = arith.constant dense<0.000000e+00> : vector<1x64xf32>
    %343 = tpu.matmul %340, %342, %cst_312 {dimension_numbers = #tpu.dot_dimension_numbers<[1], [0], [0], [1], [0, 0, 1, 1], [], []>} : vector<1x80xbf16>, vector<80x64xbf16>, vector<1x64xf32> -> vector<1x64xf32>
    %344 = arith.addf %337, %343 : vector<1x64xf32>
    %cst_313 = arith.constant 0.000000e+00 : f32
    %345 = vector.broadcast %cst_313 : f32 to vector<1x64xf32>
    %346 = arith.cmpf oge, %344, %345 : vector<1x64xf32>
    %cst_314 = arith.constant 2.000000e-01 : f32
    %347 = vector.broadcast %cst_314 : f32 to vector<1x64xf32>
    %348 = arith.mulf %347, %344 : vector<1x64xf32>
    %349 = arith.select %346, %344, %348 : vector<1x64xi1>, vector<1x64xf32>
    %c0_315 = arith.constant 0 : index
    %c9_316 = arith.constant 9 : index
    %c16_317 = arith.constant 16 : index
    %350 = vector.load %arg15[%c0_315, %c9_316, %c16_317] : memref<1x12x96xf32, #tpu.memory_space<vmem>>, vector<1x1x64xf32>
    %351 = vector.shape_cast %350 : vector<1x1x64xf32> to vector<1x64xf32>
    %352 = vector.shape_cast %349 : vector<1x64xf32> to vector<1x1x64xf32>
    tpu.vector_store %arg15[%c0_315, %c9_316, %c16_317], %352 {strides = array<i32>} : memref<1x12x96xf32, #tpu.memory_space<vmem>>, vector<1x1x64xf32>,
    %c0_318 = arith.constant 0 : index
    %c0_319 = arith.constant 0 : index
    %353 = vector.load %arg8[%c0_318, %c0_319] : memref<1x64xf32, #tpu.memory_space<vmem>>, vector<1x64xf32>
    %c0_320 = arith.constant 0 : index
    %c0_321 = arith.constant 0 : index
    %c0_322 = arith.constant 0 : index
    %354 = vector.load %arg15[%c0_320, %c0_321, %c0_322] : memref<1x12x96xf32, #tpu.memory_space<vmem>>, vector<1x1x96xf32>
    %355 = vector.shape_cast %354 : vector<1x1x96xf32> to vector<1x96xf32>
    %356 = arith.truncf %355 : vector<1x96xf32> to vector<1x96xbf16>
    %c0_323 = arith.constant 0 : index
    %c0_324 = arith.constant 0 : index
    %c0_325 = arith.constant 0 : index
    %357 = vector.load %arg3[%c0_323, %c0_324, %c0_325] : memref<5x96x64xbf16, #tpu.memory_space<vmem>>, vector<1x96x64xbf16>
    %358 = vector.shape_cast %357 : vector<1x96x64xbf16> to vector<96x64xbf16>
    %cst_326 = arith.constant dense<0.000000e+00> : vector<1x64xf32>
    %359 = tpu.matmul %356, %358, %cst_326 {dimension_numbers = #tpu.dot_dimension_numbers<[1], [0], [0], [1], [0, 0, 1, 1], [], []>} : vector<1x96xbf16>, vector<96x64xbf16>, vector<1x64xf32> -> vector<1x64xf32>
    %360 = arith.addf %353, %359 : vector<1x64xf32>
    %c0_327 = arith.constant 0 : index
    %c1_328 = arith.constant 1 : index
    %c0_329 = arith.constant 0 : index
    %361 = vector.load %arg15[%c0_327, %c1_328, %c0_329] : memref<1x12x96xf32, #tpu.memory_space<vmem>>, vector<1x1x96xf32>
    %362 = vector.shape_cast %361 : vector<1x1x96xf32> to vector<1x96xf32>
    %363 = arith.truncf %362 : vector<1x96xf32> to vector<1x96xbf16>
    %c1_330 = arith.constant 1 : index
    %c0_331 = arith.constant 0 : index
    %c0_332 = arith.constant 0 : index
    %364 = vector.load %arg3[%c1_330, %c0_331, %c0_332] : memref<5x96x64xbf16, #tpu.memory_space<vmem>>, vector<1x96x64xbf16>
    %365 = vector.shape_cast %364 : vector<1x96x64xbf16> to vector<96x64xbf16>
    %cst_333 = arith.constant dense<0.000000e+00> : vector<1x64xf32>
    %366 = tpu.matmul %363, %365, %cst_333 {dimension_numbers = #tpu.dot_dimension_numbers<[1], [0], [0], [1], [0, 0, 1, 1], [], []>} : vector<1x96xbf16>, vector<96x64xbf16>, vector<1x64xf32> -> vector<1x64xf32>
    %367 = arith.addf %360, %366 : vector<1x64xf32>
    %c0_334 = arith.constant 0 : index
    %c2_335 = arith.constant 2 : index
    %c0_336 = arith.constant 0 : index
    %368 = vector.load %arg15[%c0_334, %c2_335, %c0_336] : memref<1x12x96xf32, #tpu.memory_space<vmem>>, vector<1x1x96xf32>
    %369 = vector.shape_cast %368 : vector<1x1x96xf32> to vector<1x96xf32>
    %370 = arith.truncf %369 : vector<1x96xf32> to vector<1x96xbf16>
    %c2_337 = arith.constant 2 : index
    %c0_338 = arith.constant 0 : index
    %c0_339 = arith.constant 0 : index
    %371 = vector.load %arg3[%c2_337, %c0_338, %c0_339] : memref<5x96x64xbf16, #tpu.memory_space<vmem>>, vector<1x96x64xbf16>
    %372 = vector.shape_cast %371 : vector<1x96x64xbf16> to vector<96x64xbf16>
    %cst_340 = arith.constant dense<0.000000e+00> : vector<1x64xf32>
    %373 = tpu.matmul %370, %372, %cst_340 {dimension_numbers = #tpu.dot_dimension_numbers<[1], [0], [0], [1], [0, 0, 1, 1], [], []>} : vector<1x96xbf16>, vector<96x64xbf16>, vector<1x64xf32> -> vector<1x64xf32>
    %374 = arith.addf %367, %373 : vector<1x64xf32>
    %c0_341 = arith.constant 0 : index
    %c3_342 = arith.constant 3 : index
    %c0_343 = arith.constant 0 : index
    %375 = vector.load %arg15[%c0_341, %c3_342, %c0_343] : memref<1x12x96xf32, #tpu.memory_space<vmem>>, vector<1x1x96xf32>
    %376 = vector.shape_cast %375 : vector<1x1x96xf32> to vector<1x96xf32>
    %377 = arith.truncf %376 : vector<1x96xf32> to vector<1x96xbf16>
    %c3_344 = arith.constant 3 : index
    %c0_345 = arith.constant 0 : index
    %c0_346 = arith.constant 0 : index
    %378 = vector.load %arg3[%c3_344, %c0_345, %c0_346] : memref<5x96x64xbf16, #tpu.memory_space<vmem>>, vector<1x96x64xbf16>
    %379 = vector.shape_cast %378 : vector<1x96x64xbf16> to vector<96x64xbf16>
    %cst_347 = arith.constant dense<0.000000e+00> : vector<1x64xf32>
    %380 = tpu.matmul %377, %379, %cst_347 {dimension_numbers = #tpu.dot_dimension_numbers<[1], [0], [0], [1], [0, 0, 1, 1], [], []>} : vector<1x96xbf16>, vector<96x64xbf16>, vector<1x64xf32> -> vector<1x64xf32>
    %381 = arith.addf %374, %380 : vector<1x64xf32>
    %c0_348 = arith.constant 0 : index
    %c4_349 = arith.constant 4 : index
    %c0_350 = arith.constant 0 : index
    %382 = vector.load %arg15[%c0_348, %c4_349, %c0_350] : memref<1x12x96xf32, #tpu.memory_space<vmem>>, vector<1x1x96xf32>
    %383 = vector.shape_cast %382 : vector<1x1x96xf32> to vector<1x96xf32>
    %384 = arith.truncf %383 : vector<1x96xf32> to vector<1x96xbf16>
    %c4_351 = arith.constant 4 : index
    %c0_352 = arith.constant 0 : index
    %c0_353 = arith.constant 0 : index
    %385 = vector.load %arg3[%c4_351, %c0_352, %c0_353] : memref<5x96x64xbf16, #tpu.memory_space<vmem>>, vector<1x96x64xbf16>
    %386 = vector.shape_cast %385 : vector<1x96x64xbf16> to vector<96x64xbf16>
    %cst_354 = arith.constant dense<0.000000e+00> : vector<1x64xf32>
    %387 = tpu.matmul %384, %386, %cst_354 {dimension_numbers = #tpu.dot_dimension_numbers<[1], [0], [0], [1], [0, 0, 1, 1], [], []>} : vector<1x96xbf16>, vector<96x64xbf16>, vector<1x64xf32> -> vector<1x64xf32>
    %388 = arith.addf %381, %387 : vector<1x64xf32>
    %cst_355 = arith.constant 0.000000e+00 : f32
    %389 = vector.broadcast %cst_355 : f32 to vector<1x64xf32>
    %390 = arith.cmpf oge, %388, %389 : vector<1x64xf32>
    %cst_356 = arith.constant 2.000000e-01 : f32
    %391 = vector.broadcast %cst_356 : f32 to vector<1x64xf32>
    %392 = arith.mulf %391, %388 : vector<1x64xf32>
    %393 = arith.select %390, %388, %392 : vector<1x64xi1>, vector<1x64xf32>
    %c0_357 = arith.constant 0 : index
    %c2_358 = arith.constant 2 : index
    %c32 = arith.constant 32 : index
    %394 = vector.load %arg16[%c0_357, %c2_358, %c32] : memref<1x8x128xf32, #tpu.memory_space<vmem>>, vector<1x1x64xf32>
    %395 = vector.shape_cast %394 : vector<1x1x64xf32> to vector<1x64xf32>
    %396 = vector.shape_cast %393 : vector<1x64xf32> to vector<1x1x64xf32>
    tpu.vector_store %arg16[%c0_357, %c2_358, %c32], %396 {strides = array<i32>} : memref<1x8x128xf32, #tpu.memory_space<vmem>>, vector<1x1x64xf32>,
    %c0_359 = arith.constant 0 : index
    %c2_360 = arith.constant 2 : index
    %c0_361 = arith.constant 0 : index
    %397 = vector.load %arg15[%c0_359, %c2_360, %c0_361] : memref<1x12x96xf32, #tpu.memory_space<vmem>>, vector<1x1x96xf32>
    %398 = vector.shape_cast %397 : vector<1x1x96xf32> to vector<1x96xf32>
    %399 = arith.truncf %398 : vector<1x96xf32> to vector<1x96xbf16>
    %c0_362 = arith.constant 0 : index
    %c0_363 = arith.constant 0 : index
    %c0_364 = arith.constant 0 : index
    %400 = vector.load %arg3[%c0_362, %c0_363, %c0_364] : memref<5x96x64xbf16, #tpu.memory_space<vmem>>, vector<1x96x64xbf16>
    %401 = vector.shape_cast %400 : vector<1x96x64xbf16> to vector<96x64xbf16>
    %cst_365 = arith.constant dense<0.000000e+00> : vector<1x64xf32>
    %402 = tpu.matmul %399, %401, %cst_365 {dimension_numbers = #tpu.dot_dimension_numbers<[1], [0], [0], [1], [0, 0, 1, 1], [], []>} : vector<1x96xbf16>, vector<96x64xbf16>, vector<1x64xf32> -> vector<1x64xf32>
    %403 = arith.addf %353, %402 : vector<1x64xf32>
    %c0_366 = arith.constant 0 : index
    %c3_367 = arith.constant 3 : index
    %c0_368 = arith.constant 0 : index
    %404 = vector.load %arg15[%c0_366, %c3_367, %c0_368] : memref<1x12x96xf32, #tpu.memory_space<vmem>>, vector<1x1x96xf32>
    %405 = vector.shape_cast %404 : vector<1x1x96xf32> to vector<1x96xf32>
    %406 = arith.truncf %405 : vector<1x96xf32> to vector<1x96xbf16>
    %c1_369 = arith.constant 1 : index
    %c0_370 = arith.constant 0 : index
    %c0_371 = arith.constant 0 : index
    %407 = vector.load %arg3[%c1_369, %c0_370, %c0_371] : memref<5x96x64xbf16, #tpu.memory_space<vmem>>, vector<1x96x64xbf16>
    %408 = vector.shape_cast %407 : vector<1x96x64xbf16> to vector<96x64xbf16>
    %cst_372 = arith.constant dense<0.000000e+00> : vector<1x64xf32>
    %409 = tpu.matmul %406, %408, %cst_372 {dimension_numbers = #tpu.dot_dimension_numbers<[1], [0], [0], [1], [0, 0, 1, 1], [], []>} : vector<1x96xbf16>, vector<96x64xbf16>, vector<1x64xf32> -> vector<1x64xf32>
    %410 = arith.addf %403, %409 : vector<1x64xf32>
    %c0_373 = arith.constant 0 : index
    %c4_374 = arith.constant 4 : index
    %c0_375 = arith.constant 0 : index
    %411 = vector.load %arg15[%c0_373, %c4_374, %c0_375] : memref<1x12x96xf32, #tpu.memory_space<vmem>>, vector<1x1x96xf32>
    %412 = vector.shape_cast %411 : vector<1x1x96xf32> to vector<1x96xf32>
    %413 = arith.truncf %412 : vector<1x96xf32> to vector<1x96xbf16>
    %c2_376 = arith.constant 2 : index
    %c0_377 = arith.constant 0 : index
    %c0_378 = arith.constant 0 : index
    %414 = vector.load %arg3[%c2_376, %c0_377, %c0_378] : memref<5x96x64xbf16, #tpu.memory_space<vmem>>, vector<1x96x64xbf16>
    %415 = vector.shape_cast %414 : vector<1x96x64xbf16> to vector<96x64xbf16>
    %cst_379 = arith.constant dense<0.000000e+00> : vector<1x64xf32>
    %416 = tpu.matmul %413, %415, %cst_379 {dimension_numbers = #tpu.dot_dimension_numbers<[1], [0], [0], [1], [0, 0, 1, 1], [], []>} : vector<1x96xbf16>, vector<96x64xbf16>, vector<1x64xf32> -> vector<1x64xf32>
    %417 = arith.addf %410, %416 : vector<1x64xf32>
    %c0_380 = arith.constant 0 : index
    %c5_381 = arith.constant 5 : index
    %c0_382 = arith.constant 0 : index
    %418 = vector.load %arg15[%c0_380, %c5_381, %c0_382] : memref<1x12x96xf32, #tpu.memory_space<vmem>>, vector<1x1x96xf32>
    %419 = vector.shape_cast %418 : vector<1x1x96xf32> to vector<1x96xf32>
    %420 = arith.truncf %419 : vector<1x96xf32> to vector<1x96xbf16>
    %c3_383 = arith.constant 3 : index
    %c0_384 = arith.constant 0 : index
    %c0_385 = arith.constant 0 : index
    %421 = vector.load %arg3[%c3_383, %c0_384, %c0_385] : memref<5x96x64xbf16, #tpu.memory_space<vmem>>, vector<1x96x64xbf16>
    %422 = vector.shape_cast %421 : vector<1x96x64xbf16> to vector<96x64xbf16>
    %cst_386 = arith.constant dense<0.000000e+00> : vector<1x64xf32>
    %423 = tpu.matmul %420, %422, %cst_386 {dimension_numbers = #tpu.dot_dimension_numbers<[1], [0], [0], [1], [0, 0, 1, 1], [], []>} : vector<1x96xbf16>, vector<96x64xbf16>, vector<1x64xf32> -> vector<1x64xf32>
    %424 = arith.addf %417, %423 : vector<1x64xf32>
    %c0_387 = arith.constant 0 : index
    %c6_388 = arith.constant 6 : index
    %c0_389 = arith.constant 0 : index
    %425 = vector.load %arg15[%c0_387, %c6_388, %c0_389] : memref<1x12x96xf32, #tpu.memory_space<vmem>>, vector<1x1x96xf32>
    %426 = vector.shape_cast %425 : vector<1x1x96xf32> to vector<1x96xf32>
    %427 = arith.truncf %426 : vector<1x96xf32> to vector<1x96xbf16>
    %c4_390 = arith.constant 4 : index
    %c0_391 = arith.constant 0 : index
    %c0_392 = arith.constant 0 : index
    %428 = vector.load %arg3[%c4_390, %c0_391, %c0_392] : memref<5x96x64xbf16, #tpu.memory_space<vmem>>, vector<1x96x64xbf16>
    %429 = vector.shape_cast %428 : vector<1x96x64xbf16> to vector<96x64xbf16>
    %cst_393 = arith.constant dense<0.000000e+00> : vector<1x64xf32>
    %430 = tpu.matmul %427, %429, %cst_393 {dimension_numbers = #tpu.dot_dimension_numbers<[1], [0], [0], [1], [0, 0, 1, 1], [], []>} : vector<1x96xbf16>, vector<96x64xbf16>, vector<1x64xf32> -> vector<1x64xf32>
    %431 = arith.addf %424, %430 : vector<1x64xf32>
    %cst_394 = arith.constant 0.000000e+00 : f32
    %432 = vector.broadcast %cst_394 : f32 to vector<1x64xf32>
    %433 = arith.cmpf oge, %431, %432 : vector<1x64xf32>
    %cst_395 = arith.constant 2.000000e-01 : f32
    %434 = vector.broadcast %cst_395 : f32 to vector<1x64xf32>
    %435 = arith.mulf %434, %431 : vector<1x64xf32>
    %436 = arith.select %433, %431, %435 : vector<1x64xi1>, vector<1x64xf32>
    %c0_396 = arith.constant 0 : index
    %c3_397 = arith.constant 3 : index
    %c32_398 = arith.constant 32 : index
    %437 = vector.load %arg16[%c0_396, %c3_397, %c32_398] : memref<1x8x128xf32, #tpu.memory_space<vmem>>, vector<1x1x64xf32>
    %438 = vector.shape_cast %437 : vector<1x1x64xf32> to vector<1x64xf32>
    %439 = vector.shape_cast %436 : vector<1x64xf32> to vector<1x1x64xf32>
    tpu.vector_store %arg16[%c0_396, %c3_397, %c32_398], %439 {strides = array<i32>} : memref<1x8x128xf32, #tpu.memory_space<vmem>>, vector<1x1x64xf32>,
    %c0_399 = arith.constant 0 : index
    %c4_400 = arith.constant 4 : index
    %c0_401 = arith.constant 0 : index
    %440 = vector.load %arg15[%c0_399, %c4_400, %c0_401] : memref<1x12x96xf32, #tpu.memory_space<vmem>>, vector<1x1x96xf32>
    %441 = vector.shape_cast %440 : vector<1x1x96xf32> to vector<1x96xf32>
    %442 = arith.truncf %441 : vector<1x96xf32> to vector<1x96xbf16>
    %c0_402 = arith.constant 0 : index
    %c0_403 = arith.constant 0 : index
    %c0_404 = arith.constant 0 : index
    %443 = vector.load %arg3[%c0_402, %c0_403, %c0_404] : memref<5x96x64xbf16, #tpu.memory_space<vmem>>, vector<1x96x64xbf16>
    %444 = vector.shape_cast %443 : vector<1x96x64xbf16> to vector<96x64xbf16>
    %cst_405 = arith.constant dense<0.000000e+00> : vector<1x64xf32>
    %445 = tpu.matmul %442, %444, %cst_405 {dimension_numbers = #tpu.dot_dimension_numbers<[1], [0], [0], [1], [0, 0, 1, 1], [], []>} : vector<1x96xbf16>, vector<96x64xbf16>, vector<1x64xf32> -> vector<1x64xf32>
    %446 = arith.addf %353, %445 : vector<1x64xf32>
    %c0_406 = arith.constant 0 : index
    %c5_407 = arith.constant 5 : index
    %c0_408 = arith.constant 0 : index
    %447 = vector.load %arg15[%c0_406, %c5_407, %c0_408] : memref<1x12x96xf32, #tpu.memory_space<vmem>>, vector<1x1x96xf32>
    %448 = vector.shape_cast %447 : vector<1x1x96xf32> to vector<1x96xf32>
    %449 = arith.truncf %448 : vector<1x96xf32> to vector<1x96xbf16>
    %c1_409 = arith.constant 1 : index
    %c0_410 = arith.constant 0 : index
    %c0_411 = arith.constant 0 : index
    %450 = vector.load %arg3[%c1_409, %c0_410, %c0_411] : memref<5x96x64xbf16, #tpu.memory_space<vmem>>, vector<1x96x64xbf16>
    %451 = vector.shape_cast %450 : vector<1x96x64xbf16> to vector<96x64xbf16>
    %cst_412 = arith.constant dense<0.000000e+00> : vector<1x64xf32>
    %452 = tpu.matmul %449, %451, %cst_412 {dimension_numbers = #tpu.dot_dimension_numbers<[1], [0], [0], [1], [0, 0, 1, 1], [], []>} : vector<1x96xbf16>, vector<96x64xbf16>, vector<1x64xf32> -> vector<1x64xf32>
    %453 = arith.addf %446, %452 : vector<1x64xf32>
    %c0_413 = arith.constant 0 : index
    %c6_414 = arith.constant 6 : index
    %c0_415 = arith.constant 0 : index
    %454 = vector.load %arg15[%c0_413, %c6_414, %c0_415] : memref<1x12x96xf32, #tpu.memory_space<vmem>>, vector<1x1x96xf32>
    %455 = vector.shape_cast %454 : vector<1x1x96xf32> to vector<1x96xf32>
    %456 = arith.truncf %455 : vector<1x96xf32> to vector<1x96xbf16>
    %c2_416 = arith.constant 2 : index
    %c0_417 = arith.constant 0 : index
    %c0_418 = arith.constant 0 : index
    %457 = vector.load %arg3[%c2_416, %c0_417, %c0_418] : memref<5x96x64xbf16, #tpu.memory_space<vmem>>, vector<1x96x64xbf16>
    %458 = vector.shape_cast %457 : vector<1x96x64xbf16> to vector<96x64xbf16>
    %cst_419 = arith.constant dense<0.000000e+00> : vector<1x64xf32>
    %459 = tpu.matmul %456, %458, %cst_419 {dimension_numbers = #tpu.dot_dimension_numbers<[1], [0], [0], [1], [0, 0, 1, 1], [], []>} : vector<1x96xbf16>, vector<96x64xbf16>, vector<1x64xf32> -> vector<1x64xf32>
    %460 = arith.addf %453, %459 : vector<1x64xf32>
    %c0_420 = arith.constant 0 : index
    %c7_421 = arith.constant 7 : index
    %c0_422 = arith.constant 0 : index
    %461 = vector.load %arg15[%c0_420, %c7_421, %c0_422] : memref<1x12x96xf32, #tpu.memory_space<vmem>>, vector<1x1x96xf32>
    %462 = vector.shape_cast %461 : vector<1x1x96xf32> to vector<1x96xf32>
    %463 = arith.truncf %462 : vector<1x96xf32> to vector<1x96xbf16>
    %c3_423 = arith.constant 3 : index
    %c0_424 = arith.constant 0 : index
    %c0_425 = arith.constant 0 : index
    %464 = vector.load %arg3[%c3_423, %c0_424, %c0_425] : memref<5x96x64xbf16, #tpu.memory_space<vmem>>, vector<1x96x64xbf16>
    %465 = vector.shape_cast %464 : vector<1x96x64xbf16> to vector<96x64xbf16>
    %cst_426 = arith.constant dense<0.000000e+00> : vector<1x64xf32>
    %466 = tpu.matmul %463, %465, %cst_426 {dimension_numbers = #tpu.dot_dimension_numbers<[1], [0], [0], [1], [0, 0, 1, 1], [], []>} : vector<1x96xbf16>, vector<96x64xbf16>, vector<1x64xf32> -> vector<1x64xf32>
    %467 = arith.addf %460, %466 : vector<1x64xf32>
    %c0_427 = arith.constant 0 : index
    %c8_428 = arith.constant 8 : index
    %c0_429 = arith.constant 0 : index
    %468 = vector.load %arg15[%c0_427, %c8_428, %c0_429] : memref<1x12x96xf32, #tpu.memory_space<vmem>>, vector<1x1x96xf32>
    %469 = vector.shape_cast %468 : vector<1x1x96xf32> to vector<1x96xf32>
    %470 = arith.truncf %469 : vector<1x96xf32> to vector<1x96xbf16>
    %c4_430 = arith.constant 4 : index
    %c0_431 = arith.constant 0 : index
    %c0_432 = arith.constant 0 : index
    %471 = vector.load %arg3[%c4_430, %c0_431, %c0_432] : memref<5x96x64xbf16, #tpu.memory_space<vmem>>, vector<1x96x64xbf16>
    %472 = vector.shape_cast %471 : vector<1x96x64xbf16> to vector<96x64xbf16>
    %cst_433 = arith.constant dense<0.000000e+00> : vector<1x64xf32>
    %473 = tpu.matmul %470, %472, %cst_433 {dimension_numbers = #tpu.dot_dimension_numbers<[1], [0], [0], [1], [0, 0, 1, 1], [], []>} : vector<1x96xbf16>, vector<96x64xbf16>, vector<1x64xf32> -> vector<1x64xf32>
    %474 = arith.addf %467, %473 : vector<1x64xf32>
    %cst_434 = arith.constant 0.000000e+00 : f32
    %475 = vector.broadcast %cst_434 : f32 to vector<1x64xf32>
    %476 = arith.cmpf oge, %474, %475 : vector<1x64xf32>
    %cst_435 = arith.constant 2.000000e-01 : f32
    %477 = vector.broadcast %cst_435 : f32 to vector<1x64xf32>
    %478 = arith.mulf %477, %474 : vector<1x64xf32>
    %479 = arith.select %476, %474, %478 : vector<1x64xi1>, vector<1x64xf32>
    %c0_436 = arith.constant 0 : index
    %c4_437 = arith.constant 4 : index
    %c32_438 = arith.constant 32 : index
    %480 = vector.load %arg16[%c0_436, %c4_437, %c32_438] : memref<1x8x128xf32, #tpu.memory_space<vmem>>, vector<1x1x64xf32>
    %481 = vector.shape_cast %480 : vector<1x1x64xf32> to vector<1x64xf32>
    %482 = vector.shape_cast %479 : vector<1x64xf32> to vector<1x1x64xf32>
    tpu.vector_store %arg16[%c0_436, %c4_437, %c32_438], %482 {strides = array<i32>} : memref<1x8x128xf32, #tpu.memory_space<vmem>>, vector<1x1x64xf32>,
    %c0_439 = arith.constant 0 : index
    %c6_440 = arith.constant 6 : index
    %c0_441 = arith.constant 0 : index
    %483 = vector.load %arg15[%c0_439, %c6_440, %c0_441] : memref<1x12x96xf32, #tpu.memory_space<vmem>>, vector<1x1x96xf32>
    %484 = vector.shape_cast %483 : vector<1x1x96xf32> to vector<1x96xf32>
    %485 = arith.truncf %484 : vector<1x96xf32> to vector<1x96xbf16>
    %c0_442 = arith.constant 0 : index
    %c0_443 = arith.constant 0 : index
    %c0_444 = arith.constant 0 : index
    %486 = vector.load %arg3[%c0_442, %c0_443, %c0_444] : memref<5x96x64xbf16, #tpu.memory_space<vmem>>, vector<1x96x64xbf16>
    %487 = vector.shape_cast %486 : vector<1x96x64xbf16> to vector<96x64xbf16>
    %cst_445 = arith.constant dense<0.000000e+00> : vector<1x64xf32>
    %488 = tpu.matmul %485, %487, %cst_445 {dimension_numbers = #tpu.dot_dimension_numbers<[1], [0], [0], [1], [0, 0, 1, 1], [], []>} : vector<1x96xbf16>, vector<96x64xbf16>, vector<1x64xf32> -> vector<1x64xf32>
    %489 = arith.addf %353, %488 : vector<1x64xf32>
    %c0_446 = arith.constant 0 : index
    %c7_447 = arith.constant 7 : index
    %c0_448 = arith.constant 0 : index
    %490 = vector.load %arg15[%c0_446, %c7_447, %c0_448] : memref<1x12x96xf32, #tpu.memory_space<vmem>>, vector<1x1x96xf32>
    %491 = vector.shape_cast %490 : vector<1x1x96xf32> to vector<1x96xf32>
    %492 = arith.truncf %491 : vector<1x96xf32> to vector<1x96xbf16>
    %c1_449 = arith.constant 1 : index
    %c0_450 = arith.constant 0 : index
    %c0_451 = arith.constant 0 : index
    %493 = vector.load %arg3[%c1_449, %c0_450, %c0_451] : memref<5x96x64xbf16, #tpu.memory_space<vmem>>, vector<1x96x64xbf16>
    %494 = vector.shape_cast %493 : vector<1x96x64xbf16> to vector<96x64xbf16>
    %cst_452 = arith.constant dense<0.000000e+00> : vector<1x64xf32>
    %495 = tpu.matmul %492, %494, %cst_452 {dimension_numbers = #tpu.dot_dimension_numbers<[1], [0], [0], [1], [0, 0, 1, 1], [], []>} : vector<1x96xbf16>, vector<96x64xbf16>, vector<1x64xf32> -> vector<1x64xf32>
    %496 = arith.addf %489, %495 : vector<1x64xf32>
    %c0_453 = arith.constant 0 : index
    %c8_454 = arith.constant 8 : index
    %c0_455 = arith.constant 0 : index
    %497 = vector.load %arg15[%c0_453, %c8_454, %c0_455] : memref<1x12x96xf32, #tpu.memory_space<vmem>>, vector<1x1x96xf32>
    %498 = vector.shape_cast %497 : vector<1x1x96xf32> to vector<1x96xf32>
    %499 = arith.truncf %498 : vector<1x96xf32> to vector<1x96xbf16>
    %c2_456 = arith.constant 2 : index
    %c0_457 = arith.constant 0 : index
    %c0_458 = arith.constant 0 : index
    %500 = vector.load %arg3[%c2_456, %c0_457, %c0_458] : memref<5x96x64xbf16, #tpu.memory_space<vmem>>, vector<1x96x64xbf16>
    %501 = vector.shape_cast %500 : vector<1x96x64xbf16> to vector<96x64xbf16>
    %cst_459 = arith.constant dense<0.000000e+00> : vector<1x64xf32>
    %502 = tpu.matmul %499, %501, %cst_459 {dimension_numbers = #tpu.dot_dimension_numbers<[1], [0], [0], [1], [0, 0, 1, 1], [], []>} : vector<1x96xbf16>, vector<96x64xbf16>, vector<1x64xf32> -> vector<1x64xf32>
    %503 = arith.addf %496, %502 : vector<1x64xf32>
    %c0_460 = arith.constant 0 : index
    %c9_461 = arith.constant 9 : index
    %c0_462 = arith.constant 0 : index
    %504 = vector.load %arg15[%c0_460, %c9_461, %c0_462] : memref<1x12x96xf32, #tpu.memory_space<vmem>>, vector<1x1x96xf32>
    %505 = vector.shape_cast %504 : vector<1x1x96xf32> to vector<1x96xf32>
    %506 = arith.truncf %505 : vector<1x96xf32> to vector<1x96xbf16>
    %c3_463 = arith.constant 3 : index
    %c0_464 = arith.constant 0 : index
    %c0_465 = arith.constant 0 : index
    %507 = vector.load %arg3[%c3_463, %c0_464, %c0_465] : memref<5x96x64xbf16, #tpu.memory_space<vmem>>, vector<1x96x64xbf16>
    %508 = vector.shape_cast %507 : vector<1x96x64xbf16> to vector<96x64xbf16>
    %cst_466 = arith.constant dense<0.000000e+00> : vector<1x64xf32>
    %509 = tpu.matmul %506, %508, %cst_466 {dimension_numbers = #tpu.dot_dimension_numbers<[1], [0], [0], [1], [0, 0, 1, 1], [], []>} : vector<1x96xbf16>, vector<96x64xbf16>, vector<1x64xf32> -> vector<1x64xf32>
    %510 = arith.addf %503, %509 : vector<1x64xf32>
    %c0_467 = arith.constant 0 : index
    %c10_468 = arith.constant 10 : index
    %c0_469 = arith.constant 0 : index
    %511 = vector.load %arg15[%c0_467, %c10_468, %c0_469] : memref<1x12x96xf32, #tpu.memory_space<vmem>>, vector<1x1x96xf32>
    %512 = vector.shape_cast %511 : vector<1x1x96xf32> to vector<1x96xf32>
    %513 = arith.truncf %512 : vector<1x96xf32> to vector<1x96xbf16>
    %c4_470 = arith.constant 4 : index
    %c0_471 = arith.constant 0 : index
    %c0_472 = arith.constant 0 : index
    %514 = vector.load %arg3[%c4_470, %c0_471, %c0_472] : memref<5x96x64xbf16, #tpu.memory_space<vmem>>, vector<1x96x64xbf16>
    %515 = vector.shape_cast %514 : vector<1x96x64xbf16> to vector<96x64xbf16>
    %cst_473 = arith.constant dense<0.000000e+00> : vector<1x64xf32>
    %516 = tpu.matmul %513, %515, %cst_473 {dimension_numbers = #tpu.dot_dimension_numbers<[1], [0], [0], [1], [0, 0, 1, 1], [], []>} : vector<1x96xbf16>, vector<96x64xbf16>, vector<1x64xf32> -> vector<1x64xf32>
    %517 = arith.addf %510, %516 : vector<1x64xf32>
    %cst_474 = arith.constant 0.000000e+00 : f32
    %518 = vector.broadcast %cst_474 : f32 to vector<1x64xf32>
    %519 = arith.cmpf oge, %517, %518 : vector<1x64xf32>
    %cst_475 = arith.constant 2.000000e-01 : f32
    %520 = vector.broadcast %cst_475 : f32 to vector<1x64xf32>
    %521 = arith.mulf %520, %517 : vector<1x64xf32>
    %522 = arith.select %519, %517, %521 : vector<1x64xi1>, vector<1x64xf32>
    %c0_476 = arith.constant 0 : index
    %c5_477 = arith.constant 5 : index
    %c32_478 = arith.constant 32 : index
    %523 = vector.load %arg16[%c0_476, %c5_477, %c32_478] : memref<1x8x128xf32, #tpu.memory_space<vmem>>, vector<1x1x64xf32>
    %524 = vector.shape_cast %523 : vector<1x1x64xf32> to vector<1x64xf32>
    %525 = vector.shape_cast %522 : vector<1x64xf32> to vector<1x1x64xf32>
    tpu.vector_store %arg16[%c0_476, %c5_477, %c32_478], %525 {strides = array<i32>} : memref<1x8x128xf32, #tpu.memory_space<vmem>>, vector<1x1x64xf32>,
    %c0_479 = arith.constant 0 : index
    %c0_480 = arith.constant 0 : index
    %526 = vector.load %arg9[%c0_479, %c0_480] : memref<1x64xf32, #tpu.memory_space<vmem>>, vector<1x64xf32>
    %c0_481 = arith.constant 0 : index
    %c0_482 = arith.constant 0 : index
    %c0_483 = arith.constant 0 : index
    %527 = vector.load %arg16[%c0_481, %c0_482, %c0_483] : memref<1x8x128xf32, #tpu.memory_space<vmem>>, vector<1x1x128xf32>
    %528 = vector.shape_cast %527 : vector<1x1x128xf32> to vector<1x128xf32>
    %529 = arith.truncf %528 : vector<1x128xf32> to vector<1x128xbf16>
    %c0_484 = arith.constant 0 : index
    %c0_485 = arith.constant 0 : index
    %c0_486 = arith.constant 0 : index
    %530 = vector.load %arg4[%c0_484, %c0_485, %c0_486] : memref<5x128x64xbf16, #tpu.memory_space<vmem>>, vector<1x128x64xbf16>
    %531 = vector.shape_cast %530 : vector<1x128x64xbf16> to vector<128x64xbf16>
    %cst_487 = arith.constant dense<0.000000e+00> : vector<1x64xf32>
    %532 = tpu.matmul %529, %531, %cst_487 {dimension_numbers = #tpu.dot_dimension_numbers<[1], [0], [0], [1], [0, 0, 1, 1], [], []>} : vector<1x128xbf16>, vector<128x64xbf16>, vector<1x64xf32> -> vector<1x64xf32>
    %533 = arith.addf %526, %532 : vector<1x64xf32>
    %c0_488 = arith.constant 0 : index
    %c1_489 = arith.constant 1 : index
    %c0_490 = arith.constant 0 : index
    %534 = vector.load %arg16[%c0_488, %c1_489, %c0_490] : memref<1x8x128xf32, #tpu.memory_space<vmem>>, vector<1x1x128xf32>
    %535 = vector.shape_cast %534 : vector<1x1x128xf32> to vector<1x128xf32>
    %536 = arith.truncf %535 : vector<1x128xf32> to vector<1x128xbf16>
    %c1_491 = arith.constant 1 : index
    %c0_492 = arith.constant 0 : index
    %c0_493 = arith.constant 0 : index
    %537 = vector.load %arg4[%c1_491, %c0_492, %c0_493] : memref<5x128x64xbf16, #tpu.memory_space<vmem>>, vector<1x128x64xbf16>
    %538 = vector.shape_cast %537 : vector<1x128x64xbf16> to vector<128x64xbf16>
    %cst_494 = arith.constant dense<0.000000e+00> : vector<1x64xf32>
    %539 = tpu.matmul %536, %538, %cst_494 {dimension_numbers = #tpu.dot_dimension_numbers<[1], [0], [0], [1], [0, 0, 1, 1], [], []>} : vector<1x128xbf16>, vector<128x64xbf16>, vector<1x64xf32> -> vector<1x64xf32>
    %540 = arith.addf %533, %539 : vector<1x64xf32>
    %c0_495 = arith.constant 0 : index
    %c2_496 = arith.constant 2 : index
    %c0_497 = arith.constant 0 : index
    %541 = vector.load %arg16[%c0_495, %c2_496, %c0_497] : memref<1x8x128xf32, #tpu.memory_space<vmem>>, vector<1x1x128xf32>
    %542 = vector.shape_cast %541 : vector<1x1x128xf32> to vector<1x128xf32>
    %543 = arith.truncf %542 : vector<1x128xf32> to vector<1x128xbf16>
    %c2_498 = arith.constant 2 : index
    %c0_499 = arith.constant 0 : index
    %c0_500 = arith.constant 0 : index
    %544 = vector.load %arg4[%c2_498, %c0_499, %c0_500] : memref<5x128x64xbf16, #tpu.memory_space<vmem>>, vector<1x128x64xbf16>
    %545 = vector.shape_cast %544 : vector<1x128x64xbf16> to vector<128x64xbf16>
    %cst_501 = arith.constant dense<0.000000e+00> : vector<1x64xf32>
    %546 = tpu.matmul %543, %545, %cst_501 {dimension_numbers = #tpu.dot_dimension_numbers<[1], [0], [0], [1], [0, 0, 1, 1], [], []>} : vector<1x128xbf16>, vector<128x64xbf16>, vector<1x64xf32> -> vector<1x64xf32>
    %547 = arith.addf %540, %546 : vector<1x64xf32>
    %c0_502 = arith.constant 0 : index
    %c3_503 = arith.constant 3 : index
    %c0_504 = arith.constant 0 : index
    %548 = vector.load %arg16[%c0_502, %c3_503, %c0_504] : memref<1x8x128xf32, #tpu.memory_space<vmem>>, vector<1x1x128xf32>
    %549 = vector.shape_cast %548 : vector<1x1x128xf32> to vector<1x128xf32>
    %550 = arith.truncf %549 : vector<1x128xf32> to vector<1x128xbf16>
    %c3_505 = arith.constant 3 : index
    %c0_506 = arith.constant 0 : index
    %c0_507 = arith.constant 0 : index
    %551 = vector.load %arg4[%c3_505, %c0_506, %c0_507] : memref<5x128x64xbf16, #tpu.memory_space<vmem>>, vector<1x128x64xbf16>
    %552 = vector.shape_cast %551 : vector<1x128x64xbf16> to vector<128x64xbf16>
    %cst_508 = arith.constant dense<0.000000e+00> : vector<1x64xf32>
    %553 = tpu.matmul %550, %552, %cst_508 {dimension_numbers = #tpu.dot_dimension_numbers<[1], [0], [0], [1], [0, 0, 1, 1], [], []>} : vector<1x128xbf16>, vector<128x64xbf16>, vector<1x64xf32> -> vector<1x64xf32>
    %554 = arith.addf %547, %553 : vector<1x64xf32>
    %c0_509 = arith.constant 0 : index
    %c4_510 = arith.constant 4 : index
    %c0_511 = arith.constant 0 : index
    %555 = vector.load %arg16[%c0_509, %c4_510, %c0_511] : memref<1x8x128xf32, #tpu.memory_space<vmem>>, vector<1x1x128xf32>
    %556 = vector.shape_cast %555 : vector<1x1x128xf32> to vector<1x128xf32>
    %557 = arith.truncf %556 : vector<1x128xf32> to vector<1x128xbf16>
    %c4_512 = arith.constant 4 : index
    %c0_513 = arith.constant 0 : index
    %c0_514 = arith.constant 0 : index
    %558 = vector.load %arg4[%c4_512, %c0_513, %c0_514] : memref<5x128x64xbf16, #tpu.memory_space<vmem>>, vector<1x128x64xbf16>
    %559 = vector.shape_cast %558 : vector<1x128x64xbf16> to vector<128x64xbf16>
    %cst_515 = arith.constant dense<0.000000e+00> : vector<1x64xf32>
    %560 = tpu.matmul %557, %559, %cst_515 {dimension_numbers = #tpu.dot_dimension_numbers<[1], [0], [0], [1], [0, 0, 1, 1], [], []>} : vector<1x128xbf16>, vector<128x64xbf16>, vector<1x64xf32> -> vector<1x64xf32>
    %561 = arith.addf %554, %560 : vector<1x64xf32>
    %cst_516 = arith.constant 0.000000e+00 : f32
    %562 = vector.broadcast %cst_516 : f32 to vector<1x64xf32>
    %563 = arith.cmpf oge, %561, %562 : vector<1x64xf32>
    %cst_517 = arith.constant 2.000000e-01 : f32
    %564 = vector.broadcast %cst_517 : f32 to vector<1x64xf32>
    %565 = arith.mulf %564, %561 : vector<1x64xf32>
    %566 = arith.select %563, %561, %565 : vector<1x64xi1>, vector<1x64xf32>
    %c0_518 = arith.constant 0 : index
    %c2_519 = arith.constant 2 : index
    %c64 = arith.constant 64 : index
    %567 = vector.load %arg17[%c0_518, %c2_519, %c64] : memref<1x6x192xf32, #tpu.memory_space<vmem>>, vector<1x1x64xf32>
    %568 = vector.shape_cast %567 : vector<1x1x64xf32> to vector<1x64xf32>
    %569 = vector.shape_cast %566 : vector<1x64xf32> to vector<1x1x64xf32>
    tpu.vector_store %arg17[%c0_518, %c2_519, %c64], %569 {strides = array<i32>} : memref<1x6x192xf32, #tpu.memory_space<vmem>>, vector<1x1x64xf32>,
    %c0_520 = arith.constant 0 : index
    %c2_521 = arith.constant 2 : index
    %c0_522 = arith.constant 0 : index
    %570 = vector.load %arg16[%c0_520, %c2_521, %c0_522] : memref<1x8x128xf32, #tpu.memory_space<vmem>>, vector<1x1x128xf32>
    %571 = vector.shape_cast %570 : vector<1x1x128xf32> to vector<1x128xf32>
    %572 = arith.truncf %571 : vector<1x128xf32> to vector<1x128xbf16>
    %c0_523 = arith.constant 0 : index
    %c0_524 = arith.constant 0 : index
    %c0_525 = arith.constant 0 : index
    %573 = vector.load %arg4[%c0_523, %c0_524, %c0_525] : memref<5x128x64xbf16, #tpu.memory_space<vmem>>, vector<1x128x64xbf16>
    %574 = vector.shape_cast %573 : vector<1x128x64xbf16> to vector<128x64xbf16>
    %cst_526 = arith.constant dense<0.000000e+00> : vector<1x64xf32>
    %575 = tpu.matmul %572, %574, %cst_526 {dimension_numbers = #tpu.dot_dimension_numbers<[1], [0], [0], [1], [0, 0, 1, 1], [], []>} : vector<1x128xbf16>, vector<128x64xbf16>, vector<1x64xf32> -> vector<1x64xf32>
    %576 = arith.addf %526, %575 : vector<1x64xf32>
    %c0_527 = arith.constant 0 : index
    %c3_528 = arith.constant 3 : index
    %c0_529 = arith.constant 0 : index
    %577 = vector.load %arg16[%c0_527, %c3_528, %c0_529] : memref<1x8x128xf32, #tpu.memory_space<vmem>>, vector<1x1x128xf32>
    %578 = vector.shape_cast %577 : vector<1x1x128xf32> to vector<1x128xf32>
    %579 = arith.truncf %578 : vector<1x128xf32> to vector<1x128xbf16>
    %c1_530 = arith.constant 1 : index
    %c0_531 = arith.constant 0 : index
    %c0_532 = arith.constant 0 : index
    %580 = vector.load %arg4[%c1_530, %c0_531, %c0_532] : memref<5x128x64xbf16, #tpu.memory_space<vmem>>, vector<1x128x64xbf16>
    %581 = vector.shape_cast %580 : vector<1x128x64xbf16> to vector<128x64xbf16>
    %cst_533 = arith.constant dense<0.000000e+00> : vector<1x64xf32>
    %582 = tpu.matmul %579, %581, %cst_533 {dimension_numbers = #tpu.dot_dimension_numbers<[1], [0], [0], [1], [0, 0, 1, 1], [], []>} : vector<1x128xbf16>, vector<128x64xbf16>, vector<1x64xf32> -> vector<1x64xf32>
    %583 = arith.addf %576, %582 : vector<1x64xf32>
    %c0_534 = arith.constant 0 : index
    %c4_535 = arith.constant 4 : index
    %c0_536 = arith.constant 0 : index
    %584 = vector.load %arg16[%c0_534, %c4_535, %c0_536] : memref<1x8x128xf32, #tpu.memory_space<vmem>>, vector<1x1x128xf32>
    %585 = vector.shape_cast %584 : vector<1x1x128xf32> to vector<1x128xf32>
    %586 = arith.truncf %585 : vector<1x128xf32> to vector<1x128xbf16>
    %c2_537 = arith.constant 2 : index
    %c0_538 = arith.constant 0 : index
    %c0_539 = arith.constant 0 : index
    %587 = vector.load %arg4[%c2_537, %c0_538, %c0_539] : memref<5x128x64xbf16, #tpu.memory_space<vmem>>, vector<1x128x64xbf16>
    %588 = vector.shape_cast %587 : vector<1x128x64xbf16> to vector<128x64xbf16>
    %cst_540 = arith.constant dense<0.000000e+00> : vector<1x64xf32>
    %589 = tpu.matmul %586, %588, %cst_540 {dimension_numbers = #tpu.dot_dimension_numbers<[1], [0], [0], [1], [0, 0, 1, 1], [], []>} : vector<1x128xbf16>, vector<128x64xbf16>, vector<1x64xf32> -> vector<1x64xf32>
    %590 = arith.addf %583, %589 : vector<1x64xf32>
    %c0_541 = arith.constant 0 : index
    %c5_542 = arith.constant 5 : index
    %c0_543 = arith.constant 0 : index
    %591 = vector.load %arg16[%c0_541, %c5_542, %c0_543] : memref<1x8x128xf32, #tpu.memory_space<vmem>>, vector<1x1x128xf32>
    %592 = vector.shape_cast %591 : vector<1x1x128xf32> to vector<1x128xf32>
    %593 = arith.truncf %592 : vector<1x128xf32> to vector<1x128xbf16>
    %c3_544 = arith.constant 3 : index
    %c0_545 = arith.constant 0 : index
    %c0_546 = arith.constant 0 : index
    %594 = vector.load %arg4[%c3_544, %c0_545, %c0_546] : memref<5x128x64xbf16, #tpu.memory_space<vmem>>, vector<1x128x64xbf16>
    %595 = vector.shape_cast %594 : vector<1x128x64xbf16> to vector<128x64xbf16>
    %cst_547 = arith.constant dense<0.000000e+00> : vector<1x64xf32>
    %596 = tpu.matmul %593, %595, %cst_547 {dimension_numbers = #tpu.dot_dimension_numbers<[1], [0], [0], [1], [0, 0, 1, 1], [], []>} : vector<1x128xbf16>, vector<128x64xbf16>, vector<1x64xf32> -> vector<1x64xf32>
    %597 = arith.addf %590, %596 : vector<1x64xf32>
    %c0_548 = arith.constant 0 : index
    %c6_549 = arith.constant 6 : index
    %c0_550 = arith.constant 0 : index
    %598 = vector.load %arg16[%c0_548, %c6_549, %c0_550] : memref<1x8x128xf32, #tpu.memory_space<vmem>>, vector<1x1x128xf32>
    %599 = vector.shape_cast %598 : vector<1x1x128xf32> to vector<1x128xf32>
    %600 = arith.truncf %599 : vector<1x128xf32> to vector<1x128xbf16>
    %c4_551 = arith.constant 4 : index
    %c0_552 = arith.constant 0 : index
    %c0_553 = arith.constant 0 : index
    %601 = vector.load %arg4[%c4_551, %c0_552, %c0_553] : memref<5x128x64xbf16, #tpu.memory_space<vmem>>, vector<1x128x64xbf16>
    %602 = vector.shape_cast %601 : vector<1x128x64xbf16> to vector<128x64xbf16>
    %cst_554 = arith.constant dense<0.000000e+00> : vector<1x64xf32>
    %603 = tpu.matmul %600, %602, %cst_554 {dimension_numbers = #tpu.dot_dimension_numbers<[1], [0], [0], [1], [0, 0, 1, 1], [], []>} : vector<1x128xbf16>, vector<128x64xbf16>, vector<1x64xf32> -> vector<1x64xf32>
    %604 = arith.addf %597, %603 : vector<1x64xf32>
    %cst_555 = arith.constant 0.000000e+00 : f32
    %605 = vector.broadcast %cst_555 : f32 to vector<1x64xf32>
    %606 = arith.cmpf oge, %604, %605 : vector<1x64xf32>
    %cst_556 = arith.constant 2.000000e-01 : f32
    %607 = vector.broadcast %cst_556 : f32 to vector<1x64xf32>
    %608 = arith.mulf %607, %604 : vector<1x64xf32>
    %609 = arith.select %606, %604, %608 : vector<1x64xi1>, vector<1x64xf32>
    %c0_557 = arith.constant 0 : index
    %c3_558 = arith.constant 3 : index
    %c64_559 = arith.constant 64 : index
    %610 = vector.load %arg17[%c0_557, %c3_558, %c64_559] : memref<1x6x192xf32, #tpu.memory_space<vmem>>, vector<1x1x64xf32>
    %611 = vector.shape_cast %610 : vector<1x1x64xf32> to vector<1x64xf32>
    %612 = vector.shape_cast %609 : vector<1x64xf32> to vector<1x1x64xf32>
    tpu.vector_store %arg17[%c0_557, %c3_558, %c64_559], %612 {strides = array<i32>} : memref<1x6x192xf32, #tpu.memory_space<vmem>>, vector<1x1x64xf32>,
    %c0_560 = arith.constant 0 : index
    %c0_561 = arith.constant 0 : index
    %613 = vector.load %arg10[%c0_560, %c0_561] : memref<1x64xf32, #tpu.memory_space<vmem>>, vector<1x64xf32>
    %c0_562 = arith.constant 0 : index
    %c0_563 = arith.constant 0 : index
    %c0_564 = arith.constant 0 : index
    %614 = vector.load %arg17[%c0_562, %c0_563, %c0_564] : memref<1x6x192xf32, #tpu.memory_space<vmem>>, vector<1x1x192xf32>
    %615 = vector.shape_cast %614 : vector<1x1x192xf32> to vector<1x192xf32>
    %616 = arith.truncf %615 : vector<1x192xf32> to vector<1x192xbf16>
    %c0_565 = arith.constant 0 : index
    %c0_566 = arith.constant 0 : index
    %c0_567 = arith.constant 0 : index
    %617 = vector.load %arg5[%c0_565, %c0_566, %c0_567] : memref<5x192x64xbf16, #tpu.memory_space<vmem>>, vector<1x192x64xbf16>
    %618 = vector.shape_cast %617 : vector<1x192x64xbf16> to vector<192x64xbf16>
    %cst_568 = arith.constant dense<0.000000e+00> : vector<1x64xf32>
    %619 = tpu.matmul %616, %618, %cst_568 {dimension_numbers = #tpu.dot_dimension_numbers<[1], [0], [0], [1], [0, 0, 1, 1], [], []>} : vector<1x192xbf16>, vector<192x64xbf16>, vector<1x64xf32> -> vector<1x64xf32>
    %620 = arith.addf %613, %619 : vector<1x64xf32>
    %c0_569 = arith.constant 0 : index
    %c1_570 = arith.constant 1 : index
    %c0_571 = arith.constant 0 : index
    %621 = vector.load %arg17[%c0_569, %c1_570, %c0_571] : memref<1x6x192xf32, #tpu.memory_space<vmem>>, vector<1x1x192xf32>
    %622 = vector.shape_cast %621 : vector<1x1x192xf32> to vector<1x192xf32>
    %623 = arith.truncf %622 : vector<1x192xf32> to vector<1x192xbf16>
    %c1_572 = arith.constant 1 : index
    %c0_573 = arith.constant 0 : index
    %c0_574 = arith.constant 0 : index
    %624 = vector.load %arg5[%c1_572, %c0_573, %c0_574] : memref<5x192x64xbf16, #tpu.memory_space<vmem>>, vector<1x192x64xbf16>
    %625 = vector.shape_cast %624 : vector<1x192x64xbf16> to vector<192x64xbf16>
    %cst_575 = arith.constant dense<0.000000e+00> : vector<1x64xf32>
    %626 = tpu.matmul %623, %625, %cst_575 {dimension_numbers = #tpu.dot_dimension_numbers<[1], [0], [0], [1], [0, 0, 1, 1], [], []>} : vector<1x192xbf16>, vector<192x64xbf16>, vector<1x64xf32> -> vector<1x64xf32>
    %627 = arith.addf %620, %626 : vector<1x64xf32>
    %c0_576 = arith.constant 0 : index
    %c2_577 = arith.constant 2 : index
    %c0_578 = arith.constant 0 : index
    %628 = vector.load %arg17[%c0_576, %c2_577, %c0_578] : memref<1x6x192xf32, #tpu.memory_space<vmem>>, vector<1x1x192xf32>
    %629 = vector.shape_cast %628 : vector<1x1x192xf32> to vector<1x192xf32>
    %630 = arith.truncf %629 : vector<1x192xf32> to vector<1x192xbf16>
    %c2_579 = arith.constant 2 : index
    %c0_580 = arith.constant 0 : index
    %c0_581 = arith.constant 0 : index
    %631 = vector.load %arg5[%c2_579, %c0_580, %c0_581] : memref<5x192x64xbf16, #tpu.memory_space<vmem>>, vector<1x192x64xbf16>
    %632 = vector.shape_cast %631 : vector<1x192x64xbf16> to vector<192x64xbf16>
    %cst_582 = arith.constant dense<0.000000e+00> : vector<1x64xf32>
    %633 = tpu.matmul %630, %632, %cst_582 {dimension_numbers = #tpu.dot_dimension_numbers<[1], [0], [0], [1], [0, 0, 1, 1], [], []>} : vector<1x192xbf16>, vector<192x64xbf16>, vector<1x64xf32> -> vector<1x64xf32>
    %634 = arith.addf %627, %633 : vector<1x64xf32>
    %c0_583 = arith.constant 0 : index
    %c3_584 = arith.constant 3 : index
    %c0_585 = arith.constant 0 : index
    %635 = vector.load %arg17[%c0_583, %c3_584, %c0_585] : memref<1x6x192xf32, #tpu.memory_space<vmem>>, vector<1x1x192xf32>
    %636 = vector.shape_cast %635 : vector<1x1x192xf32> to vector<1x192xf32>
    %637 = arith.truncf %636 : vector<1x192xf32> to vector<1x192xbf16>
    %c3_586 = arith.constant 3 : index
    %c0_587 = arith.constant 0 : index
    %c0_588 = arith.constant 0 : index
    %638 = vector.load %arg5[%c3_586, %c0_587, %c0_588] : memref<5x192x64xbf16, #tpu.memory_space<vmem>>, vector<1x192x64xbf16>
    %639 = vector.shape_cast %638 : vector<1x192x64xbf16> to vector<192x64xbf16>
    %cst_589 = arith.constant dense<0.000000e+00> : vector<1x64xf32>
    %640 = tpu.matmul %637, %639, %cst_589 {dimension_numbers = #tpu.dot_dimension_numbers<[1], [0], [0], [1], [0, 0, 1, 1], [], []>} : vector<1x192xbf16>, vector<192x64xbf16>, vector<1x64xf32> -> vector<1x64xf32>
    %641 = arith.addf %634, %640 : vector<1x64xf32>
    %c0_590 = arith.constant 0 : index
    %c4_591 = arith.constant 4 : index
    %c0_592 = arith.constant 0 : index
    %642 = vector.load %arg17[%c0_590, %c4_591, %c0_592] : memref<1x6x192xf32, #tpu.memory_space<vmem>>, vector<1x1x192xf32>
    %643 = vector.shape_cast %642 : vector<1x1x192xf32> to vector<1x192xf32>
    %644 = arith.truncf %643 : vector<1x192xf32> to vector<1x192xbf16>
    %c4_593 = arith.constant 4 : index
    %c0_594 = arith.constant 0 : index
    %c0_595 = arith.constant 0 : index
    %645 = vector.load %arg5[%c4_593, %c0_594, %c0_595] : memref<5x192x64xbf16, #tpu.memory_space<vmem>>, vector<1x192x64xbf16>
    %646 = vector.shape_cast %645 : vector<1x192x64xbf16> to vector<192x64xbf16>
    %cst_596 = arith.constant dense<0.000000e+00> : vector<1x64xf32>
    %647 = tpu.matmul %644, %646, %cst_596 {dimension_numbers = #tpu.dot_dimension_numbers<[1], [0], [0], [1], [0, 0, 1, 1], [], []>} : vector<1x192xbf16>, vector<192x64xbf16>, vector<1x64xf32> -> vector<1x64xf32>
    %648 = arith.addf %641, %647 : vector<1x64xf32>
    %cst_597 = arith.constant 0.000000e+00 : f32
    %649 = vector.broadcast %cst_597 : f32 to vector<1x64xf32>
    %650 = arith.cmpf oge, %648, %649 : vector<1x64xf32>
    %cst_598 = arith.constant 2.000000e-01 : f32
    %651 = vector.broadcast %cst_598 : f32 to vector<1x64xf32>
    %652 = arith.mulf %651, %648 : vector<1x64xf32>
    %653 = arith.select %650, %648, %652 : vector<1x64xi1>, vector<1x64xf32>
    %c0_599 = arith.constant 0 : index
    %c2_600 = arith.constant 2 : index
    %c128 = arith.constant 128 : index
    %654 = vector.load %arg18[%c0_599, %c2_600, %c128] : memref<1x5x320xf32, #tpu.memory_space<vmem>>, vector<1x1x64xf32>
    %655 = vector.shape_cast %654 : vector<1x1x64xf32> to vector<1x64xf32>
    %656 = vector.shape_cast %653 : vector<1x64xf32> to vector<1x1x64xf32>
    tpu.vector_store %arg18[%c0_599, %c2_600, %c128], %656 {strides = array<i32>} : memref<1x5x320xf32, #tpu.memory_space<vmem>>, vector<1x1x64xf32>,
    %c0_601 = arith.constant 0 : index
    %c0_602 = arith.constant 0 : index
    %657 = vector.load %arg11[%c0_601, %c0_602] : memref<1x64xf32, #tpu.memory_space<vmem>>, vector<1x64xf32>
    %cst_603 = arith.constant 0.000000e+00 : f32
    %658 = vector.broadcast %cst_603 : f32 to vector<1x64xf32>
    %c0_604 = arith.constant 0 : index
    %c0_605 = arith.constant 0 : index
    %c0_606 = arith.constant 0 : index
    %659 = vector.load %arg18[%c0_604, %c0_605, %c0_606] : memref<1x5x320xf32, #tpu.memory_space<vmem>>, vector<1x1x320xf32>
    %660 = vector.shape_cast %659 : vector<1x1x320xf32> to vector<1x320xf32>
    %661 = arith.truncf %660 : vector<1x320xf32> to vector<1x320xbf16>
    %c0_607 = arith.constant 0 : index
    %c0_608 = arith.constant 0 : index
    %c0_609 = arith.constant 0 : index
    %662 = vector.load %arg6[%c0_607, %c0_608, %c0_609] : memref<5x320x64xbf16, #tpu.memory_space<vmem>>, vector<1x320x64xbf16>
    %663 = vector.shape_cast %662 : vector<1x320x64xbf16> to vector<320x64xbf16>
    %cst_610 = arith.constant dense<0.000000e+00> : vector<1x64xf32>
    %664 = tpu.matmul %661, %663, %cst_610 {dimension_numbers = #tpu.dot_dimension_numbers<[1], [0], [0], [1], [0, 0, 1, 1], [], []>} : vector<1x320xbf16>, vector<320x64xbf16>, vector<1x64xf32> -> vector<1x64xf32>
    %665 = arith.addf %657, %664 : vector<1x64xf32>
    %c0_611 = arith.constant 0 : index
    %c1_612 = arith.constant 1 : index
    %c0_613 = arith.constant 0 : index
    %666 = vector.load %arg18[%c0_611, %c1_612, %c0_613] : memref<1x5x320xf32, #tpu.memory_space<vmem>>, vector<1x1x320xf32>
    %667 = vector.shape_cast %666 : vector<1x1x320xf32> to vector<1x320xf32>
    %668 = arith.truncf %667 : vector<1x320xf32> to vector<1x320xbf16>
    %c1_614 = arith.constant 1 : index
    %c0_615 = arith.constant 0 : index
    %c0_616 = arith.constant 0 : index
    %669 = vector.load %arg6[%c1_614, %c0_615, %c0_616] : memref<5x320x64xbf16, #tpu.memory_space<vmem>>, vector<1x320x64xbf16>
    %670 = vector.shape_cast %669 : vector<1x320x64xbf16> to vector<320x64xbf16>
    %cst_617 = arith.constant dense<0.000000e+00> : vector<1x64xf32>
    %671 = tpu.matmul %668, %670, %cst_617 {dimension_numbers = #tpu.dot_dimension_numbers<[1], [0], [0], [1], [0, 0, 1, 1], [], []>} : vector<1x320xbf16>, vector<320x64xbf16>, vector<1x64xf32> -> vector<1x64xf32>
    %672 = arith.addf %665, %671 : vector<1x64xf32>
    %c0_618 = arith.constant 0 : index
    %c2_619 = arith.constant 2 : index
    %c0_620 = arith.constant 0 : index
    %673 = vector.load %arg18[%c0_618, %c2_619, %c0_620] : memref<1x5x320xf32, #tpu.memory_space<vmem>>, vector<1x1x320xf32>
    %674 = vector.shape_cast %673 : vector<1x1x320xf32> to vector<1x320xf32>
    %675 = arith.truncf %674 : vector<1x320xf32> to vector<1x320xbf16>
    %c2_621 = arith.constant 2 : index
    %c0_622 = arith.constant 0 : index
    %c0_623 = arith.constant 0 : index
    %676 = vector.load %arg6[%c2_621, %c0_622, %c0_623] : memref<5x320x64xbf16, #tpu.memory_space<vmem>>, vector<1x320x64xbf16>
    %677 = vector.shape_cast %676 : vector<1x320x64xbf16> to vector<320x64xbf16>
    %cst_624 = arith.constant dense<0.000000e+00> : vector<1x64xf32>
    %678 = tpu.matmul %675, %677, %cst_624 {dimension_numbers = #tpu.dot_dimension_numbers<[1], [0], [0], [1], [0, 0, 1, 1], [], []>} : vector<1x320xbf16>, vector<320x64xbf16>, vector<1x64xf32> -> vector<1x64xf32>
    %679 = arith.addf %672, %678 : vector<1x64xf32>
    %c0_625 = arith.constant 0 : index
    %c3_626 = arith.constant 3 : index
    %c0_627 = arith.constant 0 : index
    %680 = vector.load %arg18[%c0_625, %c3_626, %c0_627] : memref<1x5x320xf32, #tpu.memory_space<vmem>>, vector<1x1x320xf32>
    %681 = vector.shape_cast %680 : vector<1x1x320xf32> to vector<1x320xf32>
    %682 = arith.truncf %681 : vector<1x320xf32> to vector<1x320xbf16>
    %c3_628 = arith.constant 3 : index
    %c0_629 = arith.constant 0 : index
    %c0_630 = arith.constant 0 : index
    %683 = vector.load %arg6[%c3_628, %c0_629, %c0_630] : memref<5x320x64xbf16, #tpu.memory_space<vmem>>, vector<1x320x64xbf16>
    %684 = vector.shape_cast %683 : vector<1x320x64xbf16> to vector<320x64xbf16>
    %cst_631 = arith.constant dense<0.000000e+00> : vector<1x64xf32>
    %685 = tpu.matmul %682, %684, %cst_631 {dimension_numbers = #tpu.dot_dimension_numbers<[1], [0], [0], [1], [0, 0, 1, 1], [], []>} : vector<1x320xbf16>, vector<320x64xbf16>, vector<1x64xf32> -> vector<1x64xf32>
    %686 = arith.addf %679, %685 : vector<1x64xf32>
    %c0_632 = arith.constant 0 : index
    %c4_633 = arith.constant 4 : index
    %c0_634 = arith.constant 0 : index
    %687 = vector.load %arg18[%c0_632, %c4_633, %c0_634] : memref<1x5x320xf32, #tpu.memory_space<vmem>>, vector<1x1x320xf32>
    %688 = vector.shape_cast %687 : vector<1x1x320xf32> to vector<1x320xf32>
    %689 = arith.truncf %688 : vector<1x320xf32> to vector<1x320xbf16>
    %c4_635 = arith.constant 4 : index
    %c0_636 = arith.constant 0 : index
    %c0_637 = arith.constant 0 : index
    %690 = vector.load %arg6[%c4_635, %c0_636, %c0_637] : memref<5x320x64xbf16, #tpu.memory_space<vmem>>, vector<1x320x64xbf16>
    %691 = vector.shape_cast %690 : vector<1x320x64xbf16> to vector<320x64xbf16>
    %cst_638 = arith.constant dense<0.000000e+00> : vector<1x64xf32>
    %692 = tpu.matmul %689, %691, %cst_638 {dimension_numbers = #tpu.dot_dimension_numbers<[1], [0], [0], [1], [0, 0, 1, 1], [], []>} : vector<1x320xbf16>, vector<320x64xbf16>, vector<1x64xf32> -> vector<1x64xf32>
    %693 = arith.addf %686, %692 : vector<1x64xf32>
    %cst_639 = arith.constant 0.000000e+00 : f32
    %694 = vector.broadcast %cst_639 : f32 to vector<1x64xf32>
    %695 = arith.cmpf oge, %693, %694 : vector<1x64xf32>
    %cst_640 = arith.constant 2.000000e-01 : f32
    %696 = vector.broadcast %cst_640 : f32 to vector<1x64xf32>
    %697 = arith.mulf %696, %693 : vector<1x64xf32>
    %698 = arith.select %695, %693, %697 : vector<1x64xi1>, vector<1x64xf32>
    %699 = arith.addf %658, %698 : vector<1x64xf32>
    %cst_641 = arith.constant 1.000000e+00 : f32
    %700 = vector.broadcast %cst_641 : f32 to vector<1x64xf32>
    %701 = arith.mulf %699, %700 : vector<1x64xf32>
    %c0_642 = arith.constant 0 : index
    %c0_643 = arith.constant 0 : index
    %702 = vector.load %arg12[%c0_642, %c0_643] : memref<1x64xf32, #tpu.memory_space<vmem>>, vector<1x64xf32>
    %703 = arith.mulf %701, %702 : vector<1x64xf32>
    %cst_644 = arith.constant dense<0.000000e+00> : vector<1xf32>
    %704 = vector.multi_reduction <add>, %703, %cst_644 [1] : vector<1x64xf32> to vector<1xf32>
    %705 = vector.shape_cast %704 : vector<1xf32> to vector<1x1xf32>
    %c0_645 = arith.constant 0 : index
    %c0_646 = arith.constant 0 : index
    %706 = vector.load %arg13[%c0_645, %c0_646] : memref<1x1xf32, #tpu.memory_space<vmem>>, vector<1x1xf32>
    %707 = arith.addf %705, %706 : vector<1x1xf32>
    %c0_647 = arith.constant 0 : index
    %c0_648 = arith.constant 0 : index
    %c0_649 = arith.constant 0 : index
    %708 = vector.load %arg14[%c0_647, %c0_648, %c0_649] : memref<1x1x1xf32, #tpu.memory_space<vmem>>, vector<1x1x1xf32>
    %709 = vector.shape_cast %708 : vector<1x1x1xf32> to vector<1x1xf32>
    %710 = vector.shape_cast %707 : vector<1x1xf32> to vector<1x1x1xf32>
    tpu.vector_store %arg14[%c0_647, %c0_648, %c0_649], %710 {strides = array<i32>} : memref<1x1x1xf32, #tpu.memory_space<vmem>>, vector<1x1x1xf32>,
    return
  }
  func.func @transform_0(%arg0: i32) -> (i32, i32, i32) {
    %c0_i32 = arith.constant 0 : i32
    %c0_i32_0 = arith.constant 0 : i32
    %c0_i32_1 = arith.constant 0 : i32
    return %arg0, %c0_i32, %c0_i32_0 : i32, i32, i32
  }
  func.func @transform_1(%arg0: i32) -> (i32, i32, i32) {
    %c0_i32 = arith.constant 0 : i32
    %c0_i32_0 = arith.constant 0 : i32
    %c0_i32_1 = arith.constant 0 : i32
    %c0_i32_2 = arith.constant 0 : i32
    return %c0_i32, %c0_i32_0, %c0_i32_1 : i32, i32, i32
  }
  func.func @transform_2(%arg0: i32) -> (i32, i32, i32) {
    %c0_i32 = arith.constant 0 : i32
    %c0_i32_0 = arith.constant 0 : i32
    %c0_i32_1 = arith.constant 0 : i32
    %c0_i32_2 = arith.constant 0 : i32
    return %c0_i32, %c0_i32_0, %c0_i32_1 : i32, i32, i32
  }
  func.func @transform_3(%arg0: i32) -> (i32, i32, i32) {
    %c0_i32 = arith.constant 0 : i32
    %c0_i32_0 = arith.constant 0 : i32
    %c0_i32_1 = arith.constant 0 : i32
    %c0_i32_2 = arith.constant 0 : i32
    return %c0_i32, %c0_i32_0, %c0_i32_1 : i32, i32, i32
  }
  func.func @transform_4(%arg0: i32) -> (i32, i32, i32) {
    %c0_i32 = arith.constant 0 : i32
    %c0_i32_0 = arith.constant 0 : i32
    %c0_i32_1 = arith.constant 0 : i32
    %c0_i32_2 = arith.constant 0 : i32
    return %c0_i32, %c0_i32_0, %c0_i32_1 : i32, i32, i32
  }
  func.func @transform_5(%arg0: i32) -> (i32, i32, i32) {
    %c0_i32 = arith.constant 0 : i32
    %c0_i32_0 = arith.constant 0 : i32
    %c0_i32_1 = arith.constant 0 : i32
    %c0_i32_2 = arith.constant 0 : i32
    return %c0_i32, %c0_i32_0, %c0_i32_1 : i32, i32, i32
  }
  func.func @transform_6(%arg0: i32) -> (i32, i32) {
    %c0_i32 = arith.constant 0 : i32
    %c0_i32_0 = arith.constant 0 : i32
    %c0_i32_1 = arith.constant 0 : i32
    return %c0_i32, %c0_i32_0 : i32, i32
  }
  func.func @transform_7(%arg0: i32) -> (i32, i32) {
    %c0_i32 = arith.constant 0 : i32
    %c0_i32_0 = arith.constant 0 : i32
    %c0_i32_1 = arith.constant 0 : i32
    return %c0_i32, %c0_i32_0 : i32, i32
  }
  func.func @transform_8(%arg0: i32) -> (i32, i32) {
    %c0_i32 = arith.constant 0 : i32
    %c0_i32_0 = arith.constant 0 : i32
    %c0_i32_1 = arith.constant 0 : i32
    return %c0_i32, %c0_i32_0 : i32, i32
  }
  func.func @transform_9(%arg0: i32) -> (i32, i32) {
    %c0_i32 = arith.constant 0 : i32
    %c0_i32_0 = arith.constant 0 : i32
    %c0_i32_1 = arith.constant 0 : i32
    return %c0_i32, %c0_i32_0 : i32, i32
  }
  func.func @transform_10(%arg0: i32) -> (i32, i32) {
    %c0_i32 = arith.constant 0 : i32
    %c0_i32_0 = arith.constant 0 : i32
    %c0_i32_1 = arith.constant 0 : i32
    return %c0_i32, %c0_i32_0 : i32, i32
  }
  func.func @transform_11(%arg0: i32) -> (i32, i32) {
    %c0_i32 = arith.constant 0 : i32
    %c0_i32_0 = arith.constant 0 : i32
    %c0_i32_1 = arith.constant 0 : i32
    return %c0_i32, %c0_i32_0 : i32, i32
  }
  func.func @transform_12(%arg0: i32) -> (i32, i32) {
    %c0_i32 = arith.constant 0 : i32
    %c0_i32_0 = arith.constant 0 : i32
    %c0_i32_1 = arith.constant 0 : i32
    return %c0_i32, %c0_i32_0 : i32, i32
  }
  func.func @transform_13(%arg0: i32) -> (i32, i32, i32) {
    %c0_i32 = arith.constant 0 : i32
    %c0_i32_0 = arith.constant 0 : i32
    %c0_i32_1 = arith.constant 0 : i32
    return %arg0, %c0_i32, %c0_i32_0 : i32, i32, i32
  }
}

</mosaic_0001>

<llo_original>
// kernel: tile.20
$region0: #{tile.20}
  #allocation0 [shape = 's32[1]{0}', space=sflag, size = 0x4, scoped, tag = 'scoped memory for tile.20']
  %s0 = inlined_call_operand.vmem [shape: f32[8], index: 0, kind: input, shape index: {}]
  %s1 = inlined_call_operand.vmem [shape: f32[8,8], index: 1, kind: output, shape index: {}]
  // Predicated region
  $region2: #{tile.20} parent=0 // pred_check
    _
  $region3: #{tile.20} parent=0 // pred_check_branch
    %3 = sbr.rel (0) target = $region5
  $region4: #{tile.20} parent=0 // pred_region
    _
  $region5: #{tile.20} parent=0 // pred_fallthru
    _
  %v4 = vld [vmem:[%s0] ss:$0 sm:$0xff]
  %5 = vst [vmem:[%s1] sm:$0xff] %v4

// kernel: tile.21
$region0: #{tile.21}
  %s0 = inlined_call_operand.vmem [shape: f32[8,8], index: 0, kind: input, shape index: {}]
  %s1 = inlined_call_operand.vmem [shape: f32[1,64], index: 1, kind: output, shape index: {}]
  $region1: #{tile.21} parent=0
    #allocation0 [shape = 'u8[4096]{0}', space=vmem, size = 0x1000, scoped, tag = 'scoped mem for output reshape']
    %v2 = vld [vmem:[%s0] sm:$0x1]
    %vm3 = vcmask 64512
    %4 = vst.msk [vmem:[#allocation0] sm:$0x1] %vm3, %v2
    %s5 = scalar_lea.vmem %s0, 7
    %v6 = vld [vmem:[%s5] sm:$0x1]
    %7 = vrot.lane.b32.xlu0 %v6, 56
    %v8 = vpop.permute.xlu0 %7
    %vm9 = vcmask 523712
    %10 = vst.msk [vmem:[#allocation0] sm:$0x1] %vm9, %v8
    %s11 = scalar_lea.vmem %s0, 6
    %v12 = vld [vmem:[%s11] sm:$0x1]
    %13 = vrot.lane.b32.xlu0 %v12, 48
    %v14 = vpop.permute.xlu0 %13
    %vm15 = vcmask 458112
    %16 = vst.msk [vmem:[#allocation0] sm:$0x1] %vm15, %v14
    %s17 = scalar_lea.vmem %s0, 5
    %v18 = vld [vmem:[%s17] sm:$0x1]
    %19 = vrot.lane.b32.xlu0 %v18, 40
    %v20 = vpop.permute.xlu0 %19
    %vm21 = vcmask 392512
    %22 = vst.msk [vmem:[#allocation0] sm:$0x1] %vm21, %v20
    %s23 = scalar_lea.vmem %s0, 4
    %v24 = vld [vmem:[%s23] sm:$0x1]
    %25 = vrot.lane.b32.xlu0 %v24, 32
    %v26 = vpop.permute.xlu0 %25
    %vm27 = vcmask 326912
    %28 = vst.msk [vmem:[#allocation0] sm:$0x1] %vm27, %v26
    %s29 = scalar_lea.vmem %s0, 3
    %v30 = vld [vmem:[%s29] sm:$0x1]
    %31 = vrot.lane.b32.xlu0 %v30, 24
    %v32 = vpop.permute.xlu0 %31
    %vm33 = vcmask 261312
    %34 = vst.msk [vmem:[#allocation0] sm:$0x1] %vm33, %v32
    %s35 = scalar_lea.vmem %s0, 2
    %v36 = vld [vmem:[%s35] sm:$0x1]
    %37 = vrot.lane.b32.xlu0 %v36, 16
    %v38 = vpop.permute.xlu0 %37
    %vm39 = vcmask 195712
    %40 = vst.msk [vmem:[#allocation0] sm:$0x1] %vm39, %v38
    %s41 = scalar_lea.vmem %s0, 1
    %v42 = vld [vmem:[%s41] sm:$0x1]
    %43 = vrot.lane.b32.xlu0 %v42, 8
    %v44 = vpop.permute.xlu0 %43
    %vm45 = vcmask 130112
    %46 = vst.msk [vmem:[#allocation0] sm:$0x1] %vm45, %v44
    %s48 = ssub.s32 2, 1
    %v49 = vld [vmem:[#allocation0] sm:%s48]
    %s51 = ssub.s32 2, 1
    %52 = vst [vmem:[%s1] sm:%s51] %v49

// kernel: tile.25
$region0: #{tile.25}
  #allocation0 [shape = 's32[1]{0}', space=sflag, size = 0x4, scoped, tag = 'scoped memory for tile.25']
  %s0 = inlined_call_operand.vmem [shape: f32[16], index: 0, kind: input, shape index: {}]
  %s1 = inlined_call_operand.vmem [shape: f32[4,16], index: 1, kind: output, shape index: {}]
  // Predicated region
  $region2: #{tile.25} parent=0 // pred_check
    _
  $region3: #{tile.25} parent=0 // pred_check_branch
    %3 = sbr.rel (0) target = $region5
  $region4: #{tile.25} parent=0 // pred_region
    _
  $region5: #{tile.25} parent=0 // pred_fallthru
    _
  %v4 = vld [vmem:[%s0] ss:$0 sm:$0xff]
  %5 = vst [vmem:[%s1] sm:$0xf] %v4

// kernel: tile.26
$region0: #{tile.26}
  %s0 = inlined_call_operand.vmem [shape: f32[4,16], index: 0, kind: input, shape index: {}]
  %s1 = inlined_call_operand.vmem [shape: f32[1,64], index: 1, kind: output, shape index: {}]
  $region1: #{tile.26} parent=0
    #allocation0 [shape = 'u8[4096]{0}', space=vmem, size = 0x1000, scoped, tag = 'scoped mem for output reshape']
    #allocation1 [shape = 'u8[4096]{0}', space=vmem, size = 0x1000, scoped, tag = 'scoped mem for input reshape']
    %s3 = ssub.s32 16, 1
    %v4 = vld [vmem:[%s0] sm:%s3]
    %5 = vst [vmem:[#allocation1] sm:%s3] %v4
    %v6 = vld [vmem:[#allocation1] sm:$0x1]
    %vm7 = vcmask 130048
    %8 = vst.msk [vmem:[#allocation0] sm:$0x1] %vm7, %v6
    %s9 = scalar_lea.vmem [#allocation1], 3
    %v10 = vld [vmem:[%s9] sm:$0x1]
    %11 = vrot.lane.b32.xlu0 %v10, 48
    %v12 = vpop.permute.xlu0 %11
    %vm13 = vcmask 523648
    %14 = vst.msk [vmem:[#allocation0] sm:$0x1] %vm13, %v12
    %s15 = scalar_lea.vmem [#allocation1], 2
    %v16 = vld [vmem:[%s15] sm:$0x1]
    %17 = vrot.lane.b32.xlu0 %v16, 32
    %v18 = vpop.permute.xlu0 %17
    %vm19 = vcmask 392448
    %20 = vst.msk [vmem:[#allocation0] sm:$0x1] %vm19, %v18
    %s21 = scalar_lea.vmem [#allocation1], 1
    %v22 = vld [vmem:[%s21] sm:$0x1]
    %23 = vrot.lane.b32.xlu0 %v22, 16
    %v24 = vpop.permute.xlu0 %23
    %vm25 = vcmask 261248
    %26 = vst.msk [vmem:[#allocation0] sm:$0x1] %vm25, %v24
    %s28 = ssub.s32 2, 1
    %v29 = vld [vmem:[#allocation0] sm:%s28]
    %s31 = ssub.s32 2, 1
    %32 = vst [vmem:[%s1] sm:%s31] %v29

// kernel: tile.30
$region0: #{tile.30}
  #allocation0 [shape = 's32[1]{0}', space=sflag, size = 0x4, scoped, tag = 'scoped memory for tile.30']
  %s0 = inlined_call_operand.vmem [shape: f32[32], index: 0, kind: input, shape index: {}]
  %s1 = inlined_call_operand.vmem [shape: f32[2,32], index: 1, kind: output, shape index: {}]
  // Predicated region
  $region2: #{tile.30} parent=0 // pred_check
    _
  $region3: #{tile.30} parent=0 // pred_check_branch
    %3 = sbr.rel (0) target = $region5
  $region4: #{tile.30} parent=0 // pred_region
    _
  $region5: #{tile.30} parent=0 // pred_fallthru
    _
  %v4 = vld [vmem:[%s0] ss:$0 sm:$0xff]
  %5 = vst [vmem:[%s1] sm:$0x3] %v4

// kernel: tile.31
$region0: #{tile.31}
  %s0 = inlined_call_operand.vmem [shape: f32[2,32], index: 0, kind: input, shape index: {}]
  %s1 = inlined_call_operand.vmem [shape: f32[1,64], index: 1, kind: output, shape index: {}]
  $region1: #{tile.31} parent=0
    #allocation0 [shape = 'u8[4096]{0}', space=vmem, size = 0x1000, scoped, tag = 'scoped mem for output reshape']
    #allocation1 [shape = 'u8[4096]{0}', space=vmem, size = 0x1000, scoped, tag = 'scoped mem for input reshape']
    %s3 = ssub.s32 4, 1
    %v4 = vld [vmem:[%s0] sm:%s3]
    %5 = vst [vmem:[#allocation1] sm:%s3] %v4
    %v6 = vld [vmem:[#allocation1] sm:$0x1]
    %vm7 = vcmask 261120
    %8 = vst.msk [vmem:[#allocation0] sm:$0x1] %vm7, %v6
    %s9 = scalar_lea.vmem [#allocation1], 1
    %v10 = vld [vmem:[%s9] sm:$0x1]
    %11 = vrot.lane.b32.xlu0 %v10, 32
    %v12 = vpop.permute.xlu0 %11
    %vm13 = vcmask 523520
    %14 = vst.msk [vmem:[#allocation0] sm:$0x1] %vm13, %v12
    %s16 = ssub.s32 2, 1
    %v17 = vld [vmem:[#allocation0] sm:%s16]
    %s19 = ssub.s32 2, 1
    %20 = vst [vmem:[%s1] sm:%s19] %v17

// kernel: inpainting_discriminator.1
$region0: #{inpainting_discriminator.1}
  #allocation0 [shape = 'u32[]', space=smem, size = 0x4, offset = 0x4, fixed_abs, tag = 'smem constant byte address 0x4 - core index']
  #allocation1 [shape = 'u32[72,128]{1,0:T(1,128)}', space=vmem, size = 0x9000, scoped, tag = 'internal scratch']
  #allocation2 [shape = 'f32[1,12,96]{2,1,0:T(8,128)}', space=vmem, size = 0x2000, scoped, tag = 'scratch operand']
  #allocation3 [shape = 'f32[1,8,128]{2,1,0:T(8,128)}', space=vmem, size = 0x1000, scoped, tag = 'scratch operand']
  #allocation4 [shape = 'f32[1,6,192]{2,1,0:T(8,128)}', space=vmem, size = 0x2000, scoped, tag = 'scratch operand']
  #allocation5 [shape = 'f32[1,5,320]{2,1,0:T(8,128)}', space=vmem, size = 0x3000, scoped, tag = 'scratch operand']
  #allocation6 [shape = 'f32[1,1]{1,0:T(1,128)S(1)}', space=vmem, size = 0x200, scoped, tag = 'scoped memory for inpainting_discriminator.1']
  %s0 = inlined_call_operand.vmem [shape: f32[2,20,80], index: 0, kind: input, shape index: {}]
  %s1 = inlined_call_operand.vmem [shape: bf16[5,80,64], index: 1, kind: input, shape index: {}]
  %s2 = inlined_call_operand.vmem [shape: bf16[5,96,64], index: 2, kind: input, shape index: {}]
  %s3 = inlined_call_operand.vmem [shape: bf16[5,128,64], index: 3, kind: input, shape index: {}]
  %s4 = inlined_call_operand.vmem [shape: bf16[5,192,64], index: 4, kind: input, shape index: {}]
  %s5 = inlined_call_operand.vmem [shape: bf16[5,320,64], index: 5, kind: input, shape index: {}]
  %s6 = inlined_call_operand.vmem [shape: f32[1,64], index: 6, kind: input, shape index: {}]
  %s7 = inlined_call_operand.vmem [shape: f32[1,64], index: 7, kind: input, shape index: {}]
  %s8 = inlined_call_operand.vmem [shape: f32[1,64], index: 8, kind: input, shape index: {}]
  %s9 = inlined_call_operand.vmem [shape: f32[1,64], index: 9, kind: input, shape index: {}]
  %s10 = inlined_call_operand.vmem [shape: f32[1,64], index: 10, kind: input, shape index: {}]
  %s11 = inlined_call_operand.vmem [shape: f32[1,64], index: 11, kind: input, shape index: {}]
  %s12 = inlined_call_operand.<no memory space> [shape: f32[1,1], index: 12, kind: input, shape index: {}]
  %s13 = inlined_call_operand.vmem [shape: f32[2,1,1], index: 13, kind: output, shape index: {}]
  %s14 = sld [smem:[#allocation0]]
  $region85: #{inpainting_discriminator.1} parent=0
    _
  %s16 = ssub.s32 1, %s14
  %s17 = scalar_select 0, %s16, %s14
  %v18 = vstv %s12
  %19 = vst [vmem:[#allocation6] sm:$0x1] %v18
  loop: start=0, step=1, limit=4
  $region2: #{inpainting_discriminator.1} parent=0 // loop_pre_header
    _
  $region3: #{inpainting_discriminator.1} parent=0 // loop_header
    %s21 = sphi 0, %s25
    %p22 = scmp.ge.s32.totalorder %s21, 4
    %s31 = sphi 0, %s33
    %s34 = sphi 0, %s31
    %s35 = sphi 0, %s34
    %s51 = sphi 0, %s35
    %s55 = sphi 0, %s55
    %s57 = sphi 0, %s55
    %s58 = sphi 0, %s57
    %s72 = sphi 0, %s58
    %s76 = sphi 0, %s76
    %s78 = sphi 0, %s76
    %s79 = sphi 0, %s78
    %s93 = sphi 0, %s79
    %s97 = sphi 0, %s97
    %s99 = sphi 0, %s97
    %s100 = sphi 0, %s99
    %s114 = sphi 0, %s100
    %s118 = sphi 0, %s118
    %s120 = sphi 0, %s118
    %s121 = sphi 0, %s120
    %s135 = sphi 0, %s121
    %s139 = sphi 0, %s139
    %s141 = sphi 0, %s139
    %s142 = sphi 0, %s141
    %s156 = sphi 0, %s142
    %s160 = sphi 0, %s160
    %s162 = sphi 0, %s160
    %s163 = sphi 0, %s162
    %s177 = sphi 0, %s163
    %s181 = sphi 0, %s181
    %s183 = sphi 0, %s181
    %s184 = sphi 0, %s183
    %s198 = sphi 0, %s184
    %s202 = sphi 0, %s202
    %s204 = sphi 0, %s202
    %s205 = sphi 0, %s204
    %s219 = sphi 0, %s205
    %s223 = sphi 0, %s223
    %s225 = sphi 0, %s223
    %s226 = sphi 0, %s225
    %s240 = sphi 0, %s226
    %s244 = sphi 0, %s244
    %s246 = sphi 0, %s244
    %s247 = sphi 0, %s246
    %s261 = sphi 0, %s247
    %s265 = sphi 0, %s265
    %s267 = sphi 0, %s265
    %s268 = sphi 0, %s267
    %s282 = sphi 0, %s268
    %s286 = sphi 0, %s286
    %s288 = sphi 0, %s286
    %s289 = sphi 0, %s288
    %s303 = sphi 0, %s289
    %s309 = sphi 0, %s311
    %s312 = sphi 0, %s309
    %s313 = sphi 0, %s312
    %s329 = sphi 0, %s313
  $region4: #{inpainting_discriminator.1} parent=0 // loop_header_branch
    %24 = sbr.rel (%p22) target = $region8
  $region5: #{inpainting_discriminator.1} parent=0 // loop_body
    %s26 = ssub.s32 %s21, 1
    %s27 = ssub.s32 %s21, 2
    %s28 = sadd.s32 %s21, 1
    %s29 = ssub.s32 %s21, %s28
    %p30 = scmp.eq.s32.totalorder %s29, 0
    %s32 = sadd.s32 %s31, 1
    %s33 = scalar_select %p30, %s31, %s32
    %p36 = pneg %p30
    %p37 = scmp.eq.s32.totalorder %s21, 1
    %p38 = por %p36, %p37
    %p39 = scmp.ne.s32.totalorder %s31, %s34
    %p40 = scmp.eq.s32.totalorder %s21, 0
    %p41 = por %p39, %p40
    %p42 = scmp.ne.s32.totalorder %s31, %s34
    %p43 = scmp.eq.s32.totalorder %s26, 1
    %p44 = por %p42, %p43
    %p45 = scmp.ne.s32.totalorder %s34, %s35
    %p46 = scmp.eq.s32.totalorder %s26, 0
    %p47 = por %p45, %p46
    %p48 = scmp.ne.s32.totalorder %s34, %s35
    %p49 = scmp.eq.s32.totalorder %s27, 1
    %p50 = por %p48, %p49
    %p52 = scmp.ne.s32.totalorder %s35, %s51
    %p53 = scmp.eq.s32.totalorder %s27, 0
    %p54 = por %p52, %p53
    %s56 = sadd.s32 %s55, 1
    %p59 = scmp.eq.s32.totalorder %s21, 1
    %p60 = scmp.ne.s32.totalorder %s55, %s57
    %p61 = scmp.eq.s32.totalorder %s21, 0
    %p62 = por %p60, %p61
    %p63 = scmp.ne.s32.totalorder %s55, %s57
    %p64 = scmp.eq.s32.totalorder %s26, 1
    %p65 = por %p63, %p64
    %p66 = scmp.ne.s32.totalorder %s57, %s58
    %p67 = scmp.eq.s32.totalorder %s26, 0
    %p68 = por %p66, %p67
    %p69 = scmp.ne.s32.totalorder %s57, %s58
    %p70 = scmp.eq.s32.totalorder %s27, 1
    %p71 = por %p69, %p70
    %p73 = scmp.ne.s32.totalorder %s58, %s72
    %p74 = scmp.eq.s32.totalorder %s27, 0
    %p75 = por %p73, %p74
    %s77 = sadd.s32 %s76, 1
    %p80 = scmp.eq.s32.totalorder %s21, 1
    %p81 = scmp.ne.s32.totalorder %s76, %s78
    %p82 = scmp.eq.s32.totalorder %s21, 0
    %p83 = por %p81, %p82
    %p84 = scmp.ne.s32.totalorder %s76, %s78
    %p85 = scmp.eq.s32.totalorder %s26, 1
    %p86 = por %p84, %p85
    %p87 = scmp.ne.s32.totalorder %s78, %s79
    %p88 = scmp.eq.s32.totalorder %s26, 0
    %p89 = por %p87, %p88
    %p90 = scmp.ne.s32.totalorder %s78, %s79
    %p91 = scmp.eq.s32.totalorder %s27, 1
    %p92 = por %p90, %p91
    %p94 = scmp.ne.s32.totalorder %s79, %s93
    %p95 = scmp.eq.s32.totalorder %s27, 0
    %p96 = por %p94, %p95
    %s98 = sadd.s32 %s97, 1
    %p101 = scmp.eq.s32.totalorder %s21, 1
    %p102 = scmp.ne.s32.totalorder %s97, %s99
    %p103 = scmp.eq.s32.totalorder %s21, 0
    %p104 = por %p102, %p103
    %p105 = scmp.ne.s32.totalorder %s97, %s99
    %p106 = scmp.eq.s32.totalorder %s26, 1
    %p107 = por %p105, %p106
    %p108 = scmp.ne.s32.totalorder %s99, %s100
    %p109 = scmp.eq.s32.totalorder %s26, 0
    %p110 = por %p108, %p109
    %p111 = scmp.ne.s32.totalorder %s99, %s100
    %p112 = scmp.eq.s32.totalorder %s27, 1
    %p113 = por %p111, %p112
    %p115 = scmp.ne.s32.totalorder %s100, %s114
    %p116 = scmp.eq.s32.totalorder %s27, 0
    %p117 = por %p115, %p116
    %s119 = sadd.s32 %s118, 1
    %p122 = scmp.eq.s32.totalorder %s21, 1
    %p123 = scmp.ne.s32.totalorder %s118, %s120
    %p124 = scmp.eq.s32.totalorder %s21, 0
    %p125 = por %p123, %p124
    %p126 = scmp.ne.s32.totalorder %s118, %s120
    %p127 = scmp.eq.s32.totalorder %s26, 1
    %p128 = por %p126, %p127
    %p129 = scmp.ne.s32.totalorder %s120, %s121
    %p130 = scmp.eq.s32.totalorder %s26, 0
    %p131 = por %p129, %p130
    %p132 = scmp.ne.s32.totalorder %s120, %s121
    %p133 = scmp.eq.s32.totalorder %s27, 1
    %p134 = por %p132, %p133
    %p136 = scmp.ne.s32.totalorder %s121, %s135
    %p137 = scmp.eq.s32.totalorder %s27, 0
    %p138 = por %p136, %p137
    %s140 = sadd.s32 %s139, 1
    %p143 = scmp.eq.s32.totalorder %s21, 1
    %p144 = scmp.ne.s32.totalorder %s139, %s141
    %p145 = scmp.eq.s32.totalorder %s21, 0
    %p146 = por %p144, %p145
    %p147 = scmp.ne.s32.totalorder %s139, %s141
    %p148 = scmp.eq.s32.totalorder %s26, 1
    %p149 = por %p147, %p148
    %p150 = scmp.ne.s32.totalorder %s141, %s142
    %p151 = scmp.eq.s32.totalorder %s26, 0
    %p152 = por %p150, %p151
    %p153 = scmp.ne.s32.totalorder %s141, %s142
    %p154 = scmp.eq.s32.totalorder %s27, 1
    %p155 = por %p153, %p154
    %p157 = scmp.ne.s32.totalorder %s142, %s156
    %p158 = scmp.eq.s32.totalorder %s27, 0
    %p159 = por %p157, %p158
    %s161 = sadd.s32 %s160, 1
    %p164 = scmp.eq.s32.totalorder %s21, 1
    %p165 = scmp.ne.s32.totalorder %s160, %s162
    %p166 = scmp.eq.s32.totalorder %s21, 0
    %p167 = por %p165, %p166
    %p168 = scmp.ne.s32.totalorder %s160, %s162
    %p169 = scmp.eq.s32.totalorder %s26, 1
    %p170 = por %p168, %p169
    %p171 = scmp.ne.s32.totalorder %s162, %s163
    %p172 = scmp.eq.s32.totalorder %s26, 0
    %p173 = por %p171, %p172
    %p174 = scmp.ne.s32.totalorder %s162, %s163
    %p175 = scmp.eq.s32.totalorder %s27, 1
    %p176 = por %p174, %p175
    %p178 = scmp.ne.s32.totalorder %s163, %s177
    %p179 = scmp.eq.s32.totalorder %s27, 0
    %p180 = por %p178, %p179
    %s182 = sadd.s32 %s181, 1
    %p185 = scmp.eq.s32.totalorder %s21, 1
    %p186 = scmp.ne.s32.totalorder %s181, %s183
    %p187 = scmp.eq.s32.totalorder %s21, 0
    %p188 = por %p186, %p187
    %p189 = scmp.ne.s32.totalorder %s181, %s183
    %p190 = scmp.eq.s32.totalorder %s26, 1
    %p191 = por %p189, %p190
    %p192 = scmp.ne.s32.totalorder %s183, %s184
    %p193 = scmp.eq.s32.totalorder %s26, 0
    %p194 = por %p192, %p193
    %p195 = scmp.ne.s32.totalorder %s183, %s184
    %p196 = scmp.eq.s32.totalorder %s27, 1
    %p197 = por %p195, %p196
    %p199 = scmp.ne.s32.totalorder %s184, %s198
    %p200 = scmp.eq.s32.totalorder %s27, 0
    %p201 = por %p199, %p200
    %s203 = sadd.s32 %s202, 1
    %p206 = scmp.eq.s32.totalorder %s21, 1
    %p207 = scmp.ne.s32.totalorder %s202, %s204
    %p208 = scmp.eq.s32.totalorder %s21, 0
    %p209 = por %p207, %p208
    %p210 = scmp.ne.s32.totalorder %s202, %s204
    %p211 = scmp.eq.s32.totalorder %s26, 1
    %p212 = por %p210, %p211
    %p213 = scmp.ne.s32.totalorder %s204, %s205
    %p214 = scmp.eq.s32.totalorder %s26, 0
    %p215 = por %p213, %p214
    %p216 = scmp.ne.s32.totalorder %s204, %s205
    %p217 = scmp.eq.s32.totalorder %s27, 1
    %p218 = por %p216, %p217
    %p220 = scmp.ne.s32.totalorder %s205, %s219
    %p221 = scmp.eq.s32.totalorder %s27, 0
    %p222 = por %p220, %p221
    %s224 = sadd.s32 %s223, 1
    %p227 = scmp.eq.s32.totalorder %s21, 1
    %p228 = scmp.ne.s32.totalorder %s223, %s225
    %p229 = scmp.eq.s32.totalorder %s21, 0
    %p230 = por %p228, %p229
    %p231 = scmp.ne.s32.totalorder %s223, %s225
    %p232 = scmp.eq.s32.totalorder %s26, 1
    %p233 = por %p231, %p232
    %p234 = scmp.ne.s32.totalorder %s225, %s226
    %p235 = scmp.eq.s32.totalorder %s26, 0
    %p236 = por %p234, %p235
    %p237 = scmp.ne.s32.totalorder %s225, %s226
    %p238 = scmp.eq.s32.totalorder %s27, 1
    %p239 = por %p237, %p238
    %p241 = scmp.ne.s32.totalorder %s226, %s240
    %p242 = scmp.eq.s32.totalorder %s27, 0
    %p243 = por %p241, %p242
    %s245 = sadd.s32 %s244, 1
    %p248 = scmp.eq.s32.totalorder %s21, 1
    %p249 = scmp.ne.s32.totalorder %s244, %s246
    %p250 = scmp.eq.s32.totalorder %s21, 0
    %p251 = por %p249, %p250
    %p252 = scmp.ne.s32.totalorder %s244, %s246
    %p253 = scmp.eq.s32.totalorder %s26, 1
    %p254 = por %p252, %p253
    %p255 = scmp.ne.s32.totalorder %s246, %s247
    %p256 = scmp.eq.s32.totalorder %s26, 0
    %p257 = por %p255, %p256
    %p258 = scmp.ne.s32.totalorder %s246, %s247
    %p259 = scmp.eq.s32.totalorder %s27, 1
    %p260 = por %p258, %p259
    %p262 = scmp.ne.s32.totalorder %s247, %s261
    %p263 = scmp.eq.s32.totalorder %s27, 0
    %p264 = por %p262, %p263
    %s266 = sadd.s32 %s265, 1
    %p269 = scmp.eq.s32.totalorder %s21, 1
    %p270 = scmp.ne.s32.totalorder %s265, %s267
    %p271 = scmp.eq.s32.totalorder %s21, 0
    %p272 = por %p270, %p271
    %p273 = scmp.ne.s32.totalorder %s265, %s267
    %p274 = scmp.eq.s32.totalorder %s26, 1
    %p275 = por %p273, %p274
    %p276 = scmp.ne.s32.totalorder %s267, %s268
    %p277 = scmp.eq.s32.totalorder %s26, 0
    %p278 = por %p276, %p277
    %p279 = scmp.ne.s32.totalorder %s267, %s268
    %p280 = scmp.eq.s32.totalorder %s27, 1
    %p281 = por %p279, %p280
    %p283 = scmp.ne.s32.totalorder %s268, %s282
    %p284 = scmp.eq.s32.totalorder %s27, 0
    %p285 = por %p283, %p284
    %s287 = sadd.s32 %s286, 1
    %p290 = scmp.eq.s32.totalorder %s21, 1
    %p291 = scmp.ne.s32.totalorder %s286, %s288
    %p292 = scmp.eq.s32.totalorder %s21, 0
    %p293 = por %p291, %p292
    %p294 = scmp.ne.s32.totalorder %s286, %s288
    %p295 = scmp.eq.s32.totalorder %s26, 1
    %p296 = por %p294, %p295
    %p297 = scmp.ne.s32.totalorder %s288, %s289
    %p298 = scmp.eq.s32.totalorder %s26, 0
    %p299 = por %p297, %p298
    %p300 = scmp.ne.s32.totalorder %s288, %s289
    %p301 = scmp.eq.s32.totalorder %s27, 1
    %p302 = por %p300, %p301
    %p304 = scmp.ne.s32.totalorder %s289, %s303
    %p305 = scmp.eq.s32.totalorder %s27, 0
    %p306 = por %p304, %p305
    %s307 = ssub.s32 %s21, %s28
    %p308 = scmp.eq.s32.totalorder %s307, 0
    %s310 = sadd.s32 %s309, 1
    %s311 = scalar_select %p308, %s309, %s310
    %p314 = pneg %p308
    %p315 = scmp.eq.s32.totalorder %s21, 1
    %p316 = por %p314, %p315
    %p317 = scmp.ne.s32.totalorder %s309, %s312
    %p318 = scmp.eq.s32.totalorder %s21, 0
    %p319 = por %p317, %p318
    %p320 = scmp.ne.s32.totalorder %s309, %s312
    %p321 = scmp.eq.s32.totalorder %s26, 1
    %p322 = por %p320, %p321
    %p323 = scmp.ne.s32.totalorder %s312, %s313
    %p324 = scmp.eq.s32.totalorder %s26, 0
    %p325 = por %p323, %p324
    %p326 = scmp.ne.s32.totalorder %s312, %s313
    %p327 = scmp.eq.s32.totalorder %s27, 1
    %p328 = por %p326, %p327
    %p330 = scmp.ne.s32.totalorder %s313, %s329
    %p331 = scmp.eq.s32.totalorder %s27, 0
    %p332 = por %p330, %p331
    %p333 = scmp.le.s32.totalorder 1, %s21
    %p334 = scmp.lt.s32.totalorder %s21, 3
    %p335 = pnand %p333, %p334
    %p336 = pneg %p335
    // Predicated region
    $region9: #{inpainting_discriminator.1} parent=5 // pred_check
      _
    $region10: #{inpainting_discriminator.1} parent=5 // pred_check_branch
      %338 = sbr.rel (%p335) target = $region12
    $region11: #{inpainting_discriminator.1} parent=5 // pred_region
      %s339 = ssub.s32 %s21, 1
      // Predicated region
      $region13: #{inpainting_discriminator.1} parent=11 // pred_check
        %p340 = pneg %p68
      $region14: #{inpainting_discriminator.1} parent=11 // pred_check_branch
        %342 = sbr.rel (%p340) target = $region16
      $region15: #{inpainting_discriminator.1} parent=11 // pred_region
        _
      $region16: #{inpainting_discriminator.1} parent=11 // pred_fallthru
        _
      // Predicated region
      $region17: #{inpainting_discriminator.1} parent=11 // pred_check
        %p343 = pneg %p89
      $region18: #{inpainting_discriminator.1} parent=11 // pred_check_branch
        %345 = sbr.rel (%p343) target = $region20
      $region19: #{inpainting_discriminator.1} parent=11 // pred_region
        _
      $region20: #{inpainting_discriminator.1} parent=11 // pred_fallthru
        _
      // Predicated region
      $region21: #{inpainting_discriminator.1} parent=11 // pred_check
        %p346 = pneg %p110
      $region22: #{inpainting_discriminator.1} parent=11 // pred_check_branch
        %348 = sbr.rel (%p346) target = $region24
      $region23: #{inpainting_discriminator.1} parent=11 // pred_region
        _
      $region24: #{inpainting_discriminator.1} parent=11 // pred_fallthru
        _
      // Predicated region
      $region25: #{inpainting_discriminator.1} parent=11 // pred_check
        %p349 = pneg %p131
      $region26: #{inpainting_discriminator.1} parent=11 // pred_check_branch
        %351 = sbr.rel (%p349) target = $region28
      $region27: #{inpainting_discriminator.1} parent=11 // pred_region
        _
      $region28: #{inpainting_discriminator.1} parent=11 // pred_fallthru
        _
      // Predicated region
      $region29: #{inpainting_discriminator.1} parent=11 // pred_check
        %p352 = pneg %p152
      $region30: #{inpainting_discriminator.1} parent=11 // pred_check_branch
        %354 = sbr.rel (%p352) target = $region32
      $region31: #{inpainting_discriminator.1} parent=11 // pred_region
        _
      $region32: #{inpainting_discriminator.1} parent=11 // pred_fallthru
        _
      // Predicated region
      $region33: #{inpainting_discriminator.1} parent=11 // pred_check
        %p355 = pneg %p173
      $region34: #{inpainting_discriminator.1} parent=11 // pred_check_branch
        %357 = sbr.rel (%p355) target = $region36
      $region35: #{inpainting_discriminator.1} parent=11 // pred_region
        _
      $region36: #{inpainting_discriminator.1} parent=11 // pred_fallthru
        _
      // Predicated region
      $region37: #{inpainting_discriminator.1} parent=11 // pred_check
        %p358 = pneg %p194
      $region38: #{inpainting_discriminator.1} parent=11 // pred_check_branch
        %360 = sbr.rel (%p358) target = $region40
      $region39: #{inpainting_discriminator.1} parent=11 // pred_region
        _
      $region40: #{inpainting_discriminator.1} parent=11 // pred_fallthru
        _
      // Predicated region
      $region41: #{inpainting_discriminator.1} parent=11 // pred_check
        %p361 = pneg %p215
      $region42: #{inpainting_discriminator.1} parent=11 // pred_check_branch
        %363 = sbr.rel (%p361) target = $region44
      $region43: #{inpainting_discriminator.1} parent=11 // pred_region
        _
      $region44: #{inpainting_discriminator.1} parent=11 // pred_fallthru
        _
      // Predicated region
      $region45: #{inpainting_discriminator.1} parent=11 // pred_check
        %p364 = pneg %p236
      $region46: #{inpainting_discriminator.1} parent=11 // pred_check_branch
        %366 = sbr.rel (%p364) target = $region48
      $region47: #{inpainting_discriminator.1} parent=11 // pred_region
        _
      $region48: #{inpainting_discriminator.1} parent=11 // pred_fallthru
        _
      // Predicated region
      $region49: #{inpainting_discriminator.1} parent=11 // pred_check
        %p367 = pneg %p257
      $region50: #{inpainting_discriminator.1} parent=11 // pred_check_branch
        %369 = sbr.rel (%p367) target = $region52
      $region51: #{inpainting_discriminator.1} parent=11 // pred_region
        _
      $region52: #{inpainting_discriminator.1} parent=11 // pred_fallthru
        _
      // Predicated region
      $region53: #{inpainting_discriminator.1} parent=11 // pred_check
        %p370 = pneg %p278
      $region54: #{inpainting_discriminator.1} parent=11 // pred_check_branch
        %372 = sbr.rel (%p370) target = $region56
      $region55: #{inpainting_discriminator.1} parent=11 // pred_region
        _
      $region56: #{inpainting_discriminator.1} parent=11 // pred_fallthru
        _
      // Predicated region
      $region57: #{inpainting_discriminator.1} parent=11 // pred_check
        %p373 = pneg %p299
      $region58: #{inpainting_discriminator.1} parent=11 // pred_check_branch
        %375 = sbr.rel (%p373) target = $region60
      $region59: #{inpainting_discriminator.1} parent=11 // pred_region
        _
      $region60: #{inpainting_discriminator.1} parent=11 // pred_fallthru
        _
    $region12: #{inpainting_discriminator.1} parent=5 // pred_fallthru
      _
    %p376 = scmp.lt.s32.totalorder %s21, 2
    // Predicated region
    $region61: #{inpainting_discriminator.1} parent=5 // pred_check
      %p377 = pneg %p376
    $region62: #{inpainting_discriminator.1} parent=5 // pred_check_branch
      %379 = sbr.rel (%p377) target = $region64
    $region63: #{inpainting_discriminator.1} parent=5 // pred_region
      // Predicated region
      $region65: #{inpainting_discriminator.1} parent=63 // pred_check
        %p380 = pneg %p41
      $region66: #{inpainting_discriminator.1} parent=63 // pred_check_branch
        %382 = sbr.rel (%p380) target = $region68
      $region67: #{inpainting_discriminator.1} parent=63 // pred_region
        %p383 = scmp.lt.s32.totalorder %s21, 1
        %s384 = scalar_select %p383, %s21, 1
        %s385 = smul.addr %s384, 3
        %s386 = smul.addr %s385, 8
        %s387 = scalar_lea.vmem %s0, %s386
      $region68: #{inpainting_discriminator.1} parent=63 // pred_fallthru
        _
    $region64: #{inpainting_discriminator.1} parent=5 // pred_fallthru
      _
    %p388 = scmp.le.s32.totalorder 1, %s21
    %p389 = scmp.lt.s32.totalorder %s21, 3
    %p390 = pnand %p388, %p389
    %p391 = pneg %p390
    // Predicated region
    $region69: #{inpainting_discriminator.1} parent=5 // pred_check
      _
    $region70: #{inpainting_discriminator.1} parent=5 // pred_check_branch
      %393 = sbr.rel (%p390) target = $region72
    $region71: #{inpainting_discriminator.1} parent=5 // pred_region
      %s394 = ssub.s32 %s21, 1
      %p395 = scmp.lt.s32.totalorder %s26, 1
      %s396 = scalar_select %p395, %s26, 1
      %s397 = smul.addr %s396, 3
      %s398 = smul.addr %s397, 8
      %s399 = scalar_lea.vmem %s0, %s398
      %p400 = pneg %p47
      %p401 = pneg %p44
      %p402 = pneg %p68
      %p403 = pneg %p65
      %p404 = pneg %p89
      %p405 = pneg %p86
      %p406 = pneg %p110
      %p407 = pneg %p107
      %p408 = pneg %p131
      %p409 = pneg %p128
      %p410 = pneg %p152
      %p411 = pneg %p149
      %p412 = pneg %p173
      %p413 = pneg %p170
      %p414 = pneg %p194
      %p415 = pneg %p191
      %p416 = pneg %p215
      %p417 = pneg %p212
      %p418 = pneg %p236
      %p419 = pneg %p233
      %p420 = pneg %p257
      %p421 = pneg %p254
      %p422 = pneg %p278
      %p423 = pneg %p275
      %p424 = pneg %p299
      %p425 = pneg %p296
      %p426 = pneg %p325
      %p427 = pneg %p322
      %p428 = scmp.lt.s32.totalorder %s26, 1
      %s429 = scalar_select %p428, %s26, 1
      %s430 = scalar_lea.vmem %s13, %s429
      %p431 = scmp.lt.s32.totalorder %s26, 1
      %s432 = scalar_select %p431, %s26, 1
      %s433 = smul.addr %s432, 3
      %s434 = smul.addr %s433, 8
      %s435 = scalar_lea.vmem %s0, %s434
      %p436 = scmp.lt.s32.totalorder %s26, 1
      %s437 = scalar_select %p436, %s26, 1
      %s438 = scalar_lea.vmem %s13, %s437
      %vm440 = vcmask 785408
      %441 = vst.msk [vmem:[#allocation2] sm:$0xff] %vm440, 0.0
      %vm442 = vcmask 781312
      %443 = vst.msk [vmem:[#allocation2 + $0x8] sm:$0xf] %vm442, 0.0
      %444 = vst [vmem:[#allocation3] sm:$0xff] 0.0
      %445 = vst [vmem:[#allocation4] sm:$0x3f] 0.0
      %vm446 = vcmask 521216
      %447 = vst.msk [vmem:[#allocation4 + $0x8] sm:$0x3f] %vm446, 0.0
      %448 = vst [vmem:[#allocation5] sm:$0x1f] 0.0
      %449 = vst [vmem:[#allocation5 + $0x8] sm:$0x1f] 0.0
      %vm450 = vcmask 520192
      %451 = vst.msk [vmem:[#allocation5 + $0x10] sm:$0x1f] %vm450, 0.0
      %v452 = vld [vmem:[%s6] sm:$0x1]
      %v453 = vld [vmem:[%s435] sm:$0x1]
      %v454 = vpack.c.bf16 %v453, %v453
      %v455 = vld [vmem:[%s1] sm:$0xf]
      %v456 = vld [vmem:[%s1 + $0x4] sm:$0xf]
      %v457 = vld [vmem:[%s1 + $0x8] sm:$0xf]
      %v458 = vld [vmem:[%s1 + $0xc] sm:$0xf]
      %v459 = vld [vmem:[%s1 + $0x10] sm:$0xf]
      %v460 = vld [vmem:[%s1 + $0x14] sm:$0xf]
      %v461 = vld [vmem:[%s1 + $0x18] sm:$0xf]
      %v462 = vld [vmem:[%s1 + $0x1c] sm:$0xf]
      %v463 = vld [vmem:[%s1 + $0x20] sm:$0xf]
      %v464 = vld [vmem:[%s1 + $0x24] sm:$0xf]
      %v475 = vunpack.c.l.b16 %v455
      %v476 = vunpack.c.l.b16 %v456
      %v477 = vunpack.c.l.b16 %v457
      %v478 = vunpack.c.l.b16 %v458
      %v479 = vunpack.c.l.b16 %v459
      %v480 = vunpack.c.l.b16 %v460
      %v481 = vunpack.c.l.b16 %v461
      %v482 = vunpack.c.l.b16 %v462
      %v483 = vunpack.c.l.b16 %v463
      %v484 = vunpack.c.l.b16 %v464
      %v485 = vpack.c.b16 %v476, %v475
      %v486 = vpack.c.b16 %v478, %v477
      %v487 = vpack.c.b16 %v480, %v479
      %v488 = vpack.c.b16 %v482, %v481
      %v489 = vpack.c.b16 %v484, %v483
      %vm495 = vcmask 654336
      %v497 = vsel %vm495, %v454, 0
      %499 = vmatpush.bf16.msra.mxu0 0
      %500 = vmatpush.bf16.msra.mxu0 0
      %501 = vmatpush.bf16.msra.mxu0 0
      %502 = vmatpush.bf16.msra.mxu0 %v489
      %503 = vmatpush.bf16.msra.mxu0 %v488
      %504 = vmatpush.bf16.msra.mxu0 %v487
      %505 = vmatpush.bf16.msra.mxu0 %v486
      %506 = vmatpush.bf16.msra.mxu0 %v485
      %507 = vmatmul.bf16.gmra.mxu0 %v497
      %v508 = vpop.f32.mrf.mxu0
      %v509 = vadd.f32 0.0, %v508
      %v510 = vpop.f32.mrf.mxu0
      %511 = vdwg.mxu0
      %v512 = vadd.f32 %v452, %v509
      %v513 = vld [vmem:[%s435 + $0x1] sm:$0x1]
      %v514 = vpack.c.bf16 %v513, %v513
      %s515 = scalar_lea.vmem %s1, 40
      %v516 = vld [vmem:[%s515] sm:$0xf]
      %v517 = vld [vmem:[%s515 + $0x4] sm:$0xf]
      %v518 = vld [vmem:[%s515 + $0x8] sm:$0xf]
      %v519 = vld [vmem:[%s515 + $0xc] sm:$0xf]
      %v520 = vld [vmem:[%s515 + $0x10] sm:$0xf]
      %v521 = vld [vmem:[%s515 + $0x14] sm:$0xf]
      %v522 = vld [vmem:[%s515 + $0x18] sm:$0xf]
      %v523 = vld [vmem:[%s515 + $0x1c] sm:$0xf]
      %v524 = vld [vmem:[%s515 + $0x20] sm:$0xf]
      %v525 = vld [vmem:[%s515 + $0x24] sm:$0xf]
      %v536 = vunpack.c.l.b16 %v516
      %v537 = vunpack.c.l.b16 %v517
      %v538 = vunpack.c.l.b16 %v518
      %v539 = vunpack.c.l.b16 %v519
      %v540 = vunpack.c.l.b16 %v520
      %v541 = vunpack.c.l.b16 %v521
      %v542 = vunpack.c.l.b16 %v522
      %v543 = vunpack.c.l.b16 %v523
      %v544 = vunpack.c.l.b16 %v524
      %v545 = vunpack.c.l.b16 %v525
      %v546 = vpack.c.b16 %v537, %v536
      %v547 = vpack.c.b16 %v539, %v538
      %v548 = vpack.c.b16 %v541, %v540
      %v549 = vpack.c.b16 %v543, %v542
      %v550 = vpack.c.b16 %v545, %v544
      %v557 = vsel %vm495, %v514, 0
      %559 = vmatpush.bf16.msra.mxu0 0
      %560 = vmatpush.bf16.msra.mxu0 0
      %561 = vmatpush.bf16.msra.mxu0 0
      %562 = vmatpush.bf16.msra.mxu0 %v550
      %563 = vmatpush.bf16.msra.mxu0 %v549
      %564 = vmatpush.bf16.msra.mxu0 %v548
      %565 = vmatpush.bf16.msra.mxu0 %v547
      %566 = vmatpush.bf16.msra.mxu0 %v546
      %567 = vmatmul.bf16.gmra.mxu0 %v557
      %v568 = vpop.f32.mrf.mxu0
      %v569 = vadd.f32 0.0, %v568
      %v570 = vpop.f32.mrf.mxu0
      %571 = vdwg.mxu0
      %v572 = vadd.f32 %v512, %v569
      %v573 = vld [vmem:[%s435 + $0x2] sm:$0x1]
      %v574 = vpack.c.bf16 %v573, %v573
      %s575 = scalar_lea.vmem %s1, 80
      %v576 = vld [vmem:[%s575] sm:$0xf]
      %v577 = vld [vmem:[%s575 + $0x4] sm:$0xf]
      %v578 = vld [vmem:[%s575 + $0x8] sm:$0xf]
      %v579 = vld [vmem:[%s575 + $0xc] sm:$0xf]
      %v580 = vld [vmem:[%s575 + $0x10] sm:$0xf]
      %v581 = vld [vmem:[%s575 + $0x14] sm:$0xf]
      %v582 = vld [vmem:[%s575 + $0x18] sm:$0xf]
      %v583 = vld [vmem:[%s575 + $0x1c] sm:$0xf]
      %v584 = vld [vmem:[%s575 + $0x20] sm:$0xf]
      %v585 = vld [vmem:[%s575 + $0x24] sm:$0xf]
      %v596 = vunpack.c.l.b16 %v576
      %v597 = vunpack.c.l.b16 %v577
      %v598 = vunpack.c.l.b16 %v578
      %v599 = vunpack.c.l.b16 %v579
      %v600 = vunpack.c.l.b16 %v580
      %v601 = vunpack.c.l.b16 %v581
      %v602 = vunpack.c.l.b16 %v582
      %v603 = vunpack.c.l.b16 %v583
      %v604 = vunpack.c.l.b16 %v584
      %v605 = vunpack.c.l.b16 %v585
      %v606 = vpack.c.b16 %v597, %v596
      %v607 = vpack.c.b16 %v599, %v598
      %v608 = vpack.c.b16 %v601, %v600
      %v609 = vpack.c.b16 %v603, %v602
      %v610 = vpack.c.b16 %v605, %v604
      %v617 = vsel %vm495, %v574, 0
      %619 = vmatpush.bf16.msra.mxu0 0
      %620 = vmatpush.bf16.msra.mxu0 0
      %621 = vmatpush.bf16.msra.mxu0 0
      %622 = vmatpush.bf16.msra.mxu0 %v610
      %623 = vmatpush.bf16.msra.mxu0 %v609
      %624 = vmatpush.bf16.msra.mxu0 %v608
      %625 = vmatpush.bf16.msra.mxu0 %v607
      %626 = vmatpush.bf16.msra.mxu0 %v606
      %627 = vmatmul.bf16.gmra.mxu0 %v617
      %v628 = vpop.f32.mrf.mxu0
      %v629 = vadd.f32 0.0, %v628
      %v630 = vpop.f32.mrf.mxu0
      %631 = vdwg.mxu0
      %v632 = vadd.f32 %v572, %v629
      %v633 = vld [vmem:[%s435 + $0x3] sm:$0x1]
      %v634 = vpack.c.bf16 %v633, %v633
      %s635 = scalar_lea.vmem %s1, 120
      %v636 = vld [vmem:[%s635] sm:$0xf]
      %v637 = vld [vmem:[%s635 + $0x4] sm:$0xf]
      %v638 = vld [vmem:[%s635 + $0x8] sm:$0xf]
      %v639 = vld [vmem:[%s635 + $0xc] sm:$0xf]
      %v640 = vld [vmem:[%s635 + $0x10] sm:$0xf]
      %v641 = vld [vmem:[%s635 + $0x14] sm:$0xf]
      %v642 = vld [vmem:[%s635 + $0x18] sm:$0xf]
      %v643 = vld [vmem:[%s635 + $0x1c] sm:$0xf]
      %v644 = vld [vmem:[%s635 + $0x20] sm:$0xf]
      %v645 = vld [vmem:[%s635 + $0x24] sm:$0xf]
      %v656 = vunpack.c.l.b16 %v636
      %v657 = vunpack.c.l.b16 %v637
      %v658 = vunpack.c.l.b16 %v638
      %v659 = vunpack.c.l.b16 %v639
      %v660 = vunpack.c.l.b16 %v640
      %v661 = vunpack.c.l.b16 %v641
      %v662 = vunpack.c.l.b16 %v642
      %v663 = vunpack.c.l.b16 %v643
      %v664 = vunpack.c.l.b16 %v644
      %v665 = vunpack.c.l.b16 %v645
      %v666 = vpack.c.b16 %v657, %v656
      %v667 = vpack.c.b16 %v659, %v658
      %v668 = vpack.c.b16 %v661, %v660
      %v669 = vpack.c.b16 %v663, %v662
      %v670 = vpack.c.b16 %v665, %v664
      %v677 = vsel %vm495, %v634, 0
      %679 = vmatpush.bf16.msra.mxu0 0
      %680 = vmatpush.bf16.msra.mxu0 0
      %681 = vmatpush.bf16.msra.mxu0 0
      %682 = vmatpush.bf16.msra.mxu0 %v670
      %683 = vmatpush.bf16.msra.mxu0 %v669
      %684 = vmatpush.bf16.msra.mxu0 %v668
      %685 = vmatpush.bf16.msra.mxu0 %v667
      %686 = vmatpush.bf16.msra.mxu0 %v666
      %687 = vmatmul.bf16.gmra.mxu0 %v677
      %v688 = vpop.f32.mrf.mxu0
      %v689 = vadd.f32 0.0, %v688
      %v690 = vpop.f32.mrf.mxu0
      %691 = vdwg.mxu0
      %v692 = vadd.f32 %v632, %v689
      %v693 = vld [vmem:[%s435 + $0x4] sm:$0x1]
      %v694 = vpack.c.bf16 %v693, %v693
      %s695 = scalar_lea.vmem %s1, 160
      %v696 = vld [vmem:[%s695] sm:$0xf]
      %v697 = vld [vmem:[%s695 + $0x4] sm:$0xf]
      %v698 = vld [vmem:[%s695 + $0x8] sm:$0xf]
      %v699 = vld [vmem:[%s695 + $0xc] sm:$0xf]
      %v700 = vld [vmem:[%s695 + $0x10] sm:$0xf]
      %v701 = vld [vmem:[%s695 + $0x14] sm:$0xf]
      %v702 = vld [vmem:[%s695 + $0x18] sm:$0xf]
      %v703 = vld [vmem:[%s695 + $0x1c] sm:$0xf]
      %v704 = vld [vmem:[%s695 + $0x20] sm:$0xf]
      %v705 = vld [vmem:[%s695 + $0x24] sm:$0xf]
      %v716 = vunpack.c.l.b16 %v696
      %v717 = vunpack.c.l.b16 %v697
      %v718 = vunpack.c.l.b16 %v698
      %v719 = vunpack.c.l.b16 %v699
      %v720 = vunpack.c.l.b16 %v700
      %v721 = vunpack.c.l.b16 %v701
      %v722 = vunpack.c.l.b16 %v702
      %v723 = vunpack.c.l.b16 %v703
      %v724 = vunpack.c.l.b16 %v704
      %v725 = vunpack.c.l.b16 %v705
      %v726 = vpack.c.b16 %v717, %v716
      %v727 = vpack.c.b16 %v719, %v718
      %v728 = vpack.c.b16 %v721, %v720
      %v729 = vpack.c.b16 %v723, %v722
      %v730 = vpack.c.b16 %v725, %v724
      %v737 = vsel %vm495, %v694, 0
      %739 = vmatpush.bf16.msra.mxu0 0
      %740 = vmatpush.bf16.msra.mxu0 0
      %741 = vmatpush.bf16.msra.mxu0 0
      %742 = vmatpush.bf16.msra.mxu0 %v730
      %743 = vmatpush.bf16.msra.mxu0 %v729
      %744 = vmatpush.bf16.msra.mxu0 %v728
      %745 = vmatpush.bf16.msra.mxu0 %v727
      %746 = vmatpush.bf16.msra.mxu0 %v726
      %747 = vmatmul.bf16.gmra.mxu0 %v737
      %v748 = vpop.f32.mrf.mxu0
      %v749 = vadd.f32 0.0, %v748
      %v750 = vpop.f32.mrf.mxu0
      %751 = vdwg.mxu0
      %v752 = vadd.f32 %v692, %v749
      %vm753 = vcmp.ge.f32.partialorder %v752, 0.0
      %v754 = vmul.f32 %v752, 0.2
      %v755 = vsel %vm753, %v752, %v754
      %v757 = vperm.slane %v755, 0
      %758 = vrot.lane.b32.xlu0 %v757, 16
      %v759 = vpop.permute.xlu0 %758
      %vm761 = vcmask 647296
      %762 = vst.msk [vmem:[#allocation2 + $0x2] sm:$0x1] %vm761, %v759
      %v763 = vld [vmem:[%s435 + $0x2] sm:$0x1]
      %v764 = vpack.c.bf16 %v763, %v763
      %v765 = vld [vmem:[%s1] sm:$0xf]
      %v766 = vld [vmem:[%s1 + $0x4] sm:$0xf]
      %v767 = vld [vmem:[%s1 + $0x8] sm:$0xf]
      %v768 = vld [vmem:[%s1 + $0xc] sm:$0xf]
      %v769 = vld [vmem:[%s1 + $0x10] sm:$0xf]
      %v770 = vld [vmem:[%s1 + $0x14] sm:$0xf]
      %v771 = vld [vmem:[%s1 + $0x18] sm:$0xf]
      %v772 = vld [vmem:[%s1 + $0x1c] sm:$0xf]
      %v773 = vld [vmem:[%s1 + $0x20] sm:$0xf]
      %v774 = vld [vmem:[%s1 + $0x24] sm:$0xf]
      %v785 = vunpack.c.l.b16 %v765
      %v786 = vunpack.c.l.b16 %v766
      %v787 = vunpack.c.l.b16 %v767
      %v788 = vunpack.c.l.b16 %v768
      %v789 = vunpack.c.l.b16 %v769
      %v790 = vunpack.c.l.b16 %v770
      %v791 = vunpack.c.l.b16 %v771
      %v792 = vunpack.c.l.b16 %v772
      %v793 = vunpack.c.l.b16 %v773
      %v794 = vunpack.c.l.b16 %v774
      %v795 = vpack.c.b16 %v786, %v785
      %v796 = vpack.c.b16 %v788, %v787
      %v797 = vpack.c.b16 %v790, %v789
      %v798 = vpack.c.b16 %v792, %v791
      %v799 = vpack.c.b16 %v794, %v793
      %v806 = vsel %vm495, %v764, 0
      %808 = vmatpush.bf16.msra.mxu0 0
      %809 = vmatpush.bf16.msra.mxu0 0
      %810 = vmatpush.bf16.msra.mxu0 0
      %811 = vmatpush.bf16.msra.mxu0 %v799
      %812 = vmatpush.bf16.msra.mxu0 %v798
      %813 = vmatpush.bf16.msra.mxu0 %v797
      %814 = vmatpush.bf16.msra.mxu0 %v796
      %815 = vmatpush.bf16.msra.mxu0 %v795
      %816 = vmatmul.bf16.gmra.mxu0 %v806
      %v817 = vpop.f32.mrf.mxu0
      %v818 = vadd.f32 0.0, %v817
      %v819 = vpop.f32.mrf.mxu0
      %820 = vdwg.mxu0
      %v821 = vadd.f32 %v452, %v818
      %v822 = vld [vmem:[%s435 + $0x3] sm:$0x1]
      %v823 = vpack.c.bf16 %v822, %v822
      %v824 = vld [vmem:[%s515] sm:$0xf]
      %v825 = vld [vmem:[%s515 + $0x4] sm:$0xf]
      %v826 = vld [vmem:[%s515 + $0x8] sm:$0xf]
      %v827 = vld [vmem:[%s515 + $0xc] sm:$0xf]
      %v828 = vld [vmem:[%s515 + $0x10] sm:$0xf]
      %v829 = vld [vmem:[%s515 + $0x14] sm:$0xf]
      %v830 = vld [vmem:[%s515 + $0x18] sm:$0xf]
      %v831 = vld [vmem:[%s515 + $0x1c] sm:$0xf]
      %v832 = vld [vmem:[%s515 + $0x20] sm:$0xf]
      %v833 = vld [vmem:[%s515 + $0x24] sm:$0xf]
      %v844 = vunpack.c.l.b16 %v824
      %v845 = vunpack.c.l.b16 %v825
      %v846 = vunpack.c.l.b16 %v826
      %v847 = vunpack.c.l.b16 %v827
      %v848 = vunpack.c.l.b16 %v828
      %v849 = vunpack.c.l.b16 %v829
      %v850 = vunpack.c.l.b16 %v830
      %v851 = vunpack.c.l.b16 %v831
      %v852 = vunpack.c.l.b16 %v832
      %v853 = vunpack.c.l.b16 %v833
      %v854 = vpack.c.b16 %v845, %v844
      %v855 = vpack.c.b16 %v847, %v846
      %v856 = vpack.c.b16 %v849, %v848
      %v857 = vpack.c.b16 %v851, %v850
      %v858 = vpack.c.b16 %v853, %v852
      %v865 = vsel %vm495, %v823, 0
      %867 = vmatpush.bf16.msra.mxu0 0
      %868 = vmatpush.bf16.msra.mxu0 0
      %869 = vmatpush.bf16.msra.mxu0 0
      %870 = vmatpush.bf16.msra.mxu0 %v858
      %871 = vmatpush.bf16.msra.mxu0 %v857
      %872 = vmatpush.bf16.msra.mxu0 %v856
      %873 = vmatpush.bf16.msra.mxu0 %v855
      %874 = vmatpush.bf16.msra.mxu0 %v854
      %875 = vmatmul.bf16.gmra.mxu0 %v865
      %v876 = vpop.f32.mrf.mxu0
      %v877 = vadd.f32 0.0, %v876
      %v878 = vpop.f32.mrf.mxu0
      %879 = vdwg.mxu0
      %v880 = vadd.f32 %v821, %v877
      %v881 = vld [vmem:[%s435 + $0x4] sm:$0x1]
      %v882 = vpack.c.bf16 %v881, %v881
      %v883 = vld [vmem:[%s575] sm:$0xf]
      %v884 = vld [vmem:[%s575 + $0x4] sm:$0xf]
      %v885 = vld [vmem:[%s575 + $0x8] sm:$0xf]
      %v886 = vld [vmem:[%s575 + $0xc] sm:$0xf]
      %v887 = vld [vmem:[%s575 + $0x10] sm:$0xf]
      %v888 = vld [vmem:[%s575 + $0x14] sm:$0xf]
      %v889 = vld [vmem:[%s575 + $0x18] sm:$0xf]
      %v890 = vld [vmem:[%s575 + $0x1c] sm:$0xf]
      %v891 = vld [vmem:[%s575 + $0x20] sm:$0xf]
      %v892 = vld [vmem:[%s575 + $0x24] sm:$0xf]
      %v903 = vunpack.c.l.b16 %v883
      %v904 = vunpack.c.l.b16 %v884
      %v905 = vunpack.c.l.b16 %v885
      %v906 = vunpack.c.l.b16 %v886
      %v907 = vunpack.c.l.b16 %v887
      %v908 = vunpack.c.l.b16 %v888
      %v909 = vunpack.c.l.b16 %v889
      %v910 = vunpack.c.l.b16 %v890
      %v911 = vunpack.c.l.b16 %v891
      %v912 = vunpack.c.l.b16 %v892
      %v913 = vpack.c.b16 %v904, %v903
      %v914 = vpack.c.b16 %v906, %v905
      %v915 = vpack.c.b16 %v908, %v907
      %v916 = vpack.c.b16 %v910, %v909
      %v917 = vpack.c.b16 %v912, %v911
      %v924 = vsel %vm495, %v882, 0
      %926 = vmatpush.bf16.msra.mxu0 0
      %927 = vmatpush.bf16.msra.mxu0 0
      %928 = vmatpush.bf16.msra.mxu0 0
      %929 = vmatpush.bf16.msra.mxu0 %v917
      %930 = vmatpush.bf16.msra.mxu0 %v916
      %931 = vmatpush.bf16.msra.mxu0 %v915
      %932 = vmatpush.bf16.msra.mxu0 %v914
      %933 = vmatpush.bf16.msra.mxu0 %v913
      %934 = vmatmul.bf16.gmra.mxu0 %v924
      %v935 = vpop.f32.mrf.mxu0
      %v936 = vadd.f32 0.0, %v935
      %v937 = vpop.f32.mrf.mxu0
      %938 = vdwg.mxu0
      %v939 = vadd.f32 %v880, %v936
      %v940 = vld [vmem:[%s435 + $0x5] sm:$0x1]
      %v941 = vpack.c.bf16 %v940, %v940
      %v942 = vld [vmem:[%s635] sm:$0xf]
      %v943 = vld [vmem:[%s635 + $0x4] sm:$0xf]
      %v944 = vld [vmem:[%s635 + $0x8] sm:$0xf]
      %v945 = vld [vmem:[%s635 + $0xc] sm:$0xf]
      %v946 = vld [vmem:[%s635 + $0x10] sm:$0xf]
      %v947 = vld [vmem:[%s635 + $0x14] sm:$0xf]
      %v948 = vld [vmem:[%s635 + $0x18] sm:$0xf]
      %v949 = vld [vmem:[%s635 + $0x1c] sm:$0xf]
      %v950 = vld [vmem:[%s635 + $0x20] sm:$0xf]
      %v951 = vld [vmem:[%s635 + $0x24] sm:$0xf]
      %v962 = vunpack.c.l.b16 %v942
      %v963 = vunpack.c.l.b16 %v943
      %v964 = vunpack.c.l.b16 %v944
      %v965 = vunpack.c.l.b16 %v945
      %v966 = vunpack.c.l.b16 %v946
      %v967 = vunpack.c.l.b16 %v947
      %v968 = vunpack.c.l.b16 %v948
      %v969 = vunpack.c.l.b16 %v949
      %v970 = vunpack.c.l.b16 %v950
      %v971 = vunpack.c.l.b16 %v951
      %v972 = vpack.c.b16 %v963, %v962
      %v973 = vpack.c.b16 %v965, %v964
      %v974 = vpack.c.b16 %v967, %v966
      %v975 = vpack.c.b16 %v969, %v968
      %v976 = vpack.c.b16 %v971, %v970
      %v983 = vsel %vm495, %v941, 0
      %985 = vmatpush.bf16.msra.mxu0 0
      %986 = vmatpush.bf16.msra.mxu0 0
      %987 = vmatpush.bf16.msra.mxu0 0
      %988 = vmatpush.bf16.msra.mxu0 %v976
      %989 = vmatpush.bf16.msra.mxu0 %v975
      %990 = vmatpush.bf16.msra.mxu0 %v974
      %991 = vmatpush.bf16.msra.mxu0 %v973
      %992 = vmatpush.bf16.msra.mxu0 %v972
      %993 = vmatmul.bf16.gmra.mxu0 %v983
      %v994 = vpop.f32.mrf.mxu0
      %v995 = vadd.f32 0.0, %v994
      %v996 = vpop.f32.mrf.mxu0
      %997 = vdwg.mxu0
      %v998 = vadd.f32 %v939, %v995
      %v999 = vld [vmem:[%s435 + $0x6] sm:$0x1]
      %v1000 = vpack.c.bf16 %v999, %v999
      %v1001 = vld [vmem:[%s695] sm:$0xf]
      %v1002 = vld [vmem:[%s695 + $0x4] sm:$0xf]
      %v1003 = vld [vmem:[%s695 + $0x8] sm:$0xf]
      %v1004 = vld [vmem:[%s695 + $0xc] sm:$0xf]
      %v1005 = vld [vmem:[%s695 + $0x10] sm:$0xf]
      %v1006 = vld [vmem:[%s695 + $0x14] sm:$0xf]
      %v1007 = vld [vmem:[%s695 + $0x18] sm:$0xf]
      %v1008 = vld [vmem:[%s695 + $0x1c] sm:$0xf]
      %v1009 = vld [vmem:[%s695 + $0x20] sm:$0xf]
      %v1010 = vld [vmem:[%s695 + $0x24] sm:$0xf]
      %v1021 = vunpack.c.l.b16 %v1001
      %v1022 = vunpack.c.l.b16 %v1002
      %v1023 = vunpack.c.l.b16 %v1003
      %v1024 = vunpack.c.l.b16 %v1004
      %v1025 = vunpack.c.l.b16 %v1005
      %v1026 = vunpack.c.l.b16 %v1006
      %v1027 = vunpack.c.l.b16 %v1007
      %v1028 = vunpack.c.l.b16 %v1008
      %v1029 = vunpack.c.l.b16 %v1009
      %v1030 = vunpack.c.l.b16 %v1010
      %v1031 = vpack.c.b16 %v1022, %v1021
      %v1032 = vpack.c.b16 %v1024, %v1023
      %v1033 = vpack.c.b16 %v1026, %v1025
      %v1034 = vpack.c.b16 %v1028, %v1027
      %v1035 = vpack.c.b16 %v1030, %v1029
      %v1042 = vsel %vm495, %v1000, 0
      %1044 = vmatpush.bf16.msra.mxu0 0
      %1045 = vmatpush.bf16.msra.mxu0 0
      %1046 = vmatpush.bf16.msra.mxu0 0
      %1047 = vmatpush.bf16.msra.mxu0 %v1035
      %1048 = vmatpush.bf16.msra.mxu0 %v1034
      %1049 = vmatpush.bf16.msra.mxu0 %v1033
      %1050 = vmatpush.bf16.msra.mxu0 %v1032
      %1051 = vmatpush.bf16.msra.mxu0 %v1031
      %1052 = vmatmul.bf16.gmra.mxu0 %v1042
      %v1053 = vpop.f32.mrf.mxu0
      %v1054 = vadd.f32 0.0, %v1053
      %v1055 = vpop.f32.mrf.mxu0
      %1056 = vdwg.mxu0
      %v1057 = vadd.f32 %v998, %v1054
      %vm1058 = vcmp.ge.f32.partialorder %v1057, 0.0
      %v1059 = vmul.f32 %v1057, 0.2
      %v1060 = vsel %vm1058, %v1057, %v1059
      %v1062 = vperm.slane %v1060, 0
      %1063 = vrot.lane.b32.xlu0 %v1062, 16
      %v1064 = vpop.permute.xlu0 %1063
      %1066 = vst.msk [vmem:[#allocation2 + $0x3] sm:$0x1] %vm761, %v1064
      %v1067 = vld [vmem:[%s435 + $0x4] sm:$0x1]
      %v1068 = vpack.c.bf16 %v1067, %v1067
      %v1069 = vld [vmem:[%s1] sm:$0xf]
      %v1070 = vld [vmem:[%s1 + $0x4] sm:$0xf]
      %v1071 = vld [vmem:[%s1 + $0x8] sm:$0xf]
      %v1072 = vld [vmem:[%s1 + $0xc] sm:$0xf]
      %v1073 = vld [vmem:[%s1 + $0x10] sm:$0xf]
      %v1074 = vld [vmem:[%s1 + $0x14] sm:$0xf]
      %v1075 = vld [vmem:[%s1 + $0x18] sm:$0xf]
      %v1076 = vld [vmem:[%s1 + $0x1c] sm:$0xf]
      %v1077 = vld [vmem:[%s1 + $0x20] sm:$0xf]
      %v1078 = vld [vmem:[%s1 + $0x24] sm:$0xf]
      %v1089 = vunpack.c.l.b16 %v1069
      %v1090 = vunpack.c.l.b16 %v1070
      %v1091 = vunpack.c.l.b16 %v1071
      %v1092 = vunpack.c.l.b16 %v1072
      %v1093 = vunpack.c.l.b16 %v1073
      %v1094 = vunpack.c.l.b16 %v1074
      %v1095 = vunpack.c.l.b16 %v1075
      %v1096 = vunpack.c.l.b16 %v1076
      %v1097 = vunpack.c.l.b16 %v1077
      %v1098 = vunpack.c.l.b16 %v1078
      %v1099 = vpack.c.b16 %v1090, %v1089
      %v1100 = vpack.c.b16 %v1092, %v1091
      %v1101 = vpack.c.b16 %v1094, %v1093
      %v1102 = vpack.c.b16 %v1096, %v1095
      %v1103 = vpack.c.b16 %v1098, %v1097
      %v1110 = vsel %vm495, %v1068, 0
      %1112 = vmatpush.bf16.msra.mxu0 0
      %1113 = vmatpush.bf16.msra.mxu0 0
      %1114 = vmatpush.bf16.msra.mxu0 0
      %1115 = vmatpush.bf16.msra.mxu0 %v1103
      %1116 = vmatpush.bf16.msra.mxu0 %v1102
      %1117 = vmatpush.bf16.msra.mxu0 %v1101
      %1118 = vmatpush.bf16.msra.mxu0 %v1100
      %1119 = vmatpush.bf16.msra.mxu0 %v1099
      %1120 = vmatmul.bf16.gmra.mxu0 %v1110
      %v1121 = vpop.f32.mrf.mxu0
      %v1122 = vadd.f32 0.0, %v1121
      %v1123 = vpop.f32.mrf.mxu0
      %1124 = vdwg.mxu0
      %v1125 = vadd.f32 %v452, %v1122
      %v1126 = vld [vmem:[%s435 + $0x5] sm:$0x1]
      %v1127 = vpack.c.bf16 %v1126, %v1126
      %v1128 = vld [vmem:[%s515] sm:$0xf]
      %v1129 = vld [vmem:[%s515 + $0x4] sm:$0xf]
      %v1130 = vld [vmem:[%s515 + $0x8] sm:$0xf]
      %v1131 = vld [vmem:[%s515 + $0xc] sm:$0xf]
      %v1132 = vld [vmem:[%s515 + $0x10] sm:$0xf]
      %v1133 = vld [vmem:[%s515 + $0x14] sm:$0xf]
      %v1134 = vld [vmem:[%s515 + $0x18] sm:$0xf]
      %v1135 = vld [vmem:[%s515 + $0x1c] sm:$0xf]
      %v1136 = vld [vmem:[%s515 + $0x20] sm:$0xf]
      %v1137 = vld [vmem:[%s515 + $0x24] sm:$0xf]
      %v1148 = vunpack.c.l.b16 %v1128
      %v1149 = vunpack.c.l.b16 %v1129
      %v1150 = vunpack.c.l.b16 %v1130
      %v1151 = vunpack.c.l.b16 %v1131
      %v1152 = vunpack.c.l.b16 %v1132
      %v1153 = vunpack.c.l.b16 %v1133
      %v1154 = vunpack.c.l.b16 %v1134
      %v1155 = vunpack.c.l.b16 %v1135
      %v1156 = vunpack.c.l.b16 %v1136
      %v1157 = vunpack.c.l.b16 %v1137
      %v1158 = vpack.c.b16 %v1149, %v1148
      %v1159 = vpack.c.b16 %v1151, %v1150
      %v1160 = vpack.c.b16 %v1153, %v1152
      %v1161 = vpack.c.b16 %v1155, %v1154
      %v1162 = vpack.c.b16 %v1157, %v1156
      %v1169 = vsel %vm495, %v1127, 0
      %1171 = vmatpush.bf16.msra.mxu0 0
      %1172 = vmatpush.bf16.msra.mxu0 0
      %1173 = vmatpush.bf16.msra.mxu0 0
      %1174 = vmatpush.bf16.msra.mxu0 %v1162
      %1175 = vmatpush.bf16.msra.mxu0 %v1161
      %1176 = vmatpush.bf16.msra.mxu0 %v1160
      %1177 = vmatpush.bf16.msra.mxu0 %v1159
      %1178 = vmatpush.bf16.msra.mxu0 %v1158
      %1179 = vmatmul.bf16.gmra.mxu0 %v1169
      %v1180 = vpop.f32.mrf.mxu0
      %v1181 = vadd.f32 0.0, %v1180
      %v1182 = vpop.f32.mrf.mxu0
      %1183 = vdwg.mxu0
      %v1184 = vadd.f32 %v1125, %v1181
      %v1185 = vld [vmem:[%s435 + $0x6] sm:$0x1]
      %v1186 = vpack.c.bf16 %v1185, %v1185
      %v1187 = vld [vmem:[%s575] sm:$0xf]
      %v1188 = vld [vmem:[%s575 + $0x4] sm:$0xf]
      %v1189 = vld [vmem:[%s575 + $0x8] sm:$0xf]
      %v1190 = vld [vmem:[%s575 + $0xc] sm:$0xf]
      %v1191 = vld [vmem:[%s575 + $0x10] sm:$0xf]
      %v1192 = vld [vmem:[%s575 + $0x14] sm:$0xf]
      %v1193 = vld [vmem:[%s575 + $0x18] sm:$0xf]
      %v1194 = vld [vmem:[%s575 + $0x1c] sm:$0xf]
      %v1195 = vld [vmem:[%s575 + $0x20] sm:$0xf]
      %v1196 = vld [vmem:[%s575 + $0x24] sm:$0xf]
      %v1207 = vunpack.c.l.b16 %v1187
      %v1208 = vunpack.c.l.b16 %v1188
      %v1209 = vunpack.c.l.b16 %v1189
      %v1210 = vunpack.c.l.b16 %v1190
      %v1211 = vunpack.c.l.b16 %v1191
      %v1212 = vunpack.c.l.b16 %v1192
      %v1213 = vunpack.c.l.b16 %v1193
      %v1214 = vunpack.c.l.b16 %v1194
      %v1215 = vunpack.c.l.b16 %v1195
      %v1216 = vunpack.c.l.b16 %v1196
      %v1217 = vpack.c.b16 %v1208, %v1207
      %v1218 = vpack.c.b16 %v1210, %v1209
      %v1219 = vpack.c.b16 %v1212, %v1211
      %v1220 = vpack.c.b16 %v1214, %v1213
      %v1221 = vpack.c.b16 %v1216, %v1215
      %v1228 = vsel %vm495, %v1186, 0
      %1230 = vmatpush.bf16.msra.mxu0 0
      %1231 = vmatpush.bf16.msra.mxu0 0
      %1232 = vmatpush.bf16.msra.mxu0 0
      %1233 = vmatpush.bf16.msra.mxu0 %v1221
      %1234 = vmatpush.bf16.msra.mxu0 %v1220
      %1235 = vmatpush.bf16.msra.mxu0 %v1219
      %1236 = vmatpush.bf16.msra.mxu0 %v1218
      %1237 = vmatpush.bf16.msra.mxu0 %v1217
      %1238 = vmatmul.bf16.gmra.mxu0 %v1228
      %v1239 = vpop.f32.mrf.mxu0
      %v1240 = vadd.f32 0.0, %v1239
      %v1241 = vpop.f32.mrf.mxu0
      %1242 = vdwg.mxu0
      %v1243 = vadd.f32 %v1184, %v1240
      %v1244 = vld [vmem:[%s435 + $0x7] sm:$0x1]
      %v1245 = vpack.c.bf16 %v1244, %v1244
      %v1246 = vld [vmem:[%s635] sm:$0xf]
      %v1247 = vld [vmem:[%s635 + $0x4] sm:$0xf]
      %v1248 = vld [vmem:[%s635 + $0x8] sm:$0xf]
      %v1249 = vld [vmem:[%s635 + $0xc] sm:$0xf]
      %v1250 = vld [vmem:[%s635 + $0x10] sm:$0xf]
      %v1251 = vld [vmem:[%s635 + $0x14] sm:$0xf]
      %v1252 = vld [vmem:[%s635 + $0x18] sm:$0xf]
      %v1253 = vld [vmem:[%s635 + $0x1c] sm:$0xf]
      %v1254 = vld [vmem:[%s635 + $0x20] sm:$0xf]
      %v1255 = vld [vmem:[%s635 + $0x24] sm:$0xf]
      %v1266 = vunpack.c.l.b16 %v1246
      %v1267 = vunpack.c.l.b16 %v1247
      %v1268 = vunpack.c.l.b16 %v1248
      %v1269 = vunpack.c.l.b16 %v1249
      %v1270 = vunpack.c.l.b16 %v1250
      %v1271 = vunpack.c.l.b16 %v1251
      %v1272 = vunpack.c.l.b16 %v1252
      %v1273 = vunpack.c.l.b16 %v1253
      %v1274 = vunpack.c.l.b16 %v1254
      %v1275 = vunpack.c.l.b16 %v1255
      %v1276 = vpack.c.b16 %v1267, %v1266
      %v1277 = vpack.c.b16 %v1269, %v1268
      %v1278 = vpack.c.b16 %v1271, %v1270
      %v1279 = vpack.c.b16 %v1273, %v1272
      %v1280 = vpack.c.b16 %v1275, %v1274
      %v1287 = vsel %vm495, %v1245, 0
      %1289 = vmatpush.bf16.msra.mxu0 0
      %1290 = vmatpush.bf16.msra.mxu0 0
      %1291 = vmatpush.bf16.msra.mxu0 0
      %1292 = vmatpush.bf16.msra.mxu0 %v1280
      %1293 = vmatpush.bf16.msra.mxu0 %v1279
      %1294 = vmatpush.bf16.msra.mxu0 %v1278
      %1295 = vmatpush.bf16.msra.mxu0 %v1277
      %1296 = vmatpush.bf16.msra.mxu0 %v1276
      %1297 = vmatmul.bf16.gmra.mxu0 %v1287
      %v1298 = vpop.f32.mrf.mxu0
      %v1299 = vadd.f32 0.0, %v1298
      %v1300 = vpop.f32.mrf.mxu0
      %1301 = vdwg.mxu0
      %v1302 = vadd.f32 %v1243, %v1299
      %v1303 = vld [vmem:[%s435 + $0x8] sm:$0x1]
      %v1304 = vpack.c.bf16 %v1303, %v1303
      %v1305 = vld [vmem:[%s695] sm:$0xf]
      %v1306 = vld [vmem:[%s695 + $0x4] sm:$0xf]
      %v1307 = vld [vmem:[%s695 + $0x8] sm:$0xf]
      %v1308 = vld [vmem:[%s695 + $0xc] sm:$0xf]
      %v1309 = vld [vmem:[%s695 + $0x10] sm:$0xf]
      %v1310 = vld [vmem:[%s695 + $0x14] sm:$0xf]
      %v1311 = vld [vmem:[%s695 + $0x18] sm:$0xf]
      %v1312 = vld [vmem:[%s695 + $0x1c] sm:$0xf]
      %v1313 = vld [vmem:[%s695 + $0x20] sm:$0xf]
      %v1314 = vld [vmem:[%s695 + $0x24] sm:$0xf]
      %v1325 = vunpack.c.l.b16 %v1305
      %v1326 = vunpack.c.l.b16 %v1306
      %v1327 = vunpack.c.l.b16 %v1307
      %v1328 = vunpack.c.l.b16 %v1308
      %v1329 = vunpack.c.l.b16 %v1309
      %v1330 = vunpack.c.l.b16 %v1310
      %v1331 = vunpack.c.l.b16 %v1311
      %v1332 = vunpack.c.l.b16 %v1312
      %v1333 = vunpack.c.l.b16 %v1313
      %v1334 = vunpack.c.l.b16 %v1314
      %v1335 = vpack.c.b16 %v1326, %v1325
      %v1336 = vpack.c.b16 %v1328, %v1327
      %v1337 = vpack.c.b16 %v1330, %v1329
      %v1338 = vpack.c.b16 %v1332, %v1331
      %v1339 = vpack.c.b16 %v1334, %v1333
      %v1346 = vsel %vm495, %v1304, 0
      %1348 = vmatpush.bf16.msra.mxu0 0
      %1349 = vmatpush.bf16.msra.mxu0 0
      %1350 = vmatpush.bf16.msra.mxu0 0
      %1351 = vmatpush.bf16.msra.mxu0 %v1339
      %1352 = vmatpush.bf16.msra.mxu0 %v1338
      %1353 = vmatpush.bf16.msra.mxu0 %v1337
      %1354 = vmatpush.bf16.msra.mxu0 %v1336
      %1355 = vmatpush.bf16.msra.mxu0 %v1335
      %1356 = vmatmul.bf16.gmra.mxu0 %v1346
      %v1357 = vpop.f32.mrf.mxu0
      %v1358 = vadd.f32 0.0, %v1357
      %v1359 = vpop.f32.mrf.mxu0
      %1360 = vdwg.mxu0
      %v1361 = vadd.f32 %v1302, %v1358
      %vm1362 = vcmp.ge.f32.partialorder %v1361, 0.0
      %v1363 = vmul.f32 %v1361, 0.2
      %v1364 = vsel %vm1362, %v1361, %v1363
      %v1366 = vperm.slane %v1364, 0
      %1367 = vrot.lane.b32.xlu0 %v1366, 16
      %v1368 = vpop.permute.xlu0 %1367
      %1370 = vst.msk [vmem:[#allocation2 + $0x4] sm:$0x1] %vm761, %v1368
      %v1371 = vld [vmem:[%s435 + $0x6] sm:$0x1]
      %v1372 = vpack.c.bf16 %v1371, %v1371
      %v1373 = vld [vmem:[%s1] sm:$0xf]
      %v1374 = vld [vmem:[%s1 + $0x4] sm:$0xf]
      %v1375 = vld [vmem:[%s1 + $0x8] sm:$0xf]
      %v1376 = vld [vmem:[%s1 + $0xc] sm:$0xf]
      %v1377 = vld [vmem:[%s1 + $0x10] sm:$0xf]
      %v1378 = vld [vmem:[%s1 + $0x14] sm:$0xf]
      %v1379 = vld [vmem:[%s1 + $0x18] sm:$0xf]
      %v1380 = vld [vmem:[%s1 + $0x1c] sm:$0xf]
      %v1381 = vld [vmem:[%s1 + $0x20] sm:$0xf]
      %v1382 = vld [vmem:[%s1 + $0x24] sm:$0xf]
      %v1393 = vunpack.c.l.b16 %v1373
      %v1394 = vunpack.c.l.b16 %v1374
      %v1395 = vunpack.c.l.b16 %v1375
      %v1396 = vunpack.c.l.b16 %v1376
      %v1397 = vunpack.c.l.b16 %v1377
      %v1398 = vunpack.c.l.b16 %v1378
      %v1399 = vunpack.c.l.b16 %v1379
      %v1400 = vunpack.c.l.b16 %v1380
      %v1401 = vunpack.c.l.b16 %v1381
      %v1402 = vunpack.c.l.b16 %v1382
      %v1403 = vpack.c.b16 %v1394, %v1393
      %v1404 = vpack.c.b16 %v1396, %v1395
      %v1405 = vpack.c.b16 %v1398, %v1397
      %v1406 = vpack.c.b16 %v1400, %v1399
      %v1407 = vpack.c.b16 %v1402, %v1401
      %v1414 = vsel %vm495, %v1372, 0
      %1416 = vmatpush.bf16.msra.mxu0 0
      %1417 = vmatpush.bf16.msra.mxu0 0
      %1418 = vmatpush.bf16.msra.mxu0 0
      %1419 = vmatpush.bf16.msra.mxu0 %v1407
      %1420 = vmatpush.bf16.msra.mxu0 %v1406
      %1421 = vmatpush.bf16.msra.mxu0 %v1405
      %1422 = vmatpush.bf16.msra.mxu0 %v1404
      %1423 = vmatpush.bf16.msra.mxu0 %v1403
      %1424 = vmatmul.bf16.gmra.mxu0 %v1414
      %v1425 = vpop.f32.mrf.mxu0
      %v1426 = vadd.f32 0.0, %v1425
      %v1427 = vpop.f32.mrf.mxu0
      %1428 = vdwg.mxu0
      %v1429 = vadd.f32 %v452, %v1426
      %v1430 = vld [vmem:[%s435 + $0x7] sm:$0x1]
      %v1431 = vpack.c.bf16 %v1430, %v1430
      %v1432 = vld [vmem:[%s515] sm:$0xf]
      %v1433 = vld [vmem:[%s515 + $0x4] sm:$0xf]
      %v1434 = vld [vmem:[%s515 + $0x8] sm:$0xf]
      %v1435 = vld [vmem:[%s515 + $0xc] sm:$0xf]
      %v1436 = vld [vmem:[%s515 + $0x10] sm:$0xf]
      %v1437 = vld [vmem:[%s515 + $0x14] sm:$0xf]
      %v1438 = vld [vmem:[%s515 + $0x18] sm:$0xf]
      %v1439 = vld [vmem:[%s515 + $0x1c] sm:$0xf]
      %v1440 = vld [vmem:[%s515 + $0x20] sm:$0xf]
      %v1441 = vld [vmem:[%s515 + $0x24] sm:$0xf]
      %v1452 = vunpack.c.l.b16 %v1432
      %v1453 = vunpack.c.l.b16 %v1433
      %v1454 = vunpack.c.l.b16 %v1434
      %v1455 = vunpack.c.l.b16 %v1435
      %v1456 = vunpack.c.l.b16 %v1436
      %v1457 = vunpack.c.l.b16 %v1437
      %v1458 = vunpack.c.l.b16 %v1438
      %v1459 = vunpack.c.l.b16 %v1439
      %v1460 = vunpack.c.l.b16 %v1440
      %v1461 = vunpack.c.l.b16 %v1441
      %v1462 = vpack.c.b16 %v1453, %v1452
      %v1463 = vpack.c.b16 %v1455, %v1454
      %v1464 = vpack.c.b16 %v1457, %v1456
      %v1465 = vpack.c.b16 %v1459, %v1458
      %v1466 = vpack.c.b16 %v1461, %v1460
      %v1473 = vsel %vm495, %v1431, 0
      %1475 = vmatpush.bf16.msra.mxu0 0
      %1476 = vmatpush.bf16.msra.mxu0 0
      %1477 = vmatpush.bf16.msra.mxu0 0
      %1478 = vmatpush.bf16.msra.mxu0 %v1466
      %1479 = vmatpush.bf16.msra.mxu0 %v1465
      %1480 = vmatpush.bf16.msra.mxu0 %v1464
      %1481 = vmatpush.bf16.msra.mxu0 %v1463
      %1482 = vmatpush.bf16.msra.mxu0 %v1462
      %1483 = vmatmul.bf16.gmra.mxu0 %v1473
      %v1484 = vpop.f32.mrf.mxu0
      %v1485 = vadd.f32 0.0, %v1484
      %v1486 = vpop.f32.mrf.mxu0
      %1487 = vdwg.mxu0
      %v1488 = vadd.f32 %v1429, %v1485
      %v1489 = vld [vmem:[%s435 + $0x8] sm:$0x1]
      %v1490 = vpack.c.bf16 %v1489, %v1489
      %v1491 = vld [vmem:[%s575] sm:$0xf]
      %v1492 = vld [vmem:[%s575 + $0x4] sm:$0xf]
      %v1493 = vld [vmem:[%s575 + $0x8] sm:$0xf]
      %v1494 = vld [vmem:[%s575 + $0xc] sm:$0xf]
      %v1495 = vld [vmem:[%s575 + $0x10] sm:$0xf]
      %v1496 = vld [vmem:[%s575 + $0x14] sm:$0xf]
      %v1497 = vld [vmem:[%s575 + $0x18] sm:$0xf]
      %v1498 = vld [vmem:[%s575 + $0x1c] sm:$0xf]
      %v1499 = vld [vmem:[%s575 + $0x20] sm:$0xf]
      %v1500 = vld [vmem:[%s575 + $0x24] sm:$0xf]
      %v1511 = vunpack.c.l.b16 %v1491
      %v1512 = vunpack.c.l.b16 %v1492
      %v1513 = vunpack.c.l.b16 %v1493
      %v1514 = vunpack.c.l.b16 %v1494
      %v1515 = vunpack.c.l.b16 %v1495
      %v1516 = vunpack.c.l.b16 %v1496
      %v1517 = vunpack.c.l.b16 %v1497
      %v1518 = vunpack.c.l.b16 %v1498
      %v1519 = vunpack.c.l.b16 %v1499
      %v1520 = vunpack.c.l.b16 %v1500
      %v1521 = vpack.c.b16 %v1512, %v1511
      %v1522 = vpack.c.b16 %v1514, %v1513
      %v1523 = vpack.c.b16 %v1516, %v1515
      %v1524 = vpack.c.b16 %v1518, %v1517
      %v1525 = vpack.c.b16 %v1520, %v1519
      %v1532 = vsel %vm495, %v1490, 0
      %1534 = vmatpush.bf16.msra.mxu0 0
      %1535 = vmatpush.bf16.msra.mxu0 0
      %1536 = vmatpush.bf16.msra.mxu0 0
      %1537 = vmatpush.bf16.msra.mxu0 %v1525
      %1538 = vmatpush.bf16.msra.mxu0 %v1524
      %1539 = vmatpush.bf16.msra.mxu0 %v1523
      %1540 = vmatpush.bf16.msra.mxu0 %v1522
      %1541 = vmatpush.bf16.msra.mxu0 %v1521
      %1542 = vmatmul.bf16.gmra.mxu0 %v1532
      %v1543 = vpop.f32.mrf.mxu0
      %v1544 = vadd.f32 0.0, %v1543
      %v1545 = vpop.f32.mrf.mxu0
      %1546 = vdwg.mxu0
      %v1547 = vadd.f32 %v1488, %v1544
      %v1548 = vld [vmem:[%s435 + $0x9] sm:$0x1]
      %v1549 = vpack.c.bf16 %v1548, %v1548
      %v1550 = vld [vmem:[%s635] sm:$0xf]
      %v1551 = vld [vmem:[%s635 + $0x4] sm:$0xf]
      %v1552 = vld [vmem:[%s635 + $0x8] sm:$0xf]
      %v1553 = vld [vmem:[%s635 + $0xc] sm:$0xf]
      %v1554 = vld [vmem:[%s635 + $0x10] sm:$0xf]
      %v1555 = vld [vmem:[%s635 + $0x14] sm:$0xf]
      %v1556 = vld [vmem:[%s635 + $0x18] sm:$0xf]
      %v1557 = vld [vmem:[%s635 + $0x1c] sm:$0xf]
      %v1558 = vld [vmem:[%s635 + $0x20] sm:$0xf]
      %v1559 = vld [vmem:[%s635 + $0x24] sm:$0xf]
      %v1570 = vunpack.c.l.b16 %v1550
      %v1571 = vunpack.c.l.b16 %v1551
      %v1572 = vunpack.c.l.b16 %v1552
      %v1573 = vunpack.c.l.b16 %v1553
      %v1574 = vunpack.c.l.b16 %v1554
      %v1575 = vunpack.c.l.b16 %v1555
      %v1576 = vunpack.c.l.b16 %v1556
      %v1577 = vunpack.c.l.b16 %v1557
      %v1578 = vunpack.c.l.b16 %v1558
      %v1579 = vunpack.c.l.b16 %v1559
      %v1580 = vpack.c.b16 %v1571, %v1570
      %v1581 = vpack.c.b16 %v1573, %v1572
      %v1582 = vpack.c.b16 %v1575, %v1574
      %v1583 = vpack.c.b16 %v1577, %v1576
      %v1584 = vpack.c.b16 %v1579, %v1578
      %v1591 = vsel %vm495, %v1549, 0
      %1593 = vmatpush.bf16.msra.mxu0 0
      %1594 = vmatpush.bf16.msra.mxu0 0
      %1595 = vmatpush.bf16.msra.mxu0 0
      %1596 = vmatpush.bf16.msra.mxu0 %v1584
      %1597 = vmatpush.bf16.msra.mxu0 %v1583
      %1598 = vmatpush.bf16.msra.mxu0 %v1582
      %1599 = vmatpush.bf16.msra.mxu0 %v1581
      %1600 = vmatpush.bf16.msra.mxu0 %v1580
      %1601 = vmatmul.bf16.gmra.mxu0 %v1591
      %v1602 = vpop.f32.mrf.mxu0
      %v1603 = vadd.f32 0.0, %v1602
      %v1604 = vpop.f32.mrf.mxu0
      %1605 = vdwg.mxu0
      %v1606 = vadd.f32 %v1547, %v1603
      %v1607 = vld [vmem:[%s435 + $0xa] sm:$0x1]
      %v1608 = vpack.c.bf16 %v1607, %v1607
      %v1609 = vld [vmem:[%s695] sm:$0xf]
      %v1610 = vld [vmem:[%s695 + $0x4] sm:$0xf]
      %v1611 = vld [vmem:[%s695 + $0x8] sm:$0xf]
      %v1612 = vld [vmem:[%s695 + $0xc] sm:$0xf]
      %v1613 = vld [vmem:[%s695 + $0x10] sm:$0xf]
      %v1614 = vld [vmem:[%s695 + $0x14] sm:$0xf]
      %v1615 = vld [vmem:[%s695 + $0x18] sm:$0xf]
      %v1616 = vld [vmem:[%s695 + $0x1c] sm:$0xf]
      %v1617 = vld [vmem:[%s695 + $0x20] sm:$0xf]
      %v1618 = vld [vmem:[%s695 + $0x24] sm:$0xf]
      %v1629 = vunpack.c.l.b16 %v1609
      %v1630 = vunpack.c.l.b16 %v1610
      %v1631 = vunpack.c.l.b16 %v1611
      %v1632 = vunpack.c.l.b16 %v1612
      %v1633 = vunpack.c.l.b16 %v1613
      %v1634 = vunpack.c.l.b16 %v1614
      %v1635 = vunpack.c.l.b16 %v1615
      %v1636 = vunpack.c.l.b16 %v1616
      %v1637 = vunpack.c.l.b16 %v1617
      %v1638 = vunpack.c.l.b16 %v1618
      %v1639 = vpack.c.b16 %v1630, %v1629
      %v1640 = vpack.c.b16 %v1632, %v1631
      %v1641 = vpack.c.b16 %v1634, %v1633
      %v1642 = vpack.c.b16 %v1636, %v1635
      %v1643 = vpack.c.b16 %v1638, %v1637
      %v1650 = vsel %vm495, %v1608, 0
      %1652 = vmatpush.bf16.msra.mxu0 0
      %1653 = vmatpush.bf16.msra.mxu0 0
      %1654 = vmatpush.bf16.msra.mxu0 0
      %1655 = vmatpush.bf16.msra.mxu0 %v1643
      %1656 = vmatpush.bf16.msra.mxu0 %v1642
      %1657 = vmatpush.bf16.msra.mxu0 %v1641
      %1658 = vmatpush.bf16.msra.mxu0 %v1640
      %1659 = vmatpush.bf16.msra.mxu0 %v1639
      %1660 = vmatmul.bf16.gmra.mxu0 %v1650
      %v1661 = vpop.f32.mrf.mxu0
      %v1662 = vadd.f32 0.0, %v1661
      %v1663 = vpop.f32.mrf.mxu0
      %1664 = vdwg.mxu0
      %v1665 = vadd.f32 %v1606, %v1662
      %vm1666 = vcmp.ge.f32.partialorder %v1665, 0.0
      %v1667 = vmul.f32 %v1665, 0.2
      %v1668 = vsel %vm1666, %v1665, %v1667
      %v1670 = vperm.slane %v1668, 0
      %1671 = vrot.lane.b32.xlu0 %v1670, 16
      %v1672 = vpop.permute.xlu0 %1671
      %1674 = vst.msk [vmem:[#allocation2 + $0x5] sm:$0x1] %vm761, %v1672
      %v1675 = vld [vmem:[%s435 + $0x8] sm:$0x1]
      %v1676 = vpack.c.bf16 %v1675, %v1675
      %v1677 = vld [vmem:[%s1] sm:$0xf]
      %v1678 = vld [vmem:[%s1 + $0x4] sm:$0xf]
      %v1679 = vld [vmem:[%s1 + $0x8] sm:$0xf]
      %v1680 = vld [vmem:[%s1 + $0xc] sm:$0xf]
      %v1681 = vld [vmem:[%s1 + $0x10] sm:$0xf]
      %v1682 = vld [vmem:[%s1 + $0x14] sm:$0xf]
      %v1683 = vld [vmem:[%s1 + $0x18] sm:$0xf]
      %v1684 = vld [vmem:[%s1 + $0x1c] sm:$0xf]
      %v1685 = vld [vmem:[%s1 + $0x20] sm:$0xf]
      %v1686 = vld [vmem:[%s1 + $0x24] sm:$0xf]
      %v1697 = vunpack.c.l.b16 %v1677
      %v1698 = vunpack.c.l.b16 %v1678
      %v1699 = vunpack.c.l.b16 %v1679
      %v1700 = vunpack.c.l.b16 %v1680
      %v1701 = vunpack.c.l.b16 %v1681
      %v1702 = vunpack.c.l.b16 %v1682
      %v1703 = vunpack.c.l.b16 %v1683
      %v1704 = vunpack.c.l.b16 %v1684
      %v1705 = vunpack.c.l.b16 %v1685
      %v1706 = vunpack.c.l.b16 %v1686
      %v1707 = vpack.c.b16 %v1698, %v1697
      %v1708 = vpack.c.b16 %v1700, %v1699
      %v1709 = vpack.c.b16 %v1702, %v1701
      %v1710 = vpack.c.b16 %v1704, %v1703
      %v1711 = vpack.c.b16 %v1706, %v1705
      %v1718 = vsel %vm495, %v1676, 0
      %1720 = vmatpush.bf16.msra.mxu0 0
      %1721 = vmatpush.bf16.msra.mxu0 0
      %1722 = vmatpush.bf16.msra.mxu0 0
      %1723 = vmatpush.bf16.msra.mxu0 %v1711
      %1724 = vmatpush.bf16.msra.mxu0 %v1710
      %1725 = vmatpush.bf16.msra.mxu0 %v1709
      %1726 = vmatpush.bf16.msra.mxu0 %v1708
      %1727 = vmatpush.bf16.msra.mxu0 %v1707
      %1728 = vmatmul.bf16.gmra.mxu0 %v1718
      %v1729 = vpop.f32.mrf.mxu0
      %v1730 = vadd.f32 0.0, %v1729
      %v1731 = vpop.f32.mrf.mxu0
      %1732 = vdwg.mxu0
      %v1733 = vadd.f32 %v452, %v1730
      %v1734 = vld [vmem:[%s435 + $0x9] sm:$0x1]
      %v1735 = vpack.c.bf16 %v1734, %v1734
      %v1736 = vld [vmem:[%s515] sm:$0xf]
      %v1737 = vld [vmem:[%s515 + $0x4] sm:$0xf]
      %v1738 = vld [vmem:[%s515 + $0x8] sm:$0xf]
      %v1739 = vld [vmem:[%s515 + $0xc] sm:$0xf]
      %v1740 = vld [vmem:[%s515 + $0x10] sm:$0xf]
      %v1741 = vld [vmem:[%s515 + $0x14] sm:$0xf]
      %v1742 = vld [vmem:[%s515 + $0x18] sm:$0xf]
      %v1743 = vld [vmem:[%s515 + $0x1c] sm:$0xf]
      %v1744 = vld [vmem:[%s515 + $0x20] sm:$0xf]
      %v1745 = vld [vmem:[%s515 + $0x24] sm:$0xf]
      %v1756 = vunpack.c.l.b16 %v1736
      %v1757 = vunpack.c.l.b16 %v1737
      %v1758 = vunpack.c.l.b16 %v1738
      %v1759 = vunpack.c.l.b16 %v1739
      %v1760 = vunpack.c.l.b16 %v1740
      %v1761 = vunpack.c.l.b16 %v1741
      %v1762 = vunpack.c.l.b16 %v1742
      %v1763 = vunpack.c.l.b16 %v1743
      %v1764 = vunpack.c.l.b16 %v1744
      %v1765 = vunpack.c.l.b16 %v1745
      %v1766 = vpack.c.b16 %v1757, %v1756
      %v1767 = vpack.c.b16 %v1759, %v1758
      %v1768 = vpack.c.b16 %v1761, %v1760
      %v1769 = vpack.c.b16 %v1763, %v1762
      %v1770 = vpack.c.b16 %v1765, %v1764
      %v1777 = vsel %vm495, %v1735, 0
      %1779 = vmatpush.bf16.msra.mxu0 0
      %1780 = vmatpush.bf16.msra.mxu0 0
      %1781 = vmatpush.bf16.msra.mxu0 0
      %1782 = vmatpush.bf16.msra.mxu0 %v1770
      %1783 = vmatpush.bf16.msra.mxu0 %v1769
      %1784 = vmatpush.bf16.msra.mxu0 %v1768
      %1785 = vmatpush.bf16.msra.mxu0 %v1767
      %1786 = vmatpush.bf16.msra.mxu0 %v1766
      %1787 = vmatmul.bf16.gmra.mxu0 %v1777
      %v1788 = vpop.f32.mrf.mxu0
      %v1789 = vadd.f32 0.0, %v1788
      %v1790 = vpop.f32.mrf.mxu0
      %1791 = vdwg.mxu0
      %v1792 = vadd.f32 %v1733, %v1789
      %v1793 = vld [vmem:[%s435 + $0xa] sm:$0x1]
      %v1794 = vpack.c.bf16 %v1793, %v1793
      %v1795 = vld [vmem:[%s575] sm:$0xf]
      %v1796 = vld [vmem:[%s575 + $0x4] sm:$0xf]
      %v1797 = vld [vmem:[%s575 + $0x8] sm:$0xf]
      %v1798 = vld [vmem:[%s575 + $0xc] sm:$0xf]
      %v1799 = vld [vmem:[%s575 + $0x10] sm:$0xf]
      %v1800 = vld [vmem:[%s575 + $0x14] sm:$0xf]
      %v1801 = vld [vmem:[%s575 + $0x18] sm:$0xf]
      %v1802 = vld [vmem:[%s575 + $0x1c] sm:$0xf]
      %v1803 = vld [vmem:[%s575 + $0x20] sm:$0xf]
      %v1804 = vld [vmem:[%s575 + $0x24] sm:$0xf]
      %v1815 = vunpack.c.l.b16 %v1795
      %v1816 = vunpack.c.l.b16 %v1796
      %v1817 = vunpack.c.l.b16 %v1797
      %v1818 = vunpack.c.l.b16 %v1798
      %v1819 = vunpack.c.l.b16 %v1799
      %v1820 = vunpack.c.l.b16 %v1800
      %v1821 = vunpack.c.l.b16 %v1801
      %v1822 = vunpack.c.l.b16 %v1802
      %v1823 = vunpack.c.l.b16 %v1803
      %v1824 = vunpack.c.l.b16 %v1804
      %v1825 = vpack.c.b16 %v1816, %v1815
      %v1826 = vpack.c.b16 %v1818, %v1817
      %v1827 = vpack.c.b16 %v1820, %v1819
      %v1828 = vpack.c.b16 %v1822, %v1821
      %v1829 = vpack.c.b16 %v1824, %v1823
      %v1836 = vsel %vm495, %v1794, 0
      %1838 = vmatpush.bf16.msra.mxu0 0
      %1839 = vmatpush.bf16.msra.mxu0 0
      %1840 = vmatpush.bf16.msra.mxu0 0
      %1841 = vmatpush.bf16.msra.mxu0 %v1829
      %1842 = vmatpush.bf16.msra.mxu0 %v1828
      %1843 = vmatpush.bf16.msra.mxu0 %v1827
      %1844 = vmatpush.bf16.msra.mxu0 %v1826
      %1845 = vmatpush.bf16.msra.mxu0 %v1825
      %1846 = vmatmul.bf16.gmra.mxu0 %v1836
      %v1847 = vpop.f32.mrf.mxu0
      %v1848 = vadd.f32 0.0, %v1847
      %v1849 = vpop.f32.mrf.mxu0
      %1850 = vdwg.mxu0
      %v1851 = vadd.f32 %v1792, %v1848
      %v1852 = vld [vmem:[%s435 + $0xb] sm:$0x1]
      %v1853 = vpack.c.bf16 %v1852, %v1852
      %v1854 = vld [vmem:[%s635] sm:$0xf]
      %v1855 = vld [vmem:[%s635 + $0x4] sm:$0xf]
      %v1856 = vld [vmem:[%s635 + $0x8] sm:$0xf]
      %v1857 = vld [vmem:[%s635 + $0xc] sm:$0xf]
      %v1858 = vld [vmem:[%s635 + $0x10] sm:$0xf]
      %v1859 = vld [vmem:[%s635 + $0x14] sm:$0xf]
      %v1860 = vld [vmem:[%s635 + $0x18] sm:$0xf]
      %v1861 = vld [vmem:[%s635 + $0x1c] sm:$0xf]
      %v1862 = vld [vmem:[%s635 + $0x20] sm:$0xf]
      %v1863 = vld [vmem:[%s635 + $0x24] sm:$0xf]
      %v1874 = vunpack.c.l.b16 %v1854
      %v1875 = vunpack.c.l.b16 %v1855
      %v1876 = vunpack.c.l.b16 %v1856
      %v1877 = vunpack.c.l.b16 %v1857
      %v1878 = vunpack.c.l.b16 %v1858
      %v1879 = vunpack.c.l.b16 %v1859
      %v1880 = vunpack.c.l.b16 %v1860
      %v1881 = vunpack.c.l.b16 %v1861
      %v1882 = vunpack.c.l.b16 %v1862
      %v1883 = vunpack.c.l.b16 %v1863
      %v1884 = vpack.c.b16 %v1875, %v1874
      %v1885 = vpack.c.b16 %v1877, %v1876
      %v1886 = vpack.c.b16 %v1879, %v1878
      %v1887 = vpack.c.b16 %v1881, %v1880
      %v1888 = vpack.c.b16 %v1883, %v1882
      %v1895 = vsel %vm495, %v1853, 0
      %1897 = vmatpush.bf16.msra.mxu0 0
      %1898 = vmatpush.bf16.msra.mxu0 0
      %1899 = vmatpush.bf16.msra.mxu0 0
      %1900 = vmatpush.bf16.msra.mxu0 %v1888
      %1901 = vmatpush.bf16.msra.mxu0 %v1887
      %1902 = vmatpush.bf16.msra.mxu0 %v1886
      %1903 = vmatpush.bf16.msra.mxu0 %v1885
      %1904 = vmatpush.bf16.msra.mxu0 %v1884
      %1905 = vmatmul.bf16.gmra.mxu0 %v1895
      %v1906 = vpop.f32.mrf.mxu0
      %v1907 = vadd.f32 0.0, %v1906
      %v1908 = vpop.f32.mrf.mxu0
      %1909 = vdwg.mxu0
      %v1910 = vadd.f32 %v1851, %v1907
      %v1911 = vld [vmem:[%s435 + $0xc] sm:$0x1]
      %v1912 = vpack.c.bf16 %v1911, %v1911
      %v1913 = vld [vmem:[%s695] sm:$0xf]
      %v1914 = vld [vmem:[%s695 + $0x4] sm:$0xf]
      %v1915 = vld [vmem:[%s695 + $0x8] sm:$0xf]
      %v1916 = vld [vmem:[%s695 + $0xc] sm:$0xf]
      %v1917 = vld [vmem:[%s695 + $0x10] sm:$0xf]
      %v1918 = vld [vmem:[%s695 + $0x14] sm:$0xf]
      %v1919 = vld [vmem:[%s695 + $0x18] sm:$0xf]
      %v1920 = vld [vmem:[%s695 + $0x1c] sm:$0xf]
      %v1921 = vld [vmem:[%s695 + $0x20] sm:$0xf]
      %v1922 = vld [vmem:[%s695 + $0x24] sm:$0xf]
      %v1933 = vunpack.c.l.b16 %v1913
      %v1934 = vunpack.c.l.b16 %v1914
      %v1935 = vunpack.c.l.b16 %v1915
      %v1936 = vunpack.c.l.b16 %v1916
      %v1937 = vunpack.c.l.b16 %v1917
      %v1938 = vunpack.c.l.b16 %v1918
      %v1939 = vunpack.c.l.b16 %v1919
      %v1940 = vunpack.c.l.b16 %v1920
      %v1941 = vunpack.c.l.b16 %v1921
      %v1942 = vunpack.c.l.b16 %v1922
      %v1943 = vpack.c.b16 %v1934, %v1933
      %v1944 = vpack.c.b16 %v1936, %v1935
      %v1945 = vpack.c.b16 %v1938, %v1937
      %v1946 = vpack.c.b16 %v1940, %v1939
      %v1947 = vpack.c.b16 %v1942, %v1941
      %v1954 = vsel %vm495, %v1912, 0
      %1956 = vmatpush.bf16.msra.mxu0 0
      %1957 = vmatpush.bf16.msra.mxu0 0
      %1958 = vmatpush.bf16.msra.mxu0 0
      %1959 = vmatpush.bf16.msra.mxu0 %v1947
      %1960 = vmatpush.bf16.msra.mxu0 %v1946
      %1961 = vmatpush.bf16.msra.mxu0 %v1945
      %1962 = vmatpush.bf16.msra.mxu0 %v1944
      %1963 = vmatpush.bf16.msra.mxu0 %v1943
      %1964 = vmatmul.bf16.gmra.mxu0 %v1954
      %v1965 = vpop.f32.mrf.mxu0
      %v1966 = vadd.f32 0.0, %v1965
      %v1967 = vpop.f32.mrf.mxu0
      %1968 = vdwg.mxu0
      %v1969 = vadd.f32 %v1910, %v1966
      %vm1970 = vcmp.ge.f32.partialorder %v1969, 0.0
      %v1971 = vmul.f32 %v1969, 0.2
      %v1972 = vsel %vm1970, %v1969, %v1971
      %v1974 = vperm.slane %v1972, 0
      %1975 = vrot.lane.b32.xlu0 %v1974, 16
      %v1976 = vpop.permute.xlu0 %1975
      %1978 = vst.msk [vmem:[#allocation2 + $0x6] sm:$0x1] %vm761, %v1976
      %v1979 = vld [vmem:[%s435 + $0xa] sm:$0x1]
      %v1980 = vpack.c.bf16 %v1979, %v1979
      %v1981 = vld [vmem:[%s1] sm:$0xf]
      %v1982 = vld [vmem:[%s1 + $0x4] sm:$0xf]
      %v1983 = vld [vmem:[%s1 + $0x8] sm:$0xf]
      %v1984 = vld [vmem:[%s1 + $0xc] sm:$0xf]
      %v1985 = vld [vmem:[%s1 + $0x10] sm:$0xf]
      %v1986 = vld [vmem:[%s1 + $0x14] sm:$0xf]
      %v1987 = vld [vmem:[%s1 + $0x18] sm:$0xf]
      %v1988 = vld [vmem:[%s1 + $0x1c] sm:$0xf]
      %v1989 = vld [vmem:[%s1 + $0x20] sm:$0xf]
      %v1990 = vld [vmem:[%s1 + $0x24] sm:$0xf]
      %v2001 = vunpack.c.l.b16 %v1981
      %v2002 = vunpack.c.l.b16 %v1982
      %v2003 = vunpack.c.l.b16 %v1983
      %v2004 = vunpack.c.l.b16 %v1984
      %v2005 = vunpack.c.l.b16 %v1985
      %v2006 = vunpack.c.l.b16 %v1986
      %v2007 = vunpack.c.l.b16 %v1987
      %v2008 = vunpack.c.l.b16 %v1988
      %v2009 = vunpack.c.l.b16 %v1989
      %v2010 = vunpack.c.l.b16 %v1990
      %v2011 = vpack.c.b16 %v2002, %v2001
      %v2012 = vpack.c.b16 %v2004, %v2003
      %v2013 = vpack.c.b16 %v2006, %v2005
      %v2014 = vpack.c.b16 %v2008, %v2007
      %v2015 = vpack.c.b16 %v2010, %v2009
      %v2022 = vsel %vm495, %v1980, 0
      %2024 = vmatpush.bf16.msra.mxu0 0
      %2025 = vmatpush.bf16.msra.mxu0 0
      %2026 = vmatpush.bf16.msra.mxu0 0
      %2027 = vmatpush.bf16.msra.mxu0 %v2015
      %2028 = vmatpush.bf16.msra.mxu0 %v2014
      %2029 = vmatpush.bf16.msra.mxu0 %v2013
      %2030 = vmatpush.bf16.msra.mxu0 %v2012
      %2031 = vmatpush.bf16.msra.mxu0 %v2011
      %2032 = vmatmul.bf16.gmra.mxu0 %v2022
      %v2033 = vpop.f32.mrf.mxu0
      %v2034 = vadd.f32 0.0, %v2033
      %v2035 = vpop.f32.mrf.mxu0
      %2036 = vdwg.mxu0
      %v2037 = vadd.f32 %v452, %v2034
      %v2038 = vld [vmem:[%s435 + $0xb] sm:$0x1]
      %v2039 = vpack.c.bf16 %v2038, %v2038
      %v2040 = vld [vmem:[%s515] sm:$0xf]
      %v2041 = vld [vmem:[%s515 + $0x4] sm:$0xf]
      %v2042 = vld [vmem:[%s515 + $0x8] sm:$0xf]
      %v2043 = vld [vmem:[%s515 + $0xc] sm:$0xf]
      %v2044 = vld [vmem:[%s515 + $0x10] sm:$0xf]
      %v2045 = vld [vmem:[%s515 + $0x14] sm:$0xf]
      %v2046 = vld [vmem:[%s515 + $0x18] sm:$0xf]
      %v2047 = vld [vmem:[%s515 + $0x1c] sm:$0xf]
      %v2048 = vld [vmem:[%s515 + $0x20] sm:$0xf]
      %v2049 = vld [vmem:[%s515 + $0x24] sm:$0xf]
      %v2060 = vunpack.c.l.b16 %v2040
      %v2061 = vunpack.c.l.b16 %v2041
      %v2062 = vunpack.c.l.b16 %v2042
      %v2063 = vunpack.c.l.b16 %v2043
      %v2064 = vunpack.c.l.b16 %v2044
      %v2065 = vunpack.c.l.b16 %v2045
      %v2066 = vunpack.c.l.b16 %v2046
      %v2067 = vunpack.c.l.b16 %v2047
      %v2068 = vunpack.c.l.b16 %v2048
      %v2069 = vunpack.c.l.b16 %v2049
      %v2070 = vpack.c.b16 %v2061, %v2060
      %v2071 = vpack.c.b16 %v2063, %v2062
      %v2072 = vpack.c.b16 %v2065, %v2064
      %v2073 = vpack.c.b16 %v2067, %v2066
      %v2074 = vpack.c.b16 %v2069, %v2068
      %v2081 = vsel %vm495, %v2039, 0
      %2083 = vmatpush.bf16.msra.mxu0 0
      %2084 = vmatpush.bf16.msra.mxu0 0
      %2085 = vmatpush.bf16.msra.mxu0 0
      %2086 = vmatpush.bf16.msra.mxu0 %v2074
      %2087 = vmatpush.bf16.msra.mxu0 %v2073
      %2088 = vmatpush.bf16.msra.mxu0 %v2072
      %2089 = vmatpush.bf16.msra.mxu0 %v2071
      %2090 = vmatpush.bf16.msra.mxu0 %v2070
      %2091 = vmatmul.bf16.gmra.mxu0 %v2081
      %v2092 = vpop.f32.mrf.mxu0
      %v2093 = vadd.f32 0.0, %v2092
      %v2094 = vpop.f32.mrf.mxu0
      %2095 = vdwg.mxu0
      %v2096 = vadd.f32 %v2037, %v2093
      %v2097 = vld [vmem:[%s435 + $0xc] sm:$0x1]
      %v2098 = vpack.c.bf16 %v2097, %v2097
      %v2099 = vld [vmem:[%s575] sm:$0xf]
      %v2100 = vld [vmem:[%s575 + $0x4] sm:$0xf]
      %v2101 = vld [vmem:[%s575 + $0x8] sm:$0xf]
      %v2102 = vld [vmem:[%s575 + $0xc] sm:$0xf]
      %v2103 = vld [vmem:[%s575 + $0x10] sm:$0xf]
      %v2104 = vld [vmem:[%s575 + $0x14] sm:$0xf]
      %v2105 = vld [vmem:[%s575 + $0x18] sm:$0xf]
      %v2106 = vld [vmem:[%s575 + $0x1c] sm:$0xf]
      %v2107 = vld [vmem:[%s575 + $0x20] sm:$0xf]
      %v2108 = vld [vmem:[%s575 + $0x24] sm:$0xf]
      %v2119 = vunpack.c.l.b16 %v2099
      %v2120 = vunpack.c.l.b16 %v2100
      %v2121 = vunpack.c.l.b16 %v2101
      %v2122 = vunpack.c.l.b16 %v2102
      %v2123 = vunpack.c.l.b16 %v2103
      %v2124 = vunpack.c.l.b16 %v2104
      %v2125 = vunpack.c.l.b16 %v2105
      %v2126 = vunpack.c.l.b16 %v2106
      %v2127 = vunpack.c.l.b16 %v2107
      %v2128 = vunpack.c.l.b16 %v2108
      %v2129 = vpack.c.b16 %v2120, %v2119
      %v2130 = vpack.c.b16 %v2122, %v2121
      %v2131 = vpack.c.b16 %v2124, %v2123
      %v2132 = vpack.c.b16 %v2126, %v2125
      %v2133 = vpack.c.b16 %v2128, %v2127
      %v2140 = vsel %vm495, %v2098, 0
      %2142 = vmatpush.bf16.msra.mxu0 0
      %2143 = vmatpush.bf16.msra.mxu0 0
      %2144 = vmatpush.bf16.msra.mxu0 0
      %2145 = vmatpush.bf16.msra.mxu0 %v2133
      %2146 = vmatpush.bf16.msra.mxu0 %v2132
      %2147 = vmatpush.bf16.msra.mxu0 %v2131
      %2148 = vmatpush.bf16.msra.mxu0 %v2130
      %2149 = vmatpush.bf16.msra.mxu0 %v2129
      %2150 = vmatmul.bf16.gmra.mxu0 %v2140
      %v2151 = vpop.f32.mrf.mxu0
      %v2152 = vadd.f32 0.0, %v2151
      %v2153 = vpop.f32.mrf.mxu0
      %2154 = vdwg.mxu0
      %v2155 = vadd.f32 %v2096, %v2152
      %v2156 = vld [vmem:[%s435 + $0xd] sm:$0x1]
      %v2157 = vpack.c.bf16 %v2156, %v2156
      %v2158 = vld [vmem:[%s635] sm:$0xf]
      %v2159 = vld [vmem:[%s635 + $0x4] sm:$0xf]
      %v2160 = vld [vmem:[%s635 + $0x8] sm:$0xf]
      %v2161 = vld [vmem:[%s635 + $0xc] sm:$0xf]
      %v2162 = vld [vmem:[%s635 + $0x10] sm:$0xf]
      %v2163 = vld [vmem:[%s635 + $0x14] sm:$0xf]
      %v2164 = vld [vmem:[%s635 + $0x18] sm:$0xf]
      %v2165 = vld [vmem:[%s635 + $0x1c] sm:$0xf]
      %v2166 = vld [vmem:[%s635 + $0x20] sm:$0xf]
      %v2167 = vld [vmem:[%s635 + $0x24] sm:$0xf]
      %v2178 = vunpack.c.l.b16 %v2158
      %v2179 = vunpack.c.l.b16 %v2159
      %v2180 = vunpack.c.l.b16 %v2160
      %v2181 = vunpack.c.l.b16 %v2161
      %v2182 = vunpack.c.l.b16 %v2162
      %v2183 = vunpack.c.l.b16 %v2163
      %v2184 = vunpack.c.l.b16 %v2164
      %v2185 = vunpack.c.l.b16 %v2165
      %v2186 = vunpack.c.l.b16 %v2166
      %v2187 = vunpack.c.l.b16 %v2167
      %v2188 = vpack.c.b16 %v2179, %v2178
      %v2189 = vpack.c.b16 %v2181, %v2180
      %v2190 = vpack.c.b16 %v2183, %v2182
      %v2191 = vpack.c.b16 %v2185, %v2184
      %v2192 = vpack.c.b16 %v2187, %v2186
      %v2199 = vsel %vm495, %v2157, 0
      %2201 = vmatpush.bf16.msra.mxu0 0
      %2202 = vmatpush.bf16.msra.mxu0 0
      %2203 = vmatpush.bf16.msra.mxu0 0
      %2204 = vmatpush.bf16.msra.mxu0 %v2192
      %2205 = vmatpush.bf16.msra.mxu0 %v2191
      %2206 = vmatpush.bf16.msra.mxu0 %v2190
      %2207 = vmatpush.bf16.msra.mxu0 %v2189
      %2208 = vmatpush.bf16.msra.mxu0 %v2188
      %2209 = vmatmul.bf16.gmra.mxu0 %v2199
      %v2210 = vpop.f32.mrf.mxu0
      %v2211 = vadd.f32 0.0, %v2210
      %v2212 = vpop.f32.mrf.mxu0
      %2213 = vdwg.mxu0
      %v2214 = vadd.f32 %v2155, %v2211
      %v2215 = vld [vmem:[%s435 + $0xe] sm:$0x1]
      %v2216 = vpack.c.bf16 %v2215, %v2215
      %v2217 = vld [vmem:[%s695] sm:$0xf]
      %v2218 = vld [vmem:[%s695 + $0x4] sm:$0xf]
      %v2219 = vld [vmem:[%s695 + $0x8] sm:$0xf]
      %v2220 = vld [vmem:[%s695 + $0xc] sm:$0xf]
      %v2221 = vld [vmem:[%s695 + $0x10] sm:$0xf]
      %v2222 = vld [vmem:[%s695 + $0x14] sm:$0xf]
      %v2223 = vld [vmem:[%s695 + $0x18] sm:$0xf]
      %v2224 = vld [vmem:[%s695 + $0x1c] sm:$0xf]
      %v2225 = vld [vmem:[%s695 + $0x20] sm:$0xf]
      %v2226 = vld [vmem:[%s695 + $0x24] sm:$0xf]
      %v2237 = vunpack.c.l.b16 %v2217
      %v2238 = vunpack.c.l.b16 %v2218
      %v2239 = vunpack.c.l.b16 %v2219
      %v2240 = vunpack.c.l.b16 %v2220
      %v2241 = vunpack.c.l.b16 %v2221
      %v2242 = vunpack.c.l.b16 %v2222
      %v2243 = vunpack.c.l.b16 %v2223
      %v2244 = vunpack.c.l.b16 %v2224
      %v2245 = vunpack.c.l.b16 %v2225
      %v2246 = vunpack.c.l.b16 %v2226
      %v2247 = vpack.c.b16 %v2238, %v2237
      %v2248 = vpack.c.b16 %v2240, %v2239
      %v2249 = vpack.c.b16 %v2242, %v2241
      %v2250 = vpack.c.b16 %v2244, %v2243
      %v2251 = vpack.c.b16 %v2246, %v2245
      %v2258 = vsel %vm495, %v2216, 0
      %2260 = vmatpush.bf16.msra.mxu0 0
      %2261 = vmatpush.bf16.msra.mxu0 0
      %2262 = vmatpush.bf16.msra.mxu0 0
      %2263 = vmatpush.bf16.msra.mxu0 %v2251
      %2264 = vmatpush.bf16.msra.mxu0 %v2250
      %2265 = vmatpush.bf16.msra.mxu0 %v2249
      %2266 = vmatpush.bf16.msra.mxu0 %v2248
      %2267 = vmatpush.bf16.msra.mxu0 %v2247
      %2268 = vmatmul.bf16.gmra.mxu0 %v2258
      %v2269 = vpop.f32.mrf.mxu0
      %v2270 = vadd.f32 0.0, %v2269
      %v2271 = vpop.f32.mrf.mxu0
      %2272 = vdwg.mxu0
      %v2273 = vadd.f32 %v2214, %v2270
      %vm2274 = vcmp.ge.f32.partialorder %v2273, 0.0
      %v2275 = vmul.f32 %v2273, 0.2
      %v2276 = vsel %vm2274, %v2273, %v2275
      %v2278 = vperm.slane %v2276, 0
      %2279 = vrot.lane.b32.xlu0 %v2278, 16
      %v2280 = vpop.permute.xlu0 %2279
      %2282 = vst.msk [vmem:[#allocation2 + $0x7] sm:$0x1] %vm761, %v2280
      %v2283 = vld [vmem:[%s435 + $0xc] sm:$0x1]
      %v2284 = vpack.c.bf16 %v2283, %v2283
      %v2285 = vld [vmem:[%s1] sm:$0xf]
      %v2286 = vld [vmem:[%s1 + $0x4] sm:$0xf]
      %v2287 = vld [vmem:[%s1 + $0x8] sm:$0xf]
      %v2288 = vld [vmem:[%s1 + $0xc] sm:$0xf]
      %v2289 = vld [vmem:[%s1 + $0x10] sm:$0xf]
      %v2290 = vld [vmem:[%s1 + $0x14] sm:$0xf]
      %v2291 = vld [vmem:[%s1 + $0x18] sm:$0xf]
      %v2292 = vld [vmem:[%s1 + $0x1c] sm:$0xf]
      %v2293 = vld [vmem:[%s1 + $0x20] sm:$0xf]
      %v2294 = vld [vmem:[%s1 + $0x24] sm:$0xf]
      %v2305 = vunpack.c.l.b16 %v2285
      %v2306 = vunpack.c.l.b16 %v2286
      %v2307 = vunpack.c.l.b16 %v2287
      %v2308 = vunpack.c.l.b16 %v2288
      %v2309 = vunpack.c.l.b16 %v2289
      %v2310 = vunpack.c.l.b16 %v2290
      %v2311 = vunpack.c.l.b16 %v2291
      %v2312 = vunpack.c.l.b16 %v2292
      %v2313 = vunpack.c.l.b16 %v2293
      %v2314 = vunpack.c.l.b16 %v2294
      %v2315 = vpack.c.b16 %v2306, %v2305
      %v2316 = vpack.c.b16 %v2308, %v2307
      %v2317 = vpack.c.b16 %v2310, %v2309
      %v2318 = vpack.c.b16 %v2312, %v2311
      %v2319 = vpack.c.b16 %v2314, %v2313
      %v2326 = vsel %vm495, %v2284, 0
      %2328 = vmatpush.bf16.msra.mxu0 0
      %2329 = vmatpush.bf16.msra.mxu0 0
      %2330 = vmatpush.bf16.msra.mxu0 0
      %2331 = vmatpush.bf16.msra.mxu0 %v2319
      %2332 = vmatpush.bf16.msra.mxu0 %v2318
      %2333 = vmatpush.bf16.msra.mxu0 %v2317
      %2334 = vmatpush.bf16.msra.mxu0 %v2316
      %2335 = vmatpush.bf16.msra.mxu0 %v2315
      %2336 = vmatmul.bf16.gmra.mxu0 %v2326
      %v2337 = vpop.f32.mrf.mxu0
      %v2338 = vadd.f32 0.0, %v2337
      %v2339 = vpop.f32.mrf.mxu0
      %2340 = vdwg.mxu0
      %v2341 = vadd.f32 %v452, %v2338
      %v2342 = vld [vmem:[%s435 + $0xd] sm:$0x1]
      %v2343 = vpack.c.bf16 %v2342, %v2342
      %v2344 = vld [vmem:[%s515] sm:$0xf]
      %v2345 = vld [vmem:[%s515 + $0x4] sm:$0xf]
      %v2346 = vld [vmem:[%s515 + $0x8] sm:$0xf]
      %v2347 = vld [vmem:[%s515 + $0xc] sm:$0xf]
      %v2348 = vld [vmem:[%s515 + $0x10] sm:$0xf]
      %v2349 = vld [vmem:[%s515 + $0x14] sm:$0xf]
      %v2350 = vld [vmem:[%s515 + $0x18] sm:$0xf]
      %v2351 = vld [vmem:[%s515 + $0x1c] sm:$0xf]
      %v2352 = vld [vmem:[%s515 + $0x20] sm:$0xf]
      %v2353 = vld [vmem:[%s515 + $0x24] sm:$0xf]
      %v2364 = vunpack.c.l.b16 %v2344
      %v2365 = vunpack.c.l.b16 %v2345
      %v2366 = vunpack.c.l.b16 %v2346
      %v2367 = vunpack.c.l.b16 %v2347
      %v2368 = vunpack.c.l.b16 %v2348
      %v2369 = vunpack.c.l.b16 %v2349
      %v2370 = vunpack.c.l.b16 %v2350
      %v2371 = vunpack.c.l.b16 %v2351
      %v2372 = vunpack.c.l.b16 %v2352
      %v2373 = vunpack.c.l.b16 %v2353
      %v2374 = vpack.c.b16 %v2365, %v2364
      %v2375 = vpack.c.b16 %v2367, %v2366
      %v2376 = vpack.c.b16 %v2369, %v2368
      %v2377 = vpack.c.b16 %v2371, %v2370
      %v2378 = vpack.c.b16 %v2373, %v2372
      %v2385 = vsel %vm495, %v2343, 0
      %2387 = vmatpush.bf16.msra.mxu0 0
      %2388 = vmatpush.bf16.msra.mxu0 0
      %2389 = vmatpush.bf16.msra.mxu0 0
      %2390 = vmatpush.bf16.msra.mxu0 %v2378
      %2391 = vmatpush.bf16.msra.mxu0 %v2377
      %2392 = vmatpush.bf16.msra.mxu0 %v2376
      %2393 = vmatpush.bf16.msra.mxu0 %v2375
      %2394 = vmatpush.bf16.msra.mxu0 %v2374
      %2395 = vmatmul.bf16.gmra.mxu0 %v2385
      %v2396 = vpop.f32.mrf.mxu0
      %v2397 = vadd.f32 0.0, %v2396
      %v2398 = vpop.f32.mrf.mxu0
      %2399 = vdwg.mxu0
      %v2400 = vadd.f32 %v2341, %v2397
      %v2401 = vld [vmem:[%s435 + $0xe] sm:$0x1]
      %v2402 = vpack.c.bf16 %v2401, %v2401
      %v2403 = vld [vmem:[%s575] sm:$0xf]
      %v2404 = vld [vmem:[%s575 + $0x4] sm:$0xf]
      %v2405 = vld [vmem:[%s575 + $0x8] sm:$0xf]
      %v2406 = vld [vmem:[%s575 + $0xc] sm:$0xf]
      %v2407 = vld [vmem:[%s575 + $0x10] sm:$0xf]
      %v2408 = vld [vmem:[%s575 + $0x14] sm:$0xf]
      %v2409 = vld [vmem:[%s575 + $0x18] sm:$0xf]
      %v2410 = vld [vmem:[%s575 + $0x1c] sm:$0xf]
      %v2411 = vld [vmem:[%s575 + $0x20] sm:$0xf]
      %v2412 = vld [vmem:[%s575 + $0x24] sm:$0xf]
      %v2423 = vunpack.c.l.b16 %v2403
      %v2424 = vunpack.c.l.b16 %v2404
      %v2425 = vunpack.c.l.b16 %v2405
      %v2426 = vunpack.c.l.b16 %v2406
      %v2427 = vunpack.c.l.b16 %v2407
      %v2428 = vunpack.c.l.b16 %v2408
      %v2429 = vunpack.c.l.b16 %v2409
      %v2430 = vunpack.c.l.b16 %v2410
      %v2431 = vunpack.c.l.b16 %v2411
      %v2432 = vunpack.c.l.b16 %v2412
      %v2433 = vpack.c.b16 %v2424, %v2423
      %v2434 = vpack.c.b16 %v2426, %v2425
      %v2435 = vpack.c.b16 %v2428, %v2427
      %v2436 = vpack.c.b16 %v2430, %v2429
      %v2437 = vpack.c.b16 %v2432, %v2431
      %v2444 = vsel %vm495, %v2402, 0
      %2446 = vmatpush.bf16.msra.mxu0 0
      %2447 = vmatpush.bf16.msra.mxu0 0
      %2448 = vmatpush.bf16.msra.mxu0 0
      %2449 = vmatpush.bf16.msra.mxu0 %v2437
      %2450 = vmatpush.bf16.msra.mxu0 %v2436
      %2451 = vmatpush.bf16.msra.mxu0 %v2435
      %2452 = vmatpush.bf16.msra.mxu0 %v2434
      %2453 = vmatpush.bf16.msra.mxu0 %v2433
      %2454 = vmatmul.bf16.gmra.mxu0 %v2444
      %v2455 = vpop.f32.mrf.mxu0
      %v2456 = vadd.f32 0.0, %v2455
      %v2457 = vpop.f32.mrf.mxu0
      %2458 = vdwg.mxu0
      %v2459 = vadd.f32 %v2400, %v2456
      %v2460 = vld [vmem:[%s435 + $0xf] sm:$0x1]
      %v2461 = vpack.c.bf16 %v2460, %v2460
      %v2462 = vld [vmem:[%s635] sm:$0xf]
      %v2463 = vld [vmem:[%s635 + $0x4] sm:$0xf]
      %v2464 = vld [vmem:[%s635 + $0x8] sm:$0xf]
      %v2465 = vld [vmem:[%s635 + $0xc] sm:$0xf]
      %v2466 = vld [vmem:[%s635 + $0x10] sm:$0xf]
      %v2467 = vld [vmem:[%s635 + $0x14] sm:$0xf]
      %v2468 = vld [vmem:[%s635 + $0x18] sm:$0xf]
      %v2469 = vld [vmem:[%s635 + $0x1c] sm:$0xf]
      %v2470 = vld [vmem:[%s635 + $0x20] sm:$0xf]
      %v2471 = vld [vmem:[%s635 + $0x24] sm:$0xf]
      %v2482 = vunpack.c.l.b16 %v2462
      %v2483 = vunpack.c.l.b16 %v2463
      %v2484 = vunpack.c.l.b16 %v2464
      %v2485 = vunpack.c.l.b16 %v2465
      %v2486 = vunpack.c.l.b16 %v2466
      %v2487 = vunpack.c.l.b16 %v2467
      %v2488 = vunpack.c.l.b16 %v2468
      %v2489 = vunpack.c.l.b16 %v2469
      %v2490 = vunpack.c.l.b16 %v2470
      %v2491 = vunpack.c.l.b16 %v2471
      %v2492 = vpack.c.b16 %v2483, %v2482
      %v2493 = vpack.c.b16 %v2485, %v2484
      %v2494 = vpack.c.b16 %v2487, %v2486
      %v2495 = vpack.c.b16 %v2489, %v2488
      %v2496 = vpack.c.b16 %v2491, %v2490
      %v2503 = vsel %vm495, %v2461, 0
      %2505 = vmatpush.bf16.msra.mxu0 0
      %2506 = vmatpush.bf16.msra.mxu0 0
      %2507 = vmatpush.bf16.msra.mxu0 0
      %2508 = vmatpush.bf16.msra.mxu0 %v2496
      %2509 = vmatpush.bf16.msra.mxu0 %v2495
      %2510 = vmatpush.bf16.msra.mxu0 %v2494
      %2511 = vmatpush.bf16.msra.mxu0 %v2493
      %2512 = vmatpush.bf16.msra.mxu0 %v2492
      %2513 = vmatmul.bf16.gmra.mxu0 %v2503
      %v2514 = vpop.f32.mrf.mxu0
      %v2515 = vadd.f32 0.0, %v2514
      %v2516 = vpop.f32.mrf.mxu0
      %2517 = vdwg.mxu0
      %v2518 = vadd.f32 %v2459, %v2515
      %v2519 = vld [vmem:[%s435 + $0x10] sm:$0x1]
      %v2520 = vpack.c.bf16 %v2519, %v2519
      %v2521 = vld [vmem:[%s695] sm:$0xf]
      %v2522 = vld [vmem:[%s695 + $0x4] sm:$0xf]
      %v2523 = vld [vmem:[%s695 + $0x8] sm:$0xf]
      %v2524 = vld [vmem:[%s695 + $0xc] sm:$0xf]
      %v2525 = vld [vmem:[%s695 + $0x10] sm:$0xf]
      %v2526 = vld [vmem:[%s695 + $0x14] sm:$0xf]
      %v2527 = vld [vmem:[%s695 + $0x18] sm:$0xf]
      %v2528 = vld [vmem:[%s695 + $0x1c] sm:$0xf]
      %v2529 = vld [vmem:[%s695 + $0x20] sm:$0xf]
      %v2530 = vld [vmem:[%s695 + $0x24] sm:$0xf]
      %v2541 = vunpack.c.l.b16 %v2521
      %v2542 = vunpack.c.l.b16 %v2522
      %v2543 = vunpack.c.l.b16 %v2523
      %v2544 = vunpack.c.l.b16 %v2524
      %v2545 = vunpack.c.l.b16 %v2525
      %v2546 = vunpack.c.l.b16 %v2526
      %v2547 = vunpack.c.l.b16 %v2527
      %v2548 = vunpack.c.l.b16 %v2528
      %v2549 = vunpack.c.l.b16 %v2529
      %v2550 = vunpack.c.l.b16 %v2530
      %v2551 = vpack.c.b16 %v2542, %v2541
      %v2552 = vpack.c.b16 %v2544, %v2543
      %v2553 = vpack.c.b16 %v2546, %v2545
      %v2554 = vpack.c.b16 %v2548, %v2547
      %v2555 = vpack.c.b16 %v2550, %v2549
      %v2562 = vsel %vm495, %v2520, 0
      %2564 = vmatpush.bf16.msra.mxu0 0
      %2565 = vmatpush.bf16.msra.mxu0 0
      %2566 = vmatpush.bf16.msra.mxu0 0
      %2567 = vmatpush.bf16.msra.mxu0 %v2555
      %2568 = vmatpush.bf16.msra.mxu0 %v2554
      %2569 = vmatpush.bf16.msra.mxu0 %v2553
      %2570 = vmatpush.bf16.msra.mxu0 %v2552
      %2571 = vmatpush.bf16.msra.mxu0 %v2551
      %2572 = vmatmul.bf16.gmra.mxu0 %v2562
      %v2573 = vpop.f32.mrf.mxu0
      %v2574 = vadd.f32 0.0, %v2573
      %v2575 = vpop.f32.mrf.mxu0
      %2576 = vdwg.mxu0
      %v2577 = vadd.f32 %v2518, %v2574
      %vm2578 = vcmp.ge.f32.partialorder %v2577, 0.0
      %v2579 = vmul.f32 %v2577, 0.2
      %v2580 = vsel %vm2578, %v2577, %v2579
      %v2582 = vperm.slane %v2580, 0
      %2583 = vrot.lane.b32.xlu0 %v2582, 16
      %v2584 = vpop.permute.xlu0 %2583
      %2586 = vst.msk [vmem:[#allocation2 + $0x8] sm:$0x1] %vm761, %v2584
      %v2587 = vld [vmem:[%s435 + $0xe] sm:$0x1]
      %v2588 = vpack.c.bf16 %v2587, %v2587
      %v2589 = vld [vmem:[%s1] sm:$0xf]
      %v2590 = vld [vmem:[%s1 + $0x4] sm:$0xf]
      %v2591 = vld [vmem:[%s1 + $0x8] sm:$0xf]
      %v2592 = vld [vmem:[%s1 + $0xc] sm:$0xf]
      %v2593 = vld [vmem:[%s1 + $0x10] sm:$0xf]
      %v2594 = vld [vmem:[%s1 + $0x14] sm:$0xf]
      %v2595 = vld [vmem:[%s1 + $0x18] sm:$0xf]
      %v2596 = vld [vmem:[%s1 + $0x1c] sm:$0xf]
      %v2597 = vld [vmem:[%s1 + $0x20] sm:$0xf]
      %v2598 = vld [vmem:[%s1 + $0x24] sm:$0xf]
      %v2609 = vunpack.c.l.b16 %v2589
      %v2610 = vunpack.c.l.b16 %v2590
      %v2611 = vunpack.c.l.b16 %v2591
      %v2612 = vunpack.c.l.b16 %v2592
      %v2613 = vunpack.c.l.b16 %v2593
      %v2614 = vunpack.c.l.b16 %v2594
      %v2615 = vunpack.c.l.b16 %v2595
      %v2616 = vunpack.c.l.b16 %v2596
      %v2617 = vunpack.c.l.b16 %v2597
      %v2618 = vunpack.c.l.b16 %v2598
      %v2619 = vpack.c.b16 %v2610, %v2609
      %v2620 = vpack.c.b16 %v2612, %v2611
      %v2621 = vpack.c.b16 %v2614, %v2613
      %v2622 = vpack.c.b16 %v2616, %v2615
      %v2623 = vpack.c.b16 %v2618, %v2617
      %v2630 = vsel %vm495, %v2588, 0
      %2632 = vmatpush.bf16.msra.mxu0 0
      %2633 = vmatpush.bf16.msra.mxu0 0
      %2634 = vmatpush.bf16.msra.mxu0 0
      %2635 = vmatpush.bf16.msra.mxu0 %v2623
      %2636 = vmatpush.bf16.msra.mxu0 %v2622
      %2637 = vmatpush.bf16.msra.mxu0 %v2621
      %2638 = vmatpush.bf16.msra.mxu0 %v2620
      %2639 = vmatpush.bf16.msra.mxu0 %v2619
      %2640 = vmatmul.bf16.gmra.mxu0 %v2630
      %v2641 = vpop.f32.mrf.mxu0
      %v2642 = vadd.f32 0.0, %v2641
      %v2643 = vpop.f32.mrf.mxu0
      %2644 = vdwg.mxu0
      %v2645 = vadd.f32 %v452, %v2642
      %v2646 = vld [vmem:[%s435 + $0xf] sm:$0x1]
      %v2647 = vpack.c.bf16 %v2646, %v2646
      %v2648 = vld [vmem:[%s515] sm:$0xf]
      %v2649 = vld [vmem:[%s515 + $0x4] sm:$0xf]
      %v2650 = vld [vmem:[%s515 + $0x8] sm:$0xf]
      %v2651 = vld [vmem:[%s515 + $0xc] sm:$0xf]
      %v2652 = vld [vmem:[%s515 + $0x10] sm:$0xf]
      %v2653 = vld [vmem:[%s515 + $0x14] sm:$0xf]
      %v2654 = vld [vmem:[%s515 + $0x18] sm:$0xf]
      %v2655 = vld [vmem:[%s515 + $0x1c] sm:$0xf]
      %v2656 = vld [vmem:[%s515 + $0x20] sm:$0xf]
      %v2657 = vld [vmem:[%s515 + $0x24] sm:$0xf]
      %v2668 = vunpack.c.l.b16 %v2648
      %v2669 = vunpack.c.l.b16 %v2649
      %v2670 = vunpack.c.l.b16 %v2650
      %v2671 = vunpack.c.l.b16 %v2651
      %v2672 = vunpack.c.l.b16 %v2652
      %v2673 = vunpack.c.l.b16 %v2653
      %v2674 = vunpack.c.l.b16 %v2654
      %v2675 = vunpack.c.l.b16 %v2655
      %v2676 = vunpack.c.l.b16 %v2656
      %v2677 = vunpack.c.l.b16 %v2657
      %v2678 = vpack.c.b16 %v2669, %v2668
      %v2679 = vpack.c.b16 %v2671, %v2670
      %v2680 = vpack.c.b16 %v2673, %v2672
      %v2681 = vpack.c.b16 %v2675, %v2674
      %v2682 = vpack.c.b16 %v2677, %v2676
      %v2689 = vsel %vm495, %v2647, 0
      %2691 = vmatpush.bf16.msra.mxu0 0
      %2692 = vmatpush.bf16.msra.mxu0 0
      %2693 = vmatpush.bf16.msra.mxu0 0
      %2694 = vmatpush.bf16.msra.mxu0 %v2682
      %2695 = vmatpush.bf16.msra.mxu0 %v2681
      %2696 = vmatpush.bf16.msra.mxu0 %v2680
      %2697 = vmatpush.bf16.msra.mxu0 %v2679
      %2698 = vmatpush.bf16.msra.mxu0 %v2678
      %2699 = vmatmul.bf16.gmra.mxu0 %v2689
      %v2700 = vpop.f32.mrf.mxu0
      %v2701 = vadd.f32 0.0, %v2700
      %v2702 = vpop.f32.mrf.mxu0
      %2703 = vdwg.mxu0
      %v2704 = vadd.f32 %v2645, %v2701
      %v2705 = vld [vmem:[%s435 + $0x10] sm:$0x1]
      %v2706 = vpack.c.bf16 %v2705, %v2705
      %v2707 = vld [vmem:[%s575] sm:$0xf]
      %v2708 = vld [vmem:[%s575 + $0x4] sm:$0xf]
      %v2709 = vld [vmem:[%s575 + $0x8] sm:$0xf]
      %v2710 = vld [vmem:[%s575 + $0xc] sm:$0xf]
      %v2711 = vld [vmem:[%s575 + $0x10] sm:$0xf]
      %v2712 = vld [vmem:[%s575 + $0x14] sm:$0xf]
      %v2713 = vld [vmem:[%s575 + $0x18] sm:$0xf]
      %v2714 = vld [vmem:[%s575 + $0x1c] sm:$0xf]
      %v2715 = vld [vmem:[%s575 + $0x20] sm:$0xf]
      %v2716 = vld [vmem:[%s575 + $0x24] sm:$0xf]
      %v2727 = vunpack.c.l.b16 %v2707
      %v2728 = vunpack.c.l.b16 %v2708
      %v2729 = vunpack.c.l.b16 %v2709
      %v2730 = vunpack.c.l.b16 %v2710
      %v2731 = vunpack.c.l.b16 %v2711
      %v2732 = vunpack.c.l.b16 %v2712
      %v2733 = vunpack.c.l.b16 %v2713
      %v2734 = vunpack.c.l.b16 %v2714
      %v2735 = vunpack.c.l.b16 %v2715
      %v2736 = vunpack.c.l.b16 %v2716
      %v2737 = vpack.c.b16 %v2728, %v2727
      %v2738 = vpack.c.b16 %v2730, %v2729
      %v2739 = vpack.c.b16 %v2732, %v2731
      %v2740 = vpack.c.b16 %v2734, %v2733
      %v2741 = vpack.c.b16 %v2736, %v2735
      %v2748 = vsel %vm495, %v2706, 0
      %2750 = vmatpush.bf16.msra.mxu0 0
      %2751 = vmatpush.bf16.msra.mxu0 0
      %2752 = vmatpush.bf16.msra.mxu0 0
      %2753 = vmatpush.bf16.msra.mxu0 %v2741
      %2754 = vmatpush.bf16.msra.mxu0 %v2740
      %2755 = vmatpush.bf16.msra.mxu0 %v2739
      %2756 = vmatpush.bf16.msra.mxu0 %v2738
      %2757 = vmatpush.bf16.msra.mxu0 %v2737
      %2758 = vmatmul.bf16.gmra.mxu0 %v2748
      %v2759 = vpop.f32.mrf.mxu0
      %v2760 = vadd.f32 0.0, %v2759
      %v2761 = vpop.f32.mrf.mxu0
      %2762 = vdwg.mxu0
      %v2763 = vadd.f32 %v2704, %v2760
      %v2764 = vld [vmem:[%s435 + $0x11] sm:$0x1]
      %v2765 = vpack.c.bf16 %v2764, %v2764
      %v2766 = vld [vmem:[%s635] sm:$0xf]
      %v2767 = vld [vmem:[%s635 + $0x4] sm:$0xf]
      %v2768 = vld [vmem:[%s635 + $0x8] sm:$0xf]
      %v2769 = vld [vmem:[%s635 + $0xc] sm:$0xf]
      %v2770 = vld [vmem:[%s635 + $0x10] sm:$0xf]
      %v2771 = vld [vmem:[%s635 + $0x14] sm:$0xf]
      %v2772 = vld [vmem:[%s635 + $0x18] sm:$0xf]
      %v2773 = vld [vmem:[%s635 + $0x1c] sm:$0xf]
      %v2774 = vld [vmem:[%s635 + $0x20] sm:$0xf]
      %v2775 = vld [vmem:[%s635 + $0x24] sm:$0xf]
      %v2786 = vunpack.c.l.b16 %v2766
      %v2787 = vunpack.c.l.b16 %v2767
      %v2788 = vunpack.c.l.b16 %v2768
      %v2789 = vunpack.c.l.b16 %v2769
      %v2790 = vunpack.c.l.b16 %v2770
      %v2791 = vunpack.c.l.b16 %v2771
      %v2792 = vunpack.c.l.b16 %v2772
      %v2793 = vunpack.c.l.b16 %v2773
      %v2794 = vunpack.c.l.b16 %v2774
      %v2795 = vunpack.c.l.b16 %v2775
      %v2796 = vpack.c.b16 %v2787, %v2786
      %v2797 = vpack.c.b16 %v2789, %v2788
      %v2798 = vpack.c.b16 %v2791, %v2790
      %v2799 = vpack.c.b16 %v2793, %v2792
      %v2800 = vpack.c.b16 %v2795, %v2794
      %v2807 = vsel %vm495, %v2765, 0
      %2809 = vmatpush.bf16.msra.mxu0 0
      %2810 = vmatpush.bf16.msra.mxu0 0
      %2811 = vmatpush.bf16.msra.mxu0 0
      %2812 = vmatpush.bf16.msra.mxu0 %v2800
      %2813 = vmatpush.bf16.msra.mxu0 %v2799
      %2814 = vmatpush.bf16.msra.mxu0 %v2798
      %2815 = vmatpush.bf16.msra.mxu0 %v2797
      %2816 = vmatpush.bf16.msra.mxu0 %v2796
      %2817 = vmatmul.bf16.gmra.mxu0 %v2807
      %v2818 = vpop.f32.mrf.mxu0
      %v2819 = vadd.f32 0.0, %v2818
      %v2820 = vpop.f32.mrf.mxu0
      %2821 = vdwg.mxu0
      %v2822 = vadd.f32 %v2763, %v2819
      %v2823 = vld [vmem:[%s435 + $0x12] sm:$0x1]
      %v2824 = vpack.c.bf16 %v2823, %v2823
      %v2825 = vld [vmem:[%s695] sm:$0xf]
      %v2826 = vld [vmem:[%s695 + $0x4] sm:$0xf]
      %v2827 = vld [vmem:[%s695 + $0x8] sm:$0xf]
      %v2828 = vld [vmem:[%s695 + $0xc] sm:$0xf]
      %v2829 = vld [vmem:[%s695 + $0x10] sm:$0xf]
      %v2830 = vld [vmem:[%s695 + $0x14] sm:$0xf]
      %v2831 = vld [vmem:[%s695 + $0x18] sm:$0xf]
      %v2832 = vld [vmem:[%s695 + $0x1c] sm:$0xf]
      %v2833 = vld [vmem:[%s695 + $0x20] sm:$0xf]
      %v2834 = vld [vmem:[%s695 + $0x24] sm:$0xf]
      %v2845 = vunpack.c.l.b16 %v2825
      %v2846 = vunpack.c.l.b16 %v2826
      %v2847 = vunpack.c.l.b16 %v2827
      %v2848 = vunpack.c.l.b16 %v2828
      %v2849 = vunpack.c.l.b16 %v2829
      %v2850 = vunpack.c.l.b16 %v2830
      %v2851 = vunpack.c.l.b16 %v2831
      %v2852 = vunpack.c.l.b16 %v2832
      %v2853 = vunpack.c.l.b16 %v2833
      %v2854 = vunpack.c.l.b16 %v2834
      %v2855 = vpack.c.b16 %v2846, %v2845
      %v2856 = vpack.c.b16 %v2848, %v2847
      %v2857 = vpack.c.b16 %v2850, %v2849
      %v2858 = vpack.c.b16 %v2852, %v2851
      %v2859 = vpack.c.b16 %v2854, %v2853
      %v2866 = vsel %vm495, %v2824, 0
      %2868 = vmatpush.bf16.msra.mxu0 0
      %2869 = vmatpush.bf16.msra.mxu0 0
      %2870 = vmatpush.bf16.msra.mxu0 0
      %2871 = vmatpush.bf16.msra.mxu0 %v2859
      %2872 = vmatpush.bf16.msra.mxu0 %v2858
      %2873 = vmatpush.bf16.msra.mxu0 %v2857
      %2874 = vmatpush.bf16.msra.mxu0 %v2856
      %2875 = vmatpush.bf16.msra.mxu0 %v2855
      %2876 = vmatmul.bf16.gmra.mxu0 %v2866
      %v2877 = vpop.f32.mrf.mxu0
      %v2878 = vadd.f32 0.0, %v2877
      %v2879 = vpop.f32.mrf.mxu0
      %2880 = vdwg.mxu0
      %v2881 = vadd.f32 %v2822, %v2878
      %vm2882 = vcmp.ge.f32.partialorder %v2881, 0.0
      %v2883 = vmul.f32 %v2881, 0.2
      %v2884 = vsel %vm2882, %v2881, %v2883
      %v2886 = vperm.slane %v2884, 0
      %2887 = vrot.lane.b32.xlu0 %v2886, 16
      %v2888 = vpop.permute.xlu0 %2887
      %2890 = vst.msk [vmem:[#allocation2 + $0x9] sm:$0x1] %vm761, %v2888
      %v2891 = vld [vmem:[%s7] sm:$0x1]
      %v2892 = vld [vmem:[#allocation2] sm:$0x1]
      %v2893 = vpack.c.bf16 %v2892, %v2892
      %v2894 = vld [vmem:[%s2] sm:$0xf]
      %v2895 = vld [vmem:[%s2 + $0x4] sm:$0xf]
      %v2896 = vld [vmem:[%s2 + $0x8] sm:$0xf]
      %v2897 = vld [vmem:[%s2 + $0xc] sm:$0xf]
      %v2898 = vld [vmem:[%s2 + $0x10] sm:$0xf]
      %v2899 = vld [vmem:[%s2 + $0x14] sm:$0xf]
      %v2900 = vld [vmem:[%s2 + $0x18] sm:$0xf]
      %v2901 = vld [vmem:[%s2 + $0x1c] sm:$0xf]
      %v2902 = vld [vmem:[%s2 + $0x20] sm:$0xf]
      %v2903 = vld [vmem:[%s2 + $0x24] sm:$0xf]
      %v2904 = vld [vmem:[%s2 + $0x28] sm:$0xf]
      %v2905 = vld [vmem:[%s2 + $0x2c] sm:$0xf]
      %v2918 = vunpack.c.l.b16 %v2894
      %v2919 = vunpack.c.l.b16 %v2895
      %v2920 = vunpack.c.l.b16 %v2896
      %v2921 = vunpack.c.l.b16 %v2897
      %v2922 = vunpack.c.l.b16 %v2898
      %v2923 = vunpack.c.l.b16 %v2899
      %v2924 = vunpack.c.l.b16 %v2900
      %v2925 = vunpack.c.l.b16 %v2901
      %v2926 = vunpack.c.l.b16 %v2902
      %v2927 = vunpack.c.l.b16 %v2903
      %v2928 = vunpack.c.l.b16 %v2904
      %v2929 = vunpack.c.l.b16 %v2905
      %v2930 = vpack.c.b16 %v2919, %v2918
      %v2931 = vpack.c.b16 %v2921, %v2920
      %v2932 = vpack.c.b16 %v2923, %v2922
      %v2933 = vpack.c.b16 %v2925, %v2924
      %v2934 = vpack.c.b16 %v2927, %v2926
      %v2935 = vpack.c.b16 %v2929, %v2928
      %v2943 = vsel %vm440, %v2893, 0
      %2945 = vmatpush.bf16.msra.mxu0 0
      %2946 = vmatpush.bf16.msra.mxu0 0
      %2947 = vmatpush.bf16.msra.mxu0 %v2935
      %2948 = vmatpush.bf16.msra.mxu0 %v2934
      %2949 = vmatpush.bf16.msra.mxu0 %v2933
      %2950 = vmatpush.bf16.msra.mxu0 %v2932
      %2951 = vmatpush.bf16.msra.mxu0 %v2931
      %2952 = vmatpush.bf16.msra.mxu0 %v2930
      %2953 = vmatmul.bf16.gmra.mxu0 %v2943
      %v2954 = vpop.f32.mrf.mxu0
      %v2955 = vadd.f32 0.0, %v2954
      %v2956 = vpop.f32.mrf.mxu0
      %2957 = vdwg.mxu0
      %v2958 = vadd.f32 %v2891, %v2955
      %v2959 = vld [vmem:[#allocation2 + $0x1] sm:$0x1]
      %v2960 = vpack.c.bf16 %v2959, %v2959
      %s2961 = scalar_lea.vmem %s2, 48
      %v2962 = vld [vmem:[%s2961] sm:$0xf]
      %v2963 = vld [vmem:[%s2961 + $0x4] sm:$0xf]
      %v2964 = vld [vmem:[%s2961 + $0x8] sm:$0xf]
      %v2965 = vld [vmem:[%s2961 + $0xc] sm:$0xf]
      %v2966 = vld [vmem:[%s2961 + $0x10] sm:$0xf]
      %v2967 = vld [vmem:[%s2961 + $0x14] sm:$0xf]
      %v2968 = vld [vmem:[%s2961 + $0x18] sm:$0xf]
      %v2969 = vld [vmem:[%s2961 + $0x1c] sm:$0xf]
      %v2970 = vld [vmem:[%s2961 + $0x20] sm:$0xf]
      %v2971 = vld [vmem:[%s2961 + $0x24] sm:$0xf]
      %v2972 = vld [vmem:[%s2961 + $0x28] sm:$0xf]
      %v2973 = vld [vmem:[%s2961 + $0x2c] sm:$0xf]
      %v2986 = vunpack.c.l.b16 %v2962
      %v2987 = vunpack.c.l.b16 %v2963
      %v2988 = vunpack.c.l.b16 %v2964
      %v2989 = vunpack.c.l.b16 %v2965
      %v2990 = vunpack.c.l.b16 %v2966
      %v2991 = vunpack.c.l.b16 %v2967
      %v2992 = vunpack.c.l.b16 %v2968
      %v2993 = vunpack.c.l.b16 %v2969
      %v2994 = vunpack.c.l.b16 %v2970
      %v2995 = vunpack.c.l.b16 %v2971
      %v2996 = vunpack.c.l.b16 %v2972
      %v2997 = vunpack.c.l.b16 %v2973
      %v2998 = vpack.c.b16 %v2987, %v2986
      %v2999 = vpack.c.b16 %v2989, %v2988
      %v3000 = vpack.c.b16 %v2991, %v2990
      %v3001 = vpack.c.b16 %v2993, %v2992
      %v3002 = vpack.c.b16 %v2995, %v2994
      %v3003 = vpack.c.b16 %v2997, %v2996
      %v3011 = vsel %vm440, %v2960, 0
      %3013 = vmatpush.bf16.msra.mxu0 0
      %3014 = vmatpush.bf16.msra.mxu0 0
      %3015 = vmatpush.bf16.msra.mxu0 %v3003
      %3016 = vmatpush.bf16.msra.mxu0 %v3002
      %3017 = vmatpush.bf16.msra.mxu0 %v3001
      %3018 = vmatpush.bf16.msra.mxu0 %v3000
      %3019 = vmatpush.bf16.msra.mxu0 %v2999
      %3020 = vmatpush.bf16.msra.mxu0 %v2998
      %3021 = vmatmul.bf16.gmra.mxu0 %v3011
      %v3022 = vpop.f32.mrf.mxu0
      %v3023 = vadd.f32 0.0, %v3022
      %v3024 = vpop.f32.mrf.mxu0
      %3025 = vdwg.mxu0
      %v3026 = vadd.f32 %v2958, %v3023
      %v3027 = vld [vmem:[#allocation2 + $0x2] sm:$0x1]
      %v3028 = vpack.c.bf16 %v3027, %v3027
      %s3029 = scalar_lea.vmem %s2, 96
      %v3030 = vld [vmem:[%s3029] sm:$0xf]
      %v3031 = vld [vmem:[%s3029 + $0x4] sm:$0xf]
      %v3032 = vld [vmem:[%s3029 + $0x8] sm:$0xf]
      %v3033 = vld [vmem:[%s3029 + $0xc] sm:$0xf]
      %v3034 = vld [vmem:[%s3029 + $0x10] sm:$0xf]
      %v3035 = vld [vmem:[%s3029 + $0x14] sm:$0xf]
      %v3036 = vld [vmem:[%s3029 + $0x18] sm:$0xf]
      %v3037 = vld [vmem:[%s3029 + $0x1c] sm:$0xf]
      %v3038 = vld [vmem:[%s3029 + $0x20] sm:$0xf]
      %v3039 = vld [vmem:[%s3029 + $0x24] sm:$0xf]
      %v3040 = vld [vmem:[%s3029 + $0x28] sm:$0xf]
      %v3041 = vld [vmem:[%s3029 + $0x2c] sm:$0xf]
      %v3054 = vunpack.c.l.b16 %v3030
      %v3055 = vunpack.c.l.b16 %v3031
      %v3056 = vunpack.c.l.b16 %v3032
      %v3057 = vunpack.c.l.b16 %v3033
      %v3058 = vunpack.c.l.b16 %v3034
      %v3059 = vunpack.c.l.b16 %v3035
      %v3060 = vunpack.c.l.b16 %v3036
      %v3061 = vunpack.c.l.b16 %v3037
      %v3062 = vunpack.c.l.b16 %v3038
      %v3063 = vunpack.c.l.b16 %v3039
      %v3064 = vunpack.c.l.b16 %v3040
      %v3065 = vunpack.c.l.b16 %v3041
      %v3066 = vpack.c.b16 %v3055, %v3054
      %v3067 = vpack.c.b16 %v3057, %v3056
      %v3068 = vpack.c.b16 %v3059, %v3058
      %v3069 = vpack.c.b16 %v3061, %v3060
      %v3070 = vpack.c.b16 %v3063, %v3062
      %v3071 = vpack.c.b16 %v3065, %v3064
      %v3079 = vsel %vm440, %v3028, 0
      %3081 = vmatpush.bf16.msra.mxu0 0
      %3082 = vmatpush.bf16.msra.mxu0 0
      %3083 = vmatpush.bf16.msra.mxu0 %v3071
      %3084 = vmatpush.bf16.msra.mxu0 %v3070
      %3085 = vmatpush.bf16.msra.mxu0 %v3069
      %3086 = vmatpush.bf16.msra.mxu0 %v3068
      %3087 = vmatpush.bf16.msra.mxu0 %v3067
      %3088 = vmatpush.bf16.msra.mxu0 %v3066
      %3089 = vmatmul.bf16.gmra.mxu0 %v3079
      %v3090 = vpop.f32.mrf.mxu0
      %v3091 = vadd.f32 0.0, %v3090
      %v3092 = vpop.f32.mrf.mxu0
      %3093 = vdwg.mxu0
      %v3094 = vadd.f32 %v3026, %v3091
      %v3095 = vld [vmem:[#allocation2 + $0x3] sm:$0x1]
      %v3096 = vpack.c.bf16 %v3095, %v3095
      %s3097 = scalar_lea.vmem %s2, 144
      %v3098 = vld [vmem:[%s3097] sm:$0xf]
      %v3099 = vld [vmem:[%s3097 + $0x4] sm:$0xf]
      %v3100 = vld [vmem:[%s3097 + $0x8] sm:$0xf]
      %v3101 = vld [vmem:[%s3097 + $0xc] sm:$0xf]
      %v3102 = vld [vmem:[%s3097 + $0x10] sm:$0xf]
      %v3103 = vld [vmem:[%s3097 + $0x14] sm:$0xf]
      %v3104 = vld [vmem:[%s3097 + $0x18] sm:$0xf]
      %v3105 = vld [vmem:[%s3097 + $0x1c] sm:$0xf]
      %v3106 = vld [vmem:[%s3097 + $0x20] sm:$0xf]
      %v3107 = vld [vmem:[%s3097 + $0x24] sm:$0xf]
      %v3108 = vld [vmem:[%s3097 + $0x28] sm:$0xf]
      %v3109 = vld [vmem:[%s3097 + $0x2c] sm:$0xf]
      %v3122 = vunpack.c.l.b16 %v3098
      %v3123 = vunpack.c.l.b16 %v3099
      %v3124 = vunpack.c.l.b16 %v3100
      %v3125 = vunpack.c.l.b16 %v3101
      %v3126 = vunpack.c.l.b16 %v3102
      %v3127 = vunpack.c.l.b16 %v3103
      %v3128 = vunpack.c.l.b16 %v3104
      %v3129 = vunpack.c.l.b16 %v3105
      %v3130 = vunpack.c.l.b16 %v3106
      %v3131 = vunpack.c.l.b16 %v3107
      %v3132 = vunpack.c.l.b16 %v3108
      %v3133 = vunpack.c.l.b16 %v3109
      %v3134 = vpack.c.b16 %v3123, %v3122
      %v3135 = vpack.c.b16 %v3125, %v3124
      %v3136 = vpack.c.b16 %v3127, %v3126
      %v3137 = vpack.c.b16 %v3129, %v3128
      %v3138 = vpack.c.b16 %v3131, %v3130
      %v3139 = vpack.c.b16 %v3133, %v3132
      %v3147 = vsel %vm440, %v3096, 0
      %3149 = vmatpush.bf16.msra.mxu0 0
      %3150 = vmatpush.bf16.msra.mxu0 0
      %3151 = vmatpush.bf16.msra.mxu0 %v3139
      %3152 = vmatpush.bf16.msra.mxu0 %v3138
      %3153 = vmatpush.bf16.msra.mxu0 %v3137
      %3154 = vmatpush.bf16.msra.mxu0 %v3136
      %3155 = vmatpush.bf16.msra.mxu0 %v3135
      %3156 = vmatpush.bf16.msra.mxu0 %v3134
      %3157 = vmatmul.bf16.gmra.mxu0 %v3147
      %v3158 = vpop.f32.mrf.mxu0
      %v3159 = vadd.f32 0.0, %v3158
      %v3160 = vpop.f32.mrf.mxu0
      %3161 = vdwg.mxu0
      %v3162 = vadd.f32 %v3094, %v3159
      %v3163 = vld [vmem:[#allocation2 + $0x4] sm:$0x1]
      %v3164 = vpack.c.bf16 %v3163, %v3163
      %s3165 = scalar_lea.vmem %s2, 192
      %v3166 = vld [vmem:[%s3165] sm:$0xf]
      %v3167 = vld [vmem:[%s3165 + $0x4] sm:$0xf]
      %v3168 = vld [vmem:[%s3165 + $0x8] sm:$0xf]
      %v3169 = vld [vmem:[%s3165 + $0xc] sm:$0xf]
      %v3170 = vld [vmem:[%s3165 + $0x10] sm:$0xf]
      %v3171 = vld [vmem:[%s3165 + $0x14] sm:$0xf]
      %v3172 = vld [vmem:[%s3165 + $0x18] sm:$0xf]
      %v3173 = vld [vmem:[%s3165 + $0x1c] sm:$0xf]
      %v3174 = vld [vmem:[%s3165 + $0x20] sm:$0xf]
      %v3175 = vld [vmem:[%s3165 + $0x24] sm:$0xf]
      %v3176 = vld [vmem:[%s3165 + $0x28] sm:$0xf]
      %v3177 = vld [vmem:[%s3165 + $0x2c] sm:$0xf]
      %v3190 = vunpack.c.l.b16 %v3166
      %v3191 = vunpack.c.l.b16 %v3167
      %v3192 = vunpack.c.l.b16 %v3168
      %v3193 = vunpack.c.l.b16 %v3169
      %v3194 = vunpack.c.l.b16 %v3170
      %v3195 = vunpack.c.l.b16 %v3171
      %v3196 = vunpack.c.l.b16 %v3172
      %v3197 = vunpack.c.l.b16 %v3173
      %v3198 = vunpack.c.l.b16 %v3174
      %v3199 = vunpack.c.l.b16 %v3175
      %v3200 = vunpack.c.l.b16 %v3176
      %v3201 = vunpack.c.l.b16 %v3177
      %v3202 = vpack.c.b16 %v3191, %v3190
      %v3203 = vpack.c.b16 %v3193, %v3192
      %v3204 = vpack.c.b16 %v3195, %v3194
      %v3205 = vpack.c.b16 %v3197, %v3196
      %v3206 = vpack.c.b16 %v3199, %v3198
      %v3207 = vpack.c.b16 %v3201, %v3200
      %v3215 = vsel %vm440, %v3164, 0
      %3217 = vmatpush.bf16.msra.mxu0 0
      %3218 = vmatpush.bf16.msra.mxu0 0
      %3219 = vmatpush.bf16.msra.mxu0 %v3207
      %3220 = vmatpush.bf16.msra.mxu0 %v3206
      %3221 = vmatpush.bf16.msra.mxu0 %v3205
      %3222 = vmatpush.bf16.msra.mxu0 %v3204
      %3223 = vmatpush.bf16.msra.mxu0 %v3203
      %3224 = vmatpush.bf16.msra.mxu0 %v3202
      %3225 = vmatmul.bf16.gmra.mxu0 %v3215
      %v3226 = vpop.f32.mrf.mxu0
      %v3227 = vadd.f32 0.0, %v3226
      %v3228 = vpop.f32.mrf.mxu0
      %3229 = vdwg.mxu0
      %v3230 = vadd.f32 %v3162, %v3227
      %vm3231 = vcmp.ge.f32.partialorder %v3230, 0.0
      %v3232 = vmul.f32 %v3230, 0.2
      %v3233 = vsel %vm3231, %v3230, %v3232
      %v3235 = vperm.slane %v3233, 0
      %3236 = vrot.lane.b32.xlu0 %v3235, 32
      %v3237 = vpop.permute.xlu0 %3236
      %vm3239 = vcmask 778496
      %3240 = vst.msk [vmem:[#allocation3 + $0x2] sm:$0x1] %vm3239, %v3237
      %v3241 = vld [vmem:[#allocation2 + $0x2] sm:$0x1]
      %v3242 = vpack.c.bf16 %v3241, %v3241
      %v3243 = vld [vmem:[%s2] sm:$0xf]
      %v3244 = vld [vmem:[%s2 + $0x4] sm:$0xf]
      %v3245 = vld [vmem:[%s2 + $0x8] sm:$0xf]
      %v3246 = vld [vmem:[%s2 + $0xc] sm:$0xf]
      %v3247 = vld [vmem:[%s2 + $0x10] sm:$0xf]
      %v3248 = vld [vmem:[%s2 + $0x14] sm:$0xf]
      %v3249 = vld [vmem:[%s2 + $0x18] sm:$0xf]
      %v3250 = vld [vmem:[%s2 + $0x1c] sm:$0xf]
      %v3251 = vld [vmem:[%s2 + $0x20] sm:$0xf]
      %v3252 = vld [vmem:[%s2 + $0x24] sm:$0xf]
      %v3253 = vld [vmem:[%s2 + $0x28] sm:$0xf]
      %v3254 = vld [vmem:[%s2 + $0x2c] sm:$0xf]
      %v3267 = vunpack.c.l.b16 %v3243
      %v3268 = vunpack.c.l.b16 %v3244
      %v3269 = vunpack.c.l.b16 %v3245
      %v3270 = vunpack.c.l.b16 %v3246
      %v3271 = vunpack.c.l.b16 %v3247
      %v3272 = vunpack.c.l.b16 %v3248
      %v3273 = vunpack.c.l.b16 %v3249
      %v3274 = vunpack.c.l.b16 %v3250
      %v3275 = vunpack.c.l.b16 %v3251
      %v3276 = vunpack.c.l.b16 %v3252
      %v3277 = vunpack.c.l.b16 %v3253
      %v3278 = vunpack.c.l.b16 %v3254
      %v3279 = vpack.c.b16 %v3268, %v3267
      %v3280 = vpack.c.b16 %v3270, %v3269
      %v3281 = vpack.c.b16 %v3272, %v3271
      %v3282 = vpack.c.b16 %v3274, %v3273
      %v3283 = vpack.c.b16 %v3276, %v3275
      %v3284 = vpack.c.b16 %v3278, %v3277
      %v3292 = vsel %vm440, %v3242, 0
      %3294 = vmatpush.bf16.msra.mxu0 0
      %3295 = vmatpush.bf16.msra.mxu0 0
      %3296 = vmatpush.bf16.msra.mxu0 %v3284
      %3297 = vmatpush.bf16.msra.mxu0 %v3283
      %3298 = vmatpush.bf16.msra.mxu0 %v3282
      %3299 = vmatpush.bf16.msra.mxu0 %v3281
      %3300 = vmatpush.bf16.msra.mxu0 %v3280
      %3301 = vmatpush.bf16.msra.mxu0 %v3279
      %3302 = vmatmul.bf16.gmra.mxu0 %v3292
      %v3303 = vpop.f32.mrf.mxu0
      %v3304 = vadd.f32 0.0, %v3303
      %v3305 = vpop.f32.mrf.mxu0
      %3306 = vdwg.mxu0
      %v3307 = vadd.f32 %v2891, %v3304
      %v3308 = vld [vmem:[#allocation2 + $0x3] sm:$0x1]
      %v3309 = vpack.c.bf16 %v3308, %v3308
      %v3310 = vld [vmem:[%s2961] sm:$0xf]
      %v3311 = vld [vmem:[%s2961 + $0x4] sm:$0xf]
      %v3312 = vld [vmem:[%s2961 + $0x8] sm:$0xf]
      %v3313 = vld [vmem:[%s2961 + $0xc] sm:$0xf]
      %v3314 = vld [vmem:[%s2961 + $0x10] sm:$0xf]
      %v3315 = vld [vmem:[%s2961 + $0x14] sm:$0xf]
      %v3316 = vld [vmem:[%s2961 + $0x18] sm:$0xf]
      %v3317 = vld [vmem:[%s2961 + $0x1c] sm:$0xf]
      %v3318 = vld [vmem:[%s2961 + $0x20] sm:$0xf]
      %v3319 = vld [vmem:[%s2961 + $0x24] sm:$0xf]
      %v3320 = vld [vmem:[%s2961 + $0x28] sm:$0xf]
      %v3321 = vld [vmem:[%s2961 + $0x2c] sm:$0xf]
      %v3334 = vunpack.c.l.b16 %v3310
      %v3335 = vunpack.c.l.b16 %v3311
      %v3336 = vunpack.c.l.b16 %v3312
      %v3337 = vunpack.c.l.b16 %v3313
      %v3338 = vunpack.c.l.b16 %v3314
      %v3339 = vunpack.c.l.b16 %v3315
      %v3340 = vunpack.c.l.b16 %v3316
      %v3341 = vunpack.c.l.b16 %v3317
      %v3342 = vunpack.c.l.b16 %v3318
      %v3343 = vunpack.c.l.b16 %v3319
      %v3344 = vunpack.c.l.b16 %v3320
      %v3345 = vunpack.c.l.b16 %v3321
      %v3346 = vpack.c.b16 %v3335, %v3334
      %v3347 = vpack.c.b16 %v3337, %v3336
      %v3348 = vpack.c.b16 %v3339, %v3338
      %v3349 = vpack.c.b16 %v3341, %v3340
      %v3350 = vpack.c.b16 %v3343, %v3342
      %v3351 = vpack.c.b16 %v3345, %v3344
      %v3359 = vsel %vm440, %v3309, 0
      %3361 = vmatpush.bf16.msra.mxu0 0
      %3362 = vmatpush.bf16.msra.mxu0 0
      %3363 = vmatpush.bf16.msra.mxu0 %v3351
      %3364 = vmatpush.bf16.msra.mxu0 %v3350
      %3365 = vmatpush.bf16.msra.mxu0 %v3349
      %3366 = vmatpush.bf16.msra.mxu0 %v3348
      %3367 = vmatpush.bf16.msra.mxu0 %v3347
      %3368 = vmatpush.bf16.msra.mxu0 %v3346
      %3369 = vmatmul.bf16.gmra.mxu0 %v3359
      %v3370 = vpop.f32.mrf.mxu0
      %v3371 = vadd.f32 0.0, %v3370
      %v3372 = vpop.f32.mrf.mxu0
      %3373 = vdwg.mxu0
      %v3374 = vadd.f32 %v3307, %v3371
      %v3375 = vld [vmem:[#allocation2 + $0x4] sm:$0x1]
      %v3376 = vpack.c.bf16 %v3375, %v3375
      %v3377 = vld [vmem:[%s3029] sm:$0xf]
      %v3378 = vld [vmem:[%s3029 + $0x4] sm:$0xf]
      %v3379 = vld [vmem:[%s3029 + $0x8] sm:$0xf]
      %v3380 = vld [vmem:[%s3029 + $0xc] sm:$0xf]
      %v3381 = vld [vmem:[%s3029 + $0x10] sm:$0xf]
      %v3382 = vld [vmem:[%s3029 + $0x14] sm:$0xf]
      %v3383 = vld [vmem:[%s3029 + $0x18] sm:$0xf]
      %v3384 = vld [vmem:[%s3029 + $0x1c] sm:$0xf]
      %v3385 = vld [vmem:[%s3029 + $0x20] sm:$0xf]
      %v3386 = vld [vmem:[%s3029 + $0x24] sm:$0xf]
      %v3387 = vld [vmem:[%s3029 + $0x28] sm:$0xf]
      %v3388 = vld [vmem:[%s3029 + $0x2c] sm:$0xf]
      %v3401 = vunpack.c.l.b16 %v3377
      %v3402 = vunpack.c.l.b16 %v3378
      %v3403 = vunpack.c.l.b16 %v3379
      %v3404 = vunpack.c.l.b16 %v3380
      %v3405 = vunpack.c.l.b16 %v3381
      %v3406 = vunpack.c.l.b16 %v3382
      %v3407 = vunpack.c.l.b16 %v3383
      %v3408 = vunpack.c.l.b16 %v3384
      %v3409 = vunpack.c.l.b16 %v3385
      %v3410 = vunpack.c.l.b16 %v3386
      %v3411 = vunpack.c.l.b16 %v3387
      %v3412 = vunpack.c.l.b16 %v3388
      %v3413 = vpack.c.b16 %v3402, %v3401
      %v3414 = vpack.c.b16 %v3404, %v3403
      %v3415 = vpack.c.b16 %v3406, %v3405
      %v3416 = vpack.c.b16 %v3408, %v3407
      %v3417 = vpack.c.b16 %v3410, %v3409
      %v3418 = vpack.c.b16 %v3412, %v3411
      %v3426 = vsel %vm440, %v3376, 0
      %3428 = vmatpush.bf16.msra.mxu0 0
      %3429 = vmatpush.bf16.msra.mxu0 0
      %3430 = vmatpush.bf16.msra.mxu0 %v3418
      %3431 = vmatpush.bf16.msra.mxu0 %v3417
      %3432 = vmatpush.bf16.msra.mxu0 %v3416
      %3433 = vmatpush.bf16.msra.mxu0 %v3415
      %3434 = vmatpush.bf16.msra.mxu0 %v3414
      %3435 = vmatpush.bf16.msra.mxu0 %v3413
      %3436 = vmatmul.bf16.gmra.mxu0 %v3426
      %v3437 = vpop.f32.mrf.mxu0
      %v3438 = vadd.f32 0.0, %v3437
      %v3439 = vpop.f32.mrf.mxu0
      %3440 = vdwg.mxu0
      %v3441 = vadd.f32 %v3374, %v3438
      %v3442 = vld [vmem:[#allocation2 + $0x5] sm:$0x1]
      %v3443 = vpack.c.bf16 %v3442, %v3442
      %v3444 = vld [vmem:[%s3097] sm:$0xf]
      %v3445 = vld [vmem:[%s3097 + $0x4] sm:$0xf]
      %v3446 = vld [vmem:[%s3097 + $0x8] sm:$0xf]
      %v3447 = vld [vmem:[%s3097 + $0xc] sm:$0xf]
      %v3448 = vld [vmem:[%s3097 + $0x10] sm:$0xf]
      %v3449 = vld [vmem:[%s3097 + $0x14] sm:$0xf]
      %v3450 = vld [vmem:[%s3097 + $0x18] sm:$0xf]
      %v3451 = vld [vmem:[%s3097 + $0x1c] sm:$0xf]
      %v3452 = vld [vmem:[%s3097 + $0x20] sm:$0xf]
      %v3453 = vld [vmem:[%s3097 + $0x24] sm:$0xf]
      %v3454 = vld [vmem:[%s3097 + $0x28] sm:$0xf]
      %v3455 = vld [vmem:[%s3097 + $0x2c] sm:$0xf]
      %v3468 = vunpack.c.l.b16 %v3444
      %v3469 = vunpack.c.l.b16 %v3445
      %v3470 = vunpack.c.l.b16 %v3446
      %v3471 = vunpack.c.l.b16 %v3447
      %v3472 = vunpack.c.l.b16 %v3448
      %v3473 = vunpack.c.l.b16 %v3449
      %v3474 = vunpack.c.l.b16 %v3450
      %v3475 = vunpack.c.l.b16 %v3451
      %v3476 = vunpack.c.l.b16 %v3452
      %v3477 = vunpack.c.l.b16 %v3453
      %v3478 = vunpack.c.l.b16 %v3454
      %v3479 = vunpack.c.l.b16 %v3455
      %v3480 = vpack.c.b16 %v3469, %v3468
      %v3481 = vpack.c.b16 %v3471, %v3470
      %v3482 = vpack.c.b16 %v3473, %v3472
      %v3483 = vpack.c.b16 %v3475, %v3474
      %v3484 = vpack.c.b16 %v3477, %v3476
      %v3485 = vpack.c.b16 %v3479, %v3478
      %v3493 = vsel %vm440, %v3443, 0
      %3495 = vmatpush.bf16.msra.mxu0 0
      %3496 = vmatpush.bf16.msra.mxu0 0
      %3497 = vmatpush.bf16.msra.mxu0 %v3485
      %3498 = vmatpush.bf16.msra.mxu0 %v3484
      %3499 = vmatpush.bf16.msra.mxu0 %v3483
      %3500 = vmatpush.bf16.msra.mxu0 %v3482
      %3501 = vmatpush.bf16.msra.mxu0 %v3481
      %3502 = vmatpush.bf16.msra.mxu0 %v3480
      %3503 = vmatmul.bf16.gmra.mxu0 %v3493
      %v3504 = vpop.f32.mrf.mxu0
      %v3505 = vadd.f32 0.0, %v3504
      %v3506 = vpop.f32.mrf.mxu0
      %3507 = vdwg.mxu0
      %v3508 = vadd.f32 %v3441, %v3505
      %v3509 = vld [vmem:[#allocation2 + $0x6] sm:$0x1]
      %v3510 = vpack.c.bf16 %v3509, %v3509
      %v3511 = vld [vmem:[%s3165] sm:$0xf]
      %v3512 = vld [vmem:[%s3165 + $0x4] sm:$0xf]
      %v3513 = vld [vmem:[%s3165 + $0x8] sm:$0xf]
      %v3514 = vld [vmem:[%s3165 + $0xc] sm:$0xf]
      %v3515 = vld [vmem:[%s3165 + $0x10] sm:$0xf]
      %v3516 = vld [vmem:[%s3165 + $0x14] sm:$0xf]
      %v3517 = vld [vmem:[%s3165 + $0x18] sm:$0xf]
      %v3518 = vld [vmem:[%s3165 + $0x1c] sm:$0xf]
      %v3519 = vld [vmem:[%s3165 + $0x20] sm:$0xf]
      %v3520 = vld [vmem:[%s3165 + $0x24] sm:$0xf]
      %v3521 = vld [vmem:[%s3165 + $0x28] sm:$0xf]
      %v3522 = vld [vmem:[%s3165 + $0x2c] sm:$0xf]
      %v3535 = vunpack.c.l.b16 %v3511
      %v3536 = vunpack.c.l.b16 %v3512
      %v3537 = vunpack.c.l.b16 %v3513
      %v3538 = vunpack.c.l.b16 %v3514
      %v3539 = vunpack.c.l.b16 %v3515
      %v3540 = vunpack.c.l.b16 %v3516
      %v3541 = vunpack.c.l.b16 %v3517
      %v3542 = vunpack.c.l.b16 %v3518
      %v3543 = vunpack.c.l.b16 %v3519
      %v3544 = vunpack.c.l.b16 %v3520
      %v3545 = vunpack.c.l.b16 %v3521
      %v3546 = vunpack.c.l.b16 %v3522
      %v3547 = vpack.c.b16 %v3536, %v3535
      %v3548 = vpack.c.b16 %v3538, %v3537
      %v3549 = vpack.c.b16 %v3540, %v3539
      %v3550 = vpack.c.b16 %v3542, %v3541
      %v3551 = vpack.c.b16 %v3544, %v3543
      %v3552 = vpack.c.b16 %v3546, %v3545
      %v3560 = vsel %vm440, %v3510, 0
      %3562 = vmatpush.bf16.msra.mxu0 0
      %3563 = vmatpush.bf16.msra.mxu0 0
      %3564 = vmatpush.bf16.msra.mxu0 %v3552
      %3565 = vmatpush.bf16.msra.mxu0 %v3551
      %3566 = vmatpush.bf16.msra.mxu0 %v3550
      %3567 = vmatpush.bf16.msra.mxu0 %v3549
      %3568 = vmatpush.bf16.msra.mxu0 %v3548
      %3569 = vmatpush.bf16.msra.mxu0 %v3547
      %3570 = vmatmul.bf16.gmra.mxu0 %v3560
      %v3571 = vpop.f32.mrf.mxu0
      %v3572 = vadd.f32 0.0, %v3571
      %v3573 = vpop.f32.mrf.mxu0
      %3574 = vdwg.mxu0
      %v3575 = vadd.f32 %v3508, %v3572
      %vm3576 = vcmp.ge.f32.partialorder %v3575, 0.0
      %v3577 = vmul.f32 %v3575, 0.2
      %v3578 = vsel %vm3576, %v3575, %v3577
      %v3580 = vperm.slane %v3578, 0
      %3581 = vrot.lane.b32.xlu0 %v3580, 32
      %v3582 = vpop.permute.xlu0 %3581
      %3584 = vst.msk [vmem:[#allocation3 + $0x3] sm:$0x1] %vm3239, %v3582
      %v3585 = vld [vmem:[#allocation2 + $0x4] sm:$0x1]
      %v3586 = vpack.c.bf16 %v3585, %v3585
      %v3587 = vld [vmem:[%s2] sm:$0xf]
      %v3588 = vld [vmem:[%s2 + $0x4] sm:$0xf]
      %v3589 = vld [vmem:[%s2 + $0x8] sm:$0xf]
      %v3590 = vld [vmem:[%s2 + $0xc] sm:$0xf]
      %v3591 = vld [vmem:[%s2 + $0x10] sm:$0xf]
      %v3592 = vld [vmem:[%s2 + $0x14] sm:$0xf]
      %v3593 = vld [vmem:[%s2 + $0x18] sm:$0xf]
      %v3594 = vld [vmem:[%s2 + $0x1c] sm:$0xf]
      %v3595 = vld [vmem:[%s2 + $0x20] sm:$0xf]
      %v3596 = vld [vmem:[%s2 + $0x24] sm:$0xf]
      %v3597 = vld [vmem:[%s2 + $0x28] sm:$0xf]
      %v3598 = vld [vmem:[%s2 + $0x2c] sm:$0xf]
      %v3611 = vunpack.c.l.b16 %v3587
      %v3612 = vunpack.c.l.b16 %v3588
      %v3613 = vunpack.c.l.b16 %v3589
      %v3614 = vunpack.c.l.b16 %v3590
      %v3615 = vunpack.c.l.b16 %v3591
      %v3616 = vunpack.c.l.b16 %v3592
      %v3617 = vunpack.c.l.b16 %v3593
      %v3618 = vunpack.c.l.b16 %v3594
      %v3619 = vunpack.c.l.b16 %v3595
      %v3620 = vunpack.c.l.b16 %v3596
      %v3621 = vunpack.c.l.b16 %v3597
      %v3622 = vunpack.c.l.b16 %v3598
      %v3623 = vpack.c.b16 %v3612, %v3611
      %v3624 = vpack.c.b16 %v3614, %v3613
      %v3625 = vpack.c.b16 %v3616, %v3615
      %v3626 = vpack.c.b16 %v3618, %v3617
      %v3627 = vpack.c.b16 %v3620, %v3619
      %v3628 = vpack.c.b16 %v3622, %v3621
      %v3636 = vsel %vm440, %v3586, 0
      %3638 = vmatpush.bf16.msra.mxu0 0
      %3639 = vmatpush.bf16.msra.mxu0 0
      %3640 = vmatpush.bf16.msra.mxu0 %v3628
      %3641 = vmatpush.bf16.msra.mxu0 %v3627
      %3642 = vmatpush.bf16.msra.mxu0 %v3626
      %3643 = vmatpush.bf16.msra.mxu0 %v3625
      %3644 = vmatpush.bf16.msra.mxu0 %v3624
      %3645 = vmatpush.bf16.msra.mxu0 %v3623
      %3646 = vmatmul.bf16.gmra.mxu0 %v3636
      %v3647 = vpop.f32.mrf.mxu0
      %v3648 = vadd.f32 0.0, %v3647
      %v3649 = vpop.f32.mrf.mxu0
      %3650 = vdwg.mxu0
      %v3651 = vadd.f32 %v2891, %v3648
      %v3652 = vld [vmem:[#allocation2 + $0x5] sm:$0x1]
      %v3653 = vpack.c.bf16 %v3652, %v3652
      %v3654 = vld [vmem:[%s2961] sm:$0xf]
      %v3655 = vld [vmem:[%s2961 + $0x4] sm:$0xf]
      %v3656 = vld [vmem:[%s2961 + $0x8] sm:$0xf]
      %v3657 = vld [vmem:[%s2961 + $0xc] sm:$0xf]
      %v3658 = vld [vmem:[%s2961 + $0x10] sm:$0xf]
      %v3659 = vld [vmem:[%s2961 + $0x14] sm:$0xf]
      %v3660 = vld [vmem:[%s2961 + $0x18] sm:$0xf]
      %v3661 = vld [vmem:[%s2961 + $0x1c] sm:$0xf]
      %v3662 = vld [vmem:[%s2961 + $0x20] sm:$0xf]
      %v3663 = vld [vmem:[%s2961 + $0x24] sm:$0xf]
      %v3664 = vld [vmem:[%s2961 + $0x28] sm:$0xf]
      %v3665 = vld [vmem:[%s2961 + $0x2c] sm:$0xf]
      %v3678 = vunpack.c.l.b16 %v3654
      %v3679 = vunpack.c.l.b16 %v3655
      %v3680 = vunpack.c.l.b16 %v3656
      %v3681 = vunpack.c.l.b16 %v3657
      %v3682 = vunpack.c.l.b16 %v3658
      %v3683 = vunpack.c.l.b16 %v3659
      %v3684 = vunpack.c.l.b16 %v3660
      %v3685 = vunpack.c.l.b16 %v3661
      %v3686 = vunpack.c.l.b16 %v3662
      %v3687 = vunpack.c.l.b16 %v3663
      %v3688 = vunpack.c.l.b16 %v3664
      %v3689 = vunpack.c.l.b16 %v3665
      %v3690 = vpack.c.b16 %v3679, %v3678
      %v3691 = vpack.c.b16 %v3681, %v3680
      %v3692 = vpack.c.b16 %v3683, %v3682
      %v3693 = vpack.c.b16 %v3685, %v3684
      %v3694 = vpack.c.b16 %v3687, %v3686
      %v3695 = vpack.c.b16 %v3689, %v3688
      %v3703 = vsel %vm440, %v3653, 0
      %3705 = vmatpush.bf16.msra.mxu0 0
      %3706 = vmatpush.bf16.msra.mxu0 0
      %3707 = vmatpush.bf16.msra.mxu0 %v3695
      %3708 = vmatpush.bf16.msra.mxu0 %v3694
      %3709 = vmatpush.bf16.msra.mxu0 %v3693
      %3710 = vmatpush.bf16.msra.mxu0 %v3692
      %3711 = vmatpush.bf16.msra.mxu0 %v3691
      %3712 = vmatpush.bf16.msra.mxu0 %v3690
      %3713 = vmatmul.bf16.gmra.mxu0 %v3703
      %v3714 = vpop.f32.mrf.mxu0
      %v3715 = vadd.f32 0.0, %v3714
      %v3716 = vpop.f32.mrf.mxu0
      %3717 = vdwg.mxu0
      %v3718 = vadd.f32 %v3651, %v3715
      %v3719 = vld [vmem:[#allocation2 + $0x6] sm:$0x1]
      %v3720 = vpack.c.bf16 %v3719, %v3719
      %v3721 = vld [vmem:[%s3029] sm:$0xf]
      %v3722 = vld [vmem:[%s3029 + $0x4] sm:$0xf]
      %v3723 = vld [vmem:[%s3029 + $0x8] sm:$0xf]
      %v3724 = vld [vmem:[%s3029 + $0xc] sm:$0xf]
      %v3725 = vld [vmem:[%s3029 + $0x10] sm:$0xf]
      %v3726 = vld [vmem:[%s3029 + $0x14] sm:$0xf]
      %v3727 = vld [vmem:[%s3029 + $0x18] sm:$0xf]
      %v3728 = vld [vmem:[%s3029 + $0x1c] sm:$0xf]
      %v3729 = vld [vmem:[%s3029 + $0x20] sm:$0xf]
      %v3730 = vld [vmem:[%s3029 + $0x24] sm:$0xf]
      %v3731 = vld [vmem:[%s3029 + $0x28] sm:$0xf]
      %v3732 = vld [vmem:[%s3029 + $0x2c] sm:$0xf]
      %v3745 = vunpack.c.l.b16 %v3721
      %v3746 = vunpack.c.l.b16 %v3722
      %v3747 = vunpack.c.l.b16 %v3723
      %v3748 = vunpack.c.l.b16 %v3724
      %v3749 = vunpack.c.l.b16 %v3725
      %v3750 = vunpack.c.l.b16 %v3726
      %v3751 = vunpack.c.l.b16 %v3727
      %v3752 = vunpack.c.l.b16 %v3728
      %v3753 = vunpack.c.l.b16 %v3729
      %v3754 = vunpack.c.l.b16 %v3730
      %v3755 = vunpack.c.l.b16 %v3731
      %v3756 = vunpack.c.l.b16 %v3732
      %v3757 = vpack.c.b16 %v3746, %v3745
      %v3758 = vpack.c.b16 %v3748, %v3747
      %v3759 = vpack.c.b16 %v3750, %v3749
      %v3760 = vpack.c.b16 %v3752, %v3751
      %v3761 = vpack.c.b16 %v3754, %v3753
      %v3762 = vpack.c.b16 %v3756, %v3755
      %v3770 = vsel %vm440, %v3720, 0
      %3772 = vmatpush.bf16.msra.mxu0 0
      %3773 = vmatpush.bf16.msra.mxu0 0
      %3774 = vmatpush.bf16.msra.mxu0 %v3762
      %3775 = vmatpush.bf16.msra.mxu0 %v3761
      %3776 = vmatpush.bf16.msra.mxu0 %v3760
      %3777 = vmatpush.bf16.msra.mxu0 %v3759
      %3778 = vmatpush.bf16.msra.mxu0 %v3758
      %3779 = vmatpush.bf16.msra.mxu0 %v3757
      %3780 = vmatmul.bf16.gmra.mxu0 %v3770
      %v3781 = vpop.f32.mrf.mxu0
      %v3782 = vadd.f32 0.0, %v3781
      %v3783 = vpop.f32.mrf.mxu0
      %3784 = vdwg.mxu0
      %v3785 = vadd.f32 %v3718, %v3782
      %v3786 = vld [vmem:[#allocation2 + $0x7] sm:$0x1]
      %v3787 = vpack.c.bf16 %v3786, %v3786
      %v3788 = vld [vmem:[%s3097] sm:$0xf]
      %v3789 = vld [vmem:[%s3097 + $0x4] sm:$0xf]
      %v3790 = vld [vmem:[%s3097 + $0x8] sm:$0xf]
      %v3791 = vld [vmem:[%s3097 + $0xc] sm:$0xf]
      %v3792 = vld [vmem:[%s3097 + $0x10] sm:$0xf]
      %v3793 = vld [vmem:[%s3097 + $0x14] sm:$0xf]
      %v3794 = vld [vmem:[%s3097 + $0x18] sm:$0xf]
      %v3795 = vld [vmem:[%s3097 + $0x1c] sm:$0xf]
      %v3796 = vld [vmem:[%s3097 + $0x20] sm:$0xf]
      %v3797 = vld [vmem:[%s3097 + $0x24] sm:$0xf]
      %v3798 = vld [vmem:[%s3097 + $0x28] sm:$0xf]
      %v3799 = vld [vmem:[%s3097 + $0x2c] sm:$0xf]
      %v3812 = vunpack.c.l.b16 %v3788
      %v3813 = vunpack.c.l.b16 %v3789
      %v3814 = vunpack.c.l.b16 %v3790
      %v3815 = vunpack.c.l.b16 %v3791
      %v3816 = vunpack.c.l.b16 %v3792
      %v3817 = vunpack.c.l.b16 %v3793
      %v3818 = vunpack.c.l.b16 %v3794
      %v3819 = vunpack.c.l.b16 %v3795
      %v3820 = vunpack.c.l.b16 %v3796
      %v3821 = vunpack.c.l.b16 %v3797
      %v3822 = vunpack.c.l.b16 %v3798
      %v3823 = vunpack.c.l.b16 %v3799
      %v3824 = vpack.c.b16 %v3813, %v3812
      %v3825 = vpack.c.b16 %v3815, %v3814
      %v3826 = vpack.c.b16 %v3817, %v3816
      %v3827 = vpack.c.b16 %v3819, %v3818
      %v3828 = vpack.c.b16 %v3821, %v3820
      %v3829 = vpack.c.b16 %v3823, %v3822
      %v3837 = vsel %vm440, %v3787, 0
      %3839 = vmatpush.bf16.msra.mxu0 0
      %3840 = vmatpush.bf16.msra.mxu0 0
      %3841 = vmatpush.bf16.msra.mxu0 %v3829
      %3842 = vmatpush.bf16.msra.mxu0 %v3828
      %3843 = vmatpush.bf16.msra.mxu0 %v3827
      %3844 = vmatpush.bf16.msra.mxu0 %v3826
      %3845 = vmatpush.bf16.msra.mxu0 %v3825
      %3846 = vmatpush.bf16.msra.mxu0 %v3824
      %3847 = vmatmul.bf16.gmra.mxu0 %v3837
      %v3848 = vpop.f32.mrf.mxu0
      %v3849 = vadd.f32 0.0, %v3848
      %v3850 = vpop.f32.mrf.mxu0
      %3851 = vdwg.mxu0
      %v3852 = vadd.f32 %v3785, %v3849
      %v3853 = vld [vmem:[#allocation2 + $0x8] sm:$0x1]
      %v3854 = vpack.c.bf16 %v3853, %v3853
      %v3855 = vld [vmem:[%s3165] sm:$0xf]
      %v3856 = vld [vmem:[%s3165 + $0x4] sm:$0xf]
      %v3857 = vld [vmem:[%s3165 + $0x8] sm:$0xf]
      %v3858 = vld [vmem:[%s3165 + $0xc] sm:$0xf]
      %v3859 = vld [vmem:[%s3165 + $0x10] sm:$0xf]
      %v3860 = vld [vmem:[%s3165 + $0x14] sm:$0xf]
      %v3861 = vld [vmem:[%s3165 + $0x18] sm:$0xf]
      %v3862 = vld [vmem:[%s3165 + $0x1c] sm:$0xf]
      %v3863 = vld [vmem:[%s3165 + $0x20] sm:$0xf]
      %v3864 = vld [vmem:[%s3165 + $0x24] sm:$0xf]
      %v3865 = vld [vmem:[%s3165 + $0x28] sm:$0xf]
      %v3866 = vld [vmem:[%s3165 + $0x2c] sm:$0xf]
      %v3879 = vunpack.c.l.b16 %v3855
      %v3880 = vunpack.c.l.b16 %v3856
      %v3881 = vunpack.c.l.b16 %v3857
      %v3882 = vunpack.c.l.b16 %v3858
      %v3883 = vunpack.c.l.b16 %v3859
      %v3884 = vunpack.c.l.b16 %v3860
      %v3885 = vunpack.c.l.b16 %v3861
      %v3886 = vunpack.c.l.b16 %v3862
      %v3887 = vunpack.c.l.b16 %v3863
      %v3888 = vunpack.c.l.b16 %v3864
      %v3889 = vunpack.c.l.b16 %v3865
      %v3890 = vunpack.c.l.b16 %v3866
      %v3891 = vpack.c.b16 %v3880, %v3879
      %v3892 = vpack.c.b16 %v3882, %v3881
      %v3893 = vpack.c.b16 %v3884, %v3883
      %v3894 = vpack.c.b16 %v3886, %v3885
      %v3895 = vpack.c.b16 %v3888, %v3887
      %v3896 = vpack.c.b16 %v3890, %v3889
      %v3904 = vsel %vm440, %v3854, 0
      %3906 = vmatpush.bf16.msra.mxu0 0
      %3907 = vmatpush.bf16.msra.mxu0 0
      %3908 = vmatpush.bf16.msra.mxu0 %v3896
      %3909 = vmatpush.bf16.msra.mxu0 %v3895
      %3910 = vmatpush.bf16.msra.mxu0 %v3894
      %3911 = vmatpush.bf16.msra.mxu0 %v3893
      %3912 = vmatpush.bf16.msra.mxu0 %v3892
      %3913 = vmatpush.bf16.msra.mxu0 %v3891
      %3914 = vmatmul.bf16.gmra.mxu0 %v3904
      %v3915 = vpop.f32.mrf.mxu0
      %v3916 = vadd.f32 0.0, %v3915
      %v3917 = vpop.f32.mrf.mxu0
      %3918 = vdwg.mxu0
      %v3919 = vadd.f32 %v3852, %v3916
      %vm3920 = vcmp.ge.f32.partialorder %v3919, 0.0
      %v3921 = vmul.f32 %v3919, 0.2
      %v3922 = vsel %vm3920, %v3919, %v3921
      %v3924 = vperm.slane %v3922, 0
      %3925 = vrot.lane.b32.xlu0 %v3924, 32
      %v3926 = vpop.permute.xlu0 %3925
      %3928 = vst.msk [vmem:[#allocation3 + $0x4] sm:$0x1] %vm3239, %v3926
      %v3929 = vld [vmem:[#allocation2 + $0x6] sm:$0x1]
      %v3930 = vpack.c.bf16 %v3929, %v3929
      %v3931 = vld [vmem:[%s2] sm:$0xf]
      %v3932 = vld [vmem:[%s2 + $0x4] sm:$0xf]
      %v3933 = vld [vmem:[%s2 + $0x8] sm:$0xf]
      %v3934 = vld [vmem:[%s2 + $0xc] sm:$0xf]
      %v3935 = vld [vmem:[%s2 + $0x10] sm:$0xf]
      %v3936 = vld [vmem:[%s2 + $0x14] sm:$0xf]
      %v3937 = vld [vmem:[%s2 + $0x18] sm:$0xf]
      %v3938 = vld [vmem:[%s2 + $0x1c] sm:$0xf]
      %v3939 = vld [vmem:[%s2 + $0x20] sm:$0xf]
      %v3940 = vld [vmem:[%s2 + $0x24] sm:$0xf]
      %v3941 = vld [vmem:[%s2 + $0x28] sm:$0xf]
      %v3942 = vld [vmem:[%s2 + $0x2c] sm:$0xf]
      %v3955 = vunpack.c.l.b16 %v3931
      %v3956 = vunpack.c.l.b16 %v3932
      %v3957 = vunpack.c.l.b16 %v3933
      %v3958 = vunpack.c.l.b16 %v3934
      %v3959 = vunpack.c.l.b16 %v3935
      %v3960 = vunpack.c.l.b16 %v3936
      %v3961 = vunpack.c.l.b16 %v3937
      %v3962 = vunpack.c.l.b16 %v3938
      %v3963 = vunpack.c.l.b16 %v3939
      %v3964 = vunpack.c.l.b16 %v3940
      %v3965 = vunpack.c.l.b16 %v3941
      %v3966 = vunpack.c.l.b16 %v3942
      %v3967 = vpack.c.b16 %v3956, %v3955
      %v3968 = vpack.c.b16 %v3958, %v3957
      %v3969 = vpack.c.b16 %v3960, %v3959
      %v3970 = vpack.c.b16 %v3962, %v3961
      %v3971 = vpack.c.b16 %v3964, %v3963
      %v3972 = vpack.c.b16 %v3966, %v3965
      %v3980 = vsel %vm440, %v3930, 0
      %3982 = vmatpush.bf16.msra.mxu0 0
      %3983 = vmatpush.bf16.msra.mxu0 0
      %3984 = vmatpush.bf16.msra.mxu0 %v3972
      %3985 = vmatpush.bf16.msra.mxu0 %v3971
      %3986 = vmatpush.bf16.msra.mxu0 %v3970
      %3987 = vmatpush.bf16.msra.mxu0 %v3969
      %3988 = vmatpush.bf16.msra.mxu0 %v3968
      %3989 = vmatpush.bf16.msra.mxu0 %v3967
      %3990 = vmatmul.bf16.gmra.mxu0 %v3980
      %v3991 = vpop.f32.mrf.mxu0
      %v3992 = vadd.f32 0.0, %v3991
      %v3993 = vpop.f32.mrf.mxu0
      %3994 = vdwg.mxu0
      %v3995 = vadd.f32 %v2891, %v3992
      %v3996 = vld [vmem:[#allocation2 + $0x7] sm:$0x1]
      %v3997 = vpack.c.bf16 %v3996, %v3996
      %v3998 = vld [vmem:[%s2961] sm:$0xf]
      %v3999 = vld [vmem:[%s2961 + $0x4] sm:$0xf]
      %v4000 = vld [vmem:[%s2961 + $0x8] sm:$0xf]
      %v4001 = vld [vmem:[%s2961 + $0xc] sm:$0xf]
      %v4002 = vld [vmem:[%s2961 + $0x10] sm:$0xf]
      %v4003 = vld [vmem:[%s2961 + $0x14] sm:$0xf]
      %v4004 = vld [vmem:[%s2961 + $0x18] sm:$0xf]
      %v4005 = vld [vmem:[%s2961 + $0x1c] sm:$0xf]
      %v4006 = vld [vmem:[%s2961 + $0x20] sm:$0xf]
      %v4007 = vld [vmem:[%s2961 + $0x24] sm:$0xf]
      %v4008 = vld [vmem:[%s2961 + $0x28] sm:$0xf]
      %v4009 = vld [vmem:[%s2961 + $0x2c] sm:$0xf]
      %v4022 = vunpack.c.l.b16 %v3998
      %v4023 = vunpack.c.l.b16 %v3999
      %v4024 = vunpack.c.l.b16 %v4000
      %v4025 = vunpack.c.l.b16 %v4001
      %v4026 = vunpack.c.l.b16 %v4002
      %v4027 = vunpack.c.l.b16 %v4003
      %v4028 = vunpack.c.l.b16 %v4004
      %v4029 = vunpack.c.l.b16 %v4005
      %v4030 = vunpack.c.l.b16 %v4006
      %v4031 = vunpack.c.l.b16 %v4007
      %v4032 = vunpack.c.l.b16 %v4008
      %v4033 = vunpack.c.l.b16 %v4009
      %v4034 = vpack.c.b16 %v4023, %v4022
      %v4035 = vpack.c.b16 %v4025, %v4024
      %v4036 = vpack.c.b16 %v4027, %v4026
      %v4037 = vpack.c.b16 %v4029, %v4028
      %v4038 = vpack.c.b16 %v4031, %v4030
      %v4039 = vpack.c.b16 %v4033, %v4032
      %v4047 = vsel %vm440, %v3997, 0
      %4049 = vmatpush.bf16.msra.mxu0 0
      %4050 = vmatpush.bf16.msra.mxu0 0
      %4051 = vmatpush.bf16.msra.mxu0 %v4039
      %4052 = vmatpush.bf16.msra.mxu0 %v4038
      %4053 = vmatpush.bf16.msra.mxu0 %v4037
      %4054 = vmatpush.bf16.msra.mxu0 %v4036
      %4055 = vmatpush.bf16.msra.mxu0 %v4035
      %4056 = vmatpush.bf16.msra.mxu0 %v4034
      %4057 = vmatmul.bf16.gmra.mxu0 %v4047
      %v4058 = vpop.f32.mrf.mxu0
      %v4059 = vadd.f32 0.0, %v4058
      %v4060 = vpop.f32.mrf.mxu0
      %4061 = vdwg.mxu0
      %v4062 = vadd.f32 %v3995, %v4059
      %v4063 = vld [vmem:[#allocation2 + $0x8] sm:$0x1]
      %v4064 = vpack.c.bf16 %v4063, %v4063
      %v4065 = vld [vmem:[%s3029] sm:$0xf]
      %v4066 = vld [vmem:[%s3029 + $0x4] sm:$0xf]
      %v4067 = vld [vmem:[%s3029 + $0x8] sm:$0xf]
      %v4068 = vld [vmem:[%s3029 + $0xc] sm:$0xf]
      %v4069 = vld [vmem:[%s3029 + $0x10] sm:$0xf]
      %v4070 = vld [vmem:[%s3029 + $0x14] sm:$0xf]
      %v4071 = vld [vmem:[%s3029 + $0x18] sm:$0xf]
      %v4072 = vld [vmem:[%s3029 + $0x1c] sm:$0xf]
      %v4073 = vld [vmem:[%s3029 + $0x20] sm:$0xf]
      %v4074 = vld [vmem:[%s3029 + $0x24] sm:$0xf]
      %v4075 = vld [vmem:[%s3029 + $0x28] sm:$0xf]
      %v4076 = vld [vmem:[%s3029 + $0x2c] sm:$0xf]
      %v4089 = vunpack.c.l.b16 %v4065
      %v4090 = vunpack.c.l.b16 %v4066
      %v4091 = vunpack.c.l.b16 %v4067
      %v4092 = vunpack.c.l.b16 %v4068
      %v4093 = vunpack.c.l.b16 %v4069
      %v4094 = vunpack.c.l.b16 %v4070
      %v4095 = vunpack.c.l.b16 %v4071
      %v4096 = vunpack.c.l.b16 %v4072
      %v4097 = vunpack.c.l.b16 %v4073
      %v4098 = vunpack.c.l.b16 %v4074
      %v4099 = vunpack.c.l.b16 %v4075
      %v4100 = vunpack.c.l.b16 %v4076
      %v4101 = vpack.c.b16 %v4090, %v4089
      %v4102 = vpack.c.b16 %v4092, %v4091
      %v4103 = vpack.c.b16 %v4094, %v4093
      %v4104 = vpack.c.b16 %v4096, %v4095
      %v4105 = vpack.c.b16 %v4098, %v4097
      %v4106 = vpack.c.b16 %v4100, %v4099
      %v4114 = vsel %vm440, %v4064, 0
      %4116 = vmatpush.bf16.msra.mxu0 0
      %4117 = vmatpush.bf16.msra.mxu0 0
      %4118 = vmatpush.bf16.msra.mxu0 %v4106
      %4119 = vmatpush.bf16.msra.mxu0 %v4105
      %4120 = vmatpush.bf16.msra.mxu0 %v4104
      %4121 = vmatpush.bf16.msra.mxu0 %v4103
      %4122 = vmatpush.bf16.msra.mxu0 %v4102
      %4123 = vmatpush.bf16.msra.mxu0 %v4101
      %4124 = vmatmul.bf16.gmra.mxu0 %v4114
      %v4125 = vpop.f32.mrf.mxu0
      %v4126 = vadd.f32 0.0, %v4125
      %v4127 = vpop.f32.mrf.mxu0
      %4128 = vdwg.mxu0
      %v4129 = vadd.f32 %v4062, %v4126
      %v4130 = vld [vmem:[#allocation2 + $0x9] sm:$0x1]
      %v4131 = vpack.c.bf16 %v4130, %v4130
      %v4132 = vld [vmem:[%s3097] sm:$0xf]
      %v4133 = vld [vmem:[%s3097 + $0x4] sm:$0xf]
      %v4134 = vld [vmem:[%s3097 + $0x8] sm:$0xf]
      %v4135 = vld [vmem:[%s3097 + $0xc] sm:$0xf]
      %v4136 = vld [vmem:[%s3097 + $0x10] sm:$0xf]
      %v4137 = vld [vmem:[%s3097 + $0x14] sm:$0xf]
      %v4138 = vld [vmem:[%s3097 + $0x18] sm:$0xf]
      %v4139 = vld [vmem:[%s3097 + $0x1c] sm:$0xf]
      %v4140 = vld [vmem:[%s3097 + $0x20] sm:$0xf]
      %v4141 = vld [vmem:[%s3097 + $0x24] sm:$0xf]
      %v4142 = vld [vmem:[%s3097 + $0x28] sm:$0xf]
      %v4143 = vld [vmem:[%s3097 + $0x2c] sm:$0xf]
      %v4156 = vunpack.c.l.b16 %v4132
      %v4157 = vunpack.c.l.b16 %v4133
      %v4158 = vunpack.c.l.b16 %v4134
      %v4159 = vunpack.c.l.b16 %v4135
      %v4160 = vunpack.c.l.b16 %v4136
      %v4161 = vunpack.c.l.b16 %v4137
      %v4162 = vunpack.c.l.b16 %v4138
      %v4163 = vunpack.c.l.b16 %v4139
      %v4164 = vunpack.c.l.b16 %v4140
      %v4165 = vunpack.c.l.b16 %v4141
      %v4166 = vunpack.c.l.b16 %v4142
      %v4167 = vunpack.c.l.b16 %v4143
      %v4168 = vpack.c.b16 %v4157, %v4156
      %v4169 = vpack.c.b16 %v4159, %v4158
      %v4170 = vpack.c.b16 %v4161, %v4160
      %v4171 = vpack.c.b16 %v4163, %v4162
      %v4172 = vpack.c.b16 %v4165, %v4164
      %v4173 = vpack.c.b16 %v4167, %v4166
      %v4181 = vsel %vm440, %v4131, 0
      %4183 = vmatpush.bf16.msra.mxu0 0
      %4184 = vmatpush.bf16.msra.mxu0 0
      %4185 = vmatpush.bf16.msra.mxu0 %v4173
      %4186 = vmatpush.bf16.msra.mxu0 %v4172
      %4187 = vmatpush.bf16.msra.mxu0 %v4171
      %4188 = vmatpush.bf16.msra.mxu0 %v4170
      %4189 = vmatpush.bf16.msra.mxu0 %v4169
      %4190 = vmatpush.bf16.msra.mxu0 %v4168
      %4191 = vmatmul.bf16.gmra.mxu0 %v4181
      %v4192 = vpop.f32.mrf.mxu0
      %v4193 = vadd.f32 0.0, %v4192
      %v4194 = vpop.f32.mrf.mxu0
      %4195 = vdwg.mxu0
      %v4196 = vadd.f32 %v4129, %v4193
      %v4197 = vld [vmem:[#allocation2 + $0xa] sm:$0x1]
      %v4198 = vpack.c.bf16 %v4197, %v4197
      %v4199 = vld [vmem:[%s3165] sm:$0xf]
      %v4200 = vld [vmem:[%s3165 + $0x4] sm:$0xf]
      %v4201 = vld [vmem:[%s3165 + $0x8] sm:$0xf]
      %v4202 = vld [vmem:[%s3165 + $0xc] sm:$0xf]
      %v4203 = vld [vmem:[%s3165 + $0x10] sm:$0xf]
      %v4204 = vld [vmem:[%s3165 + $0x14] sm:$0xf]
      %v4205 = vld [vmem:[%s3165 + $0x18] sm:$0xf]
      %v4206 = vld [vmem:[%s3165 + $0x1c] sm:$0xf]
      %v4207 = vld [vmem:[%s3165 + $0x20] sm:$0xf]
      %v4208 = vld [vmem:[%s3165 + $0x24] sm:$0xf]
      %v4209 = vld [vmem:[%s3165 + $0x28] sm:$0xf]
      %v4210 = vld [vmem:[%s3165 + $0x2c] sm:$0xf]
      %v4223 = vunpack.c.l.b16 %v4199
      %v4224 = vunpack.c.l.b16 %v4200
      %v4225 = vunpack.c.l.b16 %v4201
      %v4226 = vunpack.c.l.b16 %v4202
      %v4227 = vunpack.c.l.b16 %v4203
      %v4228 = vunpack.c.l.b16 %v4204
      %v4229 = vunpack.c.l.b16 %v4205
      %v4230 = vunpack.c.l.b16 %v4206
      %v4231 = vunpack.c.l.b16 %v4207
      %v4232 = vunpack.c.l.b16 %v4208
      %v4233 = vunpack.c.l.b16 %v4209
      %v4234 = vunpack.c.l.b16 %v4210
      %v4235 = vpack.c.b16 %v4224, %v4223
      %v4236 = vpack.c.b16 %v4226, %v4225
      %v4237 = vpack.c.b16 %v4228, %v4227
      %v4238 = vpack.c.b16 %v4230, %v4229
      %v4239 = vpack.c.b16 %v4232, %v4231
      %v4240 = vpack.c.b16 %v4234, %v4233
      %v4248 = vsel %vm440, %v4198, 0
      %4250 = vmatpush.bf16.msra.mxu0 0
      %4251 = vmatpush.bf16.msra.mxu0 0
      %4252 = vmatpush.bf16.msra.mxu0 %v4240
      %4253 = vmatpush.bf16.msra.mxu0 %v4239
      %4254 = vmatpush.bf16.msra.mxu0 %v4238
      %4255 = vmatpush.bf16.msra.mxu0 %v4237
      %4256 = vmatpush.bf16.msra.mxu0 %v4236
      %4257 = vmatpush.bf16.msra.mxu0 %v4235
      %4258 = vmatmul.bf16.gmra.mxu0 %v4248
      %v4259 = vpop.f32.mrf.mxu0
      %v4260 = vadd.f32 0.0, %v4259
      %v4261 = vpop.f32.mrf.mxu0
      %4262 = vdwg.mxu0
      %v4263 = vadd.f32 %v4196, %v4260
      %vm4264 = vcmp.ge.f32.partialorder %v4263, 0.0
      %v4265 = vmul.f32 %v4263, 0.2
      %v4266 = vsel %vm4264, %v4263, %v4265
      %v4268 = vperm.slane %v4266, 0
      %4269 = vrot.lane.b32.xlu0 %v4268, 32
      %v4270 = vpop.permute.xlu0 %4269
      %4272 = vst.msk [vmem:[#allocation3 + $0x5] sm:$0x1] %vm3239, %v4270
      %v4273 = vld [vmem:[%s8] sm:$0x1]
      %v4274 = vld [vmem:[#allocation3] sm:$0x1]
      %v4275 = vpack.c.bf16 %v4274, %v4274
      %v4276 = vld [vmem:[%s3] sm:$0xf]
      %v4277 = vld [vmem:[%s3 + $0x4] sm:$0xf]
      %v4278 = vld [vmem:[%s3 + $0x8] sm:$0xf]
      %v4279 = vld [vmem:[%s3 + $0xc] sm:$0xf]
      %v4280 = vld [vmem:[%s3 + $0x10] sm:$0xf]
      %v4281 = vld [vmem:[%s3 + $0x14] sm:$0xf]
      %v4282 = vld [vmem:[%s3 + $0x18] sm:$0xf]
      %v4283 = vld [vmem:[%s3 + $0x1c] sm:$0xf]
      %v4284 = vld [vmem:[%s3 + $0x20] sm:$0xf]
      %v4285 = vld [vmem:[%s3 + $0x24] sm:$0xf]
      %v4286 = vld [vmem:[%s3 + $0x28] sm:$0xf]
      %v4287 = vld [vmem:[%s3 + $0x2c] sm:$0xf]
      %v4288 = vld [vmem:[%s3 + $0x30] sm:$0xf]
      %v4289 = vld [vmem:[%s3 + $0x34] sm:$0xf]
      %v4290 = vld [vmem:[%s3 + $0x38] sm:$0xf]
      %v4291 = vld [vmem:[%s3 + $0x3c] sm:$0xf]
      %v4308 = vunpack.c.l.b16 %v4276
      %v4309 = vunpack.c.l.b16 %v4277
      %v4310 = vunpack.c.l.b16 %v4278
      %v4311 = vunpack.c.l.b16 %v4279
      %v4312 = vunpack.c.l.b16 %v4280
      %v4313 = vunpack.c.l.b16 %v4281
      %v4314 = vunpack.c.l.b16 %v4282
      %v4315 = vunpack.c.l.b16 %v4283
      %v4316 = vunpack.c.l.b16 %v4284
      %v4317 = vunpack.c.l.b16 %v4285
      %v4318 = vunpack.c.l.b16 %v4286
      %v4319 = vunpack.c.l.b16 %v4287
      %v4320 = vunpack.c.l.b16 %v4288
      %v4321 = vunpack.c.l.b16 %v4289
      %v4322 = vunpack.c.l.b16 %v4290
      %v4323 = vunpack.c.l.b16 %v4291
      %v4324 = vpack.c.b16 %v4309, %v4308
      %v4325 = vpack.c.b16 %v4311, %v4310
      %v4326 = vpack.c.b16 %v4313, %v4312
      %v4327 = vpack.c.b16 %v4315, %v4314
      %v4328 = vpack.c.b16 %v4317, %v4316
      %v4329 = vpack.c.b16 %v4319, %v4318
      %v4330 = vpack.c.b16 %v4321, %v4320
      %v4331 = vpack.c.b16 %v4323, %v4322
      %4340 = vmatpush.bf16.msra.mxu0 %v4331
      %4341 = vmatpush.bf16.msra.mxu0 %v4330
      %4342 = vmatpush.bf16.msra.mxu0 %v4329
      %4343 = vmatpush.bf16.msra.mxu0 %v4328
      %4344 = vmatpush.bf16.msra.mxu0 %v4327
      %4345 = vmatpush.bf16.msra.mxu0 %v4326
      %4346 = vmatpush.bf16.msra.mxu0 %v4325
      %4347 = vmatpush.bf16.msra.mxu0 %v4324
      %4348 = vmatmul.bf16.gmra.mxu0 %v4275
      %v4349 = vpop.f32.mrf.mxu0
      %v4350 = vadd.f32 0.0, %v4349
      %v4351 = vpop.f32.mrf.mxu0
      %4352 = vdwg.mxu0
      %v4353 = vadd.f32 %v4273, %v4350
      %v4354 = vld [vmem:[#allocation3 + $0x1] sm:$0x1]
      %v4355 = vpack.c.bf16 %v4354, %v4354
      %s4356 = scalar_lea.vmem %s3, 64
      %v4357 = vld [vmem:[%s4356] sm:$0xf]
      %v4358 = vld [vmem:[%s4356 + $0x4] sm:$0xf]
      %v4359 = vld [vmem:[%s4356 + $0x8] sm:$0xf]
      %v4360 = vld [vmem:[%s4356 + $0xc] sm:$0xf]
      %v4361 = vld [vmem:[%s4356 + $0x10] sm:$0xf]
      %v4362 = vld [vmem:[%s4356 + $0x14] sm:$0xf]
      %v4363 = vld [vmem:[%s4356 + $0x18] sm:$0xf]
      %v4364 = vld [vmem:[%s4356 + $0x1c] sm:$0xf]
      %v4365 = vld [vmem:[%s4356 + $0x20] sm:$0xf]
      %v4366 = vld [vmem:[%s4356 + $0x24] sm:$0xf]
      %v4367 = vld [vmem:[%s4356 + $0x28] sm:$0xf]
      %v4368 = vld [vmem:[%s4356 + $0x2c] sm:$0xf]
      %v4369 = vld [vmem:[%s4356 + $0x30] sm:$0xf]
      %v4370 = vld [vmem:[%s4356 + $0x34] sm:$0xf]
      %v4371 = vld [vmem:[%s4356 + $0x38] sm:$0xf]
      %v4372 = vld [vmem:[%s4356 + $0x3c] sm:$0xf]
      %v4389 = vunpack.c.l.b16 %v4357
      %v4390 = vunpack.c.l.b16 %v4358
      %v4391 = vunpack.c.l.b16 %v4359
      %v4392 = vunpack.c.l.b16 %v4360
      %v4393 = vunpack.c.l.b16 %v4361
      %v4394 = vunpack.c.l.b16 %v4362
      %v4395 = vunpack.c.l.b16 %v4363
      %v4396 = vunpack.c.l.b16 %v4364
      %v4397 = vunpack.c.l.b16 %v4365
      %v4398 = vunpack.c.l.b16 %v4366
      %v4399 = vunpack.c.l.b16 %v4367
      %v4400 = vunpack.c.l.b16 %v4368
      %v4401 = vunpack.c.l.b16 %v4369
      %v4402 = vunpack.c.l.b16 %v4370
      %v4403 = vunpack.c.l.b16 %v4371
      %v4404 = vunpack.c.l.b16 %v4372
      %v4405 = vpack.c.b16 %v4390, %v4389
      %v4406 = vpack.c.b16 %v4392, %v4391
      %v4407 = vpack.c.b16 %v4394, %v4393
      %v4408 = vpack.c.b16 %v4396, %v4395
      %v4409 = vpack.c.b16 %v4398, %v4397
      %v4410 = vpack.c.b16 %v4400, %v4399
      %v4411 = vpack.c.b16 %v4402, %v4401
      %v4412 = vpack.c.b16 %v4404, %v4403
      %4421 = vmatpush.bf16.msra.mxu0 %v4412
      %4422 = vmatpush.bf16.msra.mxu0 %v4411
      %4423 = vmatpush.bf16.msra.mxu0 %v4410
      %4424 = vmatpush.bf16.msra.mxu0 %v4409
      %4425 = vmatpush.bf16.msra.mxu0 %v4408
      %4426 = vmatpush.bf16.msra.mxu0 %v4407
      %4427 = vmatpush.bf16.msra.mxu0 %v4406
      %4428 = vmatpush.bf16.msra.mxu0 %v4405
      %4429 = vmatmul.bf16.gmra.mxu0 %v4355
      %v4430 = vpop.f32.mrf.mxu0
      %v4431 = vadd.f32 0.0, %v4430
      %v4432 = vpop.f32.mrf.mxu0
      %4433 = vdwg.mxu0
      %v4434 = vadd.f32 %v4353, %v4431
      %v4435 = vld [vmem:[#allocation3 + $0x2] sm:$0x1]
      %v4436 = vpack.c.bf16 %v4435, %v4435
      %s4437 = scalar_lea.vmem %s3, 128
      %v4438 = vld [vmem:[%s4437] sm:$0xf]
      %v4439 = vld [vmem:[%s4437 + $0x4] sm:$0xf]
      %v4440 = vld [vmem:[%s4437 + $0x8] sm:$0xf]
      %v4441 = vld [vmem:[%s4437 + $0xc] sm:$0xf]
      %v4442 = vld [vmem:[%s4437 + $0x10] sm:$0xf]
      %v4443 = vld [vmem:[%s4437 + $0x14] sm:$0xf]
      %v4444 = vld [vmem:[%s4437 + $0x18] sm:$0xf]
      %v4445 = vld [vmem:[%s4437 + $0x1c] sm:$0xf]
      %v4446 = vld [vmem:[%s4437 + $0x20] sm:$0xf]
      %v4447 = vld [vmem:[%s4437 + $0x24] sm:$0xf]
      %v4448 = vld [vmem:[%s4437 + $0x28] sm:$0xf]
      %v4449 = vld [vmem:[%s4437 + $0x2c] sm:$0xf]
      %v4450 = vld [vmem:[%s4437 + $0x30] sm:$0xf]
      %v4451 = vld [vmem:[%s4437 + $0x34] sm:$0xf]
      %v4452 = vld [vmem:[%s4437 + $0x38] sm:$0xf]
      %v4453 = vld [vmem:[%s4437 + $0x3c] sm:$0xf]
      %v4470 = vunpack.c.l.b16 %v4438
      %v4471 = vunpack.c.l.b16 %v4439
      %v4472 = vunpack.c.l.b16 %v4440
      %v4473 = vunpack.c.l.b16 %v4441
      %v4474 = vunpack.c.l.b16 %v4442
      %v4475 = vunpack.c.l.b16 %v4443
      %v4476 = vunpack.c.l.b16 %v4444
      %v4477 = vunpack.c.l.b16 %v4445
      %v4478 = vunpack.c.l.b16 %v4446
      %v4479 = vunpack.c.l.b16 %v4447
      %v4480 = vunpack.c.l.b16 %v4448
      %v4481 = vunpack.c.l.b16 %v4449
      %v4482 = vunpack.c.l.b16 %v4450
      %v4483 = vunpack.c.l.b16 %v4451
      %v4484 = vunpack.c.l.b16 %v4452
      %v4485 = vunpack.c.l.b16 %v4453
      %v4486 = vpack.c.b16 %v4471, %v4470
      %v4487 = vpack.c.b16 %v4473, %v4472
      %v4488 = vpack.c.b16 %v4475, %v4474
      %v4489 = vpack.c.b16 %v4477, %v4476
      %v4490 = vpack.c.b16 %v4479, %v4478
      %v4491 = vpack.c.b16 %v4481, %v4480
      %v4492 = vpack.c.b16 %v4483, %v4482
      %v4493 = vpack.c.b16 %v4485, %v4484
      %4502 = vmatpush.bf16.msra.mxu0 %v4493
      %4503 = vmatpush.bf16.msra.mxu0 %v4492
      %4504 = vmatpush.bf16.msra.mxu0 %v4491
      %4505 = vmatpush.bf16.msra.mxu0 %v4490
      %4506 = vmatpush.bf16.msra.mxu0 %v4489
      %4507 = vmatpush.bf16.msra.mxu0 %v4488
      %4508 = vmatpush.bf16.msra.mxu0 %v4487
      %4509 = vmatpush.bf16.msra.mxu0 %v4486
      %4510 = vmatmul.bf16.gmra.mxu0 %v4436
      %v4511 = vpop.f32.mrf.mxu0
      %v4512 = vadd.f32 0.0, %v4511
      %v4513 = vpop.f32.mrf.mxu0
      %4514 = vdwg.mxu0
      %v4515 = vadd.f32 %v4434, %v4512
      %v4516 = vld [vmem:[#allocation3 + $0x3] sm:$0x1]
      %v4517 = vpack.c.bf16 %v4516, %v4516
      %s4518 = scalar_lea.vmem %s3, 192
      %v4519 = vld [vmem:[%s4518] sm:$0xf]
      %v4520 = vld [vmem:[%s4518 + $0x4] sm:$0xf]
      %v4521 = vld [vmem:[%s4518 + $0x8] sm:$0xf]
      %v4522 = vld [vmem:[%s4518 + $0xc] sm:$0xf]
      %v4523 = vld [vmem:[%s4518 + $0x10] sm:$0xf]
      %v4524 = vld [vmem:[%s4518 + $0x14] sm:$0xf]
      %v4525 = vld [vmem:[%s4518 + $0x18] sm:$0xf]
      %v4526 = vld [vmem:[%s4518 + $0x1c] sm:$0xf]
      %v4527 = vld [vmem:[%s4518 + $0x20] sm:$0xf]
      %v4528 = vld [vmem:[%s4518 + $0x24] sm:$0xf]
      %v4529 = vld [vmem:[%s4518 + $0x28] sm:$0xf]
      %v4530 = vld [vmem:[%s4518 + $0x2c] sm:$0xf]
      %v4531 = vld [vmem:[%s4518 + $0x30] sm:$0xf]
      %v4532 = vld [vmem:[%s4518 + $0x34] sm:$0xf]
      %v4533 = vld [vmem:[%s4518 + $0x38] sm:$0xf]
      %v4534 = vld [vmem:[%s4518 + $0x3c] sm:$0xf]
      %v4551 = vunpack.c.l.b16 %v4519
      %v4552 = vunpack.c.l.b16 %v4520
      %v4553 = vunpack.c.l.b16 %v4521
      %v4554 = vunpack.c.l.b16 %v4522
      %v4555 = vunpack.c.l.b16 %v4523
      %v4556 = vunpack.c.l.b16 %v4524
      %v4557 = vunpack.c.l.b16 %v4525
      %v4558 = vunpack.c.l.b16 %v4526
      %v4559 = vunpack.c.l.b16 %v4527
      %v4560 = vunpack.c.l.b16 %v4528
      %v4561 = vunpack.c.l.b16 %v4529
      %v4562 = vunpack.c.l.b16 %v4530
      %v4563 = vunpack.c.l.b16 %v4531
      %v4564 = vunpack.c.l.b16 %v4532
      %v4565 = vunpack.c.l.b16 %v4533
      %v4566 = vunpack.c.l.b16 %v4534
      %v4567 = vpack.c.b16 %v4552, %v4551
      %v4568 = vpack.c.b16 %v4554, %v4553
      %v4569 = vpack.c.b16 %v4556, %v4555
      %v4570 = vpack.c.b16 %v4558, %v4557
      %v4571 = vpack.c.b16 %v4560, %v4559
      %v4572 = vpack.c.b16 %v4562, %v4561
      %v4573 = vpack.c.b16 %v4564, %v4563
      %v4574 = vpack.c.b16 %v4566, %v4565
      %4583 = vmatpush.bf16.msra.mxu0 %v4574
      %4584 = vmatpush.bf16.msra.mxu0 %v4573
      %4585 = vmatpush.bf16.msra.mxu0 %v4572
      %4586 = vmatpush.bf16.msra.mxu0 %v4571
      %4587 = vmatpush.bf16.msra.mxu0 %v4570
      %4588 = vmatpush.bf16.msra.mxu0 %v4569
      %4589 = vmatpush.bf16.msra.mxu0 %v4568
      %4590 = vmatpush.bf16.msra.mxu0 %v4567
      %4591 = vmatmul.bf16.gmra.mxu0 %v4517
      %v4592 = vpop.f32.mrf.mxu0
      %v4593 = vadd.f32 0.0, %v4592
      %v4594 = vpop.f32.mrf.mxu0
      %4595 = vdwg.mxu0
      %v4596 = vadd.f32 %v4515, %v4593
      %v4597 = vld [vmem:[#allocation3 + $0x4] sm:$0x1]
      %v4598 = vpack.c.bf16 %v4597, %v4597
      %s4599 = scalar_lea.vmem %s3, 256
      %v4600 = vld [vmem:[%s4599] sm:$0xf]
      %v4601 = vld [vmem:[%s4599 + $0x4] sm:$0xf]
      %v4602 = vld [vmem:[%s4599 + $0x8] sm:$0xf]
      %v4603 = vld [vmem:[%s4599 + $0xc] sm:$0xf]
      %v4604 = vld [vmem:[%s4599 + $0x10] sm:$0xf]
      %v4605 = vld [vmem:[%s4599 + $0x14] sm:$0xf]
      %v4606 = vld [vmem:[%s4599 + $0x18] sm:$0xf]
      %v4607 = vld [vmem:[%s4599 + $0x1c] sm:$0xf]
      %v4608 = vld [vmem:[%s4599 + $0x20] sm:$0xf]
      %v4609 = vld [vmem:[%s4599 + $0x24] sm:$0xf]
      %v4610 = vld [vmem:[%s4599 + $0x28] sm:$0xf]
      %v4611 = vld [vmem:[%s4599 + $0x2c] sm:$0xf]
      %v4612 = vld [vmem:[%s4599 + $0x30] sm:$0xf]
      %v4613 = vld [vmem:[%s4599 + $0x34] sm:$0xf]
      %v4614 = vld [vmem:[%s4599 + $0x38] sm:$0xf]
      %v4615 = vld [vmem:[%s4599 + $0x3c] sm:$0xf]
      %v4632 = vunpack.c.l.b16 %v4600
      %v4633 = vunpack.c.l.b16 %v4601
      %v4634 = vunpack.c.l.b16 %v4602
      %v4635 = vunpack.c.l.b16 %v4603
      %v4636 = vunpack.c.l.b16 %v4604
      %v4637 = vunpack.c.l.b16 %v4605
      %v4638 = vunpack.c.l.b16 %v4606
      %v4639 = vunpack.c.l.b16 %v4607
      %v4640 = vunpack.c.l.b16 %v4608
      %v4641 = vunpack.c.l.b16 %v4609
      %v4642 = vunpack.c.l.b16 %v4610
      %v4643 = vunpack.c.l.b16 %v4611
      %v4644 = vunpack.c.l.b16 %v4612
      %v4645 = vunpack.c.l.b16 %v4613
      %v4646 = vunpack.c.l.b16 %v4614
      %v4647 = vunpack.c.l.b16 %v4615
      %v4648 = vpack.c.b16 %v4633, %v4632
      %v4649 = vpack.c.b16 %v4635, %v4634
      %v4650 = vpack.c.b16 %v4637, %v4636
      %v4651 = vpack.c.b16 %v4639, %v4638
      %v4652 = vpack.c.b16 %v4641, %v4640
      %v4653 = vpack.c.b16 %v4643, %v4642
      %v4654 = vpack.c.b16 %v4645, %v4644
      %v4655 = vpack.c.b16 %v4647, %v4646
      %4664 = vmatpush.bf16.msra.mxu0 %v4655
      %4665 = vmatpush.bf16.msra.mxu0 %v4654
      %4666 = vmatpush.bf16.msra.mxu0 %v4653
      %4667 = vmatpush.bf16.msra.mxu0 %v4652
      %4668 = vmatpush.bf16.msra.mxu0 %v4651
      %4669 = vmatpush.bf16.msra.mxu0 %v4650
      %4670 = vmatpush.bf16.msra.mxu0 %v4649
      %4671 = vmatpush.bf16.msra.mxu0 %v4648
      %4672 = vmatmul.bf16.gmra.mxu0 %v4598
      %v4673 = vpop.f32.mrf.mxu0
      %v4674 = vadd.f32 0.0, %v4673
      %v4675 = vpop.f32.mrf.mxu0
      %4676 = vdwg.mxu0
      %v4677 = vadd.f32 %v4596, %v4674
      %vm4678 = vcmp.ge.f32.partialorder %v4677, 0.0
      %v4679 = vmul.f32 %v4677, 0.2
      %v4680 = vsel %vm4678, %v4677, %v4679
      %v4682 = vperm.slane %v4680, 0
      %4683 = vrot.lane.b32.xlu0 %v4682, 64
      %v4684 = vpop.permute.xlu0 %4683
      %vm4686 = vcmask 1040896
      %4687 = vst.msk [vmem:[#allocation4 + $0x2] sm:$0x1] %vm4686, %v4684
      %v4688 = vld [vmem:[#allocation3 + $0x2] sm:$0x1]
      %v4689 = vpack.c.bf16 %v4688, %v4688
      %v4690 = vld [vmem:[%s3] sm:$0xf]
      %v4691 = vld [vmem:[%s3 + $0x4] sm:$0xf]
      %v4692 = vld [vmem:[%s3 + $0x8] sm:$0xf]
      %v4693 = vld [vmem:[%s3 + $0xc] sm:$0xf]
      %v4694 = vld [vmem:[%s3 + $0x10] sm:$0xf]
      %v4695 = vld [vmem:[%s3 + $0x14] sm:$0xf]
      %v4696 = vld [vmem:[%s3 + $0x18] sm:$0xf]
      %v4697 = vld [vmem:[%s3 + $0x1c] sm:$0xf]
      %v4698 = vld [vmem:[%s3 + $0x20] sm:$0xf]
      %v4699 = vld [vmem:[%s3 + $0x24] sm:$0xf]
      %v4700 = vld [vmem:[%s3 + $0x28] sm:$0xf]
      %v4701 = vld [vmem:[%s3 + $0x2c] sm:$0xf]
      %v4702 = vld [vmem:[%s3 + $0x30] sm:$0xf]
      %v4703 = vld [vmem:[%s3 + $0x34] sm:$0xf]
      %v4704 = vld [vmem:[%s3 + $0x38] sm:$0xf]
      %v4705 = vld [vmem:[%s3 + $0x3c] sm:$0xf]
      %v4722 = vunpack.c.l.b16 %v4690
      %v4723 = vunpack.c.l.b16 %v4691
      %v4724 = vunpack.c.l.b16 %v4692
      %v4725 = vunpack.c.l.b16 %v4693
      %v4726 = vunpack.c.l.b16 %v4694
      %v4727 = vunpack.c.l.b16 %v4695
      %v4728 = vunpack.c.l.b16 %v4696
      %v4729 = vunpack.c.l.b16 %v4697
      %v4730 = vunpack.c.l.b16 %v4698
      %v4731 = vunpack.c.l.b16 %v4699
      %v4732 = vunpack.c.l.b16 %v4700
      %v4733 = vunpack.c.l.b16 %v4701
      %v4734 = vunpack.c.l.b16 %v4702
      %v4735 = vunpack.c.l.b16 %v4703
      %v4736 = vunpack.c.l.b16 %v4704
      %v4737 = vunpack.c.l.b16 %v4705
      %v4738 = vpack.c.b16 %v4723, %v4722
      %v4739 = vpack.c.b16 %v4725, %v4724
      %v4740 = vpack.c.b16 %v4727, %v4726
      %v4741 = vpack.c.b16 %v4729, %v4728
      %v4742 = vpack.c.b16 %v4731, %v4730
      %v4743 = vpack.c.b16 %v4733, %v4732
      %v4744 = vpack.c.b16 %v4735, %v4734
      %v4745 = vpack.c.b16 %v4737, %v4736
      %4754 = vmatpush.bf16.msra.mxu0 %v4745
      %4755 = vmatpush.bf16.msra.mxu0 %v4744
      %4756 = vmatpush.bf16.msra.mxu0 %v4743
      %4757 = vmatpush.bf16.msra.mxu0 %v4742
      %4758 = vmatpush.bf16.msra.mxu0 %v4741
      %4759 = vmatpush.bf16.msra.mxu0 %v4740
      %4760 = vmatpush.bf16.msra.mxu0 %v4739
      %4761 = vmatpush.bf16.msra.mxu0 %v4738
      %4762 = vmatmul.bf16.gmra.mxu0 %v4689
      %v4763 = vpop.f32.mrf.mxu0
      %v4764 = vadd.f32 0.0, %v4763
      %v4765 = vpop.f32.mrf.mxu0
      %4766 = vdwg.mxu0
      %v4767 = vadd.f32 %v4273, %v4764
      %v4768 = vld [vmem:[#allocation3 + $0x3] sm:$0x1]
      %v4769 = vpack.c.bf16 %v4768, %v4768
      %v4770 = vld [vmem:[%s4356] sm:$0xf]
      %v4771 = vld [vmem:[%s4356 + $0x4] sm:$0xf]
      %v4772 = vld [vmem:[%s4356 + $0x8] sm:$0xf]
      %v4773 = vld [vmem:[%s4356 + $0xc] sm:$0xf]
      %v4774 = vld [vmem:[%s4356 + $0x10] sm:$0xf]
      %v4775 = vld [vmem:[%s4356 + $0x14] sm:$0xf]
      %v4776 = vld [vmem:[%s4356 + $0x18] sm:$0xf]
      %v4777 = vld [vmem:[%s4356 + $0x1c] sm:$0xf]
      %v4778 = vld [vmem:[%s4356 + $0x20] sm:$0xf]
      %v4779 = vld [vmem:[%s4356 + $0x24] sm:$0xf]
      %v4780 = vld [vmem:[%s4356 + $0x28] sm:$0xf]
      %v4781 = vld [vmem:[%s4356 + $0x2c] sm:$0xf]
      %v4782 = vld [vmem:[%s4356 + $0x30] sm:$0xf]
      %v4783 = vld [vmem:[%s4356 + $0x34] sm:$0xf]
      %v4784 = vld [vmem:[%s4356 + $0x38] sm:$0xf]
      %v4785 = vld [vmem:[%s4356 + $0x3c] sm:$0xf]
      %v4802 = vunpack.c.l.b16 %v4770
      %v4803 = vunpack.c.l.b16 %v4771
      %v4804 = vunpack.c.l.b16 %v4772
      %v4805 = vunpack.c.l.b16 %v4773
      %v4806 = vunpack.c.l.b16 %v4774
      %v4807 = vunpack.c.l.b16 %v4775
      %v4808 = vunpack.c.l.b16 %v4776
      %v4809 = vunpack.c.l.b16 %v4777
      %v4810 = vunpack.c.l.b16 %v4778
      %v4811 = vunpack.c.l.b16 %v4779
      %v4812 = vunpack.c.l.b16 %v4780
      %v4813 = vunpack.c.l.b16 %v4781
      %v4814 = vunpack.c.l.b16 %v4782
      %v4815 = vunpack.c.l.b16 %v4783
      %v4816 = vunpack.c.l.b16 %v4784
      %v4817 = vunpack.c.l.b16 %v4785
      %v4818 = vpack.c.b16 %v4803, %v4802
      %v4819 = vpack.c.b16 %v4805, %v4804
      %v4820 = vpack.c.b16 %v4807, %v4806
      %v4821 = vpack.c.b16 %v4809, %v4808
      %v4822 = vpack.c.b16 %v4811, %v4810
      %v4823 = vpack.c.b16 %v4813, %v4812
      %v4824 = vpack.c.b16 %v4815, %v4814
      %v4825 = vpack.c.b16 %v4817, %v4816
      %4834 = vmatpush.bf16.msra.mxu0 %v4825
      %4835 = vmatpush.bf16.msra.mxu0 %v4824
      %4836 = vmatpush.bf16.msra.mxu0 %v4823
      %4837 = vmatpush.bf16.msra.mxu0 %v4822
      %4838 = vmatpush.bf16.msra.mxu0 %v4821
      %4839 = vmatpush.bf16.msra.mxu0 %v4820
      %4840 = vmatpush.bf16.msra.mxu0 %v4819
      %4841 = vmatpush.bf16.msra.mxu0 %v4818
      %4842 = vmatmul.bf16.gmra.mxu0 %v4769
      %v4843 = vpop.f32.mrf.mxu0
      %v4844 = vadd.f32 0.0, %v4843
      %v4845 = vpop.f32.mrf.mxu0
      %4846 = vdwg.mxu0
      %v4847 = vadd.f32 %v4767, %v4844
      %v4848 = vld [vmem:[#allocation3 + $0x4] sm:$0x1]
      %v4849 = vpack.c.bf16 %v4848, %v4848
      %v4850 = vld [vmem:[%s4437] sm:$0xf]
      %v4851 = vld [vmem:[%s4437 + $0x4] sm:$0xf]
      %v4852 = vld [vmem:[%s4437 + $0x8] sm:$0xf]
      %v4853 = vld [vmem:[%s4437 + $0xc] sm:$0xf]
      %v4854 = vld [vmem:[%s4437 + $0x10] sm:$0xf]
      %v4855 = vld [vmem:[%s4437 + $0x14] sm:$0xf]
      %v4856 = vld [vmem:[%s4437 + $0x18] sm:$0xf]
      %v4857 = vld [vmem:[%s4437 + $0x1c] sm:$0xf]
      %v4858 = vld [vmem:[%s4437 + $0x20] sm:$0xf]
      %v4859 = vld [vmem:[%s4437 + $0x24] sm:$0xf]
      %v4860 = vld [vmem:[%s4437 + $0x28] sm:$0xf]
      %v4861 = vld [vmem:[%s4437 + $0x2c] sm:$0xf]
      %v4862 = vld [vmem:[%s4437 + $0x30] sm:$0xf]
      %v4863 = vld [vmem:[%s4437 + $0x34] sm:$0xf]
      %v4864 = vld [vmem:[%s4437 + $0x38] sm:$0xf]
      %v4865 = vld [vmem:[%s4437 + $0x3c] sm:$0xf]
      %v4882 = vunpack.c.l.b16 %v4850
      %v4883 = vunpack.c.l.b16 %v4851
      %v4884 = vunpack.c.l.b16 %v4852
      %v4885 = vunpack.c.l.b16 %v4853
      %v4886 = vunpack.c.l.b16 %v4854
      %v4887 = vunpack.c.l.b16 %v4855
      %v4888 = vunpack.c.l.b16 %v4856
      %v4889 = vunpack.c.l.b16 %v4857
      %v4890 = vunpack.c.l.b16 %v4858
      %v4891 = vunpack.c.l.b16 %v4859
      %v4892 = vunpack.c.l.b16 %v4860
      %v4893 = vunpack.c.l.b16 %v4861
      %v4894 = vunpack.c.l.b16 %v4862
      %v4895 = vunpack.c.l.b16 %v4863
      %v4896 = vunpack.c.l.b16 %v4864
      %v4897 = vunpack.c.l.b16 %v4865
      %v4898 = vpack.c.b16 %v4883, %v4882
      %v4899 = vpack.c.b16 %v4885, %v4884
      %v4900 = vpack.c.b16 %v4887, %v4886
      %v4901 = vpack.c.b16 %v4889, %v4888
      %v4902 = vpack.c.b16 %v4891, %v4890
      %v4903 = vpack.c.b16 %v4893, %v4892
      %v4904 = vpack.c.b16 %v4895, %v4894
      %v4905 = vpack.c.b16 %v4897, %v4896
      %4914 = vmatpush.bf16.msra.mxu0 %v4905
      %4915 = vmatpush.bf16.msra.mxu0 %v4904
      %4916 = vmatpush.bf16.msra.mxu0 %v4903
      %4917 = vmatpush.bf16.msra.mxu0 %v4902
      %4918 = vmatpush.bf16.msra.mxu0 %v4901
      %4919 = vmatpush.bf16.msra.mxu0 %v4900
      %4920 = vmatpush.bf16.msra.mxu0 %v4899
      %4921 = vmatpush.bf16.msra.mxu0 %v4898
      %4922 = vmatmul.bf16.gmra.mxu0 %v4849
      %v4923 = vpop.f32.mrf.mxu0
      %v4924 = vadd.f32 0.0, %v4923
      %v4925 = vpop.f32.mrf.mxu0
      %4926 = vdwg.mxu0
      %v4927 = vadd.f32 %v4847, %v4924
      %v4928 = vld [vmem:[#allocation3 + $0x5] sm:$0x1]
      %v4929 = vpack.c.bf16 %v4928, %v4928
      %v4930 = vld [vmem:[%s4518] sm:$0xf]
      %v4931 = vld [vmem:[%s4518 + $0x4] sm:$0xf]
      %v4932 = vld [vmem:[%s4518 + $0x8] sm:$0xf]
      %v4933 = vld [vmem:[%s4518 + $0xc] sm:$0xf]
      %v4934 = vld [vmem:[%s4518 + $0x10] sm:$0xf]
      %v4935 = vld [vmem:[%s4518 + $0x14] sm:$0xf]
      %v4936 = vld [vmem:[%s4518 + $0x18] sm:$0xf]
      %v4937 = vld [vmem:[%s4518 + $0x1c] sm:$0xf]
      %v4938 = vld [vmem:[%s4518 + $0x20] sm:$0xf]
      %v4939 = vld [vmem:[%s4518 + $0x24] sm:$0xf]
      %v4940 = vld [vmem:[%s4518 + $0x28] sm:$0xf]
      %v4941 = vld [vmem:[%s4518 + $0x2c] sm:$0xf]
      %v4942 = vld [vmem:[%s4518 + $0x30] sm:$0xf]
      %v4943 = vld [vmem:[%s4518 + $0x34] sm:$0xf]
      %v4944 = vld [vmem:[%s4518 + $0x38] sm:$0xf]
      %v4945 = vld [vmem:[%s4518 + $0x3c] sm:$0xf]
      %v4962 = vunpack.c.l.b16 %v4930
      %v4963 = vunpack.c.l.b16 %v4931
      %v4964 = vunpack.c.l.b16 %v4932
      %v4965 = vunpack.c.l.b16 %v4933
      %v4966 = vunpack.c.l.b16 %v4934
      %v4967 = vunpack.c.l.b16 %v4935
      %v4968 = vunpack.c.l.b16 %v4936
      %v4969 = vunpack.c.l.b16 %v4937
      %v4970 = vunpack.c.l.b16 %v4938
      %v4971 = vunpack.c.l.b16 %v4939
      %v4972 = vunpack.c.l.b16 %v4940
      %v4973 = vunpack.c.l.b16 %v4941
      %v4974 = vunpack.c.l.b16 %v4942
      %v4975 = vunpack.c.l.b16 %v4943
      %v4976 = vunpack.c.l.b16 %v4944
      %v4977 = vunpack.c.l.b16 %v4945
      %v4978 = vpack.c.b16 %v4963, %v4962
      %v4979 = vpack.c.b16 %v4965, %v4964
      %v4980 = vpack.c.b16 %v4967, %v4966
      %v4981 = vpack.c.b16 %v4969, %v4968
      %v4982 = vpack.c.b16 %v4971, %v4970
      %v4983 = vpack.c.b16 %v4973, %v4972
      %v4984 = vpack.c.b16 %v4975, %v4974
      %v4985 = vpack.c.b16 %v4977, %v4976
      %4994 = vmatpush.bf16.msra.mxu0 %v4985
      %4995 = vmatpush.bf16.msra.mxu0 %v4984
      %4996 = vmatpush.bf16.msra.mxu0 %v4983
      %4997 = vmatpush.bf16.msra.mxu0 %v4982
      %4998 = vmatpush.bf16.msra.mxu0 %v4981
      %4999 = vmatpush.bf16.msra.mxu0 %v4980
      %5000 = vmatpush.bf16.msra.mxu0 %v4979
      %5001 = vmatpush.bf16.msra.mxu0 %v4978
      %5002 = vmatmul.bf16.gmra.mxu0 %v4929
      %v5003 = vpop.f32.mrf.mxu0
      %v5004 = vadd.f32 0.0, %v5003
      %v5005 = vpop.f32.mrf.mxu0
      %5006 = vdwg.mxu0
      %v5007 = vadd.f32 %v4927, %v5004
      %v5008 = vld [vmem:[#allocation3 + $0x6] sm:$0x1]
      %v5009 = vpack.c.bf16 %v5008, %v5008
      %v5010 = vld [vmem:[%s4599] sm:$0xf]
      %v5011 = vld [vmem:[%s4599 + $0x4] sm:$0xf]
      %v5012 = vld [vmem:[%s4599 + $0x8] sm:$0xf]
      %v5013 = vld [vmem:[%s4599 + $0xc] sm:$0xf]
      %v5014 = vld [vmem:[%s4599 + $0x10] sm:$0xf]
      %v5015 = vld [vmem:[%s4599 + $0x14] sm:$0xf]
      %v5016 = vld [vmem:[%s4599 + $0x18] sm:$0xf]
      %v5017 = vld [vmem:[%s4599 + $0x1c] sm:$0xf]
      %v5018 = vld [vmem:[%s4599 + $0x20] sm:$0xf]
      %v5019 = vld [vmem:[%s4599 + $0x24] sm:$0xf]
      %v5020 = vld [vmem:[%s4599 + $0x28] sm:$0xf]
      %v5021 = vld [vmem:[%s4599 + $0x2c] sm:$0xf]
      %v5022 = vld [vmem:[%s4599 + $0x30] sm:$0xf]
      %v5023 = vld [vmem:[%s4599 + $0x34] sm:$0xf]
      %v5024 = vld [vmem:[%s4599 + $0x38] sm:$0xf]
      %v5025 = vld [vmem:[%s4599 + $0x3c] sm:$0xf]
      %v5042 = vunpack.c.l.b16 %v5010
      %v5043 = vunpack.c.l.b16 %v5011
      %v5044 = vunpack.c.l.b16 %v5012
      %v5045 = vunpack.c.l.b16 %v5013
      %v5046 = vunpack.c.l.b16 %v5014
      %v5047 = vunpack.c.l.b16 %v5015
      %v5048 = vunpack.c.l.b16 %v5016
      %v5049 = vunpack.c.l.b16 %v5017
      %v5050 = vunpack.c.l.b16 %v5018
      %v5051 = vunpack.c.l.b16 %v5019
      %v5052 = vunpack.c.l.b16 %v5020
      %v5053 = vunpack.c.l.b16 %v5021
      %v5054 = vunpack.c.l.b16 %v5022
      %v5055 = vunpack.c.l.b16 %v5023
      %v5056 = vunpack.c.l.b16 %v5024
      %v5057 = vunpack.c.l.b16 %v5025
      %v5058 = vpack.c.b16 %v5043, %v5042
      %v5059 = vpack.c.b16 %v5045, %v5044
      %v5060 = vpack.c.b16 %v5047, %v5046
      %v5061 = vpack.c.b16 %v5049, %v5048
      %v5062 = vpack.c.b16 %v5051, %v5050
      %v5063 = vpack.c.b16 %v5053, %v5052
      %v5064 = vpack.c.b16 %v5055, %v5054
      %v5065 = vpack.c.b16 %v5057, %v5056
      %5074 = vmatpush.bf16.msra.mxu0 %v5065
      %5075 = vmatpush.bf16.msra.mxu0 %v5064
      %5076 = vmatpush.bf16.msra.mxu0 %v5063
      %5077 = vmatpush.bf16.msra.mxu0 %v5062
      %5078 = vmatpush.bf16.msra.mxu0 %v5061
      %5079 = vmatpush.bf16.msra.mxu0 %v5060
      %5080 = vmatpush.bf16.msra.mxu0 %v5059
      %5081 = vmatpush.bf16.msra.mxu0 %v5058
      %5082 = vmatmul.bf16.gmra.mxu0 %v5009
      %v5083 = vpop.f32.mrf.mxu0
      %v5084 = vadd.f32 0.0, %v5083
      %v5085 = vpop.f32.mrf.mxu0
      %5086 = vdwg.mxu0
      %v5087 = vadd.f32 %v5007, %v5084
      %vm5088 = vcmp.ge.f32.partialorder %v5087, 0.0
      %v5089 = vmul.f32 %v5087, 0.2
      %v5090 = vsel %vm5088, %v5087, %v5089
      %v5092 = vperm.slane %v5090, 0
      %5093 = vrot.lane.b32.xlu0 %v5092, 64
      %v5094 = vpop.permute.xlu0 %5093
      %5096 = vst.msk [vmem:[#allocation4 + $0x3] sm:$0x1] %vm4686, %v5094
      %v5097 = vld [vmem:[%s9] sm:$0x1]
      %v5098 = vld [vmem:[#allocation4] ss:$8 sm:$0x3]
      %v5100 = vperm.slane %v5098, 0
      %v5101 = vperm.slane %v5098, 1
      %v5104 = vpack.c.bf16 %v5100, %v5100
      %v5105 = vpack.c.bf16 %v5101, %v5101
      %v5106 = vld [vmem:[%s4] sm:$0xf]
      %v5107 = vld [vmem:[%s4 + $0x4] sm:$0xf]
      %v5108 = vld [vmem:[%s4 + $0x8] sm:$0xf]
      %v5109 = vld [vmem:[%s4 + $0xc] sm:$0xf]
      %v5110 = vld [vmem:[%s4 + $0x10] sm:$0xf]
      %v5111 = vld [vmem:[%s4 + $0x14] sm:$0xf]
      %v5112 = vld [vmem:[%s4 + $0x18] sm:$0xf]
      %v5113 = vld [vmem:[%s4 + $0x1c] sm:$0xf]
      %v5114 = vld [vmem:[%s4 + $0x20] sm:$0xf]
      %v5115 = vld [vmem:[%s4 + $0x24] sm:$0xf]
      %v5116 = vld [vmem:[%s4 + $0x28] sm:$0xf]
      %v5117 = vld [vmem:[%s4 + $0x2c] sm:$0xf]
      %v5118 = vld [vmem:[%s4 + $0x30] sm:$0xf]
      %v5119 = vld [vmem:[%s4 + $0x34] sm:$0xf]
      %v5120 = vld [vmem:[%s4 + $0x38] sm:$0xf]
      %v5121 = vld [vmem:[%s4 + $0x3c] sm:$0xf]
      %v5122 = vld [vmem:[%s4 + $0x40] sm:$0xf]
      %v5123 = vld [vmem:[%s4 + $0x44] sm:$0xf]
      %v5124 = vld [vmem:[%s4 + $0x48] sm:$0xf]
      %v5125 = vld [vmem:[%s4 + $0x4c] sm:$0xf]
      %v5126 = vld [vmem:[%s4 + $0x50] sm:$0xf]
      %v5127 = vld [vmem:[%s4 + $0x54] sm:$0xf]
      %v5128 = vld [vmem:[%s4 + $0x58] sm:$0xf]
      %v5129 = vld [vmem:[%s4 + $0x5c] sm:$0xf]
      %v5154 = vunpack.c.l.b16 %v5106
      %v5155 = vunpack.c.l.b16 %v5107
      %v5156 = vunpack.c.l.b16 %v5108
      %v5157 = vunpack.c.l.b16 %v5109
      %v5158 = vunpack.c.l.b16 %v5110
      %v5159 = vunpack.c.l.b16 %v5111
      %v5160 = vunpack.c.l.b16 %v5112
      %v5161 = vunpack.c.l.b16 %v5113
      %v5162 = vunpack.c.l.b16 %v5114
      %v5163 = vunpack.c.l.b16 %v5115
      %v5164 = vunpack.c.l.b16 %v5116
      %v5165 = vunpack.c.l.b16 %v5117
      %v5166 = vunpack.c.l.b16 %v5118
      %v5167 = vunpack.c.l.b16 %v5119
      %v5168 = vunpack.c.l.b16 %v5120
      %v5169 = vunpack.c.l.b16 %v5121
      %v5170 = vunpack.c.l.b16 %v5122
      %v5171 = vunpack.c.l.b16 %v5123
      %v5172 = vunpack.c.l.b16 %v5124
      %v5173 = vunpack.c.l.b16 %v5125
      %v5174 = vunpack.c.l.b16 %v5126
      %v5175 = vunpack.c.l.b16 %v5127
      %v5176 = vunpack.c.l.b16 %v5128
      %v5177 = vunpack.c.l.b16 %v5129
      %v5178 = vpack.c.b16 %v5155, %v5154
      %v5179 = vpack.c.b16 %v5157, %v5156
      %v5180 = vpack.c.b16 %v5159, %v5158
      %v5181 = vpack.c.b16 %v5161, %v5160
      %v5182 = vpack.c.b16 %v5163, %v5162
      %v5183 = vpack.c.b16 %v5165, %v5164
      %v5184 = vpack.c.b16 %v5167, %v5166
      %v5185 = vpack.c.b16 %v5169, %v5168
      %v5186 = vpack.c.b16 %v5171, %v5170
      %v5187 = vpack.c.b16 %v5173, %v5172
      %v5188 = vpack.c.b16 %v5175, %v5174
      %v5189 = vpack.c.b16 %v5177, %v5176
      %vm5202 = vcmask 523264
      %v5204 = vsel %vm5202, %v5105, 0
      %5206 = vmatpush.bf16.msra.mxu0 %v5185
      %5207 = vmatpush.bf16.msra.mxu0 %v5184
      %5208 = vmatpush.bf16.msra.mxu0 %v5183
      %5209 = vmatpush.bf16.msra.mxu0 %v5182
      %5210 = vmatpush.bf16.msra.mxu0 %v5181
      %5211 = vmatpush.bf16.msra.mxu0 %v5180
      %5212 = vmatpush.bf16.msra.mxu0 %v5179
      %5213 = vmatpush.bf16.msra.mxu0 %v5178
      %5214 = vmatmul.bf16.gmra.mxu0 %v5104
      %v5215 = vpop.f32.mrf.mxu0
      %v5216 = vadd.f32 0.0, %v5215
      %v5217 = vpop.f32.mrf.mxu0
      %5218 = vdwg.mxu0
      %5219 = vmatpush.bf16.msra.mxu0 0
      %5220 = vmatpush.bf16.msra.mxu0 0
      %5221 = vmatpush.bf16.msra.mxu0 0
      %5222 = vmatpush.bf16.msra.mxu0 0
      %5223 = vmatpush.bf16.msra.mxu0 %v5189
      %5224 = vmatpush.bf16.msra.mxu0 %v5188
      %5225 = vmatpush.bf16.msra.mxu0 %v5187
      %5226 = vmatpush.bf16.msra.mxu0 %v5186
      %5227 = vmatmul.bf16.gmra.mxu0 %v5204
      %v5228 = vpop.f32.mrf.mxu0
      %v5229 = vadd.f32 %v5216, %v5228
      %v5230 = vpop.f32.mrf.mxu0
      %5231 = vdwg.mxu0
      %v5232 = vadd.f32 %v5097, %v5229
      %s5233 = scalar_lea.vmem [#allocation4], 1
      %v5234 = vld [vmem:[%s5233] ss:$8 sm:$0x3]
      %v5236 = vperm.slane %v5234, 0
      %v5237 = vperm.slane %v5234, 1
      %v5240 = vpack.c.bf16 %v5236, %v5236
      %v5241 = vpack.c.bf16 %v5237, %v5237
      %s5242 = scalar_lea.vmem %s4, 96
      %v5243 = vld [vmem:[%s5242] sm:$0xf]
      %v5244 = vld [vmem:[%s5242 + $0x4] sm:$0xf]
      %v5245 = vld [vmem:[%s5242 + $0x8] sm:$0xf]
      %v5246 = vld [vmem:[%s5242 + $0xc] sm:$0xf]
      %v5247 = vld [vmem:[%s5242 + $0x10] sm:$0xf]
      %v5248 = vld [vmem:[%s5242 + $0x14] sm:$0xf]
      %v5249 = vld [vmem:[%s5242 + $0x18] sm:$0xf]
      %v5250 = vld [vmem:[%s5242 + $0x1c] sm:$0xf]
      %v5251 = vld [vmem:[%s5242 + $0x20] sm:$0xf]
      %v5252 = vld [vmem:[%s5242 + $0x24] sm:$0xf]
      %v5253 = vld [vmem:[%s5242 + $0x28] sm:$0xf]
      %v5254 = vld [vmem:[%s5242 + $0x2c] sm:$0xf]
      %v5255 = vld [vmem:[%s5242 + $0x30] sm:$0xf]
      %v5256 = vld [vmem:[%s5242 + $0x34] sm:$0xf]
      %v5257 = vld [vmem:[%s5242 + $0x38] sm:$0xf]
      %v5258 = vld [vmem:[%s5242 + $0x3c] sm:$0xf]
      %v5259 = vld [vmem:[%s5242 + $0x40] sm:$0xf]
      %v5260 = vld [vmem:[%s5242 + $0x44] sm:$0xf]
      %v5261 = vld [vmem:[%s5242 + $0x48] sm:$0xf]
      %v5262 = vld [vmem:[%s5242 + $0x4c] sm:$0xf]
      %v5263 = vld [vmem:[%s5242 + $0x50] sm:$0xf]
      %v5264 = vld [vmem:[%s5242 + $0x54] sm:$0xf]
      %v5265 = vld [vmem:[%s5242 + $0x58] sm:$0xf]
      %v5266 = vld [vmem:[%s5242 + $0x5c] sm:$0xf]
      %v5291 = vunpack.c.l.b16 %v5243
      %v5292 = vunpack.c.l.b16 %v5244
      %v5293 = vunpack.c.l.b16 %v5245
      %v5294 = vunpack.c.l.b16 %v5246
      %v5295 = vunpack.c.l.b16 %v5247
      %v5296 = vunpack.c.l.b16 %v5248
      %v5297 = vunpack.c.l.b16 %v5249
      %v5298 = vunpack.c.l.b16 %v5250
      %v5299 = vunpack.c.l.b16 %v5251
      %v5300 = vunpack.c.l.b16 %v5252
      %v5301 = vunpack.c.l.b16 %v5253
      %v5302 = vunpack.c.l.b16 %v5254
      %v5303 = vunpack.c.l.b16 %v5255
      %v5304 = vunpack.c.l.b16 %v5256
      %v5305 = vunpack.c.l.b16 %v5257
      %v5306 = vunpack.c.l.b16 %v5258
      %v5307 = vunpack.c.l.b16 %v5259
      %v5308 = vunpack.c.l.b16 %v5260
      %v5309 = vunpack.c.l.b16 %v5261
      %v5310 = vunpack.c.l.b16 %v5262
      %v5311 = vunpack.c.l.b16 %v5263
      %v5312 = vunpack.c.l.b16 %v5264
      %v5313 = vunpack.c.l.b16 %v5265
      %v5314 = vunpack.c.l.b16 %v5266
      %v5315 = vpack.c.b16 %v5292, %v5291
      %v5316 = vpack.c.b16 %v5294, %v5293
      %v5317 = vpack.c.b16 %v5296, %v5295
      %v5318 = vpack.c.b16 %v5298, %v5297
      %v5319 = vpack.c.b16 %v5300, %v5299
      %v5320 = vpack.c.b16 %v5302, %v5301
      %v5321 = vpack.c.b16 %v5304, %v5303
      %v5322 = vpack.c.b16 %v5306, %v5305
      %v5323 = vpack.c.b16 %v5308, %v5307
      %v5324 = vpack.c.b16 %v5310, %v5309
      %v5325 = vpack.c.b16 %v5312, %v5311
      %v5326 = vpack.c.b16 %v5314, %v5313
      %v5340 = vsel %vm5202, %v5241, 0
      %5342 = vmatpush.bf16.msra.mxu0 %v5322
      %5343 = vmatpush.bf16.msra.mxu0 %v5321
      %5344 = vmatpush.bf16.msra.mxu0 %v5320
      %5345 = vmatpush.bf16.msra.mxu0 %v5319
      %5346 = vmatpush.bf16.msra.mxu0 %v5318
      %5347 = vmatpush.bf16.msra.mxu0 %v5317
      %5348 = vmatpush.bf16.msra.mxu0 %v5316
      %5349 = vmatpush.bf16.msra.mxu0 %v5315
      %5350 = vmatmul.bf16.gmra.mxu0 %v5240
      %v5351 = vpop.f32.mrf.mxu0
      %v5352 = vadd.f32 0.0, %v5351
      %v5353 = vpop.f32.mrf.mxu0
      %5354 = vdwg.mxu0
      %5355 = vmatpush.bf16.msra.mxu0 0
      %5356 = vmatpush.bf16.msra.mxu0 0
      %5357 = vmatpush.bf16.msra.mxu0 0
      %5358 = vmatpush.bf16.msra.mxu0 0
      %5359 = vmatpush.bf16.msra.mxu0 %v5326
      %5360 = vmatpush.bf16.msra.mxu0 %v5325
      %5361 = vmatpush.bf16.msra.mxu0 %v5324
      %5362 = vmatpush.bf16.msra.mxu0 %v5323
      %5363 = vmatmul.bf16.gmra.mxu0 %v5340
      %v5364 = vpop.f32.mrf.mxu0
      %v5365 = vadd.f32 %v5352, %v5364
      %v5366 = vpop.f32.mrf.mxu0
      %5367 = vdwg.mxu0
      %v5368 = vadd.f32 %v5232, %v5365
      %s5369 = scalar_lea.vmem [#allocation4], 2
      %v5370 = vld [vmem:[%s5369] ss:$8 sm:$0x3]
      %v5372 = vperm.slane %v5370, 0
      %v5373 = vperm.slane %v5370, 1
      %v5376 = vpack.c.bf16 %v5372, %v5372
      %v5377 = vpack.c.bf16 %v5373, %v5373
      %s5378 = scalar_lea.vmem %s4, 192
      %v5379 = vld [vmem:[%s5378] sm:$0xf]
      %v5380 = vld [vmem:[%s5378 + $0x4] sm:$0xf]
      %v5381 = vld [vmem:[%s5378 + $0x8] sm:$0xf]
      %v5382 = vld [vmem:[%s5378 + $0xc] sm:$0xf]
      %v5383 = vld [vmem:[%s5378 + $0x10] sm:$0xf]
      %v5384 = vld [vmem:[%s5378 + $0x14] sm:$0xf]
      %v5385 = vld [vmem:[%s5378 + $0x18] sm:$0xf]
      %v5386 = vld [vmem:[%s5378 + $0x1c] sm:$0xf]
      %v5387 = vld [vmem:[%s5378 + $0x20] sm:$0xf]
      %v5388 = vld [vmem:[%s5378 + $0x24] sm:$0xf]
      %v5389 = vld [vmem:[%s5378 + $0x28] sm:$0xf]
      %v5390 = vld [vmem:[%s5378 + $0x2c] sm:$0xf]
      %v5391 = vld [vmem:[%s5378 + $0x30] sm:$0xf]
      %v5392 = vld [vmem:[%s5378 + $0x34] sm:$0xf]
      %v5393 = vld [vmem:[%s5378 + $0x38] sm:$0xf]
      %v5394 = vld [vmem:[%s5378 + $0x3c] sm:$0xf]
      %v5395 = vld [vmem:[%s5378 + $0x40] sm:$0xf]
      %v5396 = vld [vmem:[%s5378 + $0x44] sm:$0xf]
      %v5397 = vld [vmem:[%s5378 + $0x48] sm:$0xf]
      %v5398 = vld [vmem:[%s5378 + $0x4c] sm:$0xf]
      %v5399 = vld [vmem:[%s5378 + $0x50] sm:$0xf]
      %v5400 = vld [vmem:[%s5378 + $0x54] sm:$0xf]
      %v5401 = vld [vmem:[%s5378 + $0x58] sm:$0xf]
      %v5402 = vld [vmem:[%s5378 + $0x5c] sm:$0xf]
      %v5427 = vunpack.c.l.b16 %v5379
      %v5428 = vunpack.c.l.b16 %v5380
      %v5429 = vunpack.c.l.b16 %v5381
      %v5430 = vunpack.c.l.b16 %v5382
      %v5431 = vunpack.c.l.b16 %v5383
      %v5432 = vunpack.c.l.b16 %v5384
      %v5433 = vunpack.c.l.b16 %v5385
      %v5434 = vunpack.c.l.b16 %v5386
      %v5435 = vunpack.c.l.b16 %v5387
      %v5436 = vunpack.c.l.b16 %v5388
      %v5437 = vunpack.c.l.b16 %v5389
      %v5438 = vunpack.c.l.b16 %v5390
      %v5439 = vunpack.c.l.b16 %v5391
      %v5440 = vunpack.c.l.b16 %v5392
      %v5441 = vunpack.c.l.b16 %v5393
      %v5442 = vunpack.c.l.b16 %v5394
      %v5443 = vunpack.c.l.b16 %v5395
      %v5444 = vunpack.c.l.b16 %v5396
      %v5445 = vunpack.c.l.b16 %v5397
      %v5446 = vunpack.c.l.b16 %v5398
      %v5447 = vunpack.c.l.b16 %v5399
      %v5448 = vunpack.c.l.b16 %v5400
      %v5449 = vunpack.c.l.b16 %v5401
      %v5450 = vunpack.c.l.b16 %v5402
      %v5451 = vpack.c.b16 %v5428, %v5427
      %v5452 = vpack.c.b16 %v5430, %v5429
      %v5453 = vpack.c.b16 %v5432, %v5431
      %v5454 = vpack.c.b16 %v5434, %v5433
      %v5455 = vpack.c.b16 %v5436, %v5435
      %v5456 = vpack.c.b16 %v5438, %v5437
      %v5457 = vpack.c.b16 %v5440, %v5439
      %v5458 = vpack.c.b16 %v5442, %v5441
      %v5459 = vpack.c.b16 %v5444, %v5443
      %v5460 = vpack.c.b16 %v5446, %v5445
      %v5461 = vpack.c.b16 %v5448, %v5447
      %v5462 = vpack.c.b16 %v5450, %v5449
      %v5476 = vsel %vm5202, %v5377, 0
      %5478 = vmatpush.bf16.msra.mxu0 %v5458
      %5479 = vmatpush.bf16.msra.mxu0 %v5457
      %5480 = vmatpush.bf16.msra.mxu0 %v5456
      %5481 = vmatpush.bf16.msra.mxu0 %v5455
      %5482 = vmatpush.bf16.msra.mxu0 %v5454
      %5483 = vmatpush.bf16.msra.mxu0 %v5453
      %5484 = vmatpush.bf16.msra.mxu0 %v5452
      %5485 = vmatpush.bf16.msra.mxu0 %v5451
      %5486 = vmatmul.bf16.gmra.mxu0 %v5376
      %v5487 = vpop.f32.mrf.mxu0
      %v5488 = vadd.f32 0.0, %v5487
      %v5489 = vpop.f32.mrf.mxu0
      %5490 = vdwg.mxu0
      %5491 = vmatpush.bf16.msra.mxu0 0
      %5492 = vmatpush.bf16.msra.mxu0 0
      %5493 = vmatpush.bf16.msra.mxu0 0
      %5494 = vmatpush.bf16.msra.mxu0 0
      %5495 = vmatpush.bf16.msra.mxu0 %v5462
      %5496 = vmatpush.bf16.msra.mxu0 %v5461
      %5497 = vmatpush.bf16.msra.mxu0 %v5460
      %5498 = vmatpush.bf16.msra.mxu0 %v5459
      %5499 = vmatmul.bf16.gmra.mxu0 %v5476
      %v5500 = vpop.f32.mrf.mxu0
      %v5501 = vadd.f32 %v5488, %v5500
      %v5502 = vpop.f32.mrf.mxu0
      %5503 = vdwg.mxu0
      %v5504 = vadd.f32 %v5368, %v5501
      %s5505 = scalar_lea.vmem [#allocation4], 3
      %v5506 = vld [vmem:[%s5505] ss:$8 sm:$0x3]
      %v5508 = vperm.slane %v5506, 0
      %v5509 = vperm.slane %v5506, 1
      %v5512 = vpack.c.bf16 %v5508, %v5508
      %v5513 = vpack.c.bf16 %v5509, %v5509
      %s5514 = scalar_lea.vmem %s4, 288
      %v5515 = vld [vmem:[%s5514] sm:$0xf]
      %v5516 = vld [vmem:[%s5514 + $0x4] sm:$0xf]
      %v5517 = vld [vmem:[%s5514 + $0x8] sm:$0xf]
      %v5518 = vld [vmem:[%s5514 + $0xc] sm:$0xf]
      %v5519 = vld [vmem:[%s5514 + $0x10] sm:$0xf]
      %v5520 = vld [vmem:[%s5514 + $0x14] sm:$0xf]
      %v5521 = vld [vmem:[%s5514 + $0x18] sm:$0xf]
      %v5522 = vld [vmem:[%s5514 + $0x1c] sm:$0xf]
      %v5523 = vld [vmem:[%s5514 + $0x20] sm:$0xf]
      %v5524 = vld [vmem:[%s5514 + $0x24] sm:$0xf]
      %v5525 = vld [vmem:[%s5514 + $0x28] sm:$0xf]
      %v5526 = vld [vmem:[%s5514 + $0x2c] sm:$0xf]
      %v5527 = vld [vmem:[%s5514 + $0x30] sm:$0xf]
      %v5528 = vld [vmem:[%s5514 + $0x34] sm:$0xf]
      %v5529 = vld [vmem:[%s5514 + $0x38] sm:$0xf]
      %v5530 = vld [vmem:[%s5514 + $0x3c] sm:$0xf]
      %v5531 = vld [vmem:[%s5514 + $0x40] sm:$0xf]
      %v5532 = vld [vmem:[%s5514 + $0x44] sm:$0xf]
      %v5533 = vld [vmem:[%s5514 + $0x48] sm:$0xf]
      %v5534 = vld [vmem:[%s5514 + $0x4c] sm:$0xf]
      %v5535 = vld [vmem:[%s5514 + $0x50] sm:$0xf]
      %v5536 = vld [vmem:[%s5514 + $0x54] sm:$0xf]
      %v5537 = vld [vmem:[%s5514 + $0x58] sm:$0xf]
      %v5538 = vld [vmem:[%s5514 + $0x5c] sm:$0xf]
      %v5563 = vunpack.c.l.b16 %v5515
      %v5564 = vunpack.c.l.b16 %v5516
      %v5565 = vunpack.c.l.b16 %v5517
      %v5566 = vunpack.c.l.b16 %v5518
      %v5567 = vunpack.c.l.b16 %v5519
      %v5568 = vunpack.c.l.b16 %v5520
      %v5569 = vunpack.c.l.b16 %v5521
      %v5570 = vunpack.c.l.b16 %v5522
      %v5571 = vunpack.c.l.b16 %v5523
      %v5572 = vunpack.c.l.b16 %v5524
      %v5573 = vunpack.c.l.b16 %v5525
      %v5574 = vunpack.c.l.b16 %v5526
      %v5575 = vunpack.c.l.b16 %v5527
      %v5576 = vunpack.c.l.b16 %v5528
      %v5577 = vunpack.c.l.b16 %v5529
      %v5578 = vunpack.c.l.b16 %v5530
      %v5579 = vunpack.c.l.b16 %v5531
      %v5580 = vunpack.c.l.b16 %v5532
      %v5581 = vunpack.c.l.b16 %v5533
      %v5582 = vunpack.c.l.b16 %v5534
      %v5583 = vunpack.c.l.b16 %v5535
      %v5584 = vunpack.c.l.b16 %v5536
      %v5585 = vunpack.c.l.b16 %v5537
      %v5586 = vunpack.c.l.b16 %v5538
      %v5587 = vpack.c.b16 %v5564, %v5563
      %v5588 = vpack.c.b16 %v5566, %v5565
      %v5589 = vpack.c.b16 %v5568, %v5567
      %v5590 = vpack.c.b16 %v5570, %v5569
      %v5591 = vpack.c.b16 %v5572, %v5571
      %v5592 = vpack.c.b16 %v5574, %v5573
      %v5593 = vpack.c.b16 %v5576, %v5575
      %v5594 = vpack.c.b16 %v5578, %v5577
      %v5595 = vpack.c.b16 %v5580, %v5579
      %v5596 = vpack.c.b16 %v5582, %v5581
      %v5597 = vpack.c.b16 %v5584, %v5583
      %v5598 = vpack.c.b16 %v5586, %v5585
      %v5612 = vsel %vm5202, %v5513, 0
      %5614 = vmatpush.bf16.msra.mxu0 %v5594
      %5615 = vmatpush.bf16.msra.mxu0 %v5593
      %5616 = vmatpush.bf16.msra.mxu0 %v5592
      %5617 = vmatpush.bf16.msra.mxu0 %v5591
      %5618 = vmatpush.bf16.msra.mxu0 %v5590
      %5619 = vmatpush.bf16.msra.mxu0 %v5589
      %5620 = vmatpush.bf16.msra.mxu0 %v5588
      %5621 = vmatpush.bf16.msra.mxu0 %v5587
      %5622 = vmatmul.bf16.gmra.mxu0 %v5512
      %v5623 = vpop.f32.mrf.mxu0
      %v5624 = vadd.f32 0.0, %v5623
      %v5625 = vpop.f32.mrf.mxu0
      %5626 = vdwg.mxu0
      %5627 = vmatpush.bf16.msra.mxu0 0
      %5628 = vmatpush.bf16.msra.mxu0 0
      %5629 = vmatpush.bf16.msra.mxu0 0
      %5630 = vmatpush.bf16.msra.mxu0 0
      %5631 = vmatpush.bf16.msra.mxu0 %v5598
      %5632 = vmatpush.bf16.msra.mxu0 %v5597
      %5633 = vmatpush.bf16.msra.mxu0 %v5596
      %5634 = vmatpush.bf16.msra.mxu0 %v5595
      %5635 = vmatmul.bf16.gmra.mxu0 %v5612
      %v5636 = vpop.f32.mrf.mxu0
      %v5637 = vadd.f32 %v5624, %v5636
      %v5638 = vpop.f32.mrf.mxu0
      %5639 = vdwg.mxu0
      %v5640 = vadd.f32 %v5504, %v5637
      %s5641 = scalar_lea.vmem [#allocation4], 4
      %v5642 = vld [vmem:[%s5641] ss:$8 sm:$0x3]
      %v5644 = vperm.slane %v5642, 0
      %v5645 = vperm.slane %v5642, 1
      %v5648 = vpack.c.bf16 %v5644, %v5644
      %v5649 = vpack.c.bf16 %v5645, %v5645
      %s5650 = scalar_lea.vmem %s4, 384
      %v5651 = vld [vmem:[%s5650] sm:$0xf]
      %v5652 = vld [vmem:[%s5650 + $0x4] sm:$0xf]
      %v5653 = vld [vmem:[%s5650 + $0x8] sm:$0xf]
      %v5654 = vld [vmem:[%s5650 + $0xc] sm:$0xf]
      %v5655 = vld [vmem:[%s5650 + $0x10] sm:$0xf]
      %v5656 = vld [vmem:[%s5650 + $0x14] sm:$0xf]
      %v5657 = vld [vmem:[%s5650 + $0x18] sm:$0xf]
      %v5658 = vld [vmem:[%s5650 + $0x1c] sm:$0xf]
      %v5659 = vld [vmem:[%s5650 + $0x20] sm:$0xf]
      %v5660 = vld [vmem:[%s5650 + $0x24] sm:$0xf]
      %v5661 = vld [vmem:[%s5650 + $0x28] sm:$0xf]
      %v5662 = vld [vmem:[%s5650 + $0x2c] sm:$0xf]
      %v5663 = vld [vmem:[%s5650 + $0x30] sm:$0xf]
      %v5664 = vld [vmem:[%s5650 + $0x34] sm:$0xf]
      %v5665 = vld [vmem:[%s5650 + $0x38] sm:$0xf]
      %v5666 = vld [vmem:[%s5650 + $0x3c] sm:$0xf]
      %v5667 = vld [vmem:[%s5650 + $0x40] sm:$0xf]
      %v5668 = vld [vmem:[%s5650 + $0x44] sm:$0xf]
      %v5669 = vld [vmem:[%s5650 + $0x48] sm:$0xf]
      %v5670 = vld [vmem:[%s5650 + $0x4c] sm:$0xf]
      %v5671 = vld [vmem:[%s5650 + $0x50] sm:$0xf]
      %v5672 = vld [vmem:[%s5650 + $0x54] sm:$0xf]
      %v5673 = vld [vmem:[%s5650 + $0x58] sm:$0xf]
      %v5674 = vld [vmem:[%s5650 + $0x5c] sm:$0xf]
      %v5699 = vunpack.c.l.b16 %v5651
      %v5700 = vunpack.c.l.b16 %v5652
      %v5701 = vunpack.c.l.b16 %v5653
      %v5702 = vunpack.c.l.b16 %v5654
      %v5703 = vunpack.c.l.b16 %v5655
      %v5704 = vunpack.c.l.b16 %v5656
      %v5705 = vunpack.c.l.b16 %v5657
      %v5706 = vunpack.c.l.b16 %v5658
      %v5707 = vunpack.c.l.b16 %v5659
      %v5708 = vunpack.c.l.b16 %v5660
      %v5709 = vunpack.c.l.b16 %v5661
      %v5710 = vunpack.c.l.b16 %v5662
      %v5711 = vunpack.c.l.b16 %v5663
      %v5712 = vunpack.c.l.b16 %v5664
      %v5713 = vunpack.c.l.b16 %v5665
      %v5714 = vunpack.c.l.b16 %v5666
      %v5715 = vunpack.c.l.b16 %v5667
      %v5716 = vunpack.c.l.b16 %v5668
      %v5717 = vunpack.c.l.b16 %v5669
      %v5718 = vunpack.c.l.b16 %v5670
      %v5719 = vunpack.c.l.b16 %v5671
      %v5720 = vunpack.c.l.b16 %v5672
      %v5721 = vunpack.c.l.b16 %v5673
      %v5722 = vunpack.c.l.b16 %v5674
      %v5723 = vpack.c.b16 %v5700, %v5699
      %v5724 = vpack.c.b16 %v5702, %v5701
      %v5725 = vpack.c.b16 %v5704, %v5703
      %v5726 = vpack.c.b16 %v5706, %v5705
      %v5727 = vpack.c.b16 %v5708, %v5707
      %v5728 = vpack.c.b16 %v5710, %v5709
      %v5729 = vpack.c.b16 %v5712, %v5711
      %v5730 = vpack.c.b16 %v5714, %v5713
      %v5731 = vpack.c.b16 %v5716, %v5715
      %v5732 = vpack.c.b16 %v5718, %v5717
      %v5733 = vpack.c.b16 %v5720, %v5719
      %v5734 = vpack.c.b16 %v5722, %v5721
      %v5748 = vsel %vm5202, %v5649, 0
      %5750 = vmatpush.bf16.msra.mxu0 %v5730
      %5751 = vmatpush.bf16.msra.mxu0 %v5729
      %5752 = vmatpush.bf16.msra.mxu0 %v5728
      %5753 = vmatpush.bf16.msra.mxu0 %v5727
      %5754 = vmatpush.bf16.msra.mxu0 %v5726
      %5755 = vmatpush.bf16.msra.mxu0 %v5725
      %5756 = vmatpush.bf16.msra.mxu0 %v5724
      %5757 = vmatpush.bf16.msra.mxu0 %v5723
      %5758 = vmatmul.bf16.gmra.mxu0 %v5648
      %v5759 = vpop.f32.mrf.mxu0
      %v5760 = vadd.f32 0.0, %v5759
      %v5761 = vpop.f32.mrf.mxu0
      %5762 = vdwg.mxu0
      %5763 = vmatpush.bf16.msra.mxu0 0
      %5764 = vmatpush.bf16.msra.mxu0 0
      %5765 = vmatpush.bf16.msra.mxu0 0
      %5766 = vmatpush.bf16.msra.mxu0 0
      %5767 = vmatpush.bf16.msra.mxu0 %v5734
      %5768 = vmatpush.bf16.msra.mxu0 %v5733
      %5769 = vmatpush.bf16.msra.mxu0 %v5732
      %5770 = vmatpush.bf16.msra.mxu0 %v5731
      %5771 = vmatmul.bf16.gmra.mxu0 %v5748
      %v5772 = vpop.f32.mrf.mxu0
      %v5773 = vadd.f32 %v5760, %v5772
      %v5774 = vpop.f32.mrf.mxu0
      %5775 = vdwg.mxu0
      %v5776 = vadd.f32 %v5640, %v5773
      %vm5777 = vcmp.ge.f32.partialorder %v5776, 0.0
      %v5778 = vmul.f32 %v5776, 0.2
      %v5779 = vsel %vm5777, %v5776, %v5778
      %vm5780 = vcmask 516096
      %5781 = vst.msk [vmem:[#allocation5 + $0xa] sm:$0x1] %vm5780, %v5779
      %v5782 = vld [vmem:[%s10] sm:$0x1]
      %v5783 = vld [vmem:[#allocation5] ss:$8 sm:$0x7]
      %v5785 = vperm.slane %v5783, 0
      %v5786 = vperm.slane %v5783, 1
      %v5787 = vperm.slane %v5783, 2
      %v5791 = vpack.c.bf16 %v5785, %v5785
      %v5792 = vpack.c.bf16 %v5786, %v5786
      %v5793 = vpack.c.bf16 %v5787, %v5787
      %v5794 = vld [vmem:[%s5] sm:$0xf]
      %v5795 = vld [vmem:[%s5 + $0x4] sm:$0xf]
      %v5796 = vld [vmem:[%s5 + $0x8] sm:$0xf]
      %v5797 = vld [vmem:[%s5 + $0xc] sm:$0xf]
      %v5798 = vld [vmem:[%s5 + $0x10] sm:$0xf]
      %v5799 = vld [vmem:[%s5 + $0x14] sm:$0xf]
      %v5800 = vld [vmem:[%s5 + $0x18] sm:$0xf]
      %v5801 = vld [vmem:[%s5 + $0x1c] sm:$0xf]
      %v5802 = vld [vmem:[%s5 + $0x20] sm:$0xf]
      %v5803 = vld [vmem:[%s5 + $0x24] sm:$0xf]
      %v5804 = vld [vmem:[%s5 + $0x28] sm:$0xf]
      %v5805 = vld [vmem:[%s5 + $0x2c] sm:$0xf]
      %v5806 = vld [vmem:[%s5 + $0x30] sm:$0xf]
      %v5807 = vld [vmem:[%s5 + $0x34] sm:$0xf]
      %v5808 = vld [vmem:[%s5 + $0x38] sm:$0xf]
      %v5809 = vld [vmem:[%s5 + $0x3c] sm:$0xf]
      %v5810 = vld [vmem:[%s5 + $0x40] sm:$0xf]
      %v5811 = vld [vmem:[%s5 + $0x44] sm:$0xf]
      %v5812 = vld [vmem:[%s5 + $0x48] sm:$0xf]
      %v5813 = vld [vmem:[%s5 + $0x4c] sm:$0xf]
      %v5814 = vld [vmem:[%s5 + $0x50] sm:$0xf]
      %v5815 = vld [vmem:[%s5 + $0x54] sm:$0xf]
      %v5816 = vld [vmem:[%s5 + $0x58] sm:$0xf]
      %v5817 = vld [vmem:[%s5 + $0x5c] sm:$0xf]
      %v5818 = vld [vmem:[%s5 + $0x60] sm:$0xf]
      %v5819 = vld [vmem:[%s5 + $0x64] sm:$0xf]
      %v5820 = vld [vmem:[%s5 + $0x68] sm:$0xf]
      %v5821 = vld [vmem:[%s5 + $0x6c] sm:$0xf]
      %v5822 = vld [vmem:[%s5 + $0x70] sm:$0xf]
      %v5823 = vld [vmem:[%s5 + $0x74] sm:$0xf]
      %v5824 = vld [vmem:[%s5 + $0x78] sm:$0xf]
      %v5825 = vld [vmem:[%s5 + $0x7c] sm:$0xf]
      %v5826 = vld [vmem:[%s5 + $0x80] sm:$0xf]
      %v5827 = vld [vmem:[%s5 + $0x84] sm:$0xf]
      %v5828 = vld [vmem:[%s5 + $0x88] sm:$0xf]
      %v5829 = vld [vmem:[%s5 + $0x8c] sm:$0xf]
      %v5830 = vld [vmem:[%s5 + $0x90] sm:$0xf]
      %v5831 = vld [vmem:[%s5 + $0x94] sm:$0xf]
      %v5832 = vld [vmem:[%s5 + $0x98] sm:$0xf]
      %v5833 = vld [vmem:[%s5 + $0x9c] sm:$0xf]
      %v5874 = vunpack.c.l.b16 %v5794
      %v5875 = vunpack.c.l.b16 %v5795
      %v5876 = vunpack.c.l.b16 %v5796
      %v5877 = vunpack.c.l.b16 %v5797
      %v5878 = vunpack.c.l.b16 %v5798
      %v5879 = vunpack.c.l.b16 %v5799
      %v5880 = vunpack.c.l.b16 %v5800
      %v5881 = vunpack.c.l.b16 %v5801
      %v5882 = vunpack.c.l.b16 %v5802
      %v5883 = vunpack.c.l.b16 %v5803
      %v5884 = vunpack.c.l.b16 %v5804
      %v5885 = vunpack.c.l.b16 %v5805
      %v5886 = vunpack.c.l.b16 %v5806
      %v5887 = vunpack.c.l.b16 %v5807
      %v5888 = vunpack.c.l.b16 %v5808
      %v5889 = vunpack.c.l.b16 %v5809
      %v5890 = vunpack.c.l.b16 %v5810
      %v5891 = vunpack.c.l.b16 %v5811
      %v5892 = vunpack.c.l.b16 %v5812
      %v5893 = vunpack.c.l.b16 %v5813
      %v5894 = vunpack.c.l.b16 %v5814
      %v5895 = vunpack.c.l.b16 %v5815
      %v5896 = vunpack.c.l.b16 %v5816
      %v5897 = vunpack.c.l.b16 %v5817
      %v5898 = vunpack.c.l.b16 %v5818
      %v5899 = vunpack.c.l.b16 %v5819
      %v5900 = vunpack.c.l.b16 %v5820
      %v5901 = vunpack.c.l.b16 %v5821
      %v5902 = vunpack.c.l.b16 %v5822
      %v5903 = vunpack.c.l.b16 %v5823
      %v5904 = vunpack.c.l.b16 %v5824
      %v5905 = vunpack.c.l.b16 %v5825
      %v5906 = vunpack.c.l.b16 %v5826
      %v5907 = vunpack.c.l.b16 %v5827
      %v5908 = vunpack.c.l.b16 %v5828
      %v5909 = vunpack.c.l.b16 %v5829
      %v5910 = vunpack.c.l.b16 %v5830
      %v5911 = vunpack.c.l.b16 %v5831
      %v5912 = vunpack.c.l.b16 %v5832
      %v5913 = vunpack.c.l.b16 %v5833
      %v5914 = vpack.c.b16 %v5875, %v5874
      %v5915 = vpack.c.b16 %v5877, %v5876
      %v5916 = vpack.c.b16 %v5879, %v5878
      %v5917 = vpack.c.b16 %v5881, %v5880
      %v5918 = vpack.c.b16 %v5883, %v5882
      %v5919 = vpack.c.b16 %v5885, %v5884
      %v5920 = vpack.c.b16 %v5887, %v5886
      %v5921 = vpack.c.b16 %v5889, %v5888
      %v5922 = vpack.c.b16 %v5891, %v5890
      %v5923 = vpack.c.b16 %v5893, %v5892
      %v5924 = vpack.c.b16 %v5895, %v5894
      %v5925 = vpack.c.b16 %v5897, %v5896
      %v5926 = vpack.c.b16 %v5899, %v5898
      %v5927 = vpack.c.b16 %v5901, %v5900
      %v5928 = vpack.c.b16 %v5903, %v5902
      %v5929 = vpack.c.b16 %v5905, %v5904
      %v5930 = vpack.c.b16 %v5907, %v5906
      %v5931 = vpack.c.b16 %v5909, %v5908
      %v5932 = vpack.c.b16 %v5911, %v5910
      %v5933 = vpack.c.b16 %v5913, %v5912
      %v5955 = vsel %vm5202, %v5793, 0
      %5957 = vmatpush.bf16.msra.mxu0 %v5921
      %5958 = vmatpush.bf16.msra.mxu0 %v5920
      %5959 = vmatpush.bf16.msra.mxu0 %v5919
      %5960 = vmatpush.bf16.msra.mxu0 %v5918
      %5961 = vmatpush.bf16.msra.mxu0 %v5917
      %5962 = vmatpush.bf16.msra.mxu0 %v5916
      %5963 = vmatpush.bf16.msra.mxu0 %v5915
      %5964 = vmatpush.bf16.msra.mxu0 %v5914
      %5965 = vmatmul.bf16.gmra.mxu0 %v5791
      %v5966 = vpop.f32.mrf.mxu0
      %v5967 = vadd.f32 0.0, %v5966
      %v5968 = vpop.f32.mrf.mxu0
      %5969 = vdwg.mxu0
      %5970 = vmatpush.bf16.msra.mxu0 %v5929
      %5971 = vmatpush.bf16.msra.mxu0 %v5928
      %5972 = vmatpush.bf16.msra.mxu0 %v5927
      %5973 = vmatpush.bf16.msra.mxu0 %v5926
      %5974 = vmatpush.bf16.msra.mxu0 %v5925
      %5975 = vmatpush.bf16.msra.mxu0 %v5924
      %5976 = vmatpush.bf16.msra.mxu0 %v5923
      %5977 = vmatpush.bf16.msra.mxu0 %v5922
      %5978 = vmatmul.bf16.gmra.mxu0 %v5792
      %v5979 = vpop.f32.mrf.mxu0
      %v5980 = vadd.f32 %v5967, %v5979
      %v5981 = vpop.f32.mrf.mxu0
      %5982 = vdwg.mxu0
      %5983 = vmatpush.bf16.msra.mxu0 0
      %5984 = vmatpush.bf16.msra.mxu0 0
      %5985 = vmatpush.bf16.msra.mxu0 0
      %5986 = vmatpush.bf16.msra.mxu0 0
      %5987 = vmatpush.bf16.msra.mxu0 %v5933
      %5988 = vmatpush.bf16.msra.mxu0 %v5932
      %5989 = vmatpush.bf16.msra.mxu0 %v5931
      %5990 = vmatpush.bf16.msra.mxu0 %v5930
      %5991 = vmatmul.bf16.gmra.mxu0 %v5955
      %v5992 = vpop.f32.mrf.mxu0
      %v5993 = vadd.f32 %v5980, %v5992
      %v5994 = vpop.f32.mrf.mxu0
      %5995 = vdwg.mxu0
      %v5996 = vadd.f32 %v5782, %v5993
      %s5997 = scalar_lea.vmem [#allocation5], 1
      %v5998 = vld [vmem:[%s5997] ss:$8 sm:$0x7]
      %v6000 = vperm.slane %v5998, 0
      %v6001 = vperm.slane %v5998, 1
      %v6002 = vperm.slane %v5998, 2
      %v6006 = vpack.c.bf16 %v6000, %v6000
      %v6007 = vpack.c.bf16 %v6001, %v6001
      %v6008 = vpack.c.bf16 %v6002, %v6002
      %s6009 = scalar_lea.vmem %s5, 160
      %v6010 = vld [vmem:[%s6009] sm:$0xf]
      %v6011 = vld [vmem:[%s6009 + $0x4] sm:$0xf]
      %v6012 = vld [vmem:[%s6009 + $0x8] sm:$0xf]
      %v6013 = vld [vmem:[%s6009 + $0xc] sm:$0xf]
      %v6014 = vld [vmem:[%s6009 + $0x10] sm:$0xf]
      %v6015 = vld [vmem:[%s6009 + $0x14] sm:$0xf]
      %v6016 = vld [vmem:[%s6009 + $0x18] sm:$0xf]
      %v6017 = vld [vmem:[%s6009 + $0x1c] sm:$0xf]
      %v6018 = vld [vmem:[%s6009 + $0x20] sm:$0xf]
      %v6019 = vld [vmem:[%s6009 + $0x24] sm:$0xf]
      %v6020 = vld [vmem:[%s6009 + $0x28] sm:$0xf]
      %v6021 = vld [vmem:[%s6009 + $0x2c] sm:$0xf]
      %v6022 = vld [vmem:[%s6009 + $0x30] sm:$0xf]
      %v6023 = vld [vmem:[%s6009 + $0x34] sm:$0xf]
      %v6024 = vld [vmem:[%s6009 + $0x38] sm:$0xf]
      %v6025 = vld [vmem:[%s6009 + $0x3c] sm:$0xf]
      %v6026 = vld [vmem:[%s6009 + $0x40] sm:$0xf]
      %v6027 = vld [vmem:[%s6009 + $0x44] sm:$0xf]
      %v6028 = vld [vmem:[%s6009 + $0x48] sm:$0xf]
      %v6029 = vld [vmem:[%s6009 + $0x4c] sm:$0xf]
      %v6030 = vld [vmem:[%s6009 + $0x50] sm:$0xf]
      %v6031 = vld [vmem:[%s6009 + $0x54] sm:$0xf]
      %v6032 = vld [vmem:[%s6009 + $0x58] sm:$0xf]
      %v6033 = vld [vmem:[%s6009 + $0x5c] sm:$0xf]
      %v6034 = vld [vmem:[%s6009 + $0x60] sm:$0xf]
      %v6035 = vld [vmem:[%s6009 + $0x64] sm:$0xf]
      %v6036 = vld [vmem:[%s6009 + $0x68] sm:$0xf]
      %v6037 = vld [vmem:[%s6009 + $0x6c] sm:$0xf]
      %v6038 = vld [vmem:[%s6009 + $0x70] sm:$0xf]
      %v6039 = vld [vmem:[%s6009 + $0x74] sm:$0xf]
      %v6040 = vld [vmem:[%s6009 + $0x78] sm:$0xf]
      %v6041 = vld [vmem:[%s6009 + $0x7c] sm:$0xf]
      %v6042 = vld [vmem:[%s6009 + $0x80] sm:$0xf]
      %v6043 = vld [vmem:[%s6009 + $0x84] sm:$0xf]
      %v6044 = vld [vmem:[%s6009 + $0x88] sm:$0xf]
      %v6045 = vld [vmem:[%s6009 + $0x8c] sm:$0xf]
      %v6046 = vld [vmem:[%s6009 + $0x90] sm:$0xf]
      %v6047 = vld [vmem:[%s6009 + $0x94] sm:$0xf]
      %v6048 = vld [vmem:[%s6009 + $0x98] sm:$0xf]
      %v6049 = vld [vmem:[%s6009 + $0x9c] sm:$0xf]
      %v6090 = vunpack.c.l.b16 %v6010
      %v6091 = vunpack.c.l.b16 %v6011
      %v6092 = vunpack.c.l.b16 %v6012
      %v6093 = vunpack.c.l.b16 %v6013
      %v6094 = vunpack.c.l.b16 %v6014
      %v6095 = vunpack.c.l.b16 %v6015
      %v6096 = vunpack.c.l.b16 %v6016
      %v6097 = vunpack.c.l.b16 %v6017
      %v6098 = vunpack.c.l.b16 %v6018
      %v6099 = vunpack.c.l.b16 %v6019
      %v6100 = vunpack.c.l.b16 %v6020
      %v6101 = vunpack.c.l.b16 %v6021
      %v6102 = vunpack.c.l.b16 %v6022
      %v6103 = vunpack.c.l.b16 %v6023
      %v6104 = vunpack.c.l.b16 %v6024
      %v6105 = vunpack.c.l.b16 %v6025
      %v6106 = vunpack.c.l.b16 %v6026
      %v6107 = vunpack.c.l.b16 %v6027
      %v6108 = vunpack.c.l.b16 %v6028
      %v6109 = vunpack.c.l.b16 %v6029
      %v6110 = vunpack.c.l.b16 %v6030
      %v6111 = vunpack.c.l.b16 %v6031
      %v6112 = vunpack.c.l.b16 %v6032
      %v6113 = vunpack.c.l.b16 %v6033
      %v6114 = vunpack.c.l.b16 %v6034
      %v6115 = vunpack.c.l.b16 %v6035
      %v6116 = vunpack.c.l.b16 %v6036
      %v6117 = vunpack.c.l.b16 %v6037
      %v6118 = vunpack.c.l.b16 %v6038
      %v6119 = vunpack.c.l.b16 %v6039
      %v6120 = vunpack.c.l.b16 %v6040
      %v6121 = vunpack.c.l.b16 %v6041
      %v6122 = vunpack.c.l.b16 %v6042
      %v6123 = vunpack.c.l.b16 %v6043
      %v6124 = vunpack.c.l.b16 %v6044
      %v6125 = vunpack.c.l.b16 %v6045
      %v6126 = vunpack.c.l.b16 %v6046
      %v6127 = vunpack.c.l.b16 %v6047
      %v6128 = vunpack.c.l.b16 %v6048
      %v6129 = vunpack.c.l.b16 %v6049
      %v6130 = vpack.c.b16 %v6091, %v6090
      %v6131 = vpack.c.b16 %v6093, %v6092
      %v6132 = vpack.c.b16 %v6095, %v6094
      %v6133 = vpack.c.b16 %v6097, %v6096
      %v6134 = vpack.c.b16 %v6099, %v6098
      %v6135 = vpack.c.b16 %v6101, %v6100
      %v6136 = vpack.c.b16 %v6103, %v6102
      %v6137 = vpack.c.b16 %v6105, %v6104
      %v6138 = vpack.c.b16 %v6107, %v6106
      %v6139 = vpack.c.b16 %v6109, %v6108
      %v6140 = vpack.c.b16 %v6111, %v6110
      %v6141 = vpack.c.b16 %v6113, %v6112
      %v6142 = vpack.c.b16 %v6115, %v6114
      %v6143 = vpack.c.b16 %v6117, %v6116
      %v6144 = vpack.c.b16 %v6119, %v6118
      %v6145 = vpack.c.b16 %v6121, %v6120
      %v6146 = vpack.c.b16 %v6123, %v6122
      %v6147 = vpack.c.b16 %v6125, %v6124
      %v6148 = vpack.c.b16 %v6127, %v6126
      %v6149 = vpack.c.b16 %v6129, %v6128
      %v6171 = vsel %vm5202, %v6008, 0
      %6173 = vmatpush.bf16.msra.mxu0 %v6137
      %6174 = vmatpush.bf16.msra.mxu0 %v6136
      %6175 = vmatpush.bf16.msra.mxu0 %v6135
      %6176 = vmatpush.bf16.msra.mxu0 %v6134
      %6177 = vmatpush.bf16.msra.mxu0 %v6133
      %6178 = vmatpush.bf16.msra.mxu0 %v6132
      %6179 = vmatpush.bf16.msra.mxu0 %v6131
      %6180 = vmatpush.bf16.msra.mxu0 %v6130
      %6181 = vmatmul.bf16.gmra.mxu0 %v6006
      %v6182 = vpop.f32.mrf.mxu0
      %v6183 = vadd.f32 0.0, %v6182
      %v6184 = vpop.f32.mrf.mxu0
      %6185 = vdwg.mxu0
      %6186 = vmatpush.bf16.msra.mxu0 %v6145
      %6187 = vmatpush.bf16.msra.mxu0 %v6144
      %6188 = vmatpush.bf16.msra.mxu0 %v6143
      %6189 = vmatpush.bf16.msra.mxu0 %v6142
      %6190 = vmatpush.bf16.msra.mxu0 %v6141
      %6191 = vmatpush.bf16.msra.mxu0 %v6140
      %6192 = vmatpush.bf16.msra.mxu0 %v6139
      %6193 = vmatpush.bf16.msra.mxu0 %v6138
      %6194 = vmatmul.bf16.gmra.mxu0 %v6007
      %v6195 = vpop.f32.mrf.mxu0
      %v6196 = vadd.f32 %v6183, %v6195
      %v6197 = vpop.f32.mrf.mxu0
      %6198 = vdwg.mxu0
      %6199 = vmatpush.bf16.msra.mxu0 0
      %6200 = vmatpush.bf16.msra.mxu0 0
      %6201 = vmatpush.bf16.msra.mxu0 0
      %6202 = vmatpush.bf16.msra.mxu0 0
      %6203 = vmatpush.bf16.msra.mxu0 %v6149
      %6204 = vmatpush.bf16.msra.mxu0 %v6148
      %6205 = vmatpush.bf16.msra.mxu0 %v6147
      %6206 = vmatpush.bf16.msra.mxu0 %v6146
      %6207 = vmatmul.bf16.gmra.mxu0 %v6171
      %v6208 = vpop.f32.mrf.mxu0
      %v6209 = vadd.f32 %v6196, %v6208
      %v6210 = vpop.f32.mrf.mxu0
      %6211 = vdwg.mxu0
      %v6212 = vadd.f32 %v5996, %v6209
      %s6213 = scalar_lea.vmem [#allocation5], 2
      %v6214 = vld [vmem:[%s6213] ss:$8 sm:$0x7]
      %v6216 = vperm.slane %v6214, 0
      %v6217 = vperm.slane %v6214, 1
      %v6218 = vperm.slane %v6214, 2
      %v6222 = vpack.c.bf16 %v6216, %v6216
      %v6223 = vpack.c.bf16 %v6217, %v6217
      %v6224 = vpack.c.bf16 %v6218, %v6218
      %s6225 = scalar_lea.vmem %s5, 320
      %v6226 = vld [vmem:[%s6225] sm:$0xf]
      %v6227 = vld [vmem:[%s6225 + $0x4] sm:$0xf]
      %v6228 = vld [vmem:[%s6225 + $0x8] sm:$0xf]
      %v6229 = vld [vmem:[%s6225 + $0xc] sm:$0xf]
      %v6230 = vld [vmem:[%s6225 + $0x10] sm:$0xf]
      %v6231 = vld [vmem:[%s6225 + $0x14] sm:$0xf]
      %v6232 = vld [vmem:[%s6225 + $0x18] sm:$0xf]
      %v6233 = vld [vmem:[%s6225 + $0x1c] sm:$0xf]
      %v6234 = vld [vmem:[%s6225 + $0x20] sm:$0xf]
      %v6235 = vld [vmem:[%s6225 + $0x24] sm:$0xf]
      %v6236 = vld [vmem:[%s6225 + $0x28] sm:$0xf]
      %v6237 = vld [vmem:[%s6225 + $0x2c] sm:$0xf]
      %v6238 = vld [vmem:[%s6225 + $0x30] sm:$0xf]
      %v6239 = vld [vmem:[%s6225 + $0x34] sm:$0xf]
      %v6240 = vld [vmem:[%s6225 + $0x38] sm:$0xf]
      %v6241 = vld [vmem:[%s6225 + $0x3c] sm:$0xf]
      %v6242 = vld [vmem:[%s6225 + $0x40] sm:$0xf]
      %v6243 = vld [vmem:[%s6225 + $0x44] sm:$0xf]
      %v6244 = vld [vmem:[%s6225 + $0x48] sm:$0xf]
      %v6245 = vld [vmem:[%s6225 + $0x4c] sm:$0xf]
      %v6246 = vld [vmem:[%s6225 + $0x50] sm:$0xf]
      %v6247 = vld [vmem:[%s6225 + $0x54] sm:$0xf]
      %v6248 = vld [vmem:[%s6225 + $0x58] sm:$0xf]
      %v6249 = vld [vmem:[%s6225 + $0x5c] sm:$0xf]
      %v6250 = vld [vmem:[%s6225 + $0x60] sm:$0xf]
      %v6251 = vld [vmem:[%s6225 + $0x64] sm:$0xf]
      %v6252 = vld [vmem:[%s6225 + $0x68] sm:$0xf]
      %v6253 = vld [vmem:[%s6225 + $0x6c] sm:$0xf]
      %v6254 = vld [vmem:[%s6225 + $0x70] sm:$0xf]
      %v6255 = vld [vmem:[%s6225 + $0x74] sm:$0xf]
      %v6256 = vld [vmem:[%s6225 + $0x78] sm:$0xf]
      %v6257 = vld [vmem:[%s6225 + $0x7c] sm:$0xf]
      %v6258 = vld [vmem:[%s6225 + $0x80] sm:$0xf]
      %v6259 = vld [vmem:[%s6225 + $0x84] sm:$0xf]
      %v6260 = vld [vmem:[%s6225 + $0x88] sm:$0xf]
      %v6261 = vld [vmem:[%s6225 + $0x8c] sm:$0xf]
      %v6262 = vld [vmem:[%s6225 + $0x90] sm:$0xf]
      %v6263 = vld [vmem:[%s6225 + $0x94] sm:$0xf]
      %v6264 = vld [vmem:[%s6225 + $0x98] sm:$0xf]
      %v6265 = vld [vmem:[%s6225 + $0x9c] sm:$0xf]
      %v6306 = vunpack.c.l.b16 %v6226
      %v6307 = vunpack.c.l.b16 %v6227
      %v6308 = vunpack.c.l.b16 %v6228
      %v6309 = vunpack.c.l.b16 %v6229
      %v6310 = vunpack.c.l.b16 %v6230
      %v6311 = vunpack.c.l.b16 %v6231
      %v6312 = vunpack.c.l.b16 %v6232
      %v6313 = vunpack.c.l.b16 %v6233
      %v6314 = vunpack.c.l.b16 %v6234
      %v6315 = vunpack.c.l.b16 %v6235
      %v6316 = vunpack.c.l.b16 %v6236
      %v6317 = vunpack.c.l.b16 %v6237
      %v6318 = vunpack.c.l.b16 %v6238
      %v6319 = vunpack.c.l.b16 %v6239
      %v6320 = vunpack.c.l.b16 %v6240
      %v6321 = vunpack.c.l.b16 %v6241
      %v6322 = vunpack.c.l.b16 %v6242
      %v6323 = vunpack.c.l.b16 %v6243
      %v6324 = vunpack.c.l.b16 %v6244
      %v6325 = vunpack.c.l.b16 %v6245
      %v6326 = vunpack.c.l.b16 %v6246
      %v6327 = vunpack.c.l.b16 %v6247
      %v6328 = vunpack.c.l.b16 %v6248
      %v6329 = vunpack.c.l.b16 %v6249
      %v6330 = vunpack.c.l.b16 %v6250
      %v6331 = vunpack.c.l.b16 %v6251
      %v6332 = vunpack.c.l.b16 %v6252
      %v6333 = vunpack.c.l.b16 %v6253
      %v6334 = vunpack.c.l.b16 %v6254
      %v6335 = vunpack.c.l.b16 %v6255
      %v6336 = vunpack.c.l.b16 %v6256
      %v6337 = vunpack.c.l.b16 %v6257
      %v6338 = vunpack.c.l.b16 %v6258
      %v6339 = vunpack.c.l.b16 %v6259
      %v6340 = vunpack.c.l.b16 %v6260
      %v6341 = vunpack.c.l.b16 %v6261
      %v6342 = vunpack.c.l.b16 %v6262
      %v6343 = vunpack.c.l.b16 %v6263
      %v6344 = vunpack.c.l.b16 %v6264
      %v6345 = vunpack.c.l.b16 %v6265
      %v6346 = vpack.c.b16 %v6307, %v6306
      %v6347 = vpack.c.b16 %v6309, %v6308
      %v6348 = vpack.c.b16 %v6311, %v6310
      %v6349 = vpack.c.b16 %v6313, %v6312
      %v6350 = vpack.c.b16 %v6315, %v6314
      %v6351 = vpack.c.b16 %v6317, %v6316
      %v6352 = vpack.c.b16 %v6319, %v6318
      %v6353 = vpack.c.b16 %v6321, %v6320
      %v6354 = vpack.c.b16 %v6323, %v6322
      %v6355 = vpack.c.b16 %v6325, %v6324
      %v6356 = vpack.c.b16 %v6327, %v6326
      %v6357 = vpack.c.b16 %v6329, %v6328
      %v6358 = vpack.c.b16 %v6331, %v6330
      %v6359 = vpack.c.b16 %v6333, %v6332
      %v6360 = vpack.c.b16 %v6335, %v6334
      %v6361 = vpack.c.b16 %v6337, %v6336
      %v6362 = vpack.c.b16 %v6339, %v6338
      %v6363 = vpack.c.b16 %v6341, %v6340
      %v6364 = vpack.c.b16 %v6343, %v6342
      %v6365 = vpack.c.b16 %v6345, %v6344
      %v6387 = vsel %vm5202, %v6224, 0
      %6389 = vmatpush.bf16.msra.mxu0 %v6353
      %6390 = vmatpush.bf16.msra.mxu0 %v6352
      %6391 = vmatpush.bf16.msra.mxu0 %v6351
      %6392 = vmatpush.bf16.msra.mxu0 %v6350
      %6393 = vmatpush.bf16.msra.mxu0 %v6349
      %6394 = vmatpush.bf16.msra.mxu0 %v6348
      %6395 = vmatpush.bf16.msra.mxu0 %v6347
      %6396 = vmatpush.bf16.msra.mxu0 %v6346
      %6397 = vmatmul.bf16.gmra.mxu0 %v6222
      %v6398 = vpop.f32.mrf.mxu0
      %v6399 = vadd.f32 0.0, %v6398
      %v6400 = vpop.f32.mrf.mxu0
      %6401 = vdwg.mxu0
      %6402 = vmatpush.bf16.msra.mxu0 %v6361
      %6403 = vmatpush.bf16.msra.mxu0 %v6360
      %6404 = vmatpush.bf16.msra.mxu0 %v6359
      %6405 = vmatpush.bf16.msra.mxu0 %v6358
      %6406 = vmatpush.bf16.msra.mxu0 %v6357
      %6407 = vmatpush.bf16.msra.mxu0 %v6356
      %6408 = vmatpush.bf16.msra.mxu0 %v6355
      %6409 = vmatpush.bf16.msra.mxu0 %v6354
      %6410 = vmatmul.bf16.gmra.mxu0 %v6223
      %v6411 = vpop.f32.mrf.mxu0
      %v6412 = vadd.f32 %v6399, %v6411
      %v6413 = vpop.f32.mrf.mxu0
      %6414 = vdwg.mxu0
      %6415 = vmatpush.bf16.msra.mxu0 0
      %6416 = vmatpush.bf16.msra.mxu0 0
      %6417 = vmatpush.bf16.msra.mxu0 0
      %6418 = vmatpush.bf16.msra.mxu0 0
      %6419 = vmatpush.bf16.msra.mxu0 %v6365
      %6420 = vmatpush.bf16.msra.mxu0 %v6364
      %6421 = vmatpush.bf16.msra.mxu0 %v6363
      %6422 = vmatpush.bf16.msra.mxu0 %v6362
      %6423 = vmatmul.bf16.gmra.mxu0 %v6387
      %v6424 = vpop.f32.mrf.mxu0
      %v6425 = vadd.f32 %v6412, %v6424
      %v6426 = vpop.f32.mrf.mxu0
      %6427 = vdwg.mxu0
      %v6428 = vadd.f32 %v6212, %v6425
      %s6429 = scalar_lea.vmem [#allocation5], 3
      %v6430 = vld [vmem:[%s6429] ss:$8 sm:$0x7]
      %v6432 = vperm.slane %v6430, 0
      %v6433 = vperm.slane %v6430, 1
      %v6434 = vperm.slane %v6430, 2
      %v6438 = vpack.c.bf16 %v6432, %v6432
      %v6439 = vpack.c.bf16 %v6433, %v6433
      %v6440 = vpack.c.bf16 %v6434, %v6434
      %s6441 = scalar_lea.vmem %s5, 480
      %v6442 = vld [vmem:[%s6441] sm:$0xf]
      %v6443 = vld [vmem:[%s6441 + $0x4] sm:$0xf]
      %v6444 = vld [vmem:[%s6441 + $0x8] sm:$0xf]
      %v6445 = vld [vmem:[%s6441 + $0xc] sm:$0xf]
      %v6446 = vld [vmem:[%s6441 + $0x10] sm:$0xf]
      %v6447 = vld [vmem:[%s6441 + $0x14] sm:$0xf]
      %v6448 = vld [vmem:[%s6441 + $0x18] sm:$0xf]
      %v6449 = vld [vmem:[%s6441 + $0x1c] sm:$0xf]
      %v6450 = vld [vmem:[%s6441 + $0x20] sm:$0xf]
      %v6451 = vld [vmem:[%s6441 + $0x24] sm:$0xf]
      %v6452 = vld [vmem:[%s6441 + $0x28] sm:$0xf]
      %v6453 = vld [vmem:[%s6441 + $0x2c] sm:$0xf]
      %v6454 = vld [vmem:[%s6441 + $0x30] sm:$0xf]
      %v6455 = vld [vmem:[%s6441 + $0x34] sm:$0xf]
      %v6456 = vld [vmem:[%s6441 + $0x38] sm:$0xf]
      %v6457 = vld [vmem:[%s6441 + $0x3c] sm:$0xf]
      %v6458 = vld [vmem:[%s6441 + $0x40] sm:$0xf]
      %v6459 = vld [vmem:[%s6441 + $0x44] sm:$0xf]
      %v6460 = vld [vmem:[%s6441 + $0x48] sm:$0xf]
      %v6461 = vld [vmem:[%s6441 + $0x4c] sm:$0xf]
      %v6462 = vld [vmem:[%s6441 + $0x50] sm:$0xf]
      %v6463 = vld [vmem:[%s6441 + $0x54] sm:$0xf]
      %v6464 = vld [vmem:[%s6441 + $0x58] sm:$0xf]
      %v6465 = vld [vmem:[%s6441 + $0x5c] sm:$0xf]
      %v6466 = vld [vmem:[%s6441 + $0x60] sm:$0xf]
      %v6467 = vld [vmem:[%s6441 + $0x64] sm:$0xf]
      %v6468 = vld [vmem:[%s6441 + $0x68] sm:$0xf]
      %v6469 = vld [vmem:[%s6441 + $0x6c] sm:$0xf]
      %v6470 = vld [vmem:[%s6441 + $0x70] sm:$0xf]
      %v6471 = vld [vmem:[%s6441 + $0x74] sm:$0xf]
      %v6472 = vld [vmem:[%s6441 + $0x78] sm:$0xf]
      %v6473 = vld [vmem:[%s6441 + $0x7c] sm:$0xf]
      %v6474 = vld [vmem:[%s6441 + $0x80] sm:$0xf]
      %v6475 = vld [vmem:[%s6441 + $0x84] sm:$0xf]
      %v6476 = vld [vmem:[%s6441 + $0x88] sm:$0xf]
      %v6477 = vld [vmem:[%s6441 + $0x8c] sm:$0xf]
      %v6478 = vld [vmem:[%s6441 + $0x90] sm:$0xf]
      %v6479 = vld [vmem:[%s6441 + $0x94] sm:$0xf]
      %v6480 = vld [vmem:[%s6441 + $0x98] sm:$0xf]
      %v6481 = vld [vmem:[%s6441 + $0x9c] sm:$0xf]
      %v6522 = vunpack.c.l.b16 %v6442
      %v6523 = vunpack.c.l.b16 %v6443
      %v6524 = vunpack.c.l.b16 %v6444
      %v6525 = vunpack.c.l.b16 %v6445
      %v6526 = vunpack.c.l.b16 %v6446
      %v6527 = vunpack.c.l.b16 %v6447
      %v6528 = vunpack.c.l.b16 %v6448
      %v6529 = vunpack.c.l.b16 %v6449
      %v6530 = vunpack.c.l.b16 %v6450
      %v6531 = vunpack.c.l.b16 %v6451
      %v6532 = vunpack.c.l.b16 %v6452
      %v6533 = vunpack.c.l.b16 %v6453
      %v6534 = vunpack.c.l.b16 %v6454
      %v6535 = vunpack.c.l.b16 %v6455
      %v6536 = vunpack.c.l.b16 %v6456
      %v6537 = vunpack.c.l.b16 %v6457
      %v6538 = vunpack.c.l.b16 %v6458
      %v6539 = vunpack.c.l.b16 %v6459
      %v6540 = vunpack.c.l.b16 %v6460
      %v6541 = vunpack.c.l.b16 %v6461
      %v6542 = vunpack.c.l.b16 %v6462
      %v6543 = vunpack.c.l.b16 %v6463
      %v6544 = vunpack.c.l.b16 %v6464
      %v6545 = vunpack.c.l.b16 %v6465
      %v6546 = vunpack.c.l.b16 %v6466
      %v6547 = vunpack.c.l.b16 %v6467
      %v6548 = vunpack.c.l.b16 %v6468
      %v6549 = vunpack.c.l.b16 %v6469
      %v6550 = vunpack.c.l.b16 %v6470
      %v6551 = vunpack.c.l.b16 %v6471
      %v6552 = vunpack.c.l.b16 %v6472
      %v6553 = vunpack.c.l.b16 %v6473
      %v6554 = vunpack.c.l.b16 %v6474
      %v6555 = vunpack.c.l.b16 %v6475
      %v6556 = vunpack.c.l.b16 %v6476
      %v6557 = vunpack.c.l.b16 %v6477
      %v6558 = vunpack.c.l.b16 %v6478
      %v6559 = vunpack.c.l.b16 %v6479
      %v6560 = vunpack.c.l.b16 %v6480
      %v6561 = vunpack.c.l.b16 %v6481
      %v6562 = vpack.c.b16 %v6523, %v6522
      %v6563 = vpack.c.b16 %v6525, %v6524
      %v6564 = vpack.c.b16 %v6527, %v6526
      %v6565 = vpack.c.b16 %v6529, %v6528
      %v6566 = vpack.c.b16 %v6531, %v6530
      %v6567 = vpack.c.b16 %v6533, %v6532
      %v6568 = vpack.c.b16 %v6535, %v6534
      %v6569 = vpack.c.b16 %v6537, %v6536
      %v6570 = vpack.c.b16 %v6539, %v6538
      %v6571 = vpack.c.b16 %v6541, %v6540
      %v6572 = vpack.c.b16 %v6543, %v6542
      %v6573 = vpack.c.b16 %v6545, %v6544
      %v6574 = vpack.c.b16 %v6547, %v6546
      %v6575 = vpack.c.b16 %v6549, %v6548
      %v6576 = vpack.c.b16 %v6551, %v6550
      %v6577 = vpack.c.b16 %v6553, %v6552
      %v6578 = vpack.c.b16 %v6555, %v6554
      %v6579 = vpack.c.b16 %v6557, %v6556
      %v6580 = vpack.c.b16 %v6559, %v6558
      %v6581 = vpack.c.b16 %v6561, %v6560
      %v6603 = vsel %vm5202, %v6440, 0
      %6605 = vmatpush.bf16.msra.mxu0 %v6569
      %6606 = vmatpush.bf16.msra.mxu0 %v6568
      %6607 = vmatpush.bf16.msra.mxu0 %v6567
      %6608 = vmatpush.bf16.msra.mxu0 %v6566
      %6609 = vmatpush.bf16.msra.mxu0 %v6565
      %6610 = vmatpush.bf16.msra.mxu0 %v6564
      %6611 = vmatpush.bf16.msra.mxu0 %v6563
      %6612 = vmatpush.bf16.msra.mxu0 %v6562
      %6613 = vmatmul.bf16.gmra.mxu0 %v6438
      %v6614 = vpop.f32.mrf.mxu0
      %v6615 = vadd.f32 0.0, %v6614
      %v6616 = vpop.f32.mrf.mxu0
      %6617 = vdwg.mxu0
      %6618 = vmatpush.bf16.msra.mxu0 %v6577
      %6619 = vmatpush.bf16.msra.mxu0 %v6576
      %6620 = vmatpush.bf16.msra.mxu0 %v6575
      %6621 = vmatpush.bf16.msra.mxu0 %v6574
      %6622 = vmatpush.bf16.msra.mxu0 %v6573
      %6623 = vmatpush.bf16.msra.mxu0 %v6572
      %6624 = vmatpush.bf16.msra.mxu0 %v6571
      %6625 = vmatpush.bf16.msra.mxu0 %v6570
      %6626 = vmatmul.bf16.gmra.mxu0 %v6439
      %v6627 = vpop.f32.mrf.mxu0
      %v6628 = vadd.f32 %v6615, %v6627
      %v6629 = vpop.f32.mrf.mxu0
      %6630 = vdwg.mxu0
      %6631 = vmatpush.bf16.msra.mxu0 0
      %6632 = vmatpush.bf16.msra.mxu0 0
      %6633 = vmatpush.bf16.msra.mxu0 0
      %6634 = vmatpush.bf16.msra.mxu0 0
      %6635 = vmatpush.bf16.msra.mxu0 %v6581
      %6636 = vmatpush.bf16.msra.mxu0 %v6580
      %6637 = vmatpush.bf16.msra.mxu0 %v6579
      %6638 = vmatpush.bf16.msra.mxu0 %v6578
      %6639 = vmatmul.bf16.gmra.mxu0 %v6603
      %v6640 = vpop.f32.mrf.mxu0
      %v6641 = vadd.f32 %v6628, %v6640
      %v6642 = vpop.f32.mrf.mxu0
      %6643 = vdwg.mxu0
      %v6644 = vadd.f32 %v6428, %v6641
      %s6645 = scalar_lea.vmem [#allocation5], 4
      %v6646 = vld [vmem:[%s6645] ss:$8 sm:$0x7]
      %v6648 = vperm.slane %v6646, 0
      %v6649 = vperm.slane %v6646, 1
      %v6650 = vperm.slane %v6646, 2
      %v6654 = vpack.c.bf16 %v6648, %v6648
      %v6655 = vpack.c.bf16 %v6649, %v6649
      %v6656 = vpack.c.bf16 %v6650, %v6650
      %s6657 = scalar_lea.vmem %s5, 640
      %v6658 = vld [vmem:[%s6657] sm:$0xf]
      %v6659 = vld [vmem:[%s6657 + $0x4] sm:$0xf]
      %v6660 = vld [vmem:[%s6657 + $0x8] sm:$0xf]
      %v6661 = vld [vmem:[%s6657 + $0xc] sm:$0xf]
      %v6662 = vld [vmem:[%s6657 + $0x10] sm:$0xf]
      %v6663 = vld [vmem:[%s6657 + $0x14] sm:$0xf]
      %v6664 = vld [vmem:[%s6657 + $0x18] sm:$0xf]
      %v6665 = vld [vmem:[%s6657 + $0x1c] sm:$0xf]
      %v6666 = vld [vmem:[%s6657 + $0x20] sm:$0xf]
      %v6667 = vld [vmem:[%s6657 + $0x24] sm:$0xf]
      %v6668 = vld [vmem:[%s6657 + $0x28] sm:$0xf]
      %v6669 = vld [vmem:[%s6657 + $0x2c] sm:$0xf]
      %v6670 = vld [vmem:[%s6657 + $0x30] sm:$0xf]
      %v6671 = vld [vmem:[%s6657 + $0x34] sm:$0xf]
      %v6672 = vld [vmem:[%s6657 + $0x38] sm:$0xf]
      %v6673 = vld [vmem:[%s6657 + $0x3c] sm:$0xf]
      %v6674 = vld [vmem:[%s6657 + $0x40] sm:$0xf]
      %v6675 = vld [vmem:[%s6657 + $0x44] sm:$0xf]
      %v6676 = vld [vmem:[%s6657 + $0x48] sm:$0xf]
      %v6677 = vld [vmem:[%s6657 + $0x4c] sm:$0xf]
      %v6678 = vld [vmem:[%s6657 + $0x50] sm:$0xf]
      %v6679 = vld [vmem:[%s6657 + $0x54] sm:$0xf]
      %v6680 = vld [vmem:[%s6657 + $0x58] sm:$0xf]
      %v6681 = vld [vmem:[%s6657 + $0x5c] sm:$0xf]
      %v6682 = vld [vmem:[%s6657 + $0x60] sm:$0xf]
      %v6683 = vld [vmem:[%s6657 + $0x64] sm:$0xf]
      %v6684 = vld [vmem:[%s6657 + $0x68] sm:$0xf]
      %v6685 = vld [vmem:[%s6657 + $0x6c] sm:$0xf]
      %v6686 = vld [vmem:[%s6657 + $0x70] sm:$0xf]
      %v6687 = vld [vmem:[%s6657 + $0x74] sm:$0xf]
      %v6688 = vld [vmem:[%s6657 + $0x78] sm:$0xf]
      %v6689 = vld [vmem:[%s6657 + $0x7c] sm:$0xf]
      %v6690 = vld [vmem:[%s6657 + $0x80] sm:$0xf]
      %v6691 = vld [vmem:[%s6657 + $0x84] sm:$0xf]
      %v6692 = vld [vmem:[%s6657 + $0x88] sm:$0xf]
      %v6693 = vld [vmem:[%s6657 + $0x8c] sm:$0xf]
      %v6694 = vld [vmem:[%s6657 + $0x90] sm:$0xf]
      %v6695 = vld [vmem:[%s6657 + $0x94] sm:$0xf]
      %v6696 = vld [vmem:[%s6657 + $0x98] sm:$0xf]
      %v6697 = vld [vmem:[%s6657 + $0x9c] sm:$0xf]
      %v6738 = vunpack.c.l.b16 %v6658
      %v6739 = vunpack.c.l.b16 %v6659
      %v6740 = vunpack.c.l.b16 %v6660
      %v6741 = vunpack.c.l.b16 %v6661
      %v6742 = vunpack.c.l.b16 %v6662
      %v6743 = vunpack.c.l.b16 %v6663
      %v6744 = vunpack.c.l.b16 %v6664
      %v6745 = vunpack.c.l.b16 %v6665
      %v6746 = vunpack.c.l.b16 %v6666
      %v6747 = vunpack.c.l.b16 %v6667
      %v6748 = vunpack.c.l.b16 %v6668
      %v6749 = vunpack.c.l.b16 %v6669
      %v6750 = vunpack.c.l.b16 %v6670
      %v6751 = vunpack.c.l.b16 %v6671
      %v6752 = vunpack.c.l.b16 %v6672
      %v6753 = vunpack.c.l.b16 %v6673
      %v6754 = vunpack.c.l.b16 %v6674
      %v6755 = vunpack.c.l.b16 %v6675
      %v6756 = vunpack.c.l.b16 %v6676
      %v6757 = vunpack.c.l.b16 %v6677
      %v6758 = vunpack.c.l.b16 %v6678
      %v6759 = vunpack.c.l.b16 %v6679
      %v6760 = vunpack.c.l.b16 %v6680
      %v6761 = vunpack.c.l.b16 %v6681
      %v6762 = vunpack.c.l.b16 %v6682
      %v6763 = vunpack.c.l.b16 %v6683
      %v6764 = vunpack.c.l.b16 %v6684
      %v6765 = vunpack.c.l.b16 %v6685
      %v6766 = vunpack.c.l.b16 %v6686
      %v6767 = vunpack.c.l.b16 %v6687
      %v6768 = vunpack.c.l.b16 %v6688
      %v6769 = vunpack.c.l.b16 %v6689
      %v6770 = vunpack.c.l.b16 %v6690
      %v6771 = vunpack.c.l.b16 %v6691
      %v6772 = vunpack.c.l.b16 %v6692
      %v6773 = vunpack.c.l.b16 %v6693
      %v6774 = vunpack.c.l.b16 %v6694
      %v6775 = vunpack.c.l.b16 %v6695
      %v6776 = vunpack.c.l.b16 %v6696
      %v6777 = vunpack.c.l.b16 %v6697
      %v6778 = vpack.c.b16 %v6739, %v6738
      %v6779 = vpack.c.b16 %v6741, %v6740
      %v6780 = vpack.c.b16 %v6743, %v6742
      %v6781 = vpack.c.b16 %v6745, %v6744
      %v6782 = vpack.c.b16 %v6747, %v6746
      %v6783 = vpack.c.b16 %v6749, %v6748
      %v6784 = vpack.c.b16 %v6751, %v6750
      %v6785 = vpack.c.b16 %v6753, %v6752
      %v6786 = vpack.c.b16 %v6755, %v6754
      %v6787 = vpack.c.b16 %v6757, %v6756
      %v6788 = vpack.c.b16 %v6759, %v6758
      %v6789 = vpack.c.b16 %v6761, %v6760
      %v6790 = vpack.c.b16 %v6763, %v6762
      %v6791 = vpack.c.b16 %v6765, %v6764
      %v6792 = vpack.c.b16 %v6767, %v6766
      %v6793 = vpack.c.b16 %v6769, %v6768
      %v6794 = vpack.c.b16 %v6771, %v6770
      %v6795 = vpack.c.b16 %v6773, %v6772
      %v6796 = vpack.c.b16 %v6775, %v6774
      %v6797 = vpack.c.b16 %v6777, %v6776
      %v6819 = vsel %vm5202, %v6656, 0
      %6821 = vmatpush.bf16.msra.mxu0 %v6785
      %6822 = vmatpush.bf16.msra.mxu0 %v6784
      %6823 = vmatpush.bf16.msra.mxu0 %v6783
      %6824 = vmatpush.bf16.msra.mxu0 %v6782
      %6825 = vmatpush.bf16.msra.mxu0 %v6781
      %6826 = vmatpush.bf16.msra.mxu0 %v6780
      %6827 = vmatpush.bf16.msra.mxu0 %v6779
      %6828 = vmatpush.bf16.msra.mxu0 %v6778
      %6829 = vmatmul.bf16.gmra.mxu0 %v6654
      %v6830 = vpop.f32.mrf.mxu0
      %v6831 = vadd.f32 0.0, %v6830
      %v6832 = vpop.f32.mrf.mxu0
      %6833 = vdwg.mxu0
      %6834 = vmatpush.bf16.msra.mxu0 %v6793
      %6835 = vmatpush.bf16.msra.mxu0 %v6792
      %6836 = vmatpush.bf16.msra.mxu0 %v6791
      %6837 = vmatpush.bf16.msra.mxu0 %v6790
      %6838 = vmatpush.bf16.msra.mxu0 %v6789
      %6839 = vmatpush.bf16.msra.mxu0 %v6788
      %6840 = vmatpush.bf16.msra.mxu0 %v6787
      %6841 = vmatpush.bf16.msra.mxu0 %v6786
      %6842 = vmatmul.bf16.gmra.mxu0 %v6655
      %v6843 = vpop.f32.mrf.mxu0
      %v6844 = vadd.f32 %v6831, %v6843
      %v6845 = vpop.f32.mrf.mxu0
      %6846 = vdwg.mxu0
      %6847 = vmatpush.bf16.msra.mxu0 0
      %6848 = vmatpush.bf16.msra.mxu0 0
      %6849 = vmatpush.bf16.msra.mxu0 0
      %6850 = vmatpush.bf16.msra.mxu0 0
      %6851 = vmatpush.bf16.msra.mxu0 %v6797
      %6852 = vmatpush.bf16.msra.mxu0 %v6796
      %6853 = vmatpush.bf16.msra.mxu0 %v6795
      %6854 = vmatpush.bf16.msra.mxu0 %v6794
      %6855 = vmatmul.bf16.gmra.mxu0 %v6819
      %v6856 = vpop.f32.mrf.mxu0
      %v6857 = vadd.f32 %v6844, %v6856
      %v6858 = vpop.f32.mrf.mxu0
      %6859 = vdwg.mxu0
      %v6860 = vadd.f32 %v6644, %v6857
      %vm6861 = vcmp.ge.f32.partialorder %v6860, 0.0
      %v6862 = vmul.f32 %v6860, 0.2
      %v6863 = vsel %vm6861, %v6860, %v6862
      %v6864 = vadd.f32 %v6863, 0.0
      %v6865 = vld [vmem:[%s11] sm:$0x1]
      %v6866 = vmul.f32 %v6864, %v6865
      %v6867 = vsel %vm5780, %v6866, 0.0
      %6868 = vadd.xlane.f32.xlu0 %v6867
      %v6869 = vpop.xlane.xlu0 %6868
      %v6870 = vld [vmem:[#allocation6] sm:$0x1]
      %v6871 = vadd.f32 %v6869, %v6870
      %vm6872 = vcmask 0
      %6873 = vst.msk [vmem:[%s438] sm:$0x1] %vm6872, %v6871
      %p6874 = scmp.lt.s32.totalorder %s26, 1
      %s6875 = scalar_select %p6874, %s26, 1
      %s6876 = scalar_lea.vmem %s13, %s6875
      // Predicated region
      $region73: #{inpainting_discriminator.1} parent=71 // pred_check
        %p6877 = pneg %p322
      $region74: #{inpainting_discriminator.1} parent=71 // pred_check_branch
        %6879 = sbr.rel (%p6877) target = $region76
      $region75: #{inpainting_discriminator.1} parent=71 // pred_region
        _
      $region76: #{inpainting_discriminator.1} parent=71 // pred_fallthru
        _
    $region72: #{inpainting_discriminator.1} parent=5 // pred_fallthru
      _
    %p6880 = scmp.le.s32.totalorder 2, %s21
    // Predicated region
    $region77: #{inpainting_discriminator.1} parent=5 // pred_check
      %p6881 = pneg %p6880
    $region78: #{inpainting_discriminator.1} parent=5 // pred_check_branch
      %6883 = sbr.rel (%p6881) target = $region80
    $region79: #{inpainting_discriminator.1} parent=5 // pred_region
      %s6884 = ssub.s32 %s21, 2
      // Predicated region
      $region81: #{inpainting_discriminator.1} parent=79 // pred_check
        %p6885 = pneg %p328
      $region82: #{inpainting_discriminator.1} parent=79 // pred_check_branch
        %6887 = sbr.rel (%p6885) target = $region84
      $region83: #{inpainting_discriminator.1} parent=79 // pred_region
        %p6888 = scmp.lt.s32.totalorder %s27, 1
        %s6889 = scalar_select %p6888, %s27, 1
        %s6890 = scalar_lea.vmem %s13, %s6889
      $region84: #{inpainting_discriminator.1} parent=79 // pred_fallthru
        _
    $region80: #{inpainting_discriminator.1} parent=5 // pred_fallthru
      _
  $region6: #{inpainting_discriminator.1} parent=0 // loop_footer
    %s25 = sadd.s32 1, %s21
  $region7: #{inpainting_discriminator.1} parent=0 // loop_footer_branch
    %20 = sbr.rel target = $region3
  $region8: #{inpainting_discriminator.1} parent=0 // loop_exit
    _

</llo_original>
